<compile_context>
chip_gen: v7x
topology: tpu7x:2x2x1
jax: 0.10.0
libtpu: 0.0.40
codegen_flags: <defaults>
</compile_context>

<pallas_src>
import jax
import jax.numpy as jnp
from jax.experimental import pallas as pl
from jax.experimental.pallas import tpu as pltpu


# ----------------------------------------------------------------------------
# Fused kernel builder (static config closure).
# ----------------------------------------------------------------------------
def _build_kernel(cfg):
    feat = cfg["feat"]
    n_feat = len(feat)
    hidden = cfg["hidden"]
    c_last = feat[-1]["cout"]
    n_param_refs = 2 * (n_feat + 2)   # (w, b) per feature layer + 2 head convs

    def conv1x1(x, w_ref, b_ref, cin, relu):
        # 1x1 conv as broadcast FMAs over input channels (VPU; channels are tiny).
        h, w = x.shape[0], x.shape[1]
        cout = w_ref.shape[1]
        acc = jnp.zeros((h, w, cout), jnp.float32)
        for ci in range(cin):
            acc = acc + x[:, :, ci:ci + 1] * w_ref[ci:ci + 1, :]
        acc = acc + b_ref[...]
        return jnp.maximum(acc, 0.0) if relu else acc

    def strided_conv_bn_relu(in_ref, w_ref, b_ref, lp):
        # kxk conv, stride 2, padding 0, with BN scale pre-folded into w/b.
        t, cin = lp["t"], lp["cin"]
        ho, wo, cout = lp["hout"], lp["wout"], lp["cout"]
        acc = jnp.zeros((ho, wo, cout), jnp.float32)
        for ky in range(t):
            for kx in range(t):
                # One slab-level strided read per tap: (ho, wo, cin).
                patch = in_ref[pl.ds(ky, ho, 2), pl.ds(kx, wo, 2), :]
                base = (ky * t + kx) * cin
                for ci in range(cin):
                    acc = acc + (patch[:, :, ci:ci + 1]
                                 * w_ref[base + ci:base + ci + 1, :])
        return jnp.maximum(acc + b_ref[...], 0.0)

    def kernel(*refs):
        x_ref = refs[0]
        p_refs = refs[1:1 + n_param_refs]
        o_ref = refs[1 + n_param_refs]
        act_scratch = refs[2 + n_param_refs:]

        # Feature stages: activation stays in VMEM scratch between stages.
        cur = x_ref
        out = None
        for l, lp in enumerate(feat):
            out = strided_conv_bn_relu(cur, p_refs[2 * l], p_refs[2 * l + 1], lp)
            if l + 1 < n_feat:
                act_scratch[l][...] = out          # single full-slab store
                cur = act_scratch[l]

        # Classifier head: 1x1 conv -> Dropout(identity, eval) -> ReLU -> 1x1 conv
        w1, b1 = p_refs[2 * n_feat], p_refs[2 * n_feat + 1]
        w2, b2 = p_refs[2 * n_feat + 2], p_refs[2 * n_feat + 3]
        h = conv1x1(out, w1, b1, c_last, relu=True)
        o_ref[...] = conv1x1(h, w2, b2, hidden, relu=False)

    return kernel


# ----------------------------------------------------------------------------
# Public wrapper (PyTorch-style NCHW in, flattened NCHW-order logits out).
# ----------------------------------------------------------------------------
def classifier_forward(x_nchw, params):
    cfg = params["cfg"]
    feat = cfg["feat"]
    n_class = cfg["n_class"]
    N = x_nchw.shape[0]
    h0, w0, c0 = feat[0]["hin"], feat[0]["win"], feat[0]["cin"]
    hf, wf = feat[-1]["hout"], feat[-1]["wout"]

    x = jnp.transpose(x_nchw, (0, 2, 3, 1)).astype(jnp.float32)   # NCHW -> NHWC

    flat = [x]
    in_specs = [pl.BlockSpec((None, h0, w0, c0), lambda i: (i, 0, 0, 0))]
    for w, b in params["feat"] + params["head"]:
        flat += [w, b]
        in_specs += [pl.BlockSpec(w.shape, lambda i: (0, 0)),
                     pl.BlockSpec(b.shape, lambda i: (0, 0))]

    out = pl.pallas_call(
        _build_kernel(cfg),
        out_shape=jax.ShapeDtypeStruct((N, hf, wf, n_class), jnp.float32),
        grid=(N,),
        in_specs=in_specs,
        out_specs=pl.BlockSpec((None, hf, wf, n_class), lambda i: (i, 0, 0, 0)),
        scratch_shapes=[pltpu.VMEM((lp["hout"], lp["wout"], lp["cout"]), jnp.float32)
                        for lp in feat[:-1]],
        compiler_params=pltpu.CompilerParams(dimension_semantics=("parallel",)),
    )(*flat)

    # NCHW-ordered flatten (tiny logits map), matching torch `.view((N, -1))`.
    return jnp.transpose(out, (0, 3, 1, 2)).reshape(N, -1)


# ----------------------------------------------------------------------------
# Deterministic parameter init + host-side BN folding.
# ----------------------------------------------------------------------------
def init_classifier(key, layers, *, hidden, n_class, h_in, w_in, scale=1.0):
    """Returns (kernel_params, raw_params_for_reference)."""
    scaled = lambda v: int(scale * v)
    feat_cfg, feat_fold, feat_raw = [], [], []
    h, w = h_in, w_in
    keys = jax.random.split(key, len(layers) + 2)
    eps = 1e-5
    for i, (inp, out, t) in enumerate(layers):
        cin = inp if i == 0 else scaled(inp)
        cout = scaled(out)
        ho, wo = (h - t) // 2 + 1, (w - t) // 2 + 1
        k = jax.random.split(keys[i], 6)
        w_oihw = 0.3 * jax.random.normal(k[0], (cout, cin, t, t), jnp.float32)
        b = 0.1 * jax.random.normal(k[1], (cout,), jnp.float32)
        gamma = 1.0 + 0.1 * jax.random.normal(k[2], (cout,), jnp.float32)
        beta = 0.1 * jax.random.normal(k[3], (cout,), jnp.float32)
        mean = 0.1 * jax.random.normal(k[4], (cout,), jnp.float32)
        var = 0.5 + jax.random.uniform(k[5], (cout,), jnp.float32)
        feat_raw.append(dict(w=w_oihw, b=b, gamma=gamma, beta=beta, mean=mean, var=var))
        # Fold BN (inference running stats) into the conv: s = gamma/sqrt(var+eps)
        s = gamma / jnp.sqrt(var + eps)
        w_k = jnp.transpose(w_oihw, (2, 3, 1, 0)).reshape(t * t * cin, cout) * s[None, :]
        b_k = ((b - mean) * s + beta).reshape(1, cout)
        feat_fold.append((w_k, b_k))
        feat_cfg.append(dict(t=t, cin=cin, cout=cout, hin=h, win=w, hout=ho, wout=wo))
        h, w = ho, wo

    c_last = feat_cfg[-1]["cout"]
    hid = scaled(hidden)
    k1 = jax.random.split(keys[-2], 2)
    w1 = 0.3 * jax.random.normal(k1[0], (hid, c_last, 1, 1), jnp.float32)
    b1 = 0.1 * jax.random.normal(k1[1], (hid,), jnp.float32)
    k2 = jax.random.split(keys[-1], 2)
    w2 = 0.3 * jax.random.normal(k2[0], (n_class, hid, 1, 1), jnp.float32)
    b2 = 0.1 * jax.random.normal(k2[1], (n_class,), jnp.float32)
    head_raw = [dict(w=w1, b=b1), dict(w=w2, b=b2)]
    head_fold = [(jnp.transpose(w1[:, :, 0, 0], (1, 0)), b1.reshape(1, hid)),
                 (jnp.transpose(w2[:, :, 0, 0], (1, 0)), b2.reshape(1, n_class))]

    cfg = dict(feat=feat_cfg, hidden=hid, n_class=n_class)
    params = dict(cfg=cfg, feat=feat_fold, head=head_fold)
    raw = dict(feat=feat_raw, head=head_raw)
    return params, raw


# ----------------------------------------------------------------------------
# Pure-JAX reference (uses the UNfolded params -> validates BN folding too).
# ----------------------------------------------------------------------------
def classifier_reference(x_nchw, raw):
    eps = 1e-5
    dn = ("NCHW", "OIHW", "NCHW")
    h = x_nchw
    for p in raw["feat"]:
        h = jax.lax.conv_general_dilated(h, p["w"], (2, 2), "VALID",
                                         dimension_numbers=dn, precision="highest")
        h = h + p["b"][None, :, None, None]
        s = p["gamma"] / jnp.sqrt(p["var"] + eps)
        h = (h - p["mean"][None, :, None, None]) * s[None, :, None, None] \
            + p["beta"][None, :, None, None]
        h = jnp.maximum(h, 0.0)
    p1, p2 = raw["head"]
    h = jax.lax.conv_general_dilated(h, p1["w"], (1, 1), "VALID",
                                     dimension_numbers=dn, precision="highest")
    h = h + p1["b"][None, :, None, None]
    h = jnp.maximum(h, 0.0)               # Dropout is identity in eval mode
    h = jax.lax.conv_general_dilated(h, p2["w"], (1, 1), "VALID",
                                     dimension_numbers=dn, precision="highest")
    h = h + p2["b"][None, :, None, None]
    return h.reshape(h.shape[0], -1)


# ----------------------------------------------------------------------------
if __name__ == "__main__":
    key = jax.random.PRNGKey(0)
    # Layer(inp, out, t) list, as in the PyTorch module spec.
    layers = [(4, 8, 3), (8, 16, 3)]
    hidden, n_class = 32, 10
    N, H, W = 2, 16, 16

    k_x, k_p = jax.random.split(key)
    x = jax.random.normal(k_x, (N, layers[0][0], H, W), jnp.float32)  # NCHW
    params, raw = init_classifier(k_p, layers, hidden=hidden, n_class=n_class,
                                  h_in=H, w_in=W, scale=1.0)

    out = jax.block_until_ready(classifier_forward(x, params))

    hf = params["cfg"]["feat"][-1]["hout"]
    wf = params["cfg"]["feat"][-1]["wout"]
    assert out.shape == (N, n_class * hf * wf), out.shape

    ref = classifier_reference(x, raw)
    err = float(jnp.max(jnp.abs(out - ref)))
    assert jnp.allclose(out, ref, atol=2e-3, rtol=2e-3), f"max abs err {err}"
    print("KERNEL_OK")
</pallas_src>

<mosaic_0001>
module attributes {stable_mosaic.version = 11 : i64} {
  func.func @kernel(%arg0: i32, %arg1: memref<1x16x16x4xf32, #tpu.memory_space<vmem>>, %arg2: memref<36x8xf32, #tpu.memory_space<vmem>>, %arg3: memref<1x8xf32, #tpu.memory_space<vmem>>, %arg4: memref<72x16xf32, #tpu.memory_space<vmem>>, %arg5: memref<1x16xf32, #tpu.memory_space<vmem>>, %arg6: memref<16x32xf32, #tpu.memory_space<vmem>>, %arg7: memref<1x32xf32, #tpu.memory_space<vmem>>, %arg8: memref<32x10xf32, #tpu.memory_space<vmem>>, %arg9: memref<1x10xf32, #tpu.memory_space<vmem>>, %arg10: memref<1x3x3x10xf32, #tpu.memory_space<vmem>>, %arg11: memref<7x7x8xf32, #tpu.memory_space<vmem>>) attributes {dimension_semantics = [#tpu.dimension_semantics<parallel>], iteration_bounds = array<i64: 2>, scalar_prefetch = 0 : i64, scratch_operands = 1 : i64, tpu.core_type = #tpu.core_type<tc>, window_params = [{transform_indices = @transform_0, window_bounds = array<i64: 1, 16, 16, 4>}, {pipeline_mode = #tpu.pipeline_mode<synchronous>, transform_indices = @transform_1, window_bounds = array<i64: 36, 8>}, {pipeline_mode = #tpu.pipeline_mode<synchronous>, transform_indices = @transform_2, window_bounds = array<i64: 1, 8>}, {pipeline_mode = #tpu.pipeline_mode<synchronous>, transform_indices = @transform_3, window_bounds = array<i64: 72, 16>}, {pipeline_mode = #tpu.pipeline_mode<synchronous>, transform_indices = @transform_4, window_bounds = array<i64: 1, 16>}, {pipeline_mode = #tpu.pipeline_mode<synchronous>, transform_indices = @transform_5, window_bounds = array<i64: 16, 32>}, {pipeline_mode = #tpu.pipeline_mode<synchronous>, transform_indices = @transform_6, window_bounds = array<i64: 1, 32>}, {pipeline_mode = #tpu.pipeline_mode<synchronous>, transform_indices = @transform_7, window_bounds = array<i64: 32, 10>}, {pipeline_mode = #tpu.pipeline_mode<synchronous>, transform_indices = @transform_8, window_bounds = array<i64: 1, 10>}, {transform_indices = @transform_9, window_bounds = array<i64: 1, 3, 3, 10>}]} {
    %cst = arith.constant 0.000000e+00 : f32
    %0 = vector.broadcast %cst : f32 to vector<7x7x8xf32>
    %c0 = arith.constant 0 : index
    %c0_0 = arith.constant 0 : index
    %c0_1 = arith.constant 0 : index
    %c0_2 = arith.constant 0 : index
    %1 = tpu.strided_load %arg1[%c0, %c0_0, %c0_1, %c0_2] {strides = array<i32: 1, 2, 2, 1>} : memref<1x16x16x4xf32, #tpu.memory_space<vmem>>, vector<1x7x7x4xf32>
    %2 = vector.shape_cast %1 : vector<1x7x7x4xf32> to vector<7x7x4xf32>
    %3 = vector.extract_strided_slice %2 {offsets = [0, 0, 0], sizes = [7, 7, 1], strides = [1, 1, 1]} : vector<7x7x4xf32> to vector<7x7x1xf32>
    %c0_3 = arith.constant 0 : index
    %c0_4 = arith.constant 0 : index
    %4 = vector.load %arg2[%c0_3, %c0_4] : memref<36x8xf32, #tpu.memory_space<vmem>>, vector<1x8xf32>
    %5 = vector.shape_cast %4 : vector<1x8xf32> to vector<1x1x8xf32>
    %6 = vector.broadcast %3 : vector<7x7x1xf32> to vector<7x7x8xf32>
    %7 = vector.broadcast %5 : vector<1x1x8xf32> to vector<7x7x8xf32>
    %8 = arith.mulf %6, %7 : vector<7x7x8xf32>
    %9 = arith.addf %0, %8 : vector<7x7x8xf32>
    %10 = vector.extract_strided_slice %2 {offsets = [0, 0, 1], sizes = [7, 7, 1], strides = [1, 1, 1]} : vector<7x7x4xf32> to vector<7x7x1xf32>
    %c1 = arith.constant 1 : index
    %c0_5 = arith.constant 0 : index
    %11 = vector.load %arg2[%c1, %c0_5] : memref<36x8xf32, #tpu.memory_space<vmem>>, vector<1x8xf32>
    %12 = vector.shape_cast %11 : vector<1x8xf32> to vector<1x1x8xf32>
    %13 = vector.broadcast %10 : vector<7x7x1xf32> to vector<7x7x8xf32>
    %14 = vector.broadcast %12 : vector<1x1x8xf32> to vector<7x7x8xf32>
    %15 = arith.mulf %13, %14 : vector<7x7x8xf32>
    %16 = arith.addf %9, %15 : vector<7x7x8xf32>
    %17 = vector.extract_strided_slice %2 {offsets = [0, 0, 2], sizes = [7, 7, 1], strides = [1, 1, 1]} : vector<7x7x4xf32> to vector<7x7x1xf32>
    %c2 = arith.constant 2 : index
    %c0_6 = arith.constant 0 : index
    %18 = vector.load %arg2[%c2, %c0_6] : memref<36x8xf32, #tpu.memory_space<vmem>>, vector<1x8xf32>
    %19 = vector.shape_cast %18 : vector<1x8xf32> to vector<1x1x8xf32>
    %20 = vector.broadcast %17 : vector<7x7x1xf32> to vector<7x7x8xf32>
    %21 = vector.broadcast %19 : vector<1x1x8xf32> to vector<7x7x8xf32>
    %22 = arith.mulf %20, %21 : vector<7x7x8xf32>
    %23 = arith.addf %16, %22 : vector<7x7x8xf32>
    %24 = vector.extract_strided_slice %2 {offsets = [0, 0, 3], sizes = [7, 7, 1], strides = [1, 1, 1]} : vector<7x7x4xf32> to vector<7x7x1xf32>
    %c3 = arith.constant 3 : index
    %c0_7 = arith.constant 0 : index
    %25 = vector.load %arg2[%c3, %c0_7] : memref<36x8xf32, #tpu.memory_space<vmem>>, vector<1x8xf32>
    %26 = vector.shape_cast %25 : vector<1x8xf32> to vector<1x1x8xf32>
    %27 = vector.broadcast %24 : vector<7x7x1xf32> to vector<7x7x8xf32>
    %28 = vector.broadcast %26 : vector<1x1x8xf32> to vector<7x7x8xf32>
    %29 = arith.mulf %27, %28 : vector<7x7x8xf32>
    %30 = arith.addf %23, %29 : vector<7x7x8xf32>
    %c0_8 = arith.constant 0 : index
    %c0_9 = arith.constant 0 : index
    %c1_10 = arith.constant 1 : index
    %c0_11 = arith.constant 0 : index
    %31 = tpu.strided_load %arg1[%c0_8, %c0_9, %c1_10, %c0_11] {strides = array<i32: 1, 2, 2, 1>} : memref<1x16x16x4xf32, #tpu.memory_space<vmem>>, vector<1x7x7x4xf32>
    %32 = vector.shape_cast %31 : vector<1x7x7x4xf32> to vector<7x7x4xf32>
    %33 = vector.extract_strided_slice %32 {offsets = [0, 0, 0], sizes = [7, 7, 1], strides = [1, 1, 1]} : vector<7x7x4xf32> to vector<7x7x1xf32>
    %c4 = arith.constant 4 : index
    %c0_12 = arith.constant 0 : index
    %34 = vector.load %arg2[%c4, %c0_12] : memref<36x8xf32, #tpu.memory_space<vmem>>, vector<1x8xf32>
    %35 = vector.shape_cast %34 : vector<1x8xf32> to vector<1x1x8xf32>
    %36 = vector.broadcast %33 : vector<7x7x1xf32> to vector<7x7x8xf32>
    %37 = vector.broadcast %35 : vector<1x1x8xf32> to vector<7x7x8xf32>
    %38 = arith.mulf %36, %37 : vector<7x7x8xf32>
    %39 = arith.addf %30, %38 : vector<7x7x8xf32>
    %40 = vector.extract_strided_slice %32 {offsets = [0, 0, 1], sizes = [7, 7, 1], strides = [1, 1, 1]} : vector<7x7x4xf32> to vector<7x7x1xf32>
    %c5 = arith.constant 5 : index
    %c0_13 = arith.constant 0 : index
    %41 = vector.load %arg2[%c5, %c0_13] : memref<36x8xf32, #tpu.memory_space<vmem>>, vector<1x8xf32>
    %42 = vector.shape_cast %41 : vector<1x8xf32> to vector<1x1x8xf32>
    %43 = vector.broadcast %40 : vector<7x7x1xf32> to vector<7x7x8xf32>
    %44 = vector.broadcast %42 : vector<1x1x8xf32> to vector<7x7x8xf32>
    %45 = arith.mulf %43, %44 : vector<7x7x8xf32>
    %46 = arith.addf %39, %45 : vector<7x7x8xf32>
    %47 = vector.extract_strided_slice %32 {offsets = [0, 0, 2], sizes = [7, 7, 1], strides = [1, 1, 1]} : vector<7x7x4xf32> to vector<7x7x1xf32>
    %c6 = arith.constant 6 : index
    %c0_14 = arith.constant 0 : index
    %48 = vector.load %arg2[%c6, %c0_14] : memref<36x8xf32, #tpu.memory_space<vmem>>, vector<1x8xf32>
    %49 = vector.shape_cast %48 : vector<1x8xf32> to vector<1x1x8xf32>
    %50 = vector.broadcast %47 : vector<7x7x1xf32> to vector<7x7x8xf32>
    %51 = vector.broadcast %49 : vector<1x1x8xf32> to vector<7x7x8xf32>
    %52 = arith.mulf %50, %51 : vector<7x7x8xf32>
    %53 = arith.addf %46, %52 : vector<7x7x8xf32>
    %54 = vector.extract_strided_slice %32 {offsets = [0, 0, 3], sizes = [7, 7, 1], strides = [1, 1, 1]} : vector<7x7x4xf32> to vector<7x7x1xf32>
    %c7 = arith.constant 7 : index
    %c0_15 = arith.constant 0 : index
    %55 = vector.load %arg2[%c7, %c0_15] : memref<36x8xf32, #tpu.memory_space<vmem>>, vector<1x8xf32>
    %56 = vector.shape_cast %55 : vector<1x8xf32> to vector<1x1x8xf32>
    %57 = vector.broadcast %54 : vector<7x7x1xf32> to vector<7x7x8xf32>
    %58 = vector.broadcast %56 : vector<1x1x8xf32> to vector<7x7x8xf32>
    %59 = arith.mulf %57, %58 : vector<7x7x8xf32>
    %60 = arith.addf %53, %59 : vector<7x7x8xf32>
    %c0_16 = arith.constant 0 : index
    %c0_17 = arith.constant 0 : index
    %c2_18 = arith.constant 2 : index
    %c0_19 = arith.constant 0 : index
    %61 = tpu.strided_load %arg1[%c0_16, %c0_17, %c2_18, %c0_19] {strides = array<i32: 1, 2, 2, 1>} : memref<1x16x16x4xf32, #tpu.memory_space<vmem>>, vector<1x7x7x4xf32>
    %62 = vector.shape_cast %61 : vector<1x7x7x4xf32> to vector<7x7x4xf32>
    %63 = vector.extract_strided_slice %62 {offsets = [0, 0, 0], sizes = [7, 7, 1], strides = [1, 1, 1]} : vector<7x7x4xf32> to vector<7x7x1xf32>
    %c8 = arith.constant 8 : index
    %c0_20 = arith.constant 0 : index
    %64 = vector.load %arg2[%c8, %c0_20] : memref<36x8xf32, #tpu.memory_space<vmem>>, vector<1x8xf32>
    %65 = vector.shape_cast %64 : vector<1x8xf32> to vector<1x1x8xf32>
    %66 = vector.broadcast %63 : vector<7x7x1xf32> to vector<7x7x8xf32>
    %67 = vector.broadcast %65 : vector<1x1x8xf32> to vector<7x7x8xf32>
    %68 = arith.mulf %66, %67 : vector<7x7x8xf32>
    %69 = arith.addf %60, %68 : vector<7x7x8xf32>
    %70 = vector.extract_strided_slice %62 {offsets = [0, 0, 1], sizes = [7, 7, 1], strides = [1, 1, 1]} : vector<7x7x4xf32> to vector<7x7x1xf32>
    %c9 = arith.constant 9 : index
    %c0_21 = arith.constant 0 : index
    %71 = vector.load %arg2[%c9, %c0_21] : memref<36x8xf32, #tpu.memory_space<vmem>>, vector<1x8xf32>
    %72 = vector.shape_cast %71 : vector<1x8xf32> to vector<1x1x8xf32>
    %73 = vector.broadcast %70 : vector<7x7x1xf32> to vector<7x7x8xf32>
    %74 = vector.broadcast %72 : vector<1x1x8xf32> to vector<7x7x8xf32>
    %75 = arith.mulf %73, %74 : vector<7x7x8xf32>
    %76 = arith.addf %69, %75 : vector<7x7x8xf32>
    %77 = vector.extract_strided_slice %62 {offsets = [0, 0, 2], sizes = [7, 7, 1], strides = [1, 1, 1]} : vector<7x7x4xf32> to vector<7x7x1xf32>
    %c10 = arith.constant 10 : index
    %c0_22 = arith.constant 0 : index
    %78 = vector.load %arg2[%c10, %c0_22] : memref<36x8xf32, #tpu.memory_space<vmem>>, vector<1x8xf32>
    %79 = vector.shape_cast %78 : vector<1x8xf32> to vector<1x1x8xf32>
    %80 = vector.broadcast %77 : vector<7x7x1xf32> to vector<7x7x8xf32>
    %81 = vector.broadcast %79 : vector<1x1x8xf32> to vector<7x7x8xf32>
    %82 = arith.mulf %80, %81 : vector<7x7x8xf32>
    %83 = arith.addf %76, %82 : vector<7x7x8xf32>
    %84 = vector.extract_strided_slice %62 {offsets = [0, 0, 3], sizes = [7, 7, 1], strides = [1, 1, 1]} : vector<7x7x4xf32> to vector<7x7x1xf32>
    %c11 = arith.constant 11 : index
    %c0_23 = arith.constant 0 : index
    %85 = vector.load %arg2[%c11, %c0_23] : memref<36x8xf32, #tpu.memory_space<vmem>>, vector<1x8xf32>
    %86 = vector.shape_cast %85 : vector<1x8xf32> to vector<1x1x8xf32>
    %87 = vector.broadcast %84 : vector<7x7x1xf32> to vector<7x7x8xf32>
    %88 = vector.broadcast %86 : vector<1x1x8xf32> to vector<7x7x8xf32>
    %89 = arith.mulf %87, %88 : vector<7x7x8xf32>
    %90 = arith.addf %83, %89 : vector<7x7x8xf32>
    %c0_24 = arith.constant 0 : index
    %c1_25 = arith.constant 1 : index
    %c0_26 = arith.constant 0 : index
    %c0_27 = arith.constant 0 : index
    %91 = tpu.strided_load %arg1[%c0_24, %c1_25, %c0_26, %c0_27] {strides = array<i32: 1, 2, 2, 1>} : memref<1x16x16x4xf32, #tpu.memory_space<vmem>>, vector<1x7x7x4xf32>
    %92 = vector.shape_cast %91 : vector<1x7x7x4xf32> to vector<7x7x4xf32>
    %93 = vector.extract_strided_slice %92 {offsets = [0, 0, 0], sizes = [7, 7, 1], strides = [1, 1, 1]} : vector<7x7x4xf32> to vector<7x7x1xf32>
    %c12 = arith.constant 12 : index
    %c0_28 = arith.constant 0 : index
    %94 = vector.load %arg2[%c12, %c0_28] : memref<36x8xf32, #tpu.memory_space<vmem>>, vector<1x8xf32>
    %95 = vector.shape_cast %94 : vector<1x8xf32> to vector<1x1x8xf32>
    %96 = vector.broadcast %93 : vector<7x7x1xf32> to vector<7x7x8xf32>
    %97 = vector.broadcast %95 : vector<1x1x8xf32> to vector<7x7x8xf32>
    %98 = arith.mulf %96, %97 : vector<7x7x8xf32>
    %99 = arith.addf %90, %98 : vector<7x7x8xf32>
    %100 = vector.extract_strided_slice %92 {offsets = [0, 0, 1], sizes = [7, 7, 1], strides = [1, 1, 1]} : vector<7x7x4xf32> to vector<7x7x1xf32>
    %c13 = arith.constant 13 : index
    %c0_29 = arith.constant 0 : index
    %101 = vector.load %arg2[%c13, %c0_29] : memref<36x8xf32, #tpu.memory_space<vmem>>, vector<1x8xf32>
    %102 = vector.shape_cast %101 : vector<1x8xf32> to vector<1x1x8xf32>
    %103 = vector.broadcast %100 : vector<7x7x1xf32> to vector<7x7x8xf32>
    %104 = vector.broadcast %102 : vector<1x1x8xf32> to vector<7x7x8xf32>
    %105 = arith.mulf %103, %104 : vector<7x7x8xf32>
    %106 = arith.addf %99, %105 : vector<7x7x8xf32>
    %107 = vector.extract_strided_slice %92 {offsets = [0, 0, 2], sizes = [7, 7, 1], strides = [1, 1, 1]} : vector<7x7x4xf32> to vector<7x7x1xf32>
    %c14 = arith.constant 14 : index
    %c0_30 = arith.constant 0 : index
    %108 = vector.load %arg2[%c14, %c0_30] : memref<36x8xf32, #tpu.memory_space<vmem>>, vector<1x8xf32>
    %109 = vector.shape_cast %108 : vector<1x8xf32> to vector<1x1x8xf32>
    %110 = vector.broadcast %107 : vector<7x7x1xf32> to vector<7x7x8xf32>
    %111 = vector.broadcast %109 : vector<1x1x8xf32> to vector<7x7x8xf32>
    %112 = arith.mulf %110, %111 : vector<7x7x8xf32>
    %113 = arith.addf %106, %112 : vector<7x7x8xf32>
    %114 = vector.extract_strided_slice %92 {offsets = [0, 0, 3], sizes = [7, 7, 1], strides = [1, 1, 1]} : vector<7x7x4xf32> to vector<7x7x1xf32>
    %c15 = arith.constant 15 : index
    %c0_31 = arith.constant 0 : index
    %115 = vector.load %arg2[%c15, %c0_31] : memref<36x8xf32, #tpu.memory_space<vmem>>, vector<1x8xf32>
    %116 = vector.shape_cast %115 : vector<1x8xf32> to vector<1x1x8xf32>
    %117 = vector.broadcast %114 : vector<7x7x1xf32> to vector<7x7x8xf32>
    %118 = vector.broadcast %116 : vector<1x1x8xf32> to vector<7x7x8xf32>
    %119 = arith.mulf %117, %118 : vector<7x7x8xf32>
    %120 = arith.addf %113, %119 : vector<7x7x8xf32>
    %c0_32 = arith.constant 0 : index
    %c1_33 = arith.constant 1 : index
    %c1_34 = arith.constant 1 : index
    %c0_35 = arith.constant 0 : index
    %121 = tpu.strided_load %arg1[%c0_32, %c1_33, %c1_34, %c0_35] {strides = array<i32: 1, 2, 2, 1>} : memref<1x16x16x4xf32, #tpu.memory_space<vmem>>, vector<1x7x7x4xf32>
    %122 = vector.shape_cast %121 : vector<1x7x7x4xf32> to vector<7x7x4xf32>
    %123 = vector.extract_strided_slice %122 {offsets = [0, 0, 0], sizes = [7, 7, 1], strides = [1, 1, 1]} : vector<7x7x4xf32> to vector<7x7x1xf32>
    %c16 = arith.constant 16 : index
    %c0_36 = arith.constant 0 : index
    %124 = vector.load %arg2[%c16, %c0_36] : memref<36x8xf32, #tpu.memory_space<vmem>>, vector<1x8xf32>
    %125 = vector.shape_cast %124 : vector<1x8xf32> to vector<1x1x8xf32>
    %126 = vector.broadcast %123 : vector<7x7x1xf32> to vector<7x7x8xf32>
    %127 = vector.broadcast %125 : vector<1x1x8xf32> to vector<7x7x8xf32>
    %128 = arith.mulf %126, %127 : vector<7x7x8xf32>
    %129 = arith.addf %120, %128 : vector<7x7x8xf32>
    %130 = vector.extract_strided_slice %122 {offsets = [0, 0, 1], sizes = [7, 7, 1], strides = [1, 1, 1]} : vector<7x7x4xf32> to vector<7x7x1xf32>
    %c17 = arith.constant 17 : index
    %c0_37 = arith.constant 0 : index
    %131 = vector.load %arg2[%c17, %c0_37] : memref<36x8xf32, #tpu.memory_space<vmem>>, vector<1x8xf32>
    %132 = vector.shape_cast %131 : vector<1x8xf32> to vector<1x1x8xf32>
    %133 = vector.broadcast %130 : vector<7x7x1xf32> to vector<7x7x8xf32>
    %134 = vector.broadcast %132 : vector<1x1x8xf32> to vector<7x7x8xf32>
    %135 = arith.mulf %133, %134 : vector<7x7x8xf32>
    %136 = arith.addf %129, %135 : vector<7x7x8xf32>
    %137 = vector.extract_strided_slice %122 {offsets = [0, 0, 2], sizes = [7, 7, 1], strides = [1, 1, 1]} : vector<7x7x4xf32> to vector<7x7x1xf32>
    %c18 = arith.constant 18 : index
    %c0_38 = arith.constant 0 : index
    %138 = vector.load %arg2[%c18, %c0_38] : memref<36x8xf32, #tpu.memory_space<vmem>>, vector<1x8xf32>
    %139 = vector.shape_cast %138 : vector<1x8xf32> to vector<1x1x8xf32>
    %140 = vector.broadcast %137 : vector<7x7x1xf32> to vector<7x7x8xf32>
    %141 = vector.broadcast %139 : vector<1x1x8xf32> to vector<7x7x8xf32>
    %142 = arith.mulf %140, %141 : vector<7x7x8xf32>
    %143 = arith.addf %136, %142 : vector<7x7x8xf32>
    %144 = vector.extract_strided_slice %122 {offsets = [0, 0, 3], sizes = [7, 7, 1], strides = [1, 1, 1]} : vector<7x7x4xf32> to vector<7x7x1xf32>
    %c19 = arith.constant 19 : index
    %c0_39 = arith.constant 0 : index
    %145 = vector.load %arg2[%c19, %c0_39] : memref<36x8xf32, #tpu.memory_space<vmem>>, vector<1x8xf32>
    %146 = vector.shape_cast %145 : vector<1x8xf32> to vector<1x1x8xf32>
    %147 = vector.broadcast %144 : vector<7x7x1xf32> to vector<7x7x8xf32>
    %148 = vector.broadcast %146 : vector<1x1x8xf32> to vector<7x7x8xf32>
    %149 = arith.mulf %147, %148 : vector<7x7x8xf32>
    %150 = arith.addf %143, %149 : vector<7x7x8xf32>
    %c0_40 = arith.constant 0 : index
    %c1_41 = arith.constant 1 : index
    %c2_42 = arith.constant 2 : index
    %c0_43 = arith.constant 0 : index
    %151 = tpu.strided_load %arg1[%c0_40, %c1_41, %c2_42, %c0_43] {strides = array<i32: 1, 2, 2, 1>} : memref<1x16x16x4xf32, #tpu.memory_space<vmem>>, vector<1x7x7x4xf32>
    %152 = vector.shape_cast %151 : vector<1x7x7x4xf32> to vector<7x7x4xf32>
    %153 = vector.extract_strided_slice %152 {offsets = [0, 0, 0], sizes = [7, 7, 1], strides = [1, 1, 1]} : vector<7x7x4xf32> to vector<7x7x1xf32>
    %c20 = arith.constant 20 : index
    %c0_44 = arith.constant 0 : index
    %154 = vector.load %arg2[%c20, %c0_44] : memref<36x8xf32, #tpu.memory_space<vmem>>, vector<1x8xf32>
    %155 = vector.shape_cast %154 : vector<1x8xf32> to vector<1x1x8xf32>
    %156 = vector.broadcast %153 : vector<7x7x1xf32> to vector<7x7x8xf32>
    %157 = vector.broadcast %155 : vector<1x1x8xf32> to vector<7x7x8xf32>
    %158 = arith.mulf %156, %157 : vector<7x7x8xf32>
    %159 = arith.addf %150, %158 : vector<7x7x8xf32>
    %160 = vector.extract_strided_slice %152 {offsets = [0, 0, 1], sizes = [7, 7, 1], strides = [1, 1, 1]} : vector<7x7x4xf32> to vector<7x7x1xf32>
    %c21 = arith.constant 21 : index
    %c0_45 = arith.constant 0 : index
    %161 = vector.load %arg2[%c21, %c0_45] : memref<36x8xf32, #tpu.memory_space<vmem>>, vector<1x8xf32>
    %162 = vector.shape_cast %161 : vector<1x8xf32> to vector<1x1x8xf32>
    %163 = vector.broadcast %160 : vector<7x7x1xf32> to vector<7x7x8xf32>
    %164 = vector.broadcast %162 : vector<1x1x8xf32> to vector<7x7x8xf32>
    %165 = arith.mulf %163, %164 : vector<7x7x8xf32>
    %166 = arith.addf %159, %165 : vector<7x7x8xf32>
    %167 = vector.extract_strided_slice %152 {offsets = [0, 0, 2], sizes = [7, 7, 1], strides = [1, 1, 1]} : vector<7x7x4xf32> to vector<7x7x1xf32>
    %c22 = arith.constant 22 : index
    %c0_46 = arith.constant 0 : index
    %168 = vector.load %arg2[%c22, %c0_46] : memref<36x8xf32, #tpu.memory_space<vmem>>, vector<1x8xf32>
    %169 = vector.shape_cast %168 : vector<1x8xf32> to vector<1x1x8xf32>
    %170 = vector.broadcast %167 : vector<7x7x1xf32> to vector<7x7x8xf32>
    %171 = vector.broadcast %169 : vector<1x1x8xf32> to vector<7x7x8xf32>
    %172 = arith.mulf %170, %171 : vector<7x7x8xf32>
    %173 = arith.addf %166, %172 : vector<7x7x8xf32>
    %174 = vector.extract_strided_slice %152 {offsets = [0, 0, 3], sizes = [7, 7, 1], strides = [1, 1, 1]} : vector<7x7x4xf32> to vector<7x7x1xf32>
    %c23 = arith.constant 23 : index
    %c0_47 = arith.constant 0 : index
    %175 = vector.load %arg2[%c23, %c0_47] : memref<36x8xf32, #tpu.memory_space<vmem>>, vector<1x8xf32>
    %176 = vector.shape_cast %175 : vector<1x8xf32> to vector<1x1x8xf32>
    %177 = vector.broadcast %174 : vector<7x7x1xf32> to vector<7x7x8xf32>
    %178 = vector.broadcast %176 : vector<1x1x8xf32> to vector<7x7x8xf32>
    %179 = arith.mulf %177, %178 : vector<7x7x8xf32>
    %180 = arith.addf %173, %179 : vector<7x7x8xf32>
    %c0_48 = arith.constant 0 : index
    %c2_49 = arith.constant 2 : index
    %c0_50 = arith.constant 0 : index
    %c0_51 = arith.constant 0 : index
    %181 = tpu.strided_load %arg1[%c0_48, %c2_49, %c0_50, %c0_51] {strides = array<i32: 1, 2, 2, 1>} : memref<1x16x16x4xf32, #tpu.memory_space<vmem>>, vector<1x7x7x4xf32>
    %182 = vector.shape_cast %181 : vector<1x7x7x4xf32> to vector<7x7x4xf32>
    %183 = vector.extract_strided_slice %182 {offsets = [0, 0, 0], sizes = [7, 7, 1], strides = [1, 1, 1]} : vector<7x7x4xf32> to vector<7x7x1xf32>
    %c24 = arith.constant 24 : index
    %c0_52 = arith.constant 0 : index
    %184 = vector.load %arg2[%c24, %c0_52] : memref<36x8xf32, #tpu.memory_space<vmem>>, vector<1x8xf32>
    %185 = vector.shape_cast %184 : vector<1x8xf32> to vector<1x1x8xf32>
    %186 = vector.broadcast %183 : vector<7x7x1xf32> to vector<7x7x8xf32>
    %187 = vector.broadcast %185 : vector<1x1x8xf32> to vector<7x7x8xf32>
    %188 = arith.mulf %186, %187 : vector<7x7x8xf32>
    %189 = arith.addf %180, %188 : vector<7x7x8xf32>
    %190 = vector.extract_strided_slice %182 {offsets = [0, 0, 1], sizes = [7, 7, 1], strides = [1, 1, 1]} : vector<7x7x4xf32> to vector<7x7x1xf32>
    %c25 = arith.constant 25 : index
    %c0_53 = arith.constant 0 : index
    %191 = vector.load %arg2[%c25, %c0_53] : memref<36x8xf32, #tpu.memory_space<vmem>>, vector<1x8xf32>
    %192 = vector.shape_cast %191 : vector<1x8xf32> to vector<1x1x8xf32>
    %193 = vector.broadcast %190 : vector<7x7x1xf32> to vector<7x7x8xf32>
    %194 = vector.broadcast %192 : vector<1x1x8xf32> to vector<7x7x8xf32>
    %195 = arith.mulf %193, %194 : vector<7x7x8xf32>
    %196 = arith.addf %189, %195 : vector<7x7x8xf32>
    %197 = vector.extract_strided_slice %182 {offsets = [0, 0, 2], sizes = [7, 7, 1], strides = [1, 1, 1]} : vector<7x7x4xf32> to vector<7x7x1xf32>
    %c26 = arith.constant 26 : index
    %c0_54 = arith.constant 0 : index
    %198 = vector.load %arg2[%c26, %c0_54] : memref<36x8xf32, #tpu.memory_space<vmem>>, vector<1x8xf32>
    %199 = vector.shape_cast %198 : vector<1x8xf32> to vector<1x1x8xf32>
    %200 = vector.broadcast %197 : vector<7x7x1xf32> to vector<7x7x8xf32>
    %201 = vector.broadcast %199 : vector<1x1x8xf32> to vector<7x7x8xf32>
    %202 = arith.mulf %200, %201 : vector<7x7x8xf32>
    %203 = arith.addf %196, %202 : vector<7x7x8xf32>
    %204 = vector.extract_strided_slice %182 {offsets = [0, 0, 3], sizes = [7, 7, 1], strides = [1, 1, 1]} : vector<7x7x4xf32> to vector<7x7x1xf32>
    %c27 = arith.constant 27 : index
    %c0_55 = arith.constant 0 : index
    %205 = vector.load %arg2[%c27, %c0_55] : memref<36x8xf32, #tpu.memory_space<vmem>>, vector<1x8xf32>
    %206 = vector.shape_cast %205 : vector<1x8xf32> to vector<1x1x8xf32>
    %207 = vector.broadcast %204 : vector<7x7x1xf32> to vector<7x7x8xf32>
    %208 = vector.broadcast %206 : vector<1x1x8xf32> to vector<7x7x8xf32>
    %209 = arith.mulf %207, %208 : vector<7x7x8xf32>
    %210 = arith.addf %203, %209 : vector<7x7x8xf32>
    %c0_56 = arith.constant 0 : index
    %c2_57 = arith.constant 2 : index
    %c1_58 = arith.constant 1 : index
    %c0_59 = arith.constant 0 : index
    %211 = tpu.strided_load %arg1[%c0_56, %c2_57, %c1_58, %c0_59] {strides = array<i32: 1, 2, 2, 1>} : memref<1x16x16x4xf32, #tpu.memory_space<vmem>>, vector<1x7x7x4xf32>
    %212 = vector.shape_cast %211 : vector<1x7x7x4xf32> to vector<7x7x4xf32>
    %213 = vector.extract_strided_slice %212 {offsets = [0, 0, 0], sizes = [7, 7, 1], strides = [1, 1, 1]} : vector<7x7x4xf32> to vector<7x7x1xf32>
    %c28 = arith.constant 28 : index
    %c0_60 = arith.constant 0 : index
    %214 = vector.load %arg2[%c28, %c0_60] : memref<36x8xf32, #tpu.memory_space<vmem>>, vector<1x8xf32>
    %215 = vector.shape_cast %214 : vector<1x8xf32> to vector<1x1x8xf32>
    %216 = vector.broadcast %213 : vector<7x7x1xf32> to vector<7x7x8xf32>
    %217 = vector.broadcast %215 : vector<1x1x8xf32> to vector<7x7x8xf32>
    %218 = arith.mulf %216, %217 : vector<7x7x8xf32>
    %219 = arith.addf %210, %218 : vector<7x7x8xf32>
    %220 = vector.extract_strided_slice %212 {offsets = [0, 0, 1], sizes = [7, 7, 1], strides = [1, 1, 1]} : vector<7x7x4xf32> to vector<7x7x1xf32>
    %c29 = arith.constant 29 : index
    %c0_61 = arith.constant 0 : index
    %221 = vector.load %arg2[%c29, %c0_61] : memref<36x8xf32, #tpu.memory_space<vmem>>, vector<1x8xf32>
    %222 = vector.shape_cast %221 : vector<1x8xf32> to vector<1x1x8xf32>
    %223 = vector.broadcast %220 : vector<7x7x1xf32> to vector<7x7x8xf32>
    %224 = vector.broadcast %222 : vector<1x1x8xf32> to vector<7x7x8xf32>
    %225 = arith.mulf %223, %224 : vector<7x7x8xf32>
    %226 = arith.addf %219, %225 : vector<7x7x8xf32>
    %227 = vector.extract_strided_slice %212 {offsets = [0, 0, 2], sizes = [7, 7, 1], strides = [1, 1, 1]} : vector<7x7x4xf32> to vector<7x7x1xf32>
    %c30 = arith.constant 30 : index
    %c0_62 = arith.constant 0 : index
    %228 = vector.load %arg2[%c30, %c0_62] : memref<36x8xf32, #tpu.memory_space<vmem>>, vector<1x8xf32>
    %229 = vector.shape_cast %228 : vector<1x8xf32> to vector<1x1x8xf32>
    %230 = vector.broadcast %227 : vector<7x7x1xf32> to vector<7x7x8xf32>
    %231 = vector.broadcast %229 : vector<1x1x8xf32> to vector<7x7x8xf32>
    %232 = arith.mulf %230, %231 : vector<7x7x8xf32>
    %233 = arith.addf %226, %232 : vector<7x7x8xf32>
    %234 = vector.extract_strided_slice %212 {offsets = [0, 0, 3], sizes = [7, 7, 1], strides = [1, 1, 1]} : vector<7x7x4xf32> to vector<7x7x1xf32>
    %c31 = arith.constant 31 : index
    %c0_63 = arith.constant 0 : index
    %235 = vector.load %arg2[%c31, %c0_63] : memref<36x8xf32, #tpu.memory_space<vmem>>, vector<1x8xf32>
    %236 = vector.shape_cast %235 : vector<1x8xf32> to vector<1x1x8xf32>
    %237 = vector.broadcast %234 : vector<7x7x1xf32> to vector<7x7x8xf32>
    %238 = vector.broadcast %236 : vector<1x1x8xf32> to vector<7x7x8xf32>
    %239 = arith.mulf %237, %238 : vector<7x7x8xf32>
    %240 = arith.addf %233, %239 : vector<7x7x8xf32>
    %c0_64 = arith.constant 0 : index
    %c2_65 = arith.constant 2 : index
    %c2_66 = arith.constant 2 : index
    %c0_67 = arith.constant 0 : index
    %241 = tpu.strided_load %arg1[%c0_64, %c2_65, %c2_66, %c0_67] {strides = array<i32: 1, 2, 2, 1>} : memref<1x16x16x4xf32, #tpu.memory_space<vmem>>, vector<1x7x7x4xf32>
    %242 = vector.shape_cast %241 : vector<1x7x7x4xf32> to vector<7x7x4xf32>
    %243 = vector.extract_strided_slice %242 {offsets = [0, 0, 0], sizes = [7, 7, 1], strides = [1, 1, 1]} : vector<7x7x4xf32> to vector<7x7x1xf32>
    %c32 = arith.constant 32 : index
    %c0_68 = arith.constant 0 : index
    %244 = vector.load %arg2[%c32, %c0_68] : memref<36x8xf32, #tpu.memory_space<vmem>>, vector<1x8xf32>
    %245 = vector.shape_cast %244 : vector<1x8xf32> to vector<1x1x8xf32>
    %246 = vector.broadcast %243 : vector<7x7x1xf32> to vector<7x7x8xf32>
    %247 = vector.broadcast %245 : vector<1x1x8xf32> to vector<7x7x8xf32>
    %248 = arith.mulf %246, %247 : vector<7x7x8xf32>
    %249 = arith.addf %240, %248 : vector<7x7x8xf32>
    %250 = vector.extract_strided_slice %242 {offsets = [0, 0, 1], sizes = [7, 7, 1], strides = [1, 1, 1]} : vector<7x7x4xf32> to vector<7x7x1xf32>
    %c33 = arith.constant 33 : index
    %c0_69 = arith.constant 0 : index
    %251 = vector.load %arg2[%c33, %c0_69] : memref<36x8xf32, #tpu.memory_space<vmem>>, vector<1x8xf32>
    %252 = vector.shape_cast %251 : vector<1x8xf32> to vector<1x1x8xf32>
    %253 = vector.broadcast %250 : vector<7x7x1xf32> to vector<7x7x8xf32>
    %254 = vector.broadcast %252 : vector<1x1x8xf32> to vector<7x7x8xf32>
    %255 = arith.mulf %253, %254 : vector<7x7x8xf32>
    %256 = arith.addf %249, %255 : vector<7x7x8xf32>
    %257 = vector.extract_strided_slice %242 {offsets = [0, 0, 2], sizes = [7, 7, 1], strides = [1, 1, 1]} : vector<7x7x4xf32> to vector<7x7x1xf32>
    %c34 = arith.constant 34 : index
    %c0_70 = arith.constant 0 : index
    %258 = vector.load %arg2[%c34, %c0_70] : memref<36x8xf32, #tpu.memory_space<vmem>>, vector<1x8xf32>
    %259 = vector.shape_cast %258 : vector<1x8xf32> to vector<1x1x8xf32>
    %260 = vector.broadcast %257 : vector<7x7x1xf32> to vector<7x7x8xf32>
    %261 = vector.broadcast %259 : vector<1x1x8xf32> to vector<7x7x8xf32>
    %262 = arith.mulf %260, %261 : vector<7x7x8xf32>
    %263 = arith.addf %256, %262 : vector<7x7x8xf32>
    %264 = vector.extract_strided_slice %242 {offsets = [0, 0, 3], sizes = [7, 7, 1], strides = [1, 1, 1]} : vector<7x7x4xf32> to vector<7x7x1xf32>
    %c35 = arith.constant 35 : index
    %c0_71 = arith.constant 0 : index
    %265 = vector.load %arg2[%c35, %c0_71] : memref<36x8xf32, #tpu.memory_space<vmem>>, vector<1x8xf32>
    %266 = vector.shape_cast %265 : vector<1x8xf32> to vector<1x1x8xf32>
    %267 = vector.broadcast %264 : vector<7x7x1xf32> to vector<7x7x8xf32>
    %268 = vector.broadcast %266 : vector<1x1x8xf32> to vector<7x7x8xf32>
    %269 = arith.mulf %267, %268 : vector<7x7x8xf32>
    %270 = arith.addf %263, %269 : vector<7x7x8xf32>
    %c0_72 = arith.constant 0 : index
    %c0_73 = arith.constant 0 : index
    %271 = vector.load %arg3[%c0_72, %c0_73] : memref<1x8xf32, #tpu.memory_space<vmem>>, vector<1x8xf32>
    %272 = vector.shape_cast %271 : vector<1x8xf32> to vector<1x1x8xf32>
    %273 = vector.broadcast %272 : vector<1x1x8xf32> to vector<7x7x8xf32>
    %274 = arith.addf %270, %273 : vector<7x7x8xf32>
    %cst_74 = arith.constant 0.000000e+00 : f32
    %275 = vector.broadcast %cst_74 : f32 to vector<7x7x8xf32>
    %276 = arith.maximumf %274, %275 : vector<7x7x8xf32>
    %c0_75 = arith.constant 0 : index
    %c0_76 = arith.constant 0 : index
    %c0_77 = arith.constant 0 : index
    %277 = vector.load %arg11[%c0_75, %c0_76, %c0_77] : memref<7x7x8xf32, #tpu.memory_space<vmem>>, vector<7x7x8xf32>
    tpu.vector_store %arg11[%c0_75, %c0_76, %c0_77], %276 {strides = array<i32>} : memref<7x7x8xf32, #tpu.memory_space<vmem>>, vector<7x7x8xf32>,
    %cst_78 = arith.constant 0.000000e+00 : f32
    %278 = vector.broadcast %cst_78 : f32 to vector<3x3x16xf32>
    %c0_79 = arith.constant 0 : index
    %c0_80 = arith.constant 0 : index
    %c0_81 = arith.constant 0 : index
    %279 = tpu.strided_load %arg11[%c0_79, %c0_80, %c0_81] {strides = array<i32: 2, 2, 1>} : memref<7x7x8xf32, #tpu.memory_space<vmem>>, vector<3x3x8xf32>
    %280 = vector.extract_strided_slice %279 {offsets = [0, 0, 0], sizes = [3, 3, 1], strides = [1, 1, 1]} : vector<3x3x8xf32> to vector<3x3x1xf32>
    %c0_82 = arith.constant 0 : index
    %c0_83 = arith.constant 0 : index
    %281 = vector.load %arg4[%c0_82, %c0_83] : memref<72x16xf32, #tpu.memory_space<vmem>>, vector<1x16xf32>
    %282 = vector.shape_cast %281 : vector<1x16xf32> to vector<1x1x16xf32>
    %283 = vector.broadcast %280 : vector<3x3x1xf32> to vector<3x3x16xf32>
    %284 = vector.broadcast %282 : vector<1x1x16xf32> to vector<3x3x16xf32>
    %285 = arith.mulf %283, %284 : vector<3x3x16xf32>
    %286 = arith.addf %278, %285 : vector<3x3x16xf32>
    %287 = vector.extract_strided_slice %279 {offsets = [0, 0, 1], sizes = [3, 3, 1], strides = [1, 1, 1]} : vector<3x3x8xf32> to vector<3x3x1xf32>
    %c1_84 = arith.constant 1 : index
    %c0_85 = arith.constant 0 : index
    %288 = vector.load %arg4[%c1_84, %c0_85] : memref<72x16xf32, #tpu.memory_space<vmem>>, vector<1x16xf32>
    %289 = vector.shape_cast %288 : vector<1x16xf32> to vector<1x1x16xf32>
    %290 = vector.broadcast %287 : vector<3x3x1xf32> to vector<3x3x16xf32>
    %291 = vector.broadcast %289 : vector<1x1x16xf32> to vector<3x3x16xf32>
    %292 = arith.mulf %290, %291 : vector<3x3x16xf32>
    %293 = arith.addf %286, %292 : vector<3x3x16xf32>
    %294 = vector.extract_strided_slice %279 {offsets = [0, 0, 2], sizes = [3, 3, 1], strides = [1, 1, 1]} : vector<3x3x8xf32> to vector<3x3x1xf32>
    %c2_86 = arith.constant 2 : index
    %c0_87 = arith.constant 0 : index
    %295 = vector.load %arg4[%c2_86, %c0_87] : memref<72x16xf32, #tpu.memory_space<vmem>>, vector<1x16xf32>
    %296 = vector.shape_cast %295 : vector<1x16xf32> to vector<1x1x16xf32>
    %297 = vector.broadcast %294 : vector<3x3x1xf32> to vector<3x3x16xf32>
    %298 = vector.broadcast %296 : vector<1x1x16xf32> to vector<3x3x16xf32>
    %299 = arith.mulf %297, %298 : vector<3x3x16xf32>
    %300 = arith.addf %293, %299 : vector<3x3x16xf32>
    %301 = vector.extract_strided_slice %279 {offsets = [0, 0, 3], sizes = [3, 3, 1], strides = [1, 1, 1]} : vector<3x3x8xf32> to vector<3x3x1xf32>
    %c3_88 = arith.constant 3 : index
    %c0_89 = arith.constant 0 : index
    %302 = vector.load %arg4[%c3_88, %c0_89] : memref<72x16xf32, #tpu.memory_space<vmem>>, vector<1x16xf32>
    %303 = vector.shape_cast %302 : vector<1x16xf32> to vector<1x1x16xf32>
    %304 = vector.broadcast %301 : vector<3x3x1xf32> to vector<3x3x16xf32>
    %305 = vector.broadcast %303 : vector<1x1x16xf32> to vector<3x3x16xf32>
    %306 = arith.mulf %304, %305 : vector<3x3x16xf32>
    %307 = arith.addf %300, %306 : vector<3x3x16xf32>
    %308 = vector.extract_strided_slice %279 {offsets = [0, 0, 4], sizes = [3, 3, 1], strides = [1, 1, 1]} : vector<3x3x8xf32> to vector<3x3x1xf32>
    %c4_90 = arith.constant 4 : index
    %c0_91 = arith.constant 0 : index
    %309 = vector.load %arg4[%c4_90, %c0_91] : memref<72x16xf32, #tpu.memory_space<vmem>>, vector<1x16xf32>
    %310 = vector.shape_cast %309 : vector<1x16xf32> to vector<1x1x16xf32>
    %311 = vector.broadcast %308 : vector<3x3x1xf32> to vector<3x3x16xf32>
    %312 = vector.broadcast %310 : vector<1x1x16xf32> to vector<3x3x16xf32>
    %313 = arith.mulf %311, %312 : vector<3x3x16xf32>
    %314 = arith.addf %307, %313 : vector<3x3x16xf32>
    %315 = vector.extract_strided_slice %279 {offsets = [0, 0, 5], sizes = [3, 3, 1], strides = [1, 1, 1]} : vector<3x3x8xf32> to vector<3x3x1xf32>
    %c5_92 = arith.constant 5 : index
    %c0_93 = arith.constant 0 : index
    %316 = vector.load %arg4[%c5_92, %c0_93] : memref<72x16xf32, #tpu.memory_space<vmem>>, vector<1x16xf32>
    %317 = vector.shape_cast %316 : vector<1x16xf32> to vector<1x1x16xf32>
    %318 = vector.broadcast %315 : vector<3x3x1xf32> to vector<3x3x16xf32>
    %319 = vector.broadcast %317 : vector<1x1x16xf32> to vector<3x3x16xf32>
    %320 = arith.mulf %318, %319 : vector<3x3x16xf32>
    %321 = arith.addf %314, %320 : vector<3x3x16xf32>
    %322 = vector.extract_strided_slice %279 {offsets = [0, 0, 6], sizes = [3, 3, 1], strides = [1, 1, 1]} : vector<3x3x8xf32> to vector<3x3x1xf32>
    %c6_94 = arith.constant 6 : index
    %c0_95 = arith.constant 0 : index
    %323 = vector.load %arg4[%c6_94, %c0_95] : memref<72x16xf32, #tpu.memory_space<vmem>>, vector<1x16xf32>
    %324 = vector.shape_cast %323 : vector<1x16xf32> to vector<1x1x16xf32>
    %325 = vector.broadcast %322 : vector<3x3x1xf32> to vector<3x3x16xf32>
    %326 = vector.broadcast %324 : vector<1x1x16xf32> to vector<3x3x16xf32>
    %327 = arith.mulf %325, %326 : vector<3x3x16xf32>
    %328 = arith.addf %321, %327 : vector<3x3x16xf32>
    %329 = vector.extract_strided_slice %279 {offsets = [0, 0, 7], sizes = [3, 3, 1], strides = [1, 1, 1]} : vector<3x3x8xf32> to vector<3x3x1xf32>
    %c7_96 = arith.constant 7 : index
    %c0_97 = arith.constant 0 : index
    %330 = vector.load %arg4[%c7_96, %c0_97] : memref<72x16xf32, #tpu.memory_space<vmem>>, vector<1x16xf32>
    %331 = vector.shape_cast %330 : vector<1x16xf32> to vector<1x1x16xf32>
    %332 = vector.broadcast %329 : vector<3x3x1xf32> to vector<3x3x16xf32>
    %333 = vector.broadcast %331 : vector<1x1x16xf32> to vector<3x3x16xf32>
    %334 = arith.mulf %332, %333 : vector<3x3x16xf32>
    %335 = arith.addf %328, %334 : vector<3x3x16xf32>
    %c0_98 = arith.constant 0 : index
    %c1_99 = arith.constant 1 : index
    %c0_100 = arith.constant 0 : index
    %336 = tpu.strided_load %arg11[%c0_98, %c1_99, %c0_100] {strides = array<i32: 2, 2, 1>} : memref<7x7x8xf32, #tpu.memory_space<vmem>>, vector<3x3x8xf32>
    %337 = vector.extract_strided_slice %336 {offsets = [0, 0, 0], sizes = [3, 3, 1], strides = [1, 1, 1]} : vector<3x3x8xf32> to vector<3x3x1xf32>
    %c8_101 = arith.constant 8 : index
    %c0_102 = arith.constant 0 : index
    %338 = vector.load %arg4[%c8_101, %c0_102] : memref<72x16xf32, #tpu.memory_space<vmem>>, vector<1x16xf32>
    %339 = vector.shape_cast %338 : vector<1x16xf32> to vector<1x1x16xf32>
    %340 = vector.broadcast %337 : vector<3x3x1xf32> to vector<3x3x16xf32>
    %341 = vector.broadcast %339 : vector<1x1x16xf32> to vector<3x3x16xf32>
    %342 = arith.mulf %340, %341 : vector<3x3x16xf32>
    %343 = arith.addf %335, %342 : vector<3x3x16xf32>
    %344 = vector.extract_strided_slice %336 {offsets = [0, 0, 1], sizes = [3, 3, 1], strides = [1, 1, 1]} : vector<3x3x8xf32> to vector<3x3x1xf32>
    %c9_103 = arith.constant 9 : index
    %c0_104 = arith.constant 0 : index
    %345 = vector.load %arg4[%c9_103, %c0_104] : memref<72x16xf32, #tpu.memory_space<vmem>>, vector<1x16xf32>
    %346 = vector.shape_cast %345 : vector<1x16xf32> to vector<1x1x16xf32>
    %347 = vector.broadcast %344 : vector<3x3x1xf32> to vector<3x3x16xf32>
    %348 = vector.broadcast %346 : vector<1x1x16xf32> to vector<3x3x16xf32>
    %349 = arith.mulf %347, %348 : vector<3x3x16xf32>
    %350 = arith.addf %343, %349 : vector<3x3x16xf32>
    %351 = vector.extract_strided_slice %336 {offsets = [0, 0, 2], sizes = [3, 3, 1], strides = [1, 1, 1]} : vector<3x3x8xf32> to vector<3x3x1xf32>
    %c10_105 = arith.constant 10 : index
    %c0_106 = arith.constant 0 : index
    %352 = vector.load %arg4[%c10_105, %c0_106] : memref<72x16xf32, #tpu.memory_space<vmem>>, vector<1x16xf32>
    %353 = vector.shape_cast %352 : vector<1x16xf32> to vector<1x1x16xf32>
    %354 = vector.broadcast %351 : vector<3x3x1xf32> to vector<3x3x16xf32>
    %355 = vector.broadcast %353 : vector<1x1x16xf32> to vector<3x3x16xf32>
    %356 = arith.mulf %354, %355 : vector<3x3x16xf32>
    %357 = arith.addf %350, %356 : vector<3x3x16xf32>
    %358 = vector.extract_strided_slice %336 {offsets = [0, 0, 3], sizes = [3, 3, 1], strides = [1, 1, 1]} : vector<3x3x8xf32> to vector<3x3x1xf32>
    %c11_107 = arith.constant 11 : index
    %c0_108 = arith.constant 0 : index
    %359 = vector.load %arg4[%c11_107, %c0_108] : memref<72x16xf32, #tpu.memory_space<vmem>>, vector<1x16xf32>
    %360 = vector.shape_cast %359 : vector<1x16xf32> to vector<1x1x16xf32>
    %361 = vector.broadcast %358 : vector<3x3x1xf32> to vector<3x3x16xf32>
    %362 = vector.broadcast %360 : vector<1x1x16xf32> to vector<3x3x16xf32>
    %363 = arith.mulf %361, %362 : vector<3x3x16xf32>
    %364 = arith.addf %357, %363 : vector<3x3x16xf32>
    %365 = vector.extract_strided_slice %336 {offsets = [0, 0, 4], sizes = [3, 3, 1], strides = [1, 1, 1]} : vector<3x3x8xf32> to vector<3x3x1xf32>
    %c12_109 = arith.constant 12 : index
    %c0_110 = arith.constant 0 : index
    %366 = vector.load %arg4[%c12_109, %c0_110] : memref<72x16xf32, #tpu.memory_space<vmem>>, vector<1x16xf32>
    %367 = vector.shape_cast %366 : vector<1x16xf32> to vector<1x1x16xf32>
    %368 = vector.broadcast %365 : vector<3x3x1xf32> to vector<3x3x16xf32>
    %369 = vector.broadcast %367 : vector<1x1x16xf32> to vector<3x3x16xf32>
    %370 = arith.mulf %368, %369 : vector<3x3x16xf32>
    %371 = arith.addf %364, %370 : vector<3x3x16xf32>
    %372 = vector.extract_strided_slice %336 {offsets = [0, 0, 5], sizes = [3, 3, 1], strides = [1, 1, 1]} : vector<3x3x8xf32> to vector<3x3x1xf32>
    %c13_111 = arith.constant 13 : index
    %c0_112 = arith.constant 0 : index
    %373 = vector.load %arg4[%c13_111, %c0_112] : memref<72x16xf32, #tpu.memory_space<vmem>>, vector<1x16xf32>
    %374 = vector.shape_cast %373 : vector<1x16xf32> to vector<1x1x16xf32>
    %375 = vector.broadcast %372 : vector<3x3x1xf32> to vector<3x3x16xf32>
    %376 = vector.broadcast %374 : vector<1x1x16xf32> to vector<3x3x16xf32>
    %377 = arith.mulf %375, %376 : vector<3x3x16xf32>
    %378 = arith.addf %371, %377 : vector<3x3x16xf32>
    %379 = vector.extract_strided_slice %336 {offsets = [0, 0, 6], sizes = [3, 3, 1], strides = [1, 1, 1]} : vector<3x3x8xf32> to vector<3x3x1xf32>
    %c14_113 = arith.constant 14 : index
    %c0_114 = arith.constant 0 : index
    %380 = vector.load %arg4[%c14_113, %c0_114] : memref<72x16xf32, #tpu.memory_space<vmem>>, vector<1x16xf32>
    %381 = vector.shape_cast %380 : vector<1x16xf32> to vector<1x1x16xf32>
    %382 = vector.broadcast %379 : vector<3x3x1xf32> to vector<3x3x16xf32>
    %383 = vector.broadcast %381 : vector<1x1x16xf32> to vector<3x3x16xf32>
    %384 = arith.mulf %382, %383 : vector<3x3x16xf32>
    %385 = arith.addf %378, %384 : vector<3x3x16xf32>
    %386 = vector.extract_strided_slice %336 {offsets = [0, 0, 7], sizes = [3, 3, 1], strides = [1, 1, 1]} : vector<3x3x8xf32> to vector<3x3x1xf32>
    %c15_115 = arith.constant 15 : index
    %c0_116 = arith.constant 0 : index
    %387 = vector.load %arg4[%c15_115, %c0_116] : memref<72x16xf32, #tpu.memory_space<vmem>>, vector<1x16xf32>
    %388 = vector.shape_cast %387 : vector<1x16xf32> to vector<1x1x16xf32>
    %389 = vector.broadcast %386 : vector<3x3x1xf32> to vector<3x3x16xf32>
    %390 = vector.broadcast %388 : vector<1x1x16xf32> to vector<3x3x16xf32>
    %391 = arith.mulf %389, %390 : vector<3x3x16xf32>
    %392 = arith.addf %385, %391 : vector<3x3x16xf32>
    %c0_117 = arith.constant 0 : index
    %c2_118 = arith.constant 2 : index
    %c0_119 = arith.constant 0 : index
    %393 = tpu.strided_load %arg11[%c0_117, %c2_118, %c0_119] {strides = array<i32: 2, 2, 1>} : memref<7x7x8xf32, #tpu.memory_space<vmem>>, vector<3x3x8xf32>
    %394 = vector.extract_strided_slice %393 {offsets = [0, 0, 0], sizes = [3, 3, 1], strides = [1, 1, 1]} : vector<3x3x8xf32> to vector<3x3x1xf32>
    %c16_120 = arith.constant 16 : index
    %c0_121 = arith.constant 0 : index
    %395 = vector.load %arg4[%c16_120, %c0_121] : memref<72x16xf32, #tpu.memory_space<vmem>>, vector<1x16xf32>
    %396 = vector.shape_cast %395 : vector<1x16xf32> to vector<1x1x16xf32>
    %397 = vector.broadcast %394 : vector<3x3x1xf32> to vector<3x3x16xf32>
    %398 = vector.broadcast %396 : vector<1x1x16xf32> to vector<3x3x16xf32>
    %399 = arith.mulf %397, %398 : vector<3x3x16xf32>
    %400 = arith.addf %392, %399 : vector<3x3x16xf32>
    %401 = vector.extract_strided_slice %393 {offsets = [0, 0, 1], sizes = [3, 3, 1], strides = [1, 1, 1]} : vector<3x3x8xf32> to vector<3x3x1xf32>
    %c17_122 = arith.constant 17 : index
    %c0_123 = arith.constant 0 : index
    %402 = vector.load %arg4[%c17_122, %c0_123] : memref<72x16xf32, #tpu.memory_space<vmem>>, vector<1x16xf32>
    %403 = vector.shape_cast %402 : vector<1x16xf32> to vector<1x1x16xf32>
    %404 = vector.broadcast %401 : vector<3x3x1xf32> to vector<3x3x16xf32>
    %405 = vector.broadcast %403 : vector<1x1x16xf32> to vector<3x3x16xf32>
    %406 = arith.mulf %404, %405 : vector<3x3x16xf32>
    %407 = arith.addf %400, %406 : vector<3x3x16xf32>
    %408 = vector.extract_strided_slice %393 {offsets = [0, 0, 2], sizes = [3, 3, 1], strides = [1, 1, 1]} : vector<3x3x8xf32> to vector<3x3x1xf32>
    %c18_124 = arith.constant 18 : index
    %c0_125 = arith.constant 0 : index
    %409 = vector.load %arg4[%c18_124, %c0_125] : memref<72x16xf32, #tpu.memory_space<vmem>>, vector<1x16xf32>
    %410 = vector.shape_cast %409 : vector<1x16xf32> to vector<1x1x16xf32>
    %411 = vector.broadcast %408 : vector<3x3x1xf32> to vector<3x3x16xf32>
    %412 = vector.broadcast %410 : vector<1x1x16xf32> to vector<3x3x16xf32>
    %413 = arith.mulf %411, %412 : vector<3x3x16xf32>
    %414 = arith.addf %407, %413 : vector<3x3x16xf32>
    %415 = vector.extract_strided_slice %393 {offsets = [0, 0, 3], sizes = [3, 3, 1], strides = [1, 1, 1]} : vector<3x3x8xf32> to vector<3x3x1xf32>
    %c19_126 = arith.constant 19 : index
    %c0_127 = arith.constant 0 : index
    %416 = vector.load %arg4[%c19_126, %c0_127] : memref<72x16xf32, #tpu.memory_space<vmem>>, vector<1x16xf32>
    %417 = vector.shape_cast %416 : vector<1x16xf32> to vector<1x1x16xf32>
    %418 = vector.broadcast %415 : vector<3x3x1xf32> to vector<3x3x16xf32>
    %419 = vector.broadcast %417 : vector<1x1x16xf32> to vector<3x3x16xf32>
    %420 = arith.mulf %418, %419 : vector<3x3x16xf32>
    %421 = arith.addf %414, %420 : vector<3x3x16xf32>
    %422 = vector.extract_strided_slice %393 {offsets = [0, 0, 4], sizes = [3, 3, 1], strides = [1, 1, 1]} : vector<3x3x8xf32> to vector<3x3x1xf32>
    %c20_128 = arith.constant 20 : index
    %c0_129 = arith.constant 0 : index
    %423 = vector.load %arg4[%c20_128, %c0_129] : memref<72x16xf32, #tpu.memory_space<vmem>>, vector<1x16xf32>
    %424 = vector.shape_cast %423 : vector<1x16xf32> to vector<1x1x16xf32>
    %425 = vector.broadcast %422 : vector<3x3x1xf32> to vector<3x3x16xf32>
    %426 = vector.broadcast %424 : vector<1x1x16xf32> to vector<3x3x16xf32>
    %427 = arith.mulf %425, %426 : vector<3x3x16xf32>
    %428 = arith.addf %421, %427 : vector<3x3x16xf32>
    %429 = vector.extract_strided_slice %393 {offsets = [0, 0, 5], sizes = [3, 3, 1], strides = [1, 1, 1]} : vector<3x3x8xf32> to vector<3x3x1xf32>
    %c21_130 = arith.constant 21 : index
    %c0_131 = arith.constant 0 : index
    %430 = vector.load %arg4[%c21_130, %c0_131] : memref<72x16xf32, #tpu.memory_space<vmem>>, vector<1x16xf32>
    %431 = vector.shape_cast %430 : vector<1x16xf32> to vector<1x1x16xf32>
    %432 = vector.broadcast %429 : vector<3x3x1xf32> to vector<3x3x16xf32>
    %433 = vector.broadcast %431 : vector<1x1x16xf32> to vector<3x3x16xf32>
    %434 = arith.mulf %432, %433 : vector<3x3x16xf32>
    %435 = arith.addf %428, %434 : vector<3x3x16xf32>
    %436 = vector.extract_strided_slice %393 {offsets = [0, 0, 6], sizes = [3, 3, 1], strides = [1, 1, 1]} : vector<3x3x8xf32> to vector<3x3x1xf32>
    %c22_132 = arith.constant 22 : index
    %c0_133 = arith.constant 0 : index
    %437 = vector.load %arg4[%c22_132, %c0_133] : memref<72x16xf32, #tpu.memory_space<vmem>>, vector<1x16xf32>
    %438 = vector.shape_cast %437 : vector<1x16xf32> to vector<1x1x16xf32>
    %439 = vector.broadcast %436 : vector<3x3x1xf32> to vector<3x3x16xf32>
    %440 = vector.broadcast %438 : vector<1x1x16xf32> to vector<3x3x16xf32>
    %441 = arith.mulf %439, %440 : vector<3x3x16xf32>
    %442 = arith.addf %435, %441 : vector<3x3x16xf32>
    %443 = vector.extract_strided_slice %393 {offsets = [0, 0, 7], sizes = [3, 3, 1], strides = [1, 1, 1]} : vector<3x3x8xf32> to vector<3x3x1xf32>
    %c23_134 = arith.constant 23 : index
    %c0_135 = arith.constant 0 : index
    %444 = vector.load %arg4[%c23_134, %c0_135] : memref<72x16xf32, #tpu.memory_space<vmem>>, vector<1x16xf32>
    %445 = vector.shape_cast %444 : vector<1x16xf32> to vector<1x1x16xf32>
    %446 = vector.broadcast %443 : vector<3x3x1xf32> to vector<3x3x16xf32>
    %447 = vector.broadcast %445 : vector<1x1x16xf32> to vector<3x3x16xf32>
    %448 = arith.mulf %446, %447 : vector<3x3x16xf32>
    %449 = arith.addf %442, %448 : vector<3x3x16xf32>
    %c1_136 = arith.constant 1 : index
    %c0_137 = arith.constant 0 : index
    %c0_138 = arith.constant 0 : index
    %450 = tpu.strided_load %arg11[%c1_136, %c0_137, %c0_138] {strides = array<i32: 2, 2, 1>} : memref<7x7x8xf32, #tpu.memory_space<vmem>>, vector<3x3x8xf32>
    %451 = vector.extract_strided_slice %450 {offsets = [0, 0, 0], sizes = [3, 3, 1], strides = [1, 1, 1]} : vector<3x3x8xf32> to vector<3x3x1xf32>
    %c24_139 = arith.constant 24 : index
    %c0_140 = arith.constant 0 : index
    %452 = vector.load %arg4[%c24_139, %c0_140] : memref<72x16xf32, #tpu.memory_space<vmem>>, vector<1x16xf32>
    %453 = vector.shape_cast %452 : vector<1x16xf32> to vector<1x1x16xf32>
    %454 = vector.broadcast %451 : vector<3x3x1xf32> to vector<3x3x16xf32>
    %455 = vector.broadcast %453 : vector<1x1x16xf32> to vector<3x3x16xf32>
    %456 = arith.mulf %454, %455 : vector<3x3x16xf32>
    %457 = arith.addf %449, %456 : vector<3x3x16xf32>
    %458 = vector.extract_strided_slice %450 {offsets = [0, 0, 1], sizes = [3, 3, 1], strides = [1, 1, 1]} : vector<3x3x8xf32> to vector<3x3x1xf32>
    %c25_141 = arith.constant 25 : index
    %c0_142 = arith.constant 0 : index
    %459 = vector.load %arg4[%c25_141, %c0_142] : memref<72x16xf32, #tpu.memory_space<vmem>>, vector<1x16xf32>
    %460 = vector.shape_cast %459 : vector<1x16xf32> to vector<1x1x16xf32>
    %461 = vector.broadcast %458 : vector<3x3x1xf32> to vector<3x3x16xf32>
    %462 = vector.broadcast %460 : vector<1x1x16xf32> to vector<3x3x16xf32>
    %463 = arith.mulf %461, %462 : vector<3x3x16xf32>
    %464 = arith.addf %457, %463 : vector<3x3x16xf32>
    %465 = vector.extract_strided_slice %450 {offsets = [0, 0, 2], sizes = [3, 3, 1], strides = [1, 1, 1]} : vector<3x3x8xf32> to vector<3x3x1xf32>
    %c26_143 = arith.constant 26 : index
    %c0_144 = arith.constant 0 : index
    %466 = vector.load %arg4[%c26_143, %c0_144] : memref<72x16xf32, #tpu.memory_space<vmem>>, vector<1x16xf32>
    %467 = vector.shape_cast %466 : vector<1x16xf32> to vector<1x1x16xf32>
    %468 = vector.broadcast %465 : vector<3x3x1xf32> to vector<3x3x16xf32>
    %469 = vector.broadcast %467 : vector<1x1x16xf32> to vector<3x3x16xf32>
    %470 = arith.mulf %468, %469 : vector<3x3x16xf32>
    %471 = arith.addf %464, %470 : vector<3x3x16xf32>
    %472 = vector.extract_strided_slice %450 {offsets = [0, 0, 3], sizes = [3, 3, 1], strides = [1, 1, 1]} : vector<3x3x8xf32> to vector<3x3x1xf32>
    %c27_145 = arith.constant 27 : index
    %c0_146 = arith.constant 0 : index
    %473 = vector.load %arg4[%c27_145, %c0_146] : memref<72x16xf32, #tpu.memory_space<vmem>>, vector<1x16xf32>
    %474 = vector.shape_cast %473 : vector<1x16xf32> to vector<1x1x16xf32>
    %475 = vector.broadcast %472 : vector<3x3x1xf32> to vector<3x3x16xf32>
    %476 = vector.broadcast %474 : vector<1x1x16xf32> to vector<3x3x16xf32>
    %477 = arith.mulf %475, %476 : vector<3x3x16xf32>
    %478 = arith.addf %471, %477 : vector<3x3x16xf32>
    %479 = vector.extract_strided_slice %450 {offsets = [0, 0, 4], sizes = [3, 3, 1], strides = [1, 1, 1]} : vector<3x3x8xf32> to vector<3x3x1xf32>
    %c28_147 = arith.constant 28 : index
    %c0_148 = arith.constant 0 : index
    %480 = vector.load %arg4[%c28_147, %c0_148] : memref<72x16xf32, #tpu.memory_space<vmem>>, vector<1x16xf32>
    %481 = vector.shape_cast %480 : vector<1x16xf32> to vector<1x1x16xf32>
    %482 = vector.broadcast %479 : vector<3x3x1xf32> to vector<3x3x16xf32>
    %483 = vector.broadcast %481 : vector<1x1x16xf32> to vector<3x3x16xf32>
    %484 = arith.mulf %482, %483 : vector<3x3x16xf32>
    %485 = arith.addf %478, %484 : vector<3x3x16xf32>
    %486 = vector.extract_strided_slice %450 {offsets = [0, 0, 5], sizes = [3, 3, 1], strides = [1, 1, 1]} : vector<3x3x8xf32> to vector<3x3x1xf32>
    %c29_149 = arith.constant 29 : index
    %c0_150 = arith.constant 0 : index
    %487 = vector.load %arg4[%c29_149, %c0_150] : memref<72x16xf32, #tpu.memory_space<vmem>>, vector<1x16xf32>
    %488 = vector.shape_cast %487 : vector<1x16xf32> to vector<1x1x16xf32>
    %489 = vector.broadcast %486 : vector<3x3x1xf32> to vector<3x3x16xf32>
    %490 = vector.broadcast %488 : vector<1x1x16xf32> to vector<3x3x16xf32>
    %491 = arith.mulf %489, %490 : vector<3x3x16xf32>
    %492 = arith.addf %485, %491 : vector<3x3x16xf32>
    %493 = vector.extract_strided_slice %450 {offsets = [0, 0, 6], sizes = [3, 3, 1], strides = [1, 1, 1]} : vector<3x3x8xf32> to vector<3x3x1xf32>
    %c30_151 = arith.constant 30 : index
    %c0_152 = arith.constant 0 : index
    %494 = vector.load %arg4[%c30_151, %c0_152] : memref<72x16xf32, #tpu.memory_space<vmem>>, vector<1x16xf32>
    %495 = vector.shape_cast %494 : vector<1x16xf32> to vector<1x1x16xf32>
    %496 = vector.broadcast %493 : vector<3x3x1xf32> to vector<3x3x16xf32>
    %497 = vector.broadcast %495 : vector<1x1x16xf32> to vector<3x3x16xf32>
    %498 = arith.mulf %496, %497 : vector<3x3x16xf32>
    %499 = arith.addf %492, %498 : vector<3x3x16xf32>
    %500 = vector.extract_strided_slice %450 {offsets = [0, 0, 7], sizes = [3, 3, 1], strides = [1, 1, 1]} : vector<3x3x8xf32> to vector<3x3x1xf32>
    %c31_153 = arith.constant 31 : index
    %c0_154 = arith.constant 0 : index
    %501 = vector.load %arg4[%c31_153, %c0_154] : memref<72x16xf32, #tpu.memory_space<vmem>>, vector<1x16xf32>
    %502 = vector.shape_cast %501 : vector<1x16xf32> to vector<1x1x16xf32>
    %503 = vector.broadcast %500 : vector<3x3x1xf32> to vector<3x3x16xf32>
    %504 = vector.broadcast %502 : vector<1x1x16xf32> to vector<3x3x16xf32>
    %505 = arith.mulf %503, %504 : vector<3x3x16xf32>
    %506 = arith.addf %499, %505 : vector<3x3x16xf32>
    %c1_155 = arith.constant 1 : index
    %c1_156 = arith.constant 1 : index
    %c0_157 = arith.constant 0 : index
    %507 = tpu.strided_load %arg11[%c1_155, %c1_156, %c0_157] {strides = array<i32: 2, 2, 1>} : memref<7x7x8xf32, #tpu.memory_space<vmem>>, vector<3x3x8xf32>
    %508 = vector.extract_strided_slice %507 {offsets = [0, 0, 0], sizes = [3, 3, 1], strides = [1, 1, 1]} : vector<3x3x8xf32> to vector<3x3x1xf32>
    %c32_158 = arith.constant 32 : index
    %c0_159 = arith.constant 0 : index
    %509 = vector.load %arg4[%c32_158, %c0_159] : memref<72x16xf32, #tpu.memory_space<vmem>>, vector<1x16xf32>
    %510 = vector.shape_cast %509 : vector<1x16xf32> to vector<1x1x16xf32>
    %511 = vector.broadcast %508 : vector<3x3x1xf32> to vector<3x3x16xf32>
    %512 = vector.broadcast %510 : vector<1x1x16xf32> to vector<3x3x16xf32>
    %513 = arith.mulf %511, %512 : vector<3x3x16xf32>
    %514 = arith.addf %506, %513 : vector<3x3x16xf32>
    %515 = vector.extract_strided_slice %507 {offsets = [0, 0, 1], sizes = [3, 3, 1], strides = [1, 1, 1]} : vector<3x3x8xf32> to vector<3x3x1xf32>
    %c33_160 = arith.constant 33 : index
    %c0_161 = arith.constant 0 : index
    %516 = vector.load %arg4[%c33_160, %c0_161] : memref<72x16xf32, #tpu.memory_space<vmem>>, vector<1x16xf32>
    %517 = vector.shape_cast %516 : vector<1x16xf32> to vector<1x1x16xf32>
    %518 = vector.broadcast %515 : vector<3x3x1xf32> to vector<3x3x16xf32>
    %519 = vector.broadcast %517 : vector<1x1x16xf32> to vector<3x3x16xf32>
    %520 = arith.mulf %518, %519 : vector<3x3x16xf32>
    %521 = arith.addf %514, %520 : vector<3x3x16xf32>
    %522 = vector.extract_strided_slice %507 {offsets = [0, 0, 2], sizes = [3, 3, 1], strides = [1, 1, 1]} : vector<3x3x8xf32> to vector<3x3x1xf32>
    %c34_162 = arith.constant 34 : index
    %c0_163 = arith.constant 0 : index
    %523 = vector.load %arg4[%c34_162, %c0_163] : memref<72x16xf32, #tpu.memory_space<vmem>>, vector<1x16xf32>
    %524 = vector.shape_cast %523 : vector<1x16xf32> to vector<1x1x16xf32>
    %525 = vector.broadcast %522 : vector<3x3x1xf32> to vector<3x3x16xf32>
    %526 = vector.broadcast %524 : vector<1x1x16xf32> to vector<3x3x16xf32>
    %527 = arith.mulf %525, %526 : vector<3x3x16xf32>
    %528 = arith.addf %521, %527 : vector<3x3x16xf32>
    %529 = vector.extract_strided_slice %507 {offsets = [0, 0, 3], sizes = [3, 3, 1], strides = [1, 1, 1]} : vector<3x3x8xf32> to vector<3x3x1xf32>
    %c35_164 = arith.constant 35 : index
    %c0_165 = arith.constant 0 : index
    %530 = vector.load %arg4[%c35_164, %c0_165] : memref<72x16xf32, #tpu.memory_space<vmem>>, vector<1x16xf32>
    %531 = vector.shape_cast %530 : vector<1x16xf32> to vector<1x1x16xf32>
    %532 = vector.broadcast %529 : vector<3x3x1xf32> to vector<3x3x16xf32>
    %533 = vector.broadcast %531 : vector<1x1x16xf32> to vector<3x3x16xf32>
    %534 = arith.mulf %532, %533 : vector<3x3x16xf32>
    %535 = arith.addf %528, %534 : vector<3x3x16xf32>
    %536 = vector.extract_strided_slice %507 {offsets = [0, 0, 4], sizes = [3, 3, 1], strides = [1, 1, 1]} : vector<3x3x8xf32> to vector<3x3x1xf32>
    %c36 = arith.constant 36 : index
    %c0_166 = arith.constant 0 : index
    %537 = vector.load %arg4[%c36, %c0_166] : memref<72x16xf32, #tpu.memory_space<vmem>>, vector<1x16xf32>
    %538 = vector.shape_cast %537 : vector<1x16xf32> to vector<1x1x16xf32>
    %539 = vector.broadcast %536 : vector<3x3x1xf32> to vector<3x3x16xf32>
    %540 = vector.broadcast %538 : vector<1x1x16xf32> to vector<3x3x16xf32>
    %541 = arith.mulf %539, %540 : vector<3x3x16xf32>
    %542 = arith.addf %535, %541 : vector<3x3x16xf32>
    %543 = vector.extract_strided_slice %507 {offsets = [0, 0, 5], sizes = [3, 3, 1], strides = [1, 1, 1]} : vector<3x3x8xf32> to vector<3x3x1xf32>
    %c37 = arith.constant 37 : index
    %c0_167 = arith.constant 0 : index
    %544 = vector.load %arg4[%c37, %c0_167] : memref<72x16xf32, #tpu.memory_space<vmem>>, vector<1x16xf32>
    %545 = vector.shape_cast %544 : vector<1x16xf32> to vector<1x1x16xf32>
    %546 = vector.broadcast %543 : vector<3x3x1xf32> to vector<3x3x16xf32>
    %547 = vector.broadcast %545 : vector<1x1x16xf32> to vector<3x3x16xf32>
    %548 = arith.mulf %546, %547 : vector<3x3x16xf32>
    %549 = arith.addf %542, %548 : vector<3x3x16xf32>
    %550 = vector.extract_strided_slice %507 {offsets = [0, 0, 6], sizes = [3, 3, 1], strides = [1, 1, 1]} : vector<3x3x8xf32> to vector<3x3x1xf32>
    %c38 = arith.constant 38 : index
    %c0_168 = arith.constant 0 : index
    %551 = vector.load %arg4[%c38, %c0_168] : memref<72x16xf32, #tpu.memory_space<vmem>>, vector<1x16xf32>
    %552 = vector.shape_cast %551 : vector<1x16xf32> to vector<1x1x16xf32>
    %553 = vector.broadcast %550 : vector<3x3x1xf32> to vector<3x3x16xf32>
    %554 = vector.broadcast %552 : vector<1x1x16xf32> to vector<3x3x16xf32>
    %555 = arith.mulf %553, %554 : vector<3x3x16xf32>
    %556 = arith.addf %549, %555 : vector<3x3x16xf32>
    %557 = vector.extract_strided_slice %507 {offsets = [0, 0, 7], sizes = [3, 3, 1], strides = [1, 1, 1]} : vector<3x3x8xf32> to vector<3x3x1xf32>
    %c39 = arith.constant 39 : index
    %c0_169 = arith.constant 0 : index
    %558 = vector.load %arg4[%c39, %c0_169] : memref<72x16xf32, #tpu.memory_space<vmem>>, vector<1x16xf32>
    %559 = vector.shape_cast %558 : vector<1x16xf32> to vector<1x1x16xf32>
    %560 = vector.broadcast %557 : vector<3x3x1xf32> to vector<3x3x16xf32>
    %561 = vector.broadcast %559 : vector<1x1x16xf32> to vector<3x3x16xf32>
    %562 = arith.mulf %560, %561 : vector<3x3x16xf32>
    %563 = arith.addf %556, %562 : vector<3x3x16xf32>
    %c1_170 = arith.constant 1 : index
    %c2_171 = arith.constant 2 : index
    %c0_172 = arith.constant 0 : index
    %564 = tpu.strided_load %arg11[%c1_170, %c2_171, %c0_172] {strides = array<i32: 2, 2, 1>} : memref<7x7x8xf32, #tpu.memory_space<vmem>>, vector<3x3x8xf32>
    %565 = vector.extract_strided_slice %564 {offsets = [0, 0, 0], sizes = [3, 3, 1], strides = [1, 1, 1]} : vector<3x3x8xf32> to vector<3x3x1xf32>
    %c40 = arith.constant 40 : index
    %c0_173 = arith.constant 0 : index
    %566 = vector.load %arg4[%c40, %c0_173] : memref<72x16xf32, #tpu.memory_space<vmem>>, vector<1x16xf32>
    %567 = vector.shape_cast %566 : vector<1x16xf32> to vector<1x1x16xf32>
    %568 = vector.broadcast %565 : vector<3x3x1xf32> to vector<3x3x16xf32>
    %569 = vector.broadcast %567 : vector<1x1x16xf32> to vector<3x3x16xf32>
    %570 = arith.mulf %568, %569 : vector<3x3x16xf32>
    %571 = arith.addf %563, %570 : vector<3x3x16xf32>
    %572 = vector.extract_strided_slice %564 {offsets = [0, 0, 1], sizes = [3, 3, 1], strides = [1, 1, 1]} : vector<3x3x8xf32> to vector<3x3x1xf32>
    %c41 = arith.constant 41 : index
    %c0_174 = arith.constant 0 : index
    %573 = vector.load %arg4[%c41, %c0_174] : memref<72x16xf32, #tpu.memory_space<vmem>>, vector<1x16xf32>
    %574 = vector.shape_cast %573 : vector<1x16xf32> to vector<1x1x16xf32>
    %575 = vector.broadcast %572 : vector<3x3x1xf32> to vector<3x3x16xf32>
    %576 = vector.broadcast %574 : vector<1x1x16xf32> to vector<3x3x16xf32>
    %577 = arith.mulf %575, %576 : vector<3x3x16xf32>
    %578 = arith.addf %571, %577 : vector<3x3x16xf32>
    %579 = vector.extract_strided_slice %564 {offsets = [0, 0, 2], sizes = [3, 3, 1], strides = [1, 1, 1]} : vector<3x3x8xf32> to vector<3x3x1xf32>
    %c42 = arith.constant 42 : index
    %c0_175 = arith.constant 0 : index
    %580 = vector.load %arg4[%c42, %c0_175] : memref<72x16xf32, #tpu.memory_space<vmem>>, vector<1x16xf32>
    %581 = vector.shape_cast %580 : vector<1x16xf32> to vector<1x1x16xf32>
    %582 = vector.broadcast %579 : vector<3x3x1xf32> to vector<3x3x16xf32>
    %583 = vector.broadcast %581 : vector<1x1x16xf32> to vector<3x3x16xf32>
    %584 = arith.mulf %582, %583 : vector<3x3x16xf32>
    %585 = arith.addf %578, %584 : vector<3x3x16xf32>
    %586 = vector.extract_strided_slice %564 {offsets = [0, 0, 3], sizes = [3, 3, 1], strides = [1, 1, 1]} : vector<3x3x8xf32> to vector<3x3x1xf32>
    %c43 = arith.constant 43 : index
    %c0_176 = arith.constant 0 : index
    %587 = vector.load %arg4[%c43, %c0_176] : memref<72x16xf32, #tpu.memory_space<vmem>>, vector<1x16xf32>
    %588 = vector.shape_cast %587 : vector<1x16xf32> to vector<1x1x16xf32>
    %589 = vector.broadcast %586 : vector<3x3x1xf32> to vector<3x3x16xf32>
    %590 = vector.broadcast %588 : vector<1x1x16xf32> to vector<3x3x16xf32>
    %591 = arith.mulf %589, %590 : vector<3x3x16xf32>
    %592 = arith.addf %585, %591 : vector<3x3x16xf32>
    %593 = vector.extract_strided_slice %564 {offsets = [0, 0, 4], sizes = [3, 3, 1], strides = [1, 1, 1]} : vector<3x3x8xf32> to vector<3x3x1xf32>
    %c44 = arith.constant 44 : index
    %c0_177 = arith.constant 0 : index
    %594 = vector.load %arg4[%c44, %c0_177] : memref<72x16xf32, #tpu.memory_space<vmem>>, vector<1x16xf32>
    %595 = vector.shape_cast %594 : vector<1x16xf32> to vector<1x1x16xf32>
    %596 = vector.broadcast %593 : vector<3x3x1xf32> to vector<3x3x16xf32>
    %597 = vector.broadcast %595 : vector<1x1x16xf32> to vector<3x3x16xf32>
    %598 = arith.mulf %596, %597 : vector<3x3x16xf32>
    %599 = arith.addf %592, %598 : vector<3x3x16xf32>
    %600 = vector.extract_strided_slice %564 {offsets = [0, 0, 5], sizes = [3, 3, 1], strides = [1, 1, 1]} : vector<3x3x8xf32> to vector<3x3x1xf32>
    %c45 = arith.constant 45 : index
    %c0_178 = arith.constant 0 : index
    %601 = vector.load %arg4[%c45, %c0_178] : memref<72x16xf32, #tpu.memory_space<vmem>>, vector<1x16xf32>
    %602 = vector.shape_cast %601 : vector<1x16xf32> to vector<1x1x16xf32>
    %603 = vector.broadcast %600 : vector<3x3x1xf32> to vector<3x3x16xf32>
    %604 = vector.broadcast %602 : vector<1x1x16xf32> to vector<3x3x16xf32>
    %605 = arith.mulf %603, %604 : vector<3x3x16xf32>
    %606 = arith.addf %599, %605 : vector<3x3x16xf32>
    %607 = vector.extract_strided_slice %564 {offsets = [0, 0, 6], sizes = [3, 3, 1], strides = [1, 1, 1]} : vector<3x3x8xf32> to vector<3x3x1xf32>
    %c46 = arith.constant 46 : index
    %c0_179 = arith.constant 0 : index
    %608 = vector.load %arg4[%c46, %c0_179] : memref<72x16xf32, #tpu.memory_space<vmem>>, vector<1x16xf32>
    %609 = vector.shape_cast %608 : vector<1x16xf32> to vector<1x1x16xf32>
    %610 = vector.broadcast %607 : vector<3x3x1xf32> to vector<3x3x16xf32>
    %611 = vector.broadcast %609 : vector<1x1x16xf32> to vector<3x3x16xf32>
    %612 = arith.mulf %610, %611 : vector<3x3x16xf32>
    %613 = arith.addf %606, %612 : vector<3x3x16xf32>
    %614 = vector.extract_strided_slice %564 {offsets = [0, 0, 7], sizes = [3, 3, 1], strides = [1, 1, 1]} : vector<3x3x8xf32> to vector<3x3x1xf32>
    %c47 = arith.constant 47 : index
    %c0_180 = arith.constant 0 : index
    %615 = vector.load %arg4[%c47, %c0_180] : memref<72x16xf32, #tpu.memory_space<vmem>>, vector<1x16xf32>
    %616 = vector.shape_cast %615 : vector<1x16xf32> to vector<1x1x16xf32>
    %617 = vector.broadcast %614 : vector<3x3x1xf32> to vector<3x3x16xf32>
    %618 = vector.broadcast %616 : vector<1x1x16xf32> to vector<3x3x16xf32>
    %619 = arith.mulf %617, %618 : vector<3x3x16xf32>
    %620 = arith.addf %613, %619 : vector<3x3x16xf32>
    %c2_181 = arith.constant 2 : index
    %c0_182 = arith.constant 0 : index
    %c0_183 = arith.constant 0 : index
    %621 = tpu.strided_load %arg11[%c2_181, %c0_182, %c0_183] {strides = array<i32: 2, 2, 1>} : memref<7x7x8xf32, #tpu.memory_space<vmem>>, vector<3x3x8xf32>
    %622 = vector.extract_strided_slice %621 {offsets = [0, 0, 0], sizes = [3, 3, 1], strides = [1, 1, 1]} : vector<3x3x8xf32> to vector<3x3x1xf32>
    %c48 = arith.constant 48 : index
    %c0_184 = arith.constant 0 : index
    %623 = vector.load %arg4[%c48, %c0_184] : memref<72x16xf32, #tpu.memory_space<vmem>>, vector<1x16xf32>
    %624 = vector.shape_cast %623 : vector<1x16xf32> to vector<1x1x16xf32>
    %625 = vector.broadcast %622 : vector<3x3x1xf32> to vector<3x3x16xf32>
    %626 = vector.broadcast %624 : vector<1x1x16xf32> to vector<3x3x16xf32>
    %627 = arith.mulf %625, %626 : vector<3x3x16xf32>
    %628 = arith.addf %620, %627 : vector<3x3x16xf32>
    %629 = vector.extract_strided_slice %621 {offsets = [0, 0, 1], sizes = [3, 3, 1], strides = [1, 1, 1]} : vector<3x3x8xf32> to vector<3x3x1xf32>
    %c49 = arith.constant 49 : index
    %c0_185 = arith.constant 0 : index
    %630 = vector.load %arg4[%c49, %c0_185] : memref<72x16xf32, #tpu.memory_space<vmem>>, vector<1x16xf32>
    %631 = vector.shape_cast %630 : vector<1x16xf32> to vector<1x1x16xf32>
    %632 = vector.broadcast %629 : vector<3x3x1xf32> to vector<3x3x16xf32>
    %633 = vector.broadcast %631 : vector<1x1x16xf32> to vector<3x3x16xf32>
    %634 = arith.mulf %632, %633 : vector<3x3x16xf32>
    %635 = arith.addf %628, %634 : vector<3x3x16xf32>
    %636 = vector.extract_strided_slice %621 {offsets = [0, 0, 2], sizes = [3, 3, 1], strides = [1, 1, 1]} : vector<3x3x8xf32> to vector<3x3x1xf32>
    %c50 = arith.constant 50 : index
    %c0_186 = arith.constant 0 : index
    %637 = vector.load %arg4[%c50, %c0_186] : memref<72x16xf32, #tpu.memory_space<vmem>>, vector<1x16xf32>
    %638 = vector.shape_cast %637 : vector<1x16xf32> to vector<1x1x16xf32>
    %639 = vector.broadcast %636 : vector<3x3x1xf32> to vector<3x3x16xf32>
    %640 = vector.broadcast %638 : vector<1x1x16xf32> to vector<3x3x16xf32>
    %641 = arith.mulf %639, %640 : vector<3x3x16xf32>
    %642 = arith.addf %635, %641 : vector<3x3x16xf32>
    %643 = vector.extract_strided_slice %621 {offsets = [0, 0, 3], sizes = [3, 3, 1], strides = [1, 1, 1]} : vector<3x3x8xf32> to vector<3x3x1xf32>
    %c51 = arith.constant 51 : index
    %c0_187 = arith.constant 0 : index
    %644 = vector.load %arg4[%c51, %c0_187] : memref<72x16xf32, #tpu.memory_space<vmem>>, vector<1x16xf32>
    %645 = vector.shape_cast %644 : vector<1x16xf32> to vector<1x1x16xf32>
    %646 = vector.broadcast %643 : vector<3x3x1xf32> to vector<3x3x16xf32>
    %647 = vector.broadcast %645 : vector<1x1x16xf32> to vector<3x3x16xf32>
    %648 = arith.mulf %646, %647 : vector<3x3x16xf32>
    %649 = arith.addf %642, %648 : vector<3x3x16xf32>
    %650 = vector.extract_strided_slice %621 {offsets = [0, 0, 4], sizes = [3, 3, 1], strides = [1, 1, 1]} : vector<3x3x8xf32> to vector<3x3x1xf32>
    %c52 = arith.constant 52 : index
    %c0_188 = arith.constant 0 : index
    %651 = vector.load %arg4[%c52, %c0_188] : memref<72x16xf32, #tpu.memory_space<vmem>>, vector<1x16xf32>
    %652 = vector.shape_cast %651 : vector<1x16xf32> to vector<1x1x16xf32>
    %653 = vector.broadcast %650 : vector<3x3x1xf32> to vector<3x3x16xf32>
    %654 = vector.broadcast %652 : vector<1x1x16xf32> to vector<3x3x16xf32>
    %655 = arith.mulf %653, %654 : vector<3x3x16xf32>
    %656 = arith.addf %649, %655 : vector<3x3x16xf32>
    %657 = vector.extract_strided_slice %621 {offsets = [0, 0, 5], sizes = [3, 3, 1], strides = [1, 1, 1]} : vector<3x3x8xf32> to vector<3x3x1xf32>
    %c53 = arith.constant 53 : index
    %c0_189 = arith.constant 0 : index
    %658 = vector.load %arg4[%c53, %c0_189] : memref<72x16xf32, #tpu.memory_space<vmem>>, vector<1x16xf32>
    %659 = vector.shape_cast %658 : vector<1x16xf32> to vector<1x1x16xf32>
    %660 = vector.broadcast %657 : vector<3x3x1xf32> to vector<3x3x16xf32>
    %661 = vector.broadcast %659 : vector<1x1x16xf32> to vector<3x3x16xf32>
    %662 = arith.mulf %660, %661 : vector<3x3x16xf32>
    %663 = arith.addf %656, %662 : vector<3x3x16xf32>
    %664 = vector.extract_strided_slice %621 {offsets = [0, 0, 6], sizes = [3, 3, 1], strides = [1, 1, 1]} : vector<3x3x8xf32> to vector<3x3x1xf32>
    %c54 = arith.constant 54 : index
    %c0_190 = arith.constant 0 : index
    %665 = vector.load %arg4[%c54, %c0_190] : memref<72x16xf32, #tpu.memory_space<vmem>>, vector<1x16xf32>
    %666 = vector.shape_cast %665 : vector<1x16xf32> to vector<1x1x16xf32>
    %667 = vector.broadcast %664 : vector<3x3x1xf32> to vector<3x3x16xf32>
    %668 = vector.broadcast %666 : vector<1x1x16xf32> to vector<3x3x16xf32>
    %669 = arith.mulf %667, %668 : vector<3x3x16xf32>
    %670 = arith.addf %663, %669 : vector<3x3x16xf32>
    %671 = vector.extract_strided_slice %621 {offsets = [0, 0, 7], sizes = [3, 3, 1], strides = [1, 1, 1]} : vector<3x3x8xf32> to vector<3x3x1xf32>
    %c55 = arith.constant 55 : index
    %c0_191 = arith.constant 0 : index
    %672 = vector.load %arg4[%c55, %c0_191] : memref<72x16xf32, #tpu.memory_space<vmem>>, vector<1x16xf32>
    %673 = vector.shape_cast %672 : vector<1x16xf32> to vector<1x1x16xf32>
    %674 = vector.broadcast %671 : vector<3x3x1xf32> to vector<3x3x16xf32>
    %675 = vector.broadcast %673 : vector<1x1x16xf32> to vector<3x3x16xf32>
    %676 = arith.mulf %674, %675 : vector<3x3x16xf32>
    %677 = arith.addf %670, %676 : vector<3x3x16xf32>
    %c2_192 = arith.constant 2 : index
    %c1_193 = arith.constant 1 : index
    %c0_194 = arith.constant 0 : index
    %678 = tpu.strided_load %arg11[%c2_192, %c1_193, %c0_194] {strides = array<i32: 2, 2, 1>} : memref<7x7x8xf32, #tpu.memory_space<vmem>>, vector<3x3x8xf32>
    %679 = vector.extract_strided_slice %678 {offsets = [0, 0, 0], sizes = [3, 3, 1], strides = [1, 1, 1]} : vector<3x3x8xf32> to vector<3x3x1xf32>
    %c56 = arith.constant 56 : index
    %c0_195 = arith.constant 0 : index
    %680 = vector.load %arg4[%c56, %c0_195] : memref<72x16xf32, #tpu.memory_space<vmem>>, vector<1x16xf32>
    %681 = vector.shape_cast %680 : vector<1x16xf32> to vector<1x1x16xf32>
    %682 = vector.broadcast %679 : vector<3x3x1xf32> to vector<3x3x16xf32>
    %683 = vector.broadcast %681 : vector<1x1x16xf32> to vector<3x3x16xf32>
    %684 = arith.mulf %682, %683 : vector<3x3x16xf32>
    %685 = arith.addf %677, %684 : vector<3x3x16xf32>
    %686 = vector.extract_strided_slice %678 {offsets = [0, 0, 1], sizes = [3, 3, 1], strides = [1, 1, 1]} : vector<3x3x8xf32> to vector<3x3x1xf32>
    %c57 = arith.constant 57 : index
    %c0_196 = arith.constant 0 : index
    %687 = vector.load %arg4[%c57, %c0_196] : memref<72x16xf32, #tpu.memory_space<vmem>>, vector<1x16xf32>
    %688 = vector.shape_cast %687 : vector<1x16xf32> to vector<1x1x16xf32>
    %689 = vector.broadcast %686 : vector<3x3x1xf32> to vector<3x3x16xf32>
    %690 = vector.broadcast %688 : vector<1x1x16xf32> to vector<3x3x16xf32>
    %691 = arith.mulf %689, %690 : vector<3x3x16xf32>
    %692 = arith.addf %685, %691 : vector<3x3x16xf32>
    %693 = vector.extract_strided_slice %678 {offsets = [0, 0, 2], sizes = [3, 3, 1], strides = [1, 1, 1]} : vector<3x3x8xf32> to vector<3x3x1xf32>
    %c58 = arith.constant 58 : index
    %c0_197 = arith.constant 0 : index
    %694 = vector.load %arg4[%c58, %c0_197] : memref<72x16xf32, #tpu.memory_space<vmem>>, vector<1x16xf32>
    %695 = vector.shape_cast %694 : vector<1x16xf32> to vector<1x1x16xf32>
    %696 = vector.broadcast %693 : vector<3x3x1xf32> to vector<3x3x16xf32>
    %697 = vector.broadcast %695 : vector<1x1x16xf32> to vector<3x3x16xf32>
    %698 = arith.mulf %696, %697 : vector<3x3x16xf32>
    %699 = arith.addf %692, %698 : vector<3x3x16xf32>
    %700 = vector.extract_strided_slice %678 {offsets = [0, 0, 3], sizes = [3, 3, 1], strides = [1, 1, 1]} : vector<3x3x8xf32> to vector<3x3x1xf32>
    %c59 = arith.constant 59 : index
    %c0_198 = arith.constant 0 : index
    %701 = vector.load %arg4[%c59, %c0_198] : memref<72x16xf32, #tpu.memory_space<vmem>>, vector<1x16xf32>
    %702 = vector.shape_cast %701 : vector<1x16xf32> to vector<1x1x16xf32>
    %703 = vector.broadcast %700 : vector<3x3x1xf32> to vector<3x3x16xf32>
    %704 = vector.broadcast %702 : vector<1x1x16xf32> to vector<3x3x16xf32>
    %705 = arith.mulf %703, %704 : vector<3x3x16xf32>
    %706 = arith.addf %699, %705 : vector<3x3x16xf32>
    %707 = vector.extract_strided_slice %678 {offsets = [0, 0, 4], sizes = [3, 3, 1], strides = [1, 1, 1]} : vector<3x3x8xf32> to vector<3x3x1xf32>
    %c60 = arith.constant 60 : index
    %c0_199 = arith.constant 0 : index
    %708 = vector.load %arg4[%c60, %c0_199] : memref<72x16xf32, #tpu.memory_space<vmem>>, vector<1x16xf32>
    %709 = vector.shape_cast %708 : vector<1x16xf32> to vector<1x1x16xf32>
    %710 = vector.broadcast %707 : vector<3x3x1xf32> to vector<3x3x16xf32>
    %711 = vector.broadcast %709 : vector<1x1x16xf32> to vector<3x3x16xf32>
    %712 = arith.mulf %710, %711 : vector<3x3x16xf32>
    %713 = arith.addf %706, %712 : vector<3x3x16xf32>
    %714 = vector.extract_strided_slice %678 {offsets = [0, 0, 5], sizes = [3, 3, 1], strides = [1, 1, 1]} : vector<3x3x8xf32> to vector<3x3x1xf32>
    %c61 = arith.constant 61 : index
    %c0_200 = arith.constant 0 : index
    %715 = vector.load %arg4[%c61, %c0_200] : memref<72x16xf32, #tpu.memory_space<vmem>>, vector<1x16xf32>
    %716 = vector.shape_cast %715 : vector<1x16xf32> to vector<1x1x16xf32>
    %717 = vector.broadcast %714 : vector<3x3x1xf32> to vector<3x3x16xf32>
    %718 = vector.broadcast %716 : vector<1x1x16xf32> to vector<3x3x16xf32>
    %719 = arith.mulf %717, %718 : vector<3x3x16xf32>
    %720 = arith.addf %713, %719 : vector<3x3x16xf32>
    %721 = vector.extract_strided_slice %678 {offsets = [0, 0, 6], sizes = [3, 3, 1], strides = [1, 1, 1]} : vector<3x3x8xf32> to vector<3x3x1xf32>
    %c62 = arith.constant 62 : index
    %c0_201 = arith.constant 0 : index
    %722 = vector.load %arg4[%c62, %c0_201] : memref<72x16xf32, #tpu.memory_space<vmem>>, vector<1x16xf32>
    %723 = vector.shape_cast %722 : vector<1x16xf32> to vector<1x1x16xf32>
    %724 = vector.broadcast %721 : vector<3x3x1xf32> to vector<3x3x16xf32>
    %725 = vector.broadcast %723 : vector<1x1x16xf32> to vector<3x3x16xf32>
    %726 = arith.mulf %724, %725 : vector<3x3x16xf32>
    %727 = arith.addf %720, %726 : vector<3x3x16xf32>
    %728 = vector.extract_strided_slice %678 {offsets = [0, 0, 7], sizes = [3, 3, 1], strides = [1, 1, 1]} : vector<3x3x8xf32> to vector<3x3x1xf32>
    %c63 = arith.constant 63 : index
    %c0_202 = arith.constant 0 : index
    %729 = vector.load %arg4[%c63, %c0_202] : memref<72x16xf32, #tpu.memory_space<vmem>>, vector<1x16xf32>
    %730 = vector.shape_cast %729 : vector<1x16xf32> to vector<1x1x16xf32>
    %731 = vector.broadcast %728 : vector<3x3x1xf32> to vector<3x3x16xf32>
    %732 = vector.broadcast %730 : vector<1x1x16xf32> to vector<3x3x16xf32>
    %733 = arith.mulf %731, %732 : vector<3x3x16xf32>
    %734 = arith.addf %727, %733 : vector<3x3x16xf32>
    %c2_203 = arith.constant 2 : index
    %c2_204 = arith.constant 2 : index
    %c0_205 = arith.constant 0 : index
    %735 = tpu.strided_load %arg11[%c2_203, %c2_204, %c0_205] {strides = array<i32: 2, 2, 1>} : memref<7x7x8xf32, #tpu.memory_space<vmem>>, vector<3x3x8xf32>
    %736 = vector.extract_strided_slice %735 {offsets = [0, 0, 0], sizes = [3, 3, 1], strides = [1, 1, 1]} : vector<3x3x8xf32> to vector<3x3x1xf32>
    %c64 = arith.constant 64 : index
    %c0_206 = arith.constant 0 : index
    %737 = vector.load %arg4[%c64, %c0_206] : memref<72x16xf32, #tpu.memory_space<vmem>>, vector<1x16xf32>
    %738 = vector.shape_cast %737 : vector<1x16xf32> to vector<1x1x16xf32>
    %739 = vector.broadcast %736 : vector<3x3x1xf32> to vector<3x3x16xf32>
    %740 = vector.broadcast %738 : vector<1x1x16xf32> to vector<3x3x16xf32>
    %741 = arith.mulf %739, %740 : vector<3x3x16xf32>
    %742 = arith.addf %734, %741 : vector<3x3x16xf32>
    %743 = vector.extract_strided_slice %735 {offsets = [0, 0, 1], sizes = [3, 3, 1], strides = [1, 1, 1]} : vector<3x3x8xf32> to vector<3x3x1xf32>
    %c65 = arith.constant 65 : index
    %c0_207 = arith.constant 0 : index
    %744 = vector.load %arg4[%c65, %c0_207] : memref<72x16xf32, #tpu.memory_space<vmem>>, vector<1x16xf32>
    %745 = vector.shape_cast %744 : vector<1x16xf32> to vector<1x1x16xf32>
    %746 = vector.broadcast %743 : vector<3x3x1xf32> to vector<3x3x16xf32>
    %747 = vector.broadcast %745 : vector<1x1x16xf32> to vector<3x3x16xf32>
    %748 = arith.mulf %746, %747 : vector<3x3x16xf32>
    %749 = arith.addf %742, %748 : vector<3x3x16xf32>
    %750 = vector.extract_strided_slice %735 {offsets = [0, 0, 2], sizes = [3, 3, 1], strides = [1, 1, 1]} : vector<3x3x8xf32> to vector<3x3x1xf32>
    %c66 = arith.constant 66 : index
    %c0_208 = arith.constant 0 : index
    %751 = vector.load %arg4[%c66, %c0_208] : memref<72x16xf32, #tpu.memory_space<vmem>>, vector<1x16xf32>
    %752 = vector.shape_cast %751 : vector<1x16xf32> to vector<1x1x16xf32>
    %753 = vector.broadcast %750 : vector<3x3x1xf32> to vector<3x3x16xf32>
    %754 = vector.broadcast %752 : vector<1x1x16xf32> to vector<3x3x16xf32>
    %755 = arith.mulf %753, %754 : vector<3x3x16xf32>
    %756 = arith.addf %749, %755 : vector<3x3x16xf32>
    %757 = vector.extract_strided_slice %735 {offsets = [0, 0, 3], sizes = [3, 3, 1], strides = [1, 1, 1]} : vector<3x3x8xf32> to vector<3x3x1xf32>
    %c67 = arith.constant 67 : index
    %c0_209 = arith.constant 0 : index
    %758 = vector.load %arg4[%c67, %c0_209] : memref<72x16xf32, #tpu.memory_space<vmem>>, vector<1x16xf32>
    %759 = vector.shape_cast %758 : vector<1x16xf32> to vector<1x1x16xf32>
    %760 = vector.broadcast %757 : vector<3x3x1xf32> to vector<3x3x16xf32>
    %761 = vector.broadcast %759 : vector<1x1x16xf32> to vector<3x3x16xf32>
    %762 = arith.mulf %760, %761 : vector<3x3x16xf32>
    %763 = arith.addf %756, %762 : vector<3x3x16xf32>
    %764 = vector.extract_strided_slice %735 {offsets = [0, 0, 4], sizes = [3, 3, 1], strides = [1, 1, 1]} : vector<3x3x8xf32> to vector<3x3x1xf32>
    %c68 = arith.constant 68 : index
    %c0_210 = arith.constant 0 : index
    %765 = vector.load %arg4[%c68, %c0_210] : memref<72x16xf32, #tpu.memory_space<vmem>>, vector<1x16xf32>
    %766 = vector.shape_cast %765 : vector<1x16xf32> to vector<1x1x16xf32>
    %767 = vector.broadcast %764 : vector<3x3x1xf32> to vector<3x3x16xf32>
    %768 = vector.broadcast %766 : vector<1x1x16xf32> to vector<3x3x16xf32>
    %769 = arith.mulf %767, %768 : vector<3x3x16xf32>
    %770 = arith.addf %763, %769 : vector<3x3x16xf32>
    %771 = vector.extract_strided_slice %735 {offsets = [0, 0, 5], sizes = [3, 3, 1], strides = [1, 1, 1]} : vector<3x3x8xf32> to vector<3x3x1xf32>
    %c69 = arith.constant 69 : index
    %c0_211 = arith.constant 0 : index
    %772 = vector.load %arg4[%c69, %c0_211] : memref<72x16xf32, #tpu.memory_space<vmem>>, vector<1x16xf32>
    %773 = vector.shape_cast %772 : vector<1x16xf32> to vector<1x1x16xf32>
    %774 = vector.broadcast %771 : vector<3x3x1xf32> to vector<3x3x16xf32>
    %775 = vector.broadcast %773 : vector<1x1x16xf32> to vector<3x3x16xf32>
    %776 = arith.mulf %774, %775 : vector<3x3x16xf32>
    %777 = arith.addf %770, %776 : vector<3x3x16xf32>
    %778 = vector.extract_strided_slice %735 {offsets = [0, 0, 6], sizes = [3, 3, 1], strides = [1, 1, 1]} : vector<3x3x8xf32> to vector<3x3x1xf32>
    %c70 = arith.constant 70 : index
    %c0_212 = arith.constant 0 : index
    %779 = vector.load %arg4[%c70, %c0_212] : memref<72x16xf32, #tpu.memory_space<vmem>>, vector<1x16xf32>
    %780 = vector.shape_cast %779 : vector<1x16xf32> to vector<1x1x16xf32>
    %781 = vector.broadcast %778 : vector<3x3x1xf32> to vector<3x3x16xf32>
    %782 = vector.broadcast %780 : vector<1x1x16xf32> to vector<3x3x16xf32>
    %783 = arith.mulf %781, %782 : vector<3x3x16xf32>
    %784 = arith.addf %777, %783 : vector<3x3x16xf32>
    %785 = vector.extract_strided_slice %735 {offsets = [0, 0, 7], sizes = [3, 3, 1], strides = [1, 1, 1]} : vector<3x3x8xf32> to vector<3x3x1xf32>
    %c71 = arith.constant 71 : index
    %c0_213 = arith.constant 0 : index
    %786 = vector.load %arg4[%c71, %c0_213] : memref<72x16xf32, #tpu.memory_space<vmem>>, vector<1x16xf32>
    %787 = vector.shape_cast %786 : vector<1x16xf32> to vector<1x1x16xf32>
    %788 = vector.broadcast %785 : vector<3x3x1xf32> to vector<3x3x16xf32>
    %789 = vector.broadcast %787 : vector<1x1x16xf32> to vector<3x3x16xf32>
    %790 = arith.mulf %788, %789 : vector<3x3x16xf32>
    %791 = arith.addf %784, %790 : vector<3x3x16xf32>
    %c0_214 = arith.constant 0 : index
    %c0_215 = arith.constant 0 : index
    %792 = vector.load %arg5[%c0_214, %c0_215] : memref<1x16xf32, #tpu.memory_space<vmem>>, vector<1x16xf32>
    %793 = vector.shape_cast %792 : vector<1x16xf32> to vector<1x1x16xf32>
    %794 = vector.broadcast %793 : vector<1x1x16xf32> to vector<3x3x16xf32>
    %795 = arith.addf %791, %794 : vector<3x3x16xf32>
    %cst_216 = arith.constant 0.000000e+00 : f32
    %796 = vector.broadcast %cst_216 : f32 to vector<3x3x16xf32>
    %797 = arith.maximumf %795, %796 : vector<3x3x16xf32>
    %cst_217 = arith.constant 0.000000e+00 : f32
    %798 = vector.broadcast %cst_217 : f32 to vector<3x3x32xf32>
    %799 = vector.extract_strided_slice %797 {offsets = [0, 0, 0], sizes = [3, 3, 1], strides = [1, 1, 1]} : vector<3x3x16xf32> to vector<3x3x1xf32>
    %c0_218 = arith.constant 0 : index
    %c0_219 = arith.constant 0 : index
    %800 = vector.load %arg6[%c0_218, %c0_219] : memref<16x32xf32, #tpu.memory_space<vmem>>, vector<1x32xf32>
    %801 = vector.shape_cast %800 : vector<1x32xf32> to vector<1x1x32xf32>
    %802 = vector.broadcast %799 : vector<3x3x1xf32> to vector<3x3x32xf32>
    %803 = vector.broadcast %801 : vector<1x1x32xf32> to vector<3x3x32xf32>
    %804 = arith.mulf %802, %803 : vector<3x3x32xf32>
    %805 = arith.addf %798, %804 : vector<3x3x32xf32>
    %806 = vector.extract_strided_slice %797 {offsets = [0, 0, 1], sizes = [3, 3, 1], strides = [1, 1, 1]} : vector<3x3x16xf32> to vector<3x3x1xf32>
    %c1_220 = arith.constant 1 : index
    %c0_221 = arith.constant 0 : index
    %807 = vector.load %arg6[%c1_220, %c0_221] : memref<16x32xf32, #tpu.memory_space<vmem>>, vector<1x32xf32>
    %808 = vector.shape_cast %807 : vector<1x32xf32> to vector<1x1x32xf32>
    %809 = vector.broadcast %806 : vector<3x3x1xf32> to vector<3x3x32xf32>
    %810 = vector.broadcast %808 : vector<1x1x32xf32> to vector<3x3x32xf32>
    %811 = arith.mulf %809, %810 : vector<3x3x32xf32>
    %812 = arith.addf %805, %811 : vector<3x3x32xf32>
    %813 = vector.extract_strided_slice %797 {offsets = [0, 0, 2], sizes = [3, 3, 1], strides = [1, 1, 1]} : vector<3x3x16xf32> to vector<3x3x1xf32>
    %c2_222 = arith.constant 2 : index
    %c0_223 = arith.constant 0 : index
    %814 = vector.load %arg6[%c2_222, %c0_223] : memref<16x32xf32, #tpu.memory_space<vmem>>, vector<1x32xf32>
    %815 = vector.shape_cast %814 : vector<1x32xf32> to vector<1x1x32xf32>
    %816 = vector.broadcast %813 : vector<3x3x1xf32> to vector<3x3x32xf32>
    %817 = vector.broadcast %815 : vector<1x1x32xf32> to vector<3x3x32xf32>
    %818 = arith.mulf %816, %817 : vector<3x3x32xf32>
    %819 = arith.addf %812, %818 : vector<3x3x32xf32>
    %820 = vector.extract_strided_slice %797 {offsets = [0, 0, 3], sizes = [3, 3, 1], strides = [1, 1, 1]} : vector<3x3x16xf32> to vector<3x3x1xf32>
    %c3_224 = arith.constant 3 : index
    %c0_225 = arith.constant 0 : index
    %821 = vector.load %arg6[%c3_224, %c0_225] : memref<16x32xf32, #tpu.memory_space<vmem>>, vector<1x32xf32>
    %822 = vector.shape_cast %821 : vector<1x32xf32> to vector<1x1x32xf32>
    %823 = vector.broadcast %820 : vector<3x3x1xf32> to vector<3x3x32xf32>
    %824 = vector.broadcast %822 : vector<1x1x32xf32> to vector<3x3x32xf32>
    %825 = arith.mulf %823, %824 : vector<3x3x32xf32>
    %826 = arith.addf %819, %825 : vector<3x3x32xf32>
    %827 = vector.extract_strided_slice %797 {offsets = [0, 0, 4], sizes = [3, 3, 1], strides = [1, 1, 1]} : vector<3x3x16xf32> to vector<3x3x1xf32>
    %c4_226 = arith.constant 4 : index
    %c0_227 = arith.constant 0 : index
    %828 = vector.load %arg6[%c4_226, %c0_227] : memref<16x32xf32, #tpu.memory_space<vmem>>, vector<1x32xf32>
    %829 = vector.shape_cast %828 : vector<1x32xf32> to vector<1x1x32xf32>
    %830 = vector.broadcast %827 : vector<3x3x1xf32> to vector<3x3x32xf32>
    %831 = vector.broadcast %829 : vector<1x1x32xf32> to vector<3x3x32xf32>
    %832 = arith.mulf %830, %831 : vector<3x3x32xf32>
    %833 = arith.addf %826, %832 : vector<3x3x32xf32>
    %834 = vector.extract_strided_slice %797 {offsets = [0, 0, 5], sizes = [3, 3, 1], strides = [1, 1, 1]} : vector<3x3x16xf32> to vector<3x3x1xf32>
    %c5_228 = arith.constant 5 : index
    %c0_229 = arith.constant 0 : index
    %835 = vector.load %arg6[%c5_228, %c0_229] : memref<16x32xf32, #tpu.memory_space<vmem>>, vector<1x32xf32>
    %836 = vector.shape_cast %835 : vector<1x32xf32> to vector<1x1x32xf32>
    %837 = vector.broadcast %834 : vector<3x3x1xf32> to vector<3x3x32xf32>
    %838 = vector.broadcast %836 : vector<1x1x32xf32> to vector<3x3x32xf32>
    %839 = arith.mulf %837, %838 : vector<3x3x32xf32>
    %840 = arith.addf %833, %839 : vector<3x3x32xf32>
    %841 = vector.extract_strided_slice %797 {offsets = [0, 0, 6], sizes = [3, 3, 1], strides = [1, 1, 1]} : vector<3x3x16xf32> to vector<3x3x1xf32>
    %c6_230 = arith.constant 6 : index
    %c0_231 = arith.constant 0 : index
    %842 = vector.load %arg6[%c6_230, %c0_231] : memref<16x32xf32, #tpu.memory_space<vmem>>, vector<1x32xf32>
    %843 = vector.shape_cast %842 : vector<1x32xf32> to vector<1x1x32xf32>
    %844 = vector.broadcast %841 : vector<3x3x1xf32> to vector<3x3x32xf32>
    %845 = vector.broadcast %843 : vector<1x1x32xf32> to vector<3x3x32xf32>
    %846 = arith.mulf %844, %845 : vector<3x3x32xf32>
    %847 = arith.addf %840, %846 : vector<3x3x32xf32>
    %848 = vector.extract_strided_slice %797 {offsets = [0, 0, 7], sizes = [3, 3, 1], strides = [1, 1, 1]} : vector<3x3x16xf32> to vector<3x3x1xf32>
    %c7_232 = arith.constant 7 : index
    %c0_233 = arith.constant 0 : index
    %849 = vector.load %arg6[%c7_232, %c0_233] : memref<16x32xf32, #tpu.memory_space<vmem>>, vector<1x32xf32>
    %850 = vector.shape_cast %849 : vector<1x32xf32> to vector<1x1x32xf32>
    %851 = vector.broadcast %848 : vector<3x3x1xf32> to vector<3x3x32xf32>
    %852 = vector.broadcast %850 : vector<1x1x32xf32> to vector<3x3x32xf32>
    %853 = arith.mulf %851, %852 : vector<3x3x32xf32>
    %854 = arith.addf %847, %853 : vector<3x3x32xf32>
    %855 = vector.extract_strided_slice %797 {offsets = [0, 0, 8], sizes = [3, 3, 1], strides = [1, 1, 1]} : vector<3x3x16xf32> to vector<3x3x1xf32>
    %c8_234 = arith.constant 8 : index
    %c0_235 = arith.constant 0 : index
    %856 = vector.load %arg6[%c8_234, %c0_235] : memref<16x32xf32, #tpu.memory_space<vmem>>, vector<1x32xf32>
    %857 = vector.shape_cast %856 : vector<1x32xf32> to vector<1x1x32xf32>
    %858 = vector.broadcast %855 : vector<3x3x1xf32> to vector<3x3x32xf32>
    %859 = vector.broadcast %857 : vector<1x1x32xf32> to vector<3x3x32xf32>
    %860 = arith.mulf %858, %859 : vector<3x3x32xf32>
    %861 = arith.addf %854, %860 : vector<3x3x32xf32>
    %862 = vector.extract_strided_slice %797 {offsets = [0, 0, 9], sizes = [3, 3, 1], strides = [1, 1, 1]} : vector<3x3x16xf32> to vector<3x3x1xf32>
    %c9_236 = arith.constant 9 : index
    %c0_237 = arith.constant 0 : index
    %863 = vector.load %arg6[%c9_236, %c0_237] : memref<16x32xf32, #tpu.memory_space<vmem>>, vector<1x32xf32>
    %864 = vector.shape_cast %863 : vector<1x32xf32> to vector<1x1x32xf32>
    %865 = vector.broadcast %862 : vector<3x3x1xf32> to vector<3x3x32xf32>
    %866 = vector.broadcast %864 : vector<1x1x32xf32> to vector<3x3x32xf32>
    %867 = arith.mulf %865, %866 : vector<3x3x32xf32>
    %868 = arith.addf %861, %867 : vector<3x3x32xf32>
    %869 = vector.extract_strided_slice %797 {offsets = [0, 0, 10], sizes = [3, 3, 1], strides = [1, 1, 1]} : vector<3x3x16xf32> to vector<3x3x1xf32>
    %c10_238 = arith.constant 10 : index
    %c0_239 = arith.constant 0 : index
    %870 = vector.load %arg6[%c10_238, %c0_239] : memref<16x32xf32, #tpu.memory_space<vmem>>, vector<1x32xf32>
    %871 = vector.shape_cast %870 : vector<1x32xf32> to vector<1x1x32xf32>
    %872 = vector.broadcast %869 : vector<3x3x1xf32> to vector<3x3x32xf32>
    %873 = vector.broadcast %871 : vector<1x1x32xf32> to vector<3x3x32xf32>
    %874 = arith.mulf %872, %873 : vector<3x3x32xf32>
    %875 = arith.addf %868, %874 : vector<3x3x32xf32>
    %876 = vector.extract_strided_slice %797 {offsets = [0, 0, 11], sizes = [3, 3, 1], strides = [1, 1, 1]} : vector<3x3x16xf32> to vector<3x3x1xf32>
    %c11_240 = arith.constant 11 : index
    %c0_241 = arith.constant 0 : index
    %877 = vector.load %arg6[%c11_240, %c0_241] : memref<16x32xf32, #tpu.memory_space<vmem>>, vector<1x32xf32>
    %878 = vector.shape_cast %877 : vector<1x32xf32> to vector<1x1x32xf32>
    %879 = vector.broadcast %876 : vector<3x3x1xf32> to vector<3x3x32xf32>
    %880 = vector.broadcast %878 : vector<1x1x32xf32> to vector<3x3x32xf32>
    %881 = arith.mulf %879, %880 : vector<3x3x32xf32>
    %882 = arith.addf %875, %881 : vector<3x3x32xf32>
    %883 = vector.extract_strided_slice %797 {offsets = [0, 0, 12], sizes = [3, 3, 1], strides = [1, 1, 1]} : vector<3x3x16xf32> to vector<3x3x1xf32>
    %c12_242 = arith.constant 12 : index
    %c0_243 = arith.constant 0 : index
    %884 = vector.load %arg6[%c12_242, %c0_243] : memref<16x32xf32, #tpu.memory_space<vmem>>, vector<1x32xf32>
    %885 = vector.shape_cast %884 : vector<1x32xf32> to vector<1x1x32xf32>
    %886 = vector.broadcast %883 : vector<3x3x1xf32> to vector<3x3x32xf32>
    %887 = vector.broadcast %885 : vector<1x1x32xf32> to vector<3x3x32xf32>
    %888 = arith.mulf %886, %887 : vector<3x3x32xf32>
    %889 = arith.addf %882, %888 : vector<3x3x32xf32>
    %890 = vector.extract_strided_slice %797 {offsets = [0, 0, 13], sizes = [3, 3, 1], strides = [1, 1, 1]} : vector<3x3x16xf32> to vector<3x3x1xf32>
    %c13_244 = arith.constant 13 : index
    %c0_245 = arith.constant 0 : index
    %891 = vector.load %arg6[%c13_244, %c0_245] : memref<16x32xf32, #tpu.memory_space<vmem>>, vector<1x32xf32>
    %892 = vector.shape_cast %891 : vector<1x32xf32> to vector<1x1x32xf32>
    %893 = vector.broadcast %890 : vector<3x3x1xf32> to vector<3x3x32xf32>
    %894 = vector.broadcast %892 : vector<1x1x32xf32> to vector<3x3x32xf32>
    %895 = arith.mulf %893, %894 : vector<3x3x32xf32>
    %896 = arith.addf %889, %895 : vector<3x3x32xf32>
    %897 = vector.extract_strided_slice %797 {offsets = [0, 0, 14], sizes = [3, 3, 1], strides = [1, 1, 1]} : vector<3x3x16xf32> to vector<3x3x1xf32>
    %c14_246 = arith.constant 14 : index
    %c0_247 = arith.constant 0 : index
    %898 = vector.load %arg6[%c14_246, %c0_247] : memref<16x32xf32, #tpu.memory_space<vmem>>, vector<1x32xf32>
    %899 = vector.shape_cast %898 : vector<1x32xf32> to vector<1x1x32xf32>
    %900 = vector.broadcast %897 : vector<3x3x1xf32> to vector<3x3x32xf32>
    %901 = vector.broadcast %899 : vector<1x1x32xf32> to vector<3x3x32xf32>
    %902 = arith.mulf %900, %901 : vector<3x3x32xf32>
    %903 = arith.addf %896, %902 : vector<3x3x32xf32>
    %904 = vector.extract_strided_slice %797 {offsets = [0, 0, 15], sizes = [3, 3, 1], strides = [1, 1, 1]} : vector<3x3x16xf32> to vector<3x3x1xf32>
    %c15_248 = arith.constant 15 : index
    %c0_249 = arith.constant 0 : index
    %905 = vector.load %arg6[%c15_248, %c0_249] : memref<16x32xf32, #tpu.memory_space<vmem>>, vector<1x32xf32>
    %906 = vector.shape_cast %905 : vector<1x32xf32> to vector<1x1x32xf32>
    %907 = vector.broadcast %904 : vector<3x3x1xf32> to vector<3x3x32xf32>
    %908 = vector.broadcast %906 : vector<1x1x32xf32> to vector<3x3x32xf32>
    %909 = arith.mulf %907, %908 : vector<3x3x32xf32>
    %910 = arith.addf %903, %909 : vector<3x3x32xf32>
    %c0_250 = arith.constant 0 : index
    %c0_251 = arith.constant 0 : index
    %911 = vector.load %arg7[%c0_250, %c0_251] : memref<1x32xf32, #tpu.memory_space<vmem>>, vector<1x32xf32>
    %912 = vector.shape_cast %911 : vector<1x32xf32> to vector<1x1x32xf32>
    %913 = vector.broadcast %912 : vector<1x1x32xf32> to vector<3x3x32xf32>
    %914 = arith.addf %910, %913 : vector<3x3x32xf32>
    %cst_252 = arith.constant 0.000000e+00 : f32
    %915 = vector.broadcast %cst_252 : f32 to vector<3x3x32xf32>
    %916 = arith.maximumf %914, %915 : vector<3x3x32xf32>
    %cst_253 = arith.constant 0.000000e+00 : f32
    %917 = vector.broadcast %cst_253 : f32 to vector<3x3x10xf32>
    %918 = vector.extract_strided_slice %916 {offsets = [0, 0, 0], sizes = [3, 3, 1], strides = [1, 1, 1]} : vector<3x3x32xf32> to vector<3x3x1xf32>
    %c0_254 = arith.constant 0 : index
    %c0_255 = arith.constant 0 : index
    %919 = vector.load %arg8[%c0_254, %c0_255] : memref<32x10xf32, #tpu.memory_space<vmem>>, vector<1x10xf32>
    %920 = vector.shape_cast %919 : vector<1x10xf32> to vector<1x1x10xf32>
    %921 = vector.broadcast %918 : vector<3x3x1xf32> to vector<3x3x10xf32>
    %922 = vector.broadcast %920 : vector<1x1x10xf32> to vector<3x3x10xf32>
    %923 = arith.mulf %921, %922 : vector<3x3x10xf32>
    %924 = arith.addf %917, %923 : vector<3x3x10xf32>
    %925 = vector.extract_strided_slice %916 {offsets = [0, 0, 1], sizes = [3, 3, 1], strides = [1, 1, 1]} : vector<3x3x32xf32> to vector<3x3x1xf32>
    %c1_256 = arith.constant 1 : index
    %c0_257 = arith.constant 0 : index
    %926 = vector.load %arg8[%c1_256, %c0_257] : memref<32x10xf32, #tpu.memory_space<vmem>>, vector<1x10xf32>
    %927 = vector.shape_cast %926 : vector<1x10xf32> to vector<1x1x10xf32>
    %928 = vector.broadcast %925 : vector<3x3x1xf32> to vector<3x3x10xf32>
    %929 = vector.broadcast %927 : vector<1x1x10xf32> to vector<3x3x10xf32>
    %930 = arith.mulf %928, %929 : vector<3x3x10xf32>
    %931 = arith.addf %924, %930 : vector<3x3x10xf32>
    %932 = vector.extract_strided_slice %916 {offsets = [0, 0, 2], sizes = [3, 3, 1], strides = [1, 1, 1]} : vector<3x3x32xf32> to vector<3x3x1xf32>
    %c2_258 = arith.constant 2 : index
    %c0_259 = arith.constant 0 : index
    %933 = vector.load %arg8[%c2_258, %c0_259] : memref<32x10xf32, #tpu.memory_space<vmem>>, vector<1x10xf32>
    %934 = vector.shape_cast %933 : vector<1x10xf32> to vector<1x1x10xf32>
    %935 = vector.broadcast %932 : vector<3x3x1xf32> to vector<3x3x10xf32>
    %936 = vector.broadcast %934 : vector<1x1x10xf32> to vector<3x3x10xf32>
    %937 = arith.mulf %935, %936 : vector<3x3x10xf32>
    %938 = arith.addf %931, %937 : vector<3x3x10xf32>
    %939 = vector.extract_strided_slice %916 {offsets = [0, 0, 3], sizes = [3, 3, 1], strides = [1, 1, 1]} : vector<3x3x32xf32> to vector<3x3x1xf32>
    %c3_260 = arith.constant 3 : index
    %c0_261 = arith.constant 0 : index
    %940 = vector.load %arg8[%c3_260, %c0_261] : memref<32x10xf32, #tpu.memory_space<vmem>>, vector<1x10xf32>
    %941 = vector.shape_cast %940 : vector<1x10xf32> to vector<1x1x10xf32>
    %942 = vector.broadcast %939 : vector<3x3x1xf32> to vector<3x3x10xf32>
    %943 = vector.broadcast %941 : vector<1x1x10xf32> to vector<3x3x10xf32>
    %944 = arith.mulf %942, %943 : vector<3x3x10xf32>
    %945 = arith.addf %938, %944 : vector<3x3x10xf32>
    %946 = vector.extract_strided_slice %916 {offsets = [0, 0, 4], sizes = [3, 3, 1], strides = [1, 1, 1]} : vector<3x3x32xf32> to vector<3x3x1xf32>
    %c4_262 = arith.constant 4 : index
    %c0_263 = arith.constant 0 : index
    %947 = vector.load %arg8[%c4_262, %c0_263] : memref<32x10xf32, #tpu.memory_space<vmem>>, vector<1x10xf32>
    %948 = vector.shape_cast %947 : vector<1x10xf32> to vector<1x1x10xf32>
    %949 = vector.broadcast %946 : vector<3x3x1xf32> to vector<3x3x10xf32>
    %950 = vector.broadcast %948 : vector<1x1x10xf32> to vector<3x3x10xf32>
    %951 = arith.mulf %949, %950 : vector<3x3x10xf32>
    %952 = arith.addf %945, %951 : vector<3x3x10xf32>
    %953 = vector.extract_strided_slice %916 {offsets = [0, 0, 5], sizes = [3, 3, 1], strides = [1, 1, 1]} : vector<3x3x32xf32> to vector<3x3x1xf32>
    %c5_264 = arith.constant 5 : index
    %c0_265 = arith.constant 0 : index
    %954 = vector.load %arg8[%c5_264, %c0_265] : memref<32x10xf32, #tpu.memory_space<vmem>>, vector<1x10xf32>
    %955 = vector.shape_cast %954 : vector<1x10xf32> to vector<1x1x10xf32>
    %956 = vector.broadcast %953 : vector<3x3x1xf32> to vector<3x3x10xf32>
    %957 = vector.broadcast %955 : vector<1x1x10xf32> to vector<3x3x10xf32>
    %958 = arith.mulf %956, %957 : vector<3x3x10xf32>
    %959 = arith.addf %952, %958 : vector<3x3x10xf32>
    %960 = vector.extract_strided_slice %916 {offsets = [0, 0, 6], sizes = [3, 3, 1], strides = [1, 1, 1]} : vector<3x3x32xf32> to vector<3x3x1xf32>
    %c6_266 = arith.constant 6 : index
    %c0_267 = arith.constant 0 : index
    %961 = vector.load %arg8[%c6_266, %c0_267] : memref<32x10xf32, #tpu.memory_space<vmem>>, vector<1x10xf32>
    %962 = vector.shape_cast %961 : vector<1x10xf32> to vector<1x1x10xf32>
    %963 = vector.broadcast %960 : vector<3x3x1xf32> to vector<3x3x10xf32>
    %964 = vector.broadcast %962 : vector<1x1x10xf32> to vector<3x3x10xf32>
    %965 = arith.mulf %963, %964 : vector<3x3x10xf32>
    %966 = arith.addf %959, %965 : vector<3x3x10xf32>
    %967 = vector.extract_strided_slice %916 {offsets = [0, 0, 7], sizes = [3, 3, 1], strides = [1, 1, 1]} : vector<3x3x32xf32> to vector<3x3x1xf32>
    %c7_268 = arith.constant 7 : index
    %c0_269 = arith.constant 0 : index
    %968 = vector.load %arg8[%c7_268, %c0_269] : memref<32x10xf32, #tpu.memory_space<vmem>>, vector<1x10xf32>
    %969 = vector.shape_cast %968 : vector<1x10xf32> to vector<1x1x10xf32>
    %970 = vector.broadcast %967 : vector<3x3x1xf32> to vector<3x3x10xf32>
    %971 = vector.broadcast %969 : vector<1x1x10xf32> to vector<3x3x10xf32>
    %972 = arith.mulf %970, %971 : vector<3x3x10xf32>
    %973 = arith.addf %966, %972 : vector<3x3x10xf32>
    %974 = vector.extract_strided_slice %916 {offsets = [0, 0, 8], sizes = [3, 3, 1], strides = [1, 1, 1]} : vector<3x3x32xf32> to vector<3x3x1xf32>
    %c8_270 = arith.constant 8 : index
    %c0_271 = arith.constant 0 : index
    %975 = vector.load %arg8[%c8_270, %c0_271] : memref<32x10xf32, #tpu.memory_space<vmem>>, vector<1x10xf32>
    %976 = vector.shape_cast %975 : vector<1x10xf32> to vector<1x1x10xf32>
    %977 = vector.broadcast %974 : vector<3x3x1xf32> to vector<3x3x10xf32>
    %978 = vector.broadcast %976 : vector<1x1x10xf32> to vector<3x3x10xf32>
    %979 = arith.mulf %977, %978 : vector<3x3x10xf32>
    %980 = arith.addf %973, %979 : vector<3x3x10xf32>
    %981 = vector.extract_strided_slice %916 {offsets = [0, 0, 9], sizes = [3, 3, 1], strides = [1, 1, 1]} : vector<3x3x32xf32> to vector<3x3x1xf32>
    %c9_272 = arith.constant 9 : index
    %c0_273 = arith.constant 0 : index
    %982 = vector.load %arg8[%c9_272, %c0_273] : memref<32x10xf32, #tpu.memory_space<vmem>>, vector<1x10xf32>
    %983 = vector.shape_cast %982 : vector<1x10xf32> to vector<1x1x10xf32>
    %984 = vector.broadcast %981 : vector<3x3x1xf32> to vector<3x3x10xf32>
    %985 = vector.broadcast %983 : vector<1x1x10xf32> to vector<3x3x10xf32>
    %986 = arith.mulf %984, %985 : vector<3x3x10xf32>
    %987 = arith.addf %980, %986 : vector<3x3x10xf32>
    %988 = vector.extract_strided_slice %916 {offsets = [0, 0, 10], sizes = [3, 3, 1], strides = [1, 1, 1]} : vector<3x3x32xf32> to vector<3x3x1xf32>
    %c10_274 = arith.constant 10 : index
    %c0_275 = arith.constant 0 : index
    %989 = vector.load %arg8[%c10_274, %c0_275] : memref<32x10xf32, #tpu.memory_space<vmem>>, vector<1x10xf32>
    %990 = vector.shape_cast %989 : vector<1x10xf32> to vector<1x1x10xf32>
    %991 = vector.broadcast %988 : vector<3x3x1xf32> to vector<3x3x10xf32>
    %992 = vector.broadcast %990 : vector<1x1x10xf32> to vector<3x3x10xf32>
    %993 = arith.mulf %991, %992 : vector<3x3x10xf32>
    %994 = arith.addf %987, %993 : vector<3x3x10xf32>
    %995 = vector.extract_strided_slice %916 {offsets = [0, 0, 11], sizes = [3, 3, 1], strides = [1, 1, 1]} : vector<3x3x32xf32> to vector<3x3x1xf32>
    %c11_276 = arith.constant 11 : index
    %c0_277 = arith.constant 0 : index
    %996 = vector.load %arg8[%c11_276, %c0_277] : memref<32x10xf32, #tpu.memory_space<vmem>>, vector<1x10xf32>
    %997 = vector.shape_cast %996 : vector<1x10xf32> to vector<1x1x10xf32>
    %998 = vector.broadcast %995 : vector<3x3x1xf32> to vector<3x3x10xf32>
    %999 = vector.broadcast %997 : vector<1x1x10xf32> to vector<3x3x10xf32>
    %1000 = arith.mulf %998, %999 : vector<3x3x10xf32>
    %1001 = arith.addf %994, %1000 : vector<3x3x10xf32>
    %1002 = vector.extract_strided_slice %916 {offsets = [0, 0, 12], sizes = [3, 3, 1], strides = [1, 1, 1]} : vector<3x3x32xf32> to vector<3x3x1xf32>
    %c12_278 = arith.constant 12 : index
    %c0_279 = arith.constant 0 : index
    %1003 = vector.load %arg8[%c12_278, %c0_279] : memref<32x10xf32, #tpu.memory_space<vmem>>, vector<1x10xf32>
    %1004 = vector.shape_cast %1003 : vector<1x10xf32> to vector<1x1x10xf32>
    %1005 = vector.broadcast %1002 : vector<3x3x1xf32> to vector<3x3x10xf32>
    %1006 = vector.broadcast %1004 : vector<1x1x10xf32> to vector<3x3x10xf32>
    %1007 = arith.mulf %1005, %1006 : vector<3x3x10xf32>
    %1008 = arith.addf %1001, %1007 : vector<3x3x10xf32>
    %1009 = vector.extract_strided_slice %916 {offsets = [0, 0, 13], sizes = [3, 3, 1], strides = [1, 1, 1]} : vector<3x3x32xf32> to vector<3x3x1xf32>
    %c13_280 = arith.constant 13 : index
    %c0_281 = arith.constant 0 : index
    %1010 = vector.load %arg8[%c13_280, %c0_281] : memref<32x10xf32, #tpu.memory_space<vmem>>, vector<1x10xf32>
    %1011 = vector.shape_cast %1010 : vector<1x10xf32> to vector<1x1x10xf32>
    %1012 = vector.broadcast %1009 : vector<3x3x1xf32> to vector<3x3x10xf32>
    %1013 = vector.broadcast %1011 : vector<1x1x10xf32> to vector<3x3x10xf32>
    %1014 = arith.mulf %1012, %1013 : vector<3x3x10xf32>
    %1015 = arith.addf %1008, %1014 : vector<3x3x10xf32>
    %1016 = vector.extract_strided_slice %916 {offsets = [0, 0, 14], sizes = [3, 3, 1], strides = [1, 1, 1]} : vector<3x3x32xf32> to vector<3x3x1xf32>
    %c14_282 = arith.constant 14 : index
    %c0_283 = arith.constant 0 : index
    %1017 = vector.load %arg8[%c14_282, %c0_283] : memref<32x10xf32, #tpu.memory_space<vmem>>, vector<1x10xf32>
    %1018 = vector.shape_cast %1017 : vector<1x10xf32> to vector<1x1x10xf32>
    %1019 = vector.broadcast %1016 : vector<3x3x1xf32> to vector<3x3x10xf32>
    %1020 = vector.broadcast %1018 : vector<1x1x10xf32> to vector<3x3x10xf32>
    %1021 = arith.mulf %1019, %1020 : vector<3x3x10xf32>
    %1022 = arith.addf %1015, %1021 : vector<3x3x10xf32>
    %1023 = vector.extract_strided_slice %916 {offsets = [0, 0, 15], sizes = [3, 3, 1], strides = [1, 1, 1]} : vector<3x3x32xf32> to vector<3x3x1xf32>
    %c15_284 = arith.constant 15 : index
    %c0_285 = arith.constant 0 : index
    %1024 = vector.load %arg8[%c15_284, %c0_285] : memref<32x10xf32, #tpu.memory_space<vmem>>, vector<1x10xf32>
    %1025 = vector.shape_cast %1024 : vector<1x10xf32> to vector<1x1x10xf32>
    %1026 = vector.broadcast %1023 : vector<3x3x1xf32> to vector<3x3x10xf32>
    %1027 = vector.broadcast %1025 : vector<1x1x10xf32> to vector<3x3x10xf32>
    %1028 = arith.mulf %1026, %1027 : vector<3x3x10xf32>
    %1029 = arith.addf %1022, %1028 : vector<3x3x10xf32>
    %1030 = vector.extract_strided_slice %916 {offsets = [0, 0, 16], sizes = [3, 3, 1], strides = [1, 1, 1]} : vector<3x3x32xf32> to vector<3x3x1xf32>
    %c16_286 = arith.constant 16 : index
    %c0_287 = arith.constant 0 : index
    %1031 = vector.load %arg8[%c16_286, %c0_287] : memref<32x10xf32, #tpu.memory_space<vmem>>, vector<1x10xf32>
    %1032 = vector.shape_cast %1031 : vector<1x10xf32> to vector<1x1x10xf32>
    %1033 = vector.broadcast %1030 : vector<3x3x1xf32> to vector<3x3x10xf32>
    %1034 = vector.broadcast %1032 : vector<1x1x10xf32> to vector<3x3x10xf32>
    %1035 = arith.mulf %1033, %1034 : vector<3x3x10xf32>
    %1036 = arith.addf %1029, %1035 : vector<3x3x10xf32>
    %1037 = vector.extract_strided_slice %916 {offsets = [0, 0, 17], sizes = [3, 3, 1], strides = [1, 1, 1]} : vector<3x3x32xf32> to vector<3x3x1xf32>
    %c17_288 = arith.constant 17 : index
    %c0_289 = arith.constant 0 : index
    %1038 = vector.load %arg8[%c17_288, %c0_289] : memref<32x10xf32, #tpu.memory_space<vmem>>, vector<1x10xf32>
    %1039 = vector.shape_cast %1038 : vector<1x10xf32> to vector<1x1x10xf32>
    %1040 = vector.broadcast %1037 : vector<3x3x1xf32> to vector<3x3x10xf32>
    %1041 = vector.broadcast %1039 : vector<1x1x10xf32> to vector<3x3x10xf32>
    %1042 = arith.mulf %1040, %1041 : vector<3x3x10xf32>
    %1043 = arith.addf %1036, %1042 : vector<3x3x10xf32>
    %1044 = vector.extract_strided_slice %916 {offsets = [0, 0, 18], sizes = [3, 3, 1], strides = [1, 1, 1]} : vector<3x3x32xf32> to vector<3x3x1xf32>
    %c18_290 = arith.constant 18 : index
    %c0_291 = arith.constant 0 : index
    %1045 = vector.load %arg8[%c18_290, %c0_291] : memref<32x10xf32, #tpu.memory_space<vmem>>, vector<1x10xf32>
    %1046 = vector.shape_cast %1045 : vector<1x10xf32> to vector<1x1x10xf32>
    %1047 = vector.broadcast %1044 : vector<3x3x1xf32> to vector<3x3x10xf32>
    %1048 = vector.broadcast %1046 : vector<1x1x10xf32> to vector<3x3x10xf32>
    %1049 = arith.mulf %1047, %1048 : vector<3x3x10xf32>
    %1050 = arith.addf %1043, %1049 : vector<3x3x10xf32>
    %1051 = vector.extract_strided_slice %916 {offsets = [0, 0, 19], sizes = [3, 3, 1], strides = [1, 1, 1]} : vector<3x3x32xf32> to vector<3x3x1xf32>
    %c19_292 = arith.constant 19 : index
    %c0_293 = arith.constant 0 : index
    %1052 = vector.load %arg8[%c19_292, %c0_293] : memref<32x10xf32, #tpu.memory_space<vmem>>, vector<1x10xf32>
    %1053 = vector.shape_cast %1052 : vector<1x10xf32> to vector<1x1x10xf32>
    %1054 = vector.broadcast %1051 : vector<3x3x1xf32> to vector<3x3x10xf32>
    %1055 = vector.broadcast %1053 : vector<1x1x10xf32> to vector<3x3x10xf32>
    %1056 = arith.mulf %1054, %1055 : vector<3x3x10xf32>
    %1057 = arith.addf %1050, %1056 : vector<3x3x10xf32>
    %1058 = vector.extract_strided_slice %916 {offsets = [0, 0, 20], sizes = [3, 3, 1], strides = [1, 1, 1]} : vector<3x3x32xf32> to vector<3x3x1xf32>
    %c20_294 = arith.constant 20 : index
    %c0_295 = arith.constant 0 : index
    %1059 = vector.load %arg8[%c20_294, %c0_295] : memref<32x10xf32, #tpu.memory_space<vmem>>, vector<1x10xf32>
    %1060 = vector.shape_cast %1059 : vector<1x10xf32> to vector<1x1x10xf32>
    %1061 = vector.broadcast %1058 : vector<3x3x1xf32> to vector<3x3x10xf32>
    %1062 = vector.broadcast %1060 : vector<1x1x10xf32> to vector<3x3x10xf32>
    %1063 = arith.mulf %1061, %1062 : vector<3x3x10xf32>
    %1064 = arith.addf %1057, %1063 : vector<3x3x10xf32>
    %1065 = vector.extract_strided_slice %916 {offsets = [0, 0, 21], sizes = [3, 3, 1], strides = [1, 1, 1]} : vector<3x3x32xf32> to vector<3x3x1xf32>
    %c21_296 = arith.constant 21 : index
    %c0_297 = arith.constant 0 : index
    %1066 = vector.load %arg8[%c21_296, %c0_297] : memref<32x10xf32, #tpu.memory_space<vmem>>, vector<1x10xf32>
    %1067 = vector.shape_cast %1066 : vector<1x10xf32> to vector<1x1x10xf32>
    %1068 = vector.broadcast %1065 : vector<3x3x1xf32> to vector<3x3x10xf32>
    %1069 = vector.broadcast %1067 : vector<1x1x10xf32> to vector<3x3x10xf32>
    %1070 = arith.mulf %1068, %1069 : vector<3x3x10xf32>
    %1071 = arith.addf %1064, %1070 : vector<3x3x10xf32>
    %1072 = vector.extract_strided_slice %916 {offsets = [0, 0, 22], sizes = [3, 3, 1], strides = [1, 1, 1]} : vector<3x3x32xf32> to vector<3x3x1xf32>
    %c22_298 = arith.constant 22 : index
    %c0_299 = arith.constant 0 : index
    %1073 = vector.load %arg8[%c22_298, %c0_299] : memref<32x10xf32, #tpu.memory_space<vmem>>, vector<1x10xf32>
    %1074 = vector.shape_cast %1073 : vector<1x10xf32> to vector<1x1x10xf32>
    %1075 = vector.broadcast %1072 : vector<3x3x1xf32> to vector<3x3x10xf32>
    %1076 = vector.broadcast %1074 : vector<1x1x10xf32> to vector<3x3x10xf32>
    %1077 = arith.mulf %1075, %1076 : vector<3x3x10xf32>
    %1078 = arith.addf %1071, %1077 : vector<3x3x10xf32>
    %1079 = vector.extract_strided_slice %916 {offsets = [0, 0, 23], sizes = [3, 3, 1], strides = [1, 1, 1]} : vector<3x3x32xf32> to vector<3x3x1xf32>
    %c23_300 = arith.constant 23 : index
    %c0_301 = arith.constant 0 : index
    %1080 = vector.load %arg8[%c23_300, %c0_301] : memref<32x10xf32, #tpu.memory_space<vmem>>, vector<1x10xf32>
    %1081 = vector.shape_cast %1080 : vector<1x10xf32> to vector<1x1x10xf32>
    %1082 = vector.broadcast %1079 : vector<3x3x1xf32> to vector<3x3x10xf32>
    %1083 = vector.broadcast %1081 : vector<1x1x10xf32> to vector<3x3x10xf32>
    %1084 = arith.mulf %1082, %1083 : vector<3x3x10xf32>
    %1085 = arith.addf %1078, %1084 : vector<3x3x10xf32>
    %1086 = vector.extract_strided_slice %916 {offsets = [0, 0, 24], sizes = [3, 3, 1], strides = [1, 1, 1]} : vector<3x3x32xf32> to vector<3x3x1xf32>
    %c24_302 = arith.constant 24 : index
    %c0_303 = arith.constant 0 : index
    %1087 = vector.load %arg8[%c24_302, %c0_303] : memref<32x10xf32, #tpu.memory_space<vmem>>, vector<1x10xf32>
    %1088 = vector.shape_cast %1087 : vector<1x10xf32> to vector<1x1x10xf32>
    %1089 = vector.broadcast %1086 : vector<3x3x1xf32> to vector<3x3x10xf32>
    %1090 = vector.broadcast %1088 : vector<1x1x10xf32> to vector<3x3x10xf32>
    %1091 = arith.mulf %1089, %1090 : vector<3x3x10xf32>
    %1092 = arith.addf %1085, %1091 : vector<3x3x10xf32>
    %1093 = vector.extract_strided_slice %916 {offsets = [0, 0, 25], sizes = [3, 3, 1], strides = [1, 1, 1]} : vector<3x3x32xf32> to vector<3x3x1xf32>
    %c25_304 = arith.constant 25 : index
    %c0_305 = arith.constant 0 : index
    %1094 = vector.load %arg8[%c25_304, %c0_305] : memref<32x10xf32, #tpu.memory_space<vmem>>, vector<1x10xf32>
    %1095 = vector.shape_cast %1094 : vector<1x10xf32> to vector<1x1x10xf32>
    %1096 = vector.broadcast %1093 : vector<3x3x1xf32> to vector<3x3x10xf32>
    %1097 = vector.broadcast %1095 : vector<1x1x10xf32> to vector<3x3x10xf32>
    %1098 = arith.mulf %1096, %1097 : vector<3x3x10xf32>
    %1099 = arith.addf %1092, %1098 : vector<3x3x10xf32>
    %1100 = vector.extract_strided_slice %916 {offsets = [0, 0, 26], sizes = [3, 3, 1], strides = [1, 1, 1]} : vector<3x3x32xf32> to vector<3x3x1xf32>
    %c26_306 = arith.constant 26 : index
    %c0_307 = arith.constant 0 : index
    %1101 = vector.load %arg8[%c26_306, %c0_307] : memref<32x10xf32, #tpu.memory_space<vmem>>, vector<1x10xf32>
    %1102 = vector.shape_cast %1101 : vector<1x10xf32> to vector<1x1x10xf32>
    %1103 = vector.broadcast %1100 : vector<3x3x1xf32> to vector<3x3x10xf32>
    %1104 = vector.broadcast %1102 : vector<1x1x10xf32> to vector<3x3x10xf32>
    %1105 = arith.mulf %1103, %1104 : vector<3x3x10xf32>
    %1106 = arith.addf %1099, %1105 : vector<3x3x10xf32>
    %1107 = vector.extract_strided_slice %916 {offsets = [0, 0, 27], sizes = [3, 3, 1], strides = [1, 1, 1]} : vector<3x3x32xf32> to vector<3x3x1xf32>
    %c27_308 = arith.constant 27 : index
    %c0_309 = arith.constant 0 : index
    %1108 = vector.load %arg8[%c27_308, %c0_309] : memref<32x10xf32, #tpu.memory_space<vmem>>, vector<1x10xf32>
    %1109 = vector.shape_cast %1108 : vector<1x10xf32> to vector<1x1x10xf32>
    %1110 = vector.broadcast %1107 : vector<3x3x1xf32> to vector<3x3x10xf32>
    %1111 = vector.broadcast %1109 : vector<1x1x10xf32> to vector<3x3x10xf32>
    %1112 = arith.mulf %1110, %1111 : vector<3x3x10xf32>
    %1113 = arith.addf %1106, %1112 : vector<3x3x10xf32>
    %1114 = vector.extract_strided_slice %916 {offsets = [0, 0, 28], sizes = [3, 3, 1], strides = [1, 1, 1]} : vector<3x3x32xf32> to vector<3x3x1xf32>
    %c28_310 = arith.constant 28 : index
    %c0_311 = arith.constant 0 : index
    %1115 = vector.load %arg8[%c28_310, %c0_311] : memref<32x10xf32, #tpu.memory_space<vmem>>, vector<1x10xf32>
    %1116 = vector.shape_cast %1115 : vector<1x10xf32> to vector<1x1x10xf32>
    %1117 = vector.broadcast %1114 : vector<3x3x1xf32> to vector<3x3x10xf32>
    %1118 = vector.broadcast %1116 : vector<1x1x10xf32> to vector<3x3x10xf32>
    %1119 = arith.mulf %1117, %1118 : vector<3x3x10xf32>
    %1120 = arith.addf %1113, %1119 : vector<3x3x10xf32>
    %1121 = vector.extract_strided_slice %916 {offsets = [0, 0, 29], sizes = [3, 3, 1], strides = [1, 1, 1]} : vector<3x3x32xf32> to vector<3x3x1xf32>
    %c29_312 = arith.constant 29 : index
    %c0_313 = arith.constant 0 : index
    %1122 = vector.load %arg8[%c29_312, %c0_313] : memref<32x10xf32, #tpu.memory_space<vmem>>, vector<1x10xf32>
    %1123 = vector.shape_cast %1122 : vector<1x10xf32> to vector<1x1x10xf32>
    %1124 = vector.broadcast %1121 : vector<3x3x1xf32> to vector<3x3x10xf32>
    %1125 = vector.broadcast %1123 : vector<1x1x10xf32> to vector<3x3x10xf32>
    %1126 = arith.mulf %1124, %1125 : vector<3x3x10xf32>
    %1127 = arith.addf %1120, %1126 : vector<3x3x10xf32>
    %1128 = vector.extract_strided_slice %916 {offsets = [0, 0, 30], sizes = [3, 3, 1], strides = [1, 1, 1]} : vector<3x3x32xf32> to vector<3x3x1xf32>
    %c30_314 = arith.constant 30 : index
    %c0_315 = arith.constant 0 : index
    %1129 = vector.load %arg8[%c30_314, %c0_315] : memref<32x10xf32, #tpu.memory_space<vmem>>, vector<1x10xf32>
    %1130 = vector.shape_cast %1129 : vector<1x10xf32> to vector<1x1x10xf32>
    %1131 = vector.broadcast %1128 : vector<3x3x1xf32> to vector<3x3x10xf32>
    %1132 = vector.broadcast %1130 : vector<1x1x10xf32> to vector<3x3x10xf32>
    %1133 = arith.mulf %1131, %1132 : vector<3x3x10xf32>
    %1134 = arith.addf %1127, %1133 : vector<3x3x10xf32>
    %1135 = vector.extract_strided_slice %916 {offsets = [0, 0, 31], sizes = [3, 3, 1], strides = [1, 1, 1]} : vector<3x3x32xf32> to vector<3x3x1xf32>
    %c31_316 = arith.constant 31 : index
    %c0_317 = arith.constant 0 : index
    %1136 = vector.load %arg8[%c31_316, %c0_317] : memref<32x10xf32, #tpu.memory_space<vmem>>, vector<1x10xf32>
    %1137 = vector.shape_cast %1136 : vector<1x10xf32> to vector<1x1x10xf32>
    %1138 = vector.broadcast %1135 : vector<3x3x1xf32> to vector<3x3x10xf32>
    %1139 = vector.broadcast %1137 : vector<1x1x10xf32> to vector<3x3x10xf32>
    %1140 = arith.mulf %1138, %1139 : vector<3x3x10xf32>
    %1141 = arith.addf %1134, %1140 : vector<3x3x10xf32>
    %c0_318 = arith.constant 0 : index
    %c0_319 = arith.constant 0 : index
    %1142 = vector.load %arg9[%c0_318, %c0_319] : memref<1x10xf32, #tpu.memory_space<vmem>>, vector<1x10xf32>
    %1143 = vector.shape_cast %1142 : vector<1x10xf32> to vector<1x1x10xf32>
    %1144 = vector.broadcast %1143 : vector<1x1x10xf32> to vector<3x3x10xf32>
    %1145 = arith.addf %1141, %1144 : vector<3x3x10xf32>
    %c0_320 = arith.constant 0 : index
    %c0_321 = arith.constant 0 : index
    %c0_322 = arith.constant 0 : index
    %c0_323 = arith.constant 0 : index
    %1146 = vector.load %arg10[%c0_320, %c0_321, %c0_322, %c0_323] : memref<1x3x3x10xf32, #tpu.memory_space<vmem>>, vector<1x3x3x10xf32>
    %1147 = vector.shape_cast %1146 : vector<1x3x3x10xf32> to vector<3x3x10xf32>
    %1148 = vector.shape_cast %1145 : vector<3x3x10xf32> to vector<1x3x3x10xf32>
    tpu.vector_store %arg10[%c0_320, %c0_321, %c0_322, %c0_323], %1148 {strides = array<i32>} : memref<1x3x3x10xf32, #tpu.memory_space<vmem>>, vector<1x3x3x10xf32>,
    return
  }
  func.func @transform_0(%arg0: i32) -> (i32, i32, i32, i32) {
    %c0_i32 = arith.constant 0 : i32
    %c0_i32_0 = arith.constant 0 : i32
    %c0_i32_1 = arith.constant 0 : i32
    %c0_i32_2 = arith.constant 0 : i32
    return %arg0, %c0_i32, %c0_i32_0, %c0_i32_1 : i32, i32, i32, i32
  }
  func.func @transform_1(%arg0: i32) -> (i32, i32) {
    %c0_i32 = arith.constant 0 : i32
    %c0_i32_0 = arith.constant 0 : i32
    %c0_i32_1 = arith.constant 0 : i32
    return %c0_i32, %c0_i32_0 : i32, i32
  }
  func.func @transform_2(%arg0: i32) -> (i32, i32) {
    %c0_i32 = arith.constant 0 : i32
    %c0_i32_0 = arith.constant 0 : i32
    %c0_i32_1 = arith.constant 0 : i32
    return %c0_i32, %c0_i32_0 : i32, i32
  }
  func.func @transform_3(%arg0: i32) -> (i32, i32) {
    %c0_i32 = arith.constant 0 : i32
    %c0_i32_0 = arith.constant 0 : i32
    %c0_i32_1 = arith.constant 0 : i32
    return %c0_i32, %c0_i32_0 : i32, i32
  }
  func.func @transform_4(%arg0: i32) -> (i32, i32) {
    %c0_i32 = arith.constant 0 : i32
    %c0_i32_0 = arith.constant 0 : i32
    %c0_i32_1 = arith.constant 0 : i32
    return %c0_i32, %c0_i32_0 : i32, i32
  }
  func.func @transform_5(%arg0: i32) -> (i32, i32) {
    %c0_i32 = arith.constant 0 : i32
    %c0_i32_0 = arith.constant 0 : i32
    %c0_i32_1 = arith.constant 0 : i32
    return %c0_i32, %c0_i32_0 : i32, i32
  }
  func.func @transform_6(%arg0: i32) -> (i32, i32) {
    %c0_i32 = arith.constant 0 : i32
    %c0_i32_0 = arith.constant 0 : i32
    %c0_i32_1 = arith.constant 0 : i32
    return %c0_i32, %c0_i32_0 : i32, i32
  }
  func.func @transform_7(%arg0: i32) -> (i32, i32) {
    %c0_i32 = arith.constant 0 : i32
    %c0_i32_0 = arith.constant 0 : i32
    %c0_i32_1 = arith.constant 0 : i32
    return %c0_i32, %c0_i32_0 : i32, i32
  }
  func.func @transform_8(%arg0: i32) -> (i32, i32) {
    %c0_i32 = arith.constant 0 : i32
    %c0_i32_0 = arith.constant 0 : i32
    %c0_i32_1 = arith.constant 0 : i32
    return %c0_i32, %c0_i32_0 : i32, i32
  }
  func.func @transform_9(%arg0: i32) -> (i32, i32, i32, i32) {
    %c0_i32 = arith.constant 0 : i32
    %c0_i32_0 = arith.constant 0 : i32
    %c0_i32_1 = arith.constant 0 : i32
    %c0_i32_2 = arith.constant 0 : i32
    return %arg0, %c0_i32, %c0_i32_0, %c0_i32_1 : i32, i32, i32, i32
  }
}

</mosaic_0001>

<llo_original>
// kernel: tpu_custom_call.1
$region0: #{tpu_custom_call.1}
  #allocation0 [shape = 'u32[]', space=smem, size = 0x4, offset = 0x4, fixed_abs, tag = 'smem constant byte address 0x4 - core index']
  #allocation1 [shape = 'u32[144,128]{1,0:T(1,128)}', space=vmem, size = 0x12000, scoped, tag = 'internal scratch']
  #allocation2 [shape = 'f32[7,7,8]{2,1,0:T(8,128)}', space=vmem, size = 0x7000, scoped, tag = 'scratch operand']
  %s0 = inlined_call_operand.vmem [shape: f32[2,16,16,4], index: 0, kind: input, shape index: {}]
  %s1 = inlined_call_operand.vmem [shape: f32[36,8], index: 1, kind: input, shape index: {}]
  %s2 = inlined_call_operand.vmem [shape: f32[1,8], index: 2, kind: input, shape index: {}]
  %s3 = inlined_call_operand.vmem [shape: f32[72,16], index: 3, kind: input, shape index: {}]
  %s4 = inlined_call_operand.vmem [shape: f32[1,16], index: 4, kind: input, shape index: {}]
  %s5 = inlined_call_operand.vmem [shape: f32[16,32], index: 5, kind: input, shape index: {}]
  %s6 = inlined_call_operand.vmem [shape: f32[1,32], index: 6, kind: input, shape index: {}]
  %s7 = inlined_call_operand.vmem [shape: f32[32,10], index: 7, kind: input, shape index: {}]
  %s8 = inlined_call_operand.vmem [shape: f32[1,10], index: 8, kind: input, shape index: {}]
  %s9 = inlined_call_operand.vmem [shape: f32[2,3,3,10], index: 9, kind: output, shape index: {}]
  %s10 = sld [smem:[#allocation0]]
  $region69: #{tpu_custom_call.1} parent=0
    _
  %s12 = ssub.s32 1, %s10
  %s13 = scalar_select 0, %s12, %s10
  loop: start=0, step=1, limit=4
  $region2: #{tpu_custom_call.1} parent=0 // loop_pre_header
    _
  $region3: #{tpu_custom_call.1} parent=0 // loop_header
    %s15 = sphi 0, %s19
    %p16 = scmp.ge.s32.totalorder %s15, 4
    %s25 = sphi 0, %s27
    %s28 = sphi 0, %s25
    %s29 = sphi 0, %s28
    %s45 = sphi 0, %s29
    %s49 = sphi 0, %s49
    %s51 = sphi 0, %s49
    %s52 = sphi 0, %s51
    %s66 = sphi 0, %s52
    %s70 = sphi 0, %s70
    %s72 = sphi 0, %s70
    %s73 = sphi 0, %s72
    %s87 = sphi 0, %s73
    %s91 = sphi 0, %s91
    %s93 = sphi 0, %s91
    %s94 = sphi 0, %s93
    %s108 = sphi 0, %s94
    %s112 = sphi 0, %s112
    %s114 = sphi 0, %s112
    %s115 = sphi 0, %s114
    %s129 = sphi 0, %s115
    %s133 = sphi 0, %s133
    %s135 = sphi 0, %s133
    %s136 = sphi 0, %s135
    %s150 = sphi 0, %s136
    %s154 = sphi 0, %s154
    %s156 = sphi 0, %s154
    %s157 = sphi 0, %s156
    %s171 = sphi 0, %s157
    %s175 = sphi 0, %s175
    %s177 = sphi 0, %s175
    %s178 = sphi 0, %s177
    %s192 = sphi 0, %s178
    %s196 = sphi 0, %s196
    %s198 = sphi 0, %s196
    %s199 = sphi 0, %s198
    %s213 = sphi 0, %s199
    %s219 = sphi 0, %s221
    %s222 = sphi 0, %s219
    %s223 = sphi 0, %s222
    %s239 = sphi 0, %s223
  $region4: #{tpu_custom_call.1} parent=0 // loop_header_branch
    %18 = sbr.rel (%p16) target = $region8
  $region5: #{tpu_custom_call.1} parent=0 // loop_body
    %s20 = ssub.s32 %s15, 1
    %s21 = ssub.s32 %s15, 2
    %s22 = sadd.s32 %s15, 1
    %s23 = ssub.s32 %s15, %s22
    %p24 = scmp.eq.s32.totalorder %s23, 0
    %s26 = sadd.s32 %s25, 1
    %s27 = scalar_select %p24, %s25, %s26
    %p30 = pneg %p24
    %p31 = scmp.eq.s32.totalorder %s15, 1
    %p32 = por %p30, %p31
    %p33 = scmp.ne.s32.totalorder %s25, %s28
    %p34 = scmp.eq.s32.totalorder %s15, 0
    %p35 = por %p33, %p34
    %p36 = scmp.ne.s32.totalorder %s25, %s28
    %p37 = scmp.eq.s32.totalorder %s20, 1
    %p38 = por %p36, %p37
    %p39 = scmp.ne.s32.totalorder %s28, %s29
    %p40 = scmp.eq.s32.totalorder %s20, 0
    %p41 = por %p39, %p40
    %p42 = scmp.ne.s32.totalorder %s28, %s29
    %p43 = scmp.eq.s32.totalorder %s21, 1
    %p44 = por %p42, %p43
    %p46 = scmp.ne.s32.totalorder %s29, %s45
    %p47 = scmp.eq.s32.totalorder %s21, 0
    %p48 = por %p46, %p47
    %s50 = sadd.s32 %s49, 1
    %p53 = scmp.eq.s32.totalorder %s15, 1
    %p54 = scmp.ne.s32.totalorder %s49, %s51
    %p55 = scmp.eq.s32.totalorder %s15, 0
    %p56 = por %p54, %p55
    %p57 = scmp.ne.s32.totalorder %s49, %s51
    %p58 = scmp.eq.s32.totalorder %s20, 1
    %p59 = por %p57, %p58
    %p60 = scmp.ne.s32.totalorder %s51, %s52
    %p61 = scmp.eq.s32.totalorder %s20, 0
    %p62 = por %p60, %p61
    %p63 = scmp.ne.s32.totalorder %s51, %s52
    %p64 = scmp.eq.s32.totalorder %s21, 1
    %p65 = por %p63, %p64
    %p67 = scmp.ne.s32.totalorder %s52, %s66
    %p68 = scmp.eq.s32.totalorder %s21, 0
    %p69 = por %p67, %p68
    %s71 = sadd.s32 %s70, 1
    %p74 = scmp.eq.s32.totalorder %s15, 1
    %p75 = scmp.ne.s32.totalorder %s70, %s72
    %p76 = scmp.eq.s32.totalorder %s15, 0
    %p77 = por %p75, %p76
    %p78 = scmp.ne.s32.totalorder %s70, %s72
    %p79 = scmp.eq.s32.totalorder %s20, 1
    %p80 = por %p78, %p79
    %p81 = scmp.ne.s32.totalorder %s72, %s73
    %p82 = scmp.eq.s32.totalorder %s20, 0
    %p83 = por %p81, %p82
    %p84 = scmp.ne.s32.totalorder %s72, %s73
    %p85 = scmp.eq.s32.totalorder %s21, 1
    %p86 = por %p84, %p85
    %p88 = scmp.ne.s32.totalorder %s73, %s87
    %p89 = scmp.eq.s32.totalorder %s21, 0
    %p90 = por %p88, %p89
    %s92 = sadd.s32 %s91, 1
    %p95 = scmp.eq.s32.totalorder %s15, 1
    %p96 = scmp.ne.s32.totalorder %s91, %s93
    %p97 = scmp.eq.s32.totalorder %s15, 0
    %p98 = por %p96, %p97
    %p99 = scmp.ne.s32.totalorder %s91, %s93
    %p100 = scmp.eq.s32.totalorder %s20, 1
    %p101 = por %p99, %p100
    %p102 = scmp.ne.s32.totalorder %s93, %s94
    %p103 = scmp.eq.s32.totalorder %s20, 0
    %p104 = por %p102, %p103
    %p105 = scmp.ne.s32.totalorder %s93, %s94
    %p106 = scmp.eq.s32.totalorder %s21, 1
    %p107 = por %p105, %p106
    %p109 = scmp.ne.s32.totalorder %s94, %s108
    %p110 = scmp.eq.s32.totalorder %s21, 0
    %p111 = por %p109, %p110
    %s113 = sadd.s32 %s112, 1
    %p116 = scmp.eq.s32.totalorder %s15, 1
    %p117 = scmp.ne.s32.totalorder %s112, %s114
    %p118 = scmp.eq.s32.totalorder %s15, 0
    %p119 = por %p117, %p118
    %p120 = scmp.ne.s32.totalorder %s112, %s114
    %p121 = scmp.eq.s32.totalorder %s20, 1
    %p122 = por %p120, %p121
    %p123 = scmp.ne.s32.totalorder %s114, %s115
    %p124 = scmp.eq.s32.totalorder %s20, 0
    %p125 = por %p123, %p124
    %p126 = scmp.ne.s32.totalorder %s114, %s115
    %p127 = scmp.eq.s32.totalorder %s21, 1
    %p128 = por %p126, %p127
    %p130 = scmp.ne.s32.totalorder %s115, %s129
    %p131 = scmp.eq.s32.totalorder %s21, 0
    %p132 = por %p130, %p131
    %s134 = sadd.s32 %s133, 1
    %p137 = scmp.eq.s32.totalorder %s15, 1
    %p138 = scmp.ne.s32.totalorder %s133, %s135
    %p139 = scmp.eq.s32.totalorder %s15, 0
    %p140 = por %p138, %p139
    %p141 = scmp.ne.s32.totalorder %s133, %s135
    %p142 = scmp.eq.s32.totalorder %s20, 1
    %p143 = por %p141, %p142
    %p144 = scmp.ne.s32.totalorder %s135, %s136
    %p145 = scmp.eq.s32.totalorder %s20, 0
    %p146 = por %p144, %p145
    %p147 = scmp.ne.s32.totalorder %s135, %s136
    %p148 = scmp.eq.s32.totalorder %s21, 1
    %p149 = por %p147, %p148
    %p151 = scmp.ne.s32.totalorder %s136, %s150
    %p152 = scmp.eq.s32.totalorder %s21, 0
    %p153 = por %p151, %p152
    %s155 = sadd.s32 %s154, 1
    %p158 = scmp.eq.s32.totalorder %s15, 1
    %p159 = scmp.ne.s32.totalorder %s154, %s156
    %p160 = scmp.eq.s32.totalorder %s15, 0
    %p161 = por %p159, %p160
    %p162 = scmp.ne.s32.totalorder %s154, %s156
    %p163 = scmp.eq.s32.totalorder %s20, 1
    %p164 = por %p162, %p163
    %p165 = scmp.ne.s32.totalorder %s156, %s157
    %p166 = scmp.eq.s32.totalorder %s20, 0
    %p167 = por %p165, %p166
    %p168 = scmp.ne.s32.totalorder %s156, %s157
    %p169 = scmp.eq.s32.totalorder %s21, 1
    %p170 = por %p168, %p169
    %p172 = scmp.ne.s32.totalorder %s157, %s171
    %p173 = scmp.eq.s32.totalorder %s21, 0
    %p174 = por %p172, %p173
    %s176 = sadd.s32 %s175, 1
    %p179 = scmp.eq.s32.totalorder %s15, 1
    %p180 = scmp.ne.s32.totalorder %s175, %s177
    %p181 = scmp.eq.s32.totalorder %s15, 0
    %p182 = por %p180, %p181
    %p183 = scmp.ne.s32.totalorder %s175, %s177
    %p184 = scmp.eq.s32.totalorder %s20, 1
    %p185 = por %p183, %p184
    %p186 = scmp.ne.s32.totalorder %s177, %s178
    %p187 = scmp.eq.s32.totalorder %s20, 0
    %p188 = por %p186, %p187
    %p189 = scmp.ne.s32.totalorder %s177, %s178
    %p190 = scmp.eq.s32.totalorder %s21, 1
    %p191 = por %p189, %p190
    %p193 = scmp.ne.s32.totalorder %s178, %s192
    %p194 = scmp.eq.s32.totalorder %s21, 0
    %p195 = por %p193, %p194
    %s197 = sadd.s32 %s196, 1
    %p200 = scmp.eq.s32.totalorder %s15, 1
    %p201 = scmp.ne.s32.totalorder %s196, %s198
    %p202 = scmp.eq.s32.totalorder %s15, 0
    %p203 = por %p201, %p202
    %p204 = scmp.ne.s32.totalorder %s196, %s198
    %p205 = scmp.eq.s32.totalorder %s20, 1
    %p206 = por %p204, %p205
    %p207 = scmp.ne.s32.totalorder %s198, %s199
    %p208 = scmp.eq.s32.totalorder %s20, 0
    %p209 = por %p207, %p208
    %p210 = scmp.ne.s32.totalorder %s198, %s199
    %p211 = scmp.eq.s32.totalorder %s21, 1
    %p212 = por %p210, %p211
    %p214 = scmp.ne.s32.totalorder %s199, %s213
    %p215 = scmp.eq.s32.totalorder %s21, 0
    %p216 = por %p214, %p215
    %s217 = ssub.s32 %s15, %s22
    %p218 = scmp.eq.s32.totalorder %s217, 0
    %s220 = sadd.s32 %s219, 1
    %s221 = scalar_select %p218, %s219, %s220
    %p224 = pneg %p218
    %p225 = scmp.eq.s32.totalorder %s15, 1
    %p226 = por %p224, %p225
    %p227 = scmp.ne.s32.totalorder %s219, %s222
    %p228 = scmp.eq.s32.totalorder %s15, 0
    %p229 = por %p227, %p228
    %p230 = scmp.ne.s32.totalorder %s219, %s222
    %p231 = scmp.eq.s32.totalorder %s20, 1
    %p232 = por %p230, %p231
    %p233 = scmp.ne.s32.totalorder %s222, %s223
    %p234 = scmp.eq.s32.totalorder %s20, 0
    %p235 = por %p233, %p234
    %p236 = scmp.ne.s32.totalorder %s222, %s223
    %p237 = scmp.eq.s32.totalorder %s21, 1
    %p238 = por %p236, %p237
    %p240 = scmp.ne.s32.totalorder %s223, %s239
    %p241 = scmp.eq.s32.totalorder %s21, 0
    %p242 = por %p240, %p241
    %p243 = scmp.le.s32.totalorder 1, %s15
    %p244 = scmp.lt.s32.totalorder %s15, 3
    %p245 = pnand %p243, %p244
    %p246 = pneg %p245
    // Predicated region
    $region9: #{tpu_custom_call.1} parent=5 // pred_check
      _
    $region10: #{tpu_custom_call.1} parent=5 // pred_check_branch
      %248 = sbr.rel (%p245) target = $region12
    $region11: #{tpu_custom_call.1} parent=5 // pred_region
      %s249 = ssub.s32 %s15, 1
      // Predicated region
      $region13: #{tpu_custom_call.1} parent=11 // pred_check
        %p250 = pneg %p62
      $region14: #{tpu_custom_call.1} parent=11 // pred_check_branch
        %252 = sbr.rel (%p250) target = $region16
      $region15: #{tpu_custom_call.1} parent=11 // pred_region
        _
      $region16: #{tpu_custom_call.1} parent=11 // pred_fallthru
        _
      // Predicated region
      $region17: #{tpu_custom_call.1} parent=11 // pred_check
        %p253 = pneg %p83
      $region18: #{tpu_custom_call.1} parent=11 // pred_check_branch
        %255 = sbr.rel (%p253) target = $region20
      $region19: #{tpu_custom_call.1} parent=11 // pred_region
        _
      $region20: #{tpu_custom_call.1} parent=11 // pred_fallthru
        _
      // Predicated region
      $region21: #{tpu_custom_call.1} parent=11 // pred_check
        %p256 = pneg %p104
      $region22: #{tpu_custom_call.1} parent=11 // pred_check_branch
        %258 = sbr.rel (%p256) target = $region24
      $region23: #{tpu_custom_call.1} parent=11 // pred_region
        _
      $region24: #{tpu_custom_call.1} parent=11 // pred_fallthru
        _
      // Predicated region
      $region25: #{tpu_custom_call.1} parent=11 // pred_check
        %p259 = pneg %p125
      $region26: #{tpu_custom_call.1} parent=11 // pred_check_branch
        %261 = sbr.rel (%p259) target = $region28
      $region27: #{tpu_custom_call.1} parent=11 // pred_region
        _
      $region28: #{tpu_custom_call.1} parent=11 // pred_fallthru
        _
      // Predicated region
      $region29: #{tpu_custom_call.1} parent=11 // pred_check
        %p262 = pneg %p146
      $region30: #{tpu_custom_call.1} parent=11 // pred_check_branch
        %264 = sbr.rel (%p262) target = $region32
      $region31: #{tpu_custom_call.1} parent=11 // pred_region
        _
      $region32: #{tpu_custom_call.1} parent=11 // pred_fallthru
        _
      // Predicated region
      $region33: #{tpu_custom_call.1} parent=11 // pred_check
        %p265 = pneg %p167
      $region34: #{tpu_custom_call.1} parent=11 // pred_check_branch
        %267 = sbr.rel (%p265) target = $region36
      $region35: #{tpu_custom_call.1} parent=11 // pred_region
        _
      $region36: #{tpu_custom_call.1} parent=11 // pred_fallthru
        _
      // Predicated region
      $region37: #{tpu_custom_call.1} parent=11 // pred_check
        %p268 = pneg %p188
      $region38: #{tpu_custom_call.1} parent=11 // pred_check_branch
        %270 = sbr.rel (%p268) target = $region40
      $region39: #{tpu_custom_call.1} parent=11 // pred_region
        _
      $region40: #{tpu_custom_call.1} parent=11 // pred_fallthru
        _
      // Predicated region
      $region41: #{tpu_custom_call.1} parent=11 // pred_check
        %p271 = pneg %p209
      $region42: #{tpu_custom_call.1} parent=11 // pred_check_branch
        %273 = sbr.rel (%p271) target = $region44
      $region43: #{tpu_custom_call.1} parent=11 // pred_region
        _
      $region44: #{tpu_custom_call.1} parent=11 // pred_fallthru
        _
    $region12: #{tpu_custom_call.1} parent=5 // pred_fallthru
      _
    %p274 = scmp.lt.s32.totalorder %s15, 2
    // Predicated region
    $region45: #{tpu_custom_call.1} parent=5 // pred_check
      %p275 = pneg %p274
    $region46: #{tpu_custom_call.1} parent=5 // pred_check_branch
      %277 = sbr.rel (%p275) target = $region48
    $region47: #{tpu_custom_call.1} parent=5 // pred_region
      // Predicated region
      $region49: #{tpu_custom_call.1} parent=47 // pred_check
        %p278 = pneg %p35
      $region50: #{tpu_custom_call.1} parent=47 // pred_check_branch
        %280 = sbr.rel (%p278) target = $region52
      $region51: #{tpu_custom_call.1} parent=47 // pred_region
        %p281 = scmp.lt.s32.totalorder %s15, 1
        %s282 = scalar_select %p281, %s15, 1
        %s283 = smul.addr %s282, 32
        %s284 = smul.addr %s283, 8
        %s285 = scalar_lea.vmem %s0, %s284
      $region52: #{tpu_custom_call.1} parent=47 // pred_fallthru
        _
    $region48: #{tpu_custom_call.1} parent=5 // pred_fallthru
      _
    %p286 = scmp.le.s32.totalorder 1, %s15
    %p287 = scmp.lt.s32.totalorder %s15, 3
    %p288 = pnand %p286, %p287
    %p289 = pneg %p288
    // Predicated region
    $region53: #{tpu_custom_call.1} parent=5 // pred_check
      _
    $region54: #{tpu_custom_call.1} parent=5 // pred_check_branch
      %291 = sbr.rel (%p288) target = $region56
    $region55: #{tpu_custom_call.1} parent=5 // pred_region
      %s292 = ssub.s32 %s15, 1
      %p293 = scmp.lt.s32.totalorder %s20, 1
      %s294 = scalar_select %p293, %s20, 1
      %s295 = smul.addr %s294, 32
      %s296 = smul.addr %s295, 8
      %s297 = scalar_lea.vmem %s0, %s296
      %p298 = pneg %p41
      %p299 = pneg %p38
      %p300 = pneg %p62
      %p301 = pneg %p59
      %p302 = pneg %p83
      %p303 = pneg %p80
      %p304 = pneg %p104
      %p305 = pneg %p101
      %p306 = pneg %p125
      %p307 = pneg %p122
      %p308 = pneg %p146
      %p309 = pneg %p143
      %p310 = pneg %p167
      %p311 = pneg %p164
      %p312 = pneg %p188
      %p313 = pneg %p185
      %p314 = pneg %p209
      %p315 = pneg %p206
      %p316 = pneg %p235
      %p317 = pneg %p232
      %p318 = scmp.lt.s32.totalorder %s20, 1
      %s319 = scalar_select %p318, %s20, 1
      %s320 = smul.addr %s319, 3
      %s321 = smul.addr %s320, 4
      %s322 = scalar_lea.vmem %s9, %s321
      %p323 = scmp.lt.s32.totalorder %s20, 1
      %s324 = scalar_select %p323, %s20, 1
      %s325 = smul.addr %s324, 32
      %s326 = smul.addr %s325, 8
      %s327 = scalar_lea.vmem %s0, %s326
      %p328 = scmp.lt.s32.totalorder %s20, 1
      %s329 = scalar_select %p328, %s20, 1
      %s330 = smul.addr %s329, 3
      %s331 = smul.addr %s330, 4
      %s332 = scalar_lea.vmem %s9, %s331
      %v333 = vld [vmem:[%s327] ss:$2 sm:$0x7f]
      %s334 = scalar_lea.vmem %s327, 32
      %v335 = vld [vmem:[%s334] ss:$2 sm:$0x7f]
      %s336 = scalar_lea.vmem %s327, 64
      %v337 = vld [vmem:[%s336] ss:$2 sm:$0x7f]
      %s338 = scalar_lea.vmem %s327, 96
      %v339 = vld [vmem:[%s338] ss:$2 sm:$0x7f]
      %s340 = scalar_lea.vmem %s327, 128
      %v341 = vld [vmem:[%s340] ss:$2 sm:$0x7f]
      %s342 = scalar_lea.vmem %s327, 160
      %v343 = vld [vmem:[%s342] ss:$2 sm:$0x7f]
      %s344 = scalar_lea.vmem %s327, 192
      %v345 = vld [vmem:[%s344] ss:$2 sm:$0x7f]
      %v346 = vld [vmem:[%s1] sm:$0x1]
      %348 = vset.pattern.permute.xlu0 0
      %349 = vperm.xlu0 %348, %v333
      %v350 = vpop.permute.xlu0 %349
      %353 = vset.pattern.permute.xlu0 0
      %354 = vperm.xlu0 %353, %v335
      %v355 = vpop.permute.xlu0 %354
      %358 = vset.pattern.permute.xlu0 0
      %359 = vperm.xlu0 %358, %v337
      %v360 = vpop.permute.xlu0 %359
      %363 = vset.pattern.permute.xlu0 0
      %364 = vperm.xlu0 %363, %v339
      %v365 = vpop.permute.xlu0 %364
      %368 = vset.pattern.permute.xlu0 0
      %369 = vperm.xlu0 %368, %v341
      %v370 = vpop.permute.xlu0 %369
      %373 = vset.pattern.permute.xlu0 0
      %374 = vperm.xlu0 %373, %v343
      %v375 = vpop.permute.xlu0 %374
      %378 = vset.pattern.permute.xlu0 0
      %379 = vperm.xlu0 %378, %v345
      %v380 = vpop.permute.xlu0 %379
      %v382 = vlaneseq
      %v383 = vshrl.u32 %v382, 7
      %v384 = vsub.s32 0, %v383
      %v385 = vrot.slane %v346, %v384
      %v386 = vmul.f32 %v350, %v385
      %v387 = vmul.f32 %v355, %v385
      %v388 = vmul.f32 %v360, %v385
      %v389 = vmul.f32 %v365, %v385
      %v390 = vmul.f32 %v370, %v385
      %v391 = vmul.f32 %v375, %v385
      %v392 = vmul.f32 %v380, %v385
      %v393 = vadd.f32 %v386, 0.0
      %v394 = vadd.f32 %v387, 0.0
      %v395 = vadd.f32 %v388, 0.0
      %v396 = vadd.f32 %v389, 0.0
      %v397 = vadd.f32 %v390, 0.0
      %v398 = vadd.f32 %v391, 0.0
      %v399 = vadd.f32 %v392, 0.0
      %v400 = vld [vmem:[%s1 + $0x1] sm:$0x1]
      %401 = vset.pattern.permute.xlu0 1
      %402 = vperm.xlu0 %401, %v333
      %v403 = vpop.permute.xlu0 %402
      %405 = vset.pattern.permute.xlu0 1
      %406 = vperm.xlu0 %405, %v335
      %v407 = vpop.permute.xlu0 %406
      %409 = vset.pattern.permute.xlu0 1
      %410 = vperm.xlu0 %409, %v337
      %v411 = vpop.permute.xlu0 %410
      %413 = vset.pattern.permute.xlu0 1
      %414 = vperm.xlu0 %413, %v339
      %v415 = vpop.permute.xlu0 %414
      %417 = vset.pattern.permute.xlu0 1
      %418 = vperm.xlu0 %417, %v341
      %v419 = vpop.permute.xlu0 %418
      %421 = vset.pattern.permute.xlu0 1
      %422 = vperm.xlu0 %421, %v343
      %v423 = vpop.permute.xlu0 %422
      %425 = vset.pattern.permute.xlu0 1
      %426 = vperm.xlu0 %425, %v345
      %v427 = vpop.permute.xlu0 %426
      %v429 = vlaneseq
      %v430 = vshrl.u32 %v429, 7
      %v431 = vsub.s32 0, %v430
      %v432 = vrot.slane %v400, %v431
      %v433 = vmul.f32 %v403, %v432
      %v434 = vmul.f32 %v407, %v432
      %v435 = vmul.f32 %v411, %v432
      %v436 = vmul.f32 %v415, %v432
      %v437 = vmul.f32 %v419, %v432
      %v438 = vmul.f32 %v423, %v432
      %v439 = vmul.f32 %v427, %v432
      %v440 = vadd.f32 %v393, %v433
      %v441 = vadd.f32 %v394, %v434
      %v442 = vadd.f32 %v395, %v435
      %v443 = vadd.f32 %v396, %v436
      %v444 = vadd.f32 %v397, %v437
      %v445 = vadd.f32 %v398, %v438
      %v446 = vadd.f32 %v399, %v439
      %v447 = vld [vmem:[%s1 + $0x2] sm:$0x1]
      %448 = vset.pattern.permute.xlu0 2
      %449 = vperm.xlu0 %448, %v333
      %v450 = vpop.permute.xlu0 %449
      %452 = vset.pattern.permute.xlu0 2
      %453 = vperm.xlu0 %452, %v335
      %v454 = vpop.permute.xlu0 %453
      %456 = vset.pattern.permute.xlu0 2
      %457 = vperm.xlu0 %456, %v337
      %v458 = vpop.permute.xlu0 %457
      %460 = vset.pattern.permute.xlu0 2
      %461 = vperm.xlu0 %460, %v339
      %v462 = vpop.permute.xlu0 %461
      %464 = vset.pattern.permute.xlu0 2
      %465 = vperm.xlu0 %464, %v341
      %v466 = vpop.permute.xlu0 %465
      %468 = vset.pattern.permute.xlu0 2
      %469 = vperm.xlu0 %468, %v343
      %v470 = vpop.permute.xlu0 %469
      %472 = vset.pattern.permute.xlu0 2
      %473 = vperm.xlu0 %472, %v345
      %v474 = vpop.permute.xlu0 %473
      %v476 = vlaneseq
      %v477 = vshrl.u32 %v476, 7
      %v478 = vsub.s32 0, %v477
      %v479 = vrot.slane %v447, %v478
      %v480 = vmul.f32 %v450, %v479
      %v481 = vmul.f32 %v454, %v479
      %v482 = vmul.f32 %v458, %v479
      %v483 = vmul.f32 %v462, %v479
      %v484 = vmul.f32 %v466, %v479
      %v485 = vmul.f32 %v470, %v479
      %v486 = vmul.f32 %v474, %v479
      %v487 = vadd.f32 %v440, %v480
      %v488 = vadd.f32 %v441, %v481
      %v489 = vadd.f32 %v442, %v482
      %v490 = vadd.f32 %v443, %v483
      %v491 = vadd.f32 %v444, %v484
      %v492 = vadd.f32 %v445, %v485
      %v493 = vadd.f32 %v446, %v486
      %v494 = vld [vmem:[%s1 + $0x3] sm:$0x1]
      %495 = vset.pattern.permute.xlu0 3
      %496 = vperm.xlu0 %495, %v333
      %v497 = vpop.permute.xlu0 %496
      %499 = vset.pattern.permute.xlu0 3
      %500 = vperm.xlu0 %499, %v335
      %v501 = vpop.permute.xlu0 %500
      %503 = vset.pattern.permute.xlu0 3
      %504 = vperm.xlu0 %503, %v337
      %v505 = vpop.permute.xlu0 %504
      %507 = vset.pattern.permute.xlu0 3
      %508 = vperm.xlu0 %507, %v339
      %v509 = vpop.permute.xlu0 %508
      %511 = vset.pattern.permute.xlu0 3
      %512 = vperm.xlu0 %511, %v341
      %v513 = vpop.permute.xlu0 %512
      %515 = vset.pattern.permute.xlu0 3
      %516 = vperm.xlu0 %515, %v343
      %v517 = vpop.permute.xlu0 %516
      %519 = vset.pattern.permute.xlu0 3
      %520 = vperm.xlu0 %519, %v345
      %v521 = vpop.permute.xlu0 %520
      %v523 = vlaneseq
      %v524 = vshrl.u32 %v523, 7
      %v525 = vsub.s32 0, %v524
      %v526 = vrot.slane %v494, %v525
      %v527 = vmul.f32 %v497, %v526
      %v528 = vmul.f32 %v501, %v526
      %v529 = vmul.f32 %v505, %v526
      %v530 = vmul.f32 %v509, %v526
      %v531 = vmul.f32 %v513, %v526
      %v532 = vmul.f32 %v517, %v526
      %v533 = vmul.f32 %v521, %v526
      %v534 = vadd.f32 %v487, %v527
      %v535 = vadd.f32 %v488, %v528
      %v536 = vadd.f32 %v489, %v529
      %v537 = vadd.f32 %v490, %v530
      %v538 = vadd.f32 %v491, %v531
      %v539 = vadd.f32 %v492, %v532
      %v540 = vadd.f32 %v493, %v533
      %s541 = scalar_lea.vmem %s327, 1
      %v542 = vld [vmem:[%s541] ss:$2 sm:$0x7f]
      %s543 = scalar_lea.vmem %s327, 33
      %v544 = vld [vmem:[%s543] ss:$2 sm:$0x7f]
      %s545 = scalar_lea.vmem %s327, 65
      %v546 = vld [vmem:[%s545] ss:$2 sm:$0x7f]
      %s547 = scalar_lea.vmem %s327, 97
      %v548 = vld [vmem:[%s547] ss:$2 sm:$0x7f]
      %s549 = scalar_lea.vmem %s327, 129
      %v550 = vld [vmem:[%s549] ss:$2 sm:$0x7f]
      %s551 = scalar_lea.vmem %s327, 161
      %v552 = vld [vmem:[%s551] ss:$2 sm:$0x7f]
      %s553 = scalar_lea.vmem %s327, 193
      %v554 = vld [vmem:[%s553] ss:$2 sm:$0x7f]
      %v555 = vld [vmem:[%s1 + $0x4] sm:$0x1]
      %557 = vset.pattern.permute.xlu0 0
      %558 = vperm.xlu0 %557, %v542
      %v559 = vpop.permute.xlu0 %558
      %562 = vset.pattern.permute.xlu0 0
      %563 = vperm.xlu0 %562, %v544
      %v564 = vpop.permute.xlu0 %563
      %567 = vset.pattern.permute.xlu0 0
      %568 = vperm.xlu0 %567, %v546
      %v569 = vpop.permute.xlu0 %568
      %572 = vset.pattern.permute.xlu0 0
      %573 = vperm.xlu0 %572, %v548
      %v574 = vpop.permute.xlu0 %573
      %577 = vset.pattern.permute.xlu0 0
      %578 = vperm.xlu0 %577, %v550
      %v579 = vpop.permute.xlu0 %578
      %582 = vset.pattern.permute.xlu0 0
      %583 = vperm.xlu0 %582, %v552
      %v584 = vpop.permute.xlu0 %583
      %587 = vset.pattern.permute.xlu0 0
      %588 = vperm.xlu0 %587, %v554
      %v589 = vpop.permute.xlu0 %588
      %v591 = vlaneseq
      %v592 = vshrl.u32 %v591, 7
      %v593 = vsub.s32 0, %v592
      %v594 = vrot.slane %v555, %v593
      %v595 = vmul.f32 %v559, %v594
      %v596 = vmul.f32 %v564, %v594
      %v597 = vmul.f32 %v569, %v594
      %v598 = vmul.f32 %v574, %v594
      %v599 = vmul.f32 %v579, %v594
      %v600 = vmul.f32 %v584, %v594
      %v601 = vmul.f32 %v589, %v594
      %v602 = vadd.f32 %v534, %v595
      %v603 = vadd.f32 %v535, %v596
      %v604 = vadd.f32 %v536, %v597
      %v605 = vadd.f32 %v537, %v598
      %v606 = vadd.f32 %v538, %v599
      %v607 = vadd.f32 %v539, %v600
      %v608 = vadd.f32 %v540, %v601
      %v609 = vld [vmem:[%s1 + $0x5] sm:$0x1]
      %610 = vset.pattern.permute.xlu0 1
      %611 = vperm.xlu0 %610, %v542
      %v612 = vpop.permute.xlu0 %611
      %614 = vset.pattern.permute.xlu0 1
      %615 = vperm.xlu0 %614, %v544
      %v616 = vpop.permute.xlu0 %615
      %618 = vset.pattern.permute.xlu0 1
      %619 = vperm.xlu0 %618, %v546
      %v620 = vpop.permute.xlu0 %619
      %622 = vset.pattern.permute.xlu0 1
      %623 = vperm.xlu0 %622, %v548
      %v624 = vpop.permute.xlu0 %623
      %626 = vset.pattern.permute.xlu0 1
      %627 = vperm.xlu0 %626, %v550
      %v628 = vpop.permute.xlu0 %627
      %630 = vset.pattern.permute.xlu0 1
      %631 = vperm.xlu0 %630, %v552
      %v632 = vpop.permute.xlu0 %631
      %634 = vset.pattern.permute.xlu0 1
      %635 = vperm.xlu0 %634, %v554
      %v636 = vpop.permute.xlu0 %635
      %v638 = vlaneseq
      %v639 = vshrl.u32 %v638, 7
      %v640 = vsub.s32 0, %v639
      %v641 = vrot.slane %v609, %v640
      %v642 = vmul.f32 %v612, %v641
      %v643 = vmul.f32 %v616, %v641
      %v644 = vmul.f32 %v620, %v641
      %v645 = vmul.f32 %v624, %v641
      %v646 = vmul.f32 %v628, %v641
      %v647 = vmul.f32 %v632, %v641
      %v648 = vmul.f32 %v636, %v641
      %v649 = vadd.f32 %v602, %v642
      %v650 = vadd.f32 %v603, %v643
      %v651 = vadd.f32 %v604, %v644
      %v652 = vadd.f32 %v605, %v645
      %v653 = vadd.f32 %v606, %v646
      %v654 = vadd.f32 %v607, %v647
      %v655 = vadd.f32 %v608, %v648
      %v656 = vld [vmem:[%s1 + $0x6] sm:$0x1]
      %657 = vset.pattern.permute.xlu0 2
      %658 = vperm.xlu0 %657, %v542
      %v659 = vpop.permute.xlu0 %658
      %661 = vset.pattern.permute.xlu0 2
      %662 = vperm.xlu0 %661, %v544
      %v663 = vpop.permute.xlu0 %662
      %665 = vset.pattern.permute.xlu0 2
      %666 = vperm.xlu0 %665, %v546
      %v667 = vpop.permute.xlu0 %666
      %669 = vset.pattern.permute.xlu0 2
      %670 = vperm.xlu0 %669, %v548
      %v671 = vpop.permute.xlu0 %670
      %673 = vset.pattern.permute.xlu0 2
      %674 = vperm.xlu0 %673, %v550
      %v675 = vpop.permute.xlu0 %674
      %677 = vset.pattern.permute.xlu0 2
      %678 = vperm.xlu0 %677, %v552
      %v679 = vpop.permute.xlu0 %678
      %681 = vset.pattern.permute.xlu0 2
      %682 = vperm.xlu0 %681, %v554
      %v683 = vpop.permute.xlu0 %682
      %v685 = vlaneseq
      %v686 = vshrl.u32 %v685, 7
      %v687 = vsub.s32 0, %v686
      %v688 = vrot.slane %v656, %v687
      %v689 = vmul.f32 %v659, %v688
      %v690 = vmul.f32 %v663, %v688
      %v691 = vmul.f32 %v667, %v688
      %v692 = vmul.f32 %v671, %v688
      %v693 = vmul.f32 %v675, %v688
      %v694 = vmul.f32 %v679, %v688
      %v695 = vmul.f32 %v683, %v688
      %v696 = vadd.f32 %v649, %v689
      %v697 = vadd.f32 %v650, %v690
      %v698 = vadd.f32 %v651, %v691
      %v699 = vadd.f32 %v652, %v692
      %v700 = vadd.f32 %v653, %v693
      %v701 = vadd.f32 %v654, %v694
      %v702 = vadd.f32 %v655, %v695
      %v703 = vld [vmem:[%s1 + $0x7] sm:$0x1]
      %704 = vset.pattern.permute.xlu0 3
      %705 = vperm.xlu0 %704, %v542
      %v706 = vpop.permute.xlu0 %705
      %708 = vset.pattern.permute.xlu0 3
      %709 = vperm.xlu0 %708, %v544
      %v710 = vpop.permute.xlu0 %709
      %712 = vset.pattern.permute.xlu0 3
      %713 = vperm.xlu0 %712, %v546
      %v714 = vpop.permute.xlu0 %713
      %716 = vset.pattern.permute.xlu0 3
      %717 = vperm.xlu0 %716, %v548
      %v718 = vpop.permute.xlu0 %717
      %720 = vset.pattern.permute.xlu0 3
      %721 = vperm.xlu0 %720, %v550
      %v722 = vpop.permute.xlu0 %721
      %724 = vset.pattern.permute.xlu0 3
      %725 = vperm.xlu0 %724, %v552
      %v726 = vpop.permute.xlu0 %725
      %728 = vset.pattern.permute.xlu0 3
      %729 = vperm.xlu0 %728, %v554
      %v730 = vpop.permute.xlu0 %729
      %v732 = vlaneseq
      %v733 = vshrl.u32 %v732, 7
      %v734 = vsub.s32 0, %v733
      %v735 = vrot.slane %v703, %v734
      %v736 = vmul.f32 %v706, %v735
      %v737 = vmul.f32 %v710, %v735
      %v738 = vmul.f32 %v714, %v735
      %v739 = vmul.f32 %v718, %v735
      %v740 = vmul.f32 %v722, %v735
      %v741 = vmul.f32 %v726, %v735
      %v742 = vmul.f32 %v730, %v735
      %v743 = vadd.f32 %v696, %v736
      %v744 = vadd.f32 %v697, %v737
      %v745 = vadd.f32 %v698, %v738
      %v746 = vadd.f32 %v699, %v739
      %v747 = vadd.f32 %v700, %v740
      %v748 = vadd.f32 %v701, %v741
      %v749 = vadd.f32 %v702, %v742
      %s750 = scalar_lea.vmem %s327, 2
      %v751 = vld [vmem:[%s750] ss:$2 sm:$0x7f]
      %s752 = scalar_lea.vmem %s327, 34
      %v753 = vld [vmem:[%s752] ss:$2 sm:$0x7f]
      %s754 = scalar_lea.vmem %s327, 66
      %v755 = vld [vmem:[%s754] ss:$2 sm:$0x7f]
      %s756 = scalar_lea.vmem %s327, 98
      %v757 = vld [vmem:[%s756] ss:$2 sm:$0x7f]
      %s758 = scalar_lea.vmem %s327, 130
      %v759 = vld [vmem:[%s758] ss:$2 sm:$0x7f]
      %s760 = scalar_lea.vmem %s327, 162
      %v761 = vld [vmem:[%s760] ss:$2 sm:$0x7f]
      %s762 = scalar_lea.vmem %s327, 194
      %v763 = vld [vmem:[%s762] ss:$2 sm:$0x7f]
      %v764 = vld [vmem:[%s1 + $0x8] sm:$0x1]
      %766 = vset.pattern.permute.xlu0 0
      %767 = vperm.xlu0 %766, %v751
      %v768 = vpop.permute.xlu0 %767
      %771 = vset.pattern.permute.xlu0 0
      %772 = vperm.xlu0 %771, %v753
      %v773 = vpop.permute.xlu0 %772
      %776 = vset.pattern.permute.xlu0 0
      %777 = vperm.xlu0 %776, %v755
      %v778 = vpop.permute.xlu0 %777
      %781 = vset.pattern.permute.xlu0 0
      %782 = vperm.xlu0 %781, %v757
      %v783 = vpop.permute.xlu0 %782
      %786 = vset.pattern.permute.xlu0 0
      %787 = vperm.xlu0 %786, %v759
      %v788 = vpop.permute.xlu0 %787
      %791 = vset.pattern.permute.xlu0 0
      %792 = vperm.xlu0 %791, %v761
      %v793 = vpop.permute.xlu0 %792
      %796 = vset.pattern.permute.xlu0 0
      %797 = vperm.xlu0 %796, %v763
      %v798 = vpop.permute.xlu0 %797
      %v800 = vlaneseq
      %v801 = vshrl.u32 %v800, 7
      %v802 = vsub.s32 0, %v801
      %v803 = vrot.slane %v764, %v802
      %v804 = vmul.f32 %v768, %v803
      %v805 = vmul.f32 %v773, %v803
      %v806 = vmul.f32 %v778, %v803
      %v807 = vmul.f32 %v783, %v803
      %v808 = vmul.f32 %v788, %v803
      %v809 = vmul.f32 %v793, %v803
      %v810 = vmul.f32 %v798, %v803
      %v811 = vadd.f32 %v743, %v804
      %v812 = vadd.f32 %v744, %v805
      %v813 = vadd.f32 %v745, %v806
      %v814 = vadd.f32 %v746, %v807
      %v815 = vadd.f32 %v747, %v808
      %v816 = vadd.f32 %v748, %v809
      %v817 = vadd.f32 %v749, %v810
      %v818 = vld [vmem:[%s1 + $0x9] sm:$0x1]
      %819 = vset.pattern.permute.xlu0 1
      %820 = vperm.xlu0 %819, %v751
      %v821 = vpop.permute.xlu0 %820
      %823 = vset.pattern.permute.xlu0 1
      %824 = vperm.xlu0 %823, %v753
      %v825 = vpop.permute.xlu0 %824
      %827 = vset.pattern.permute.xlu0 1
      %828 = vperm.xlu0 %827, %v755
      %v829 = vpop.permute.xlu0 %828
      %831 = vset.pattern.permute.xlu0 1
      %832 = vperm.xlu0 %831, %v757
      %v833 = vpop.permute.xlu0 %832
      %835 = vset.pattern.permute.xlu0 1
      %836 = vperm.xlu0 %835, %v759
      %v837 = vpop.permute.xlu0 %836
      %839 = vset.pattern.permute.xlu0 1
      %840 = vperm.xlu0 %839, %v761
      %v841 = vpop.permute.xlu0 %840
      %843 = vset.pattern.permute.xlu0 1
      %844 = vperm.xlu0 %843, %v763
      %v845 = vpop.permute.xlu0 %844
      %v847 = vlaneseq
      %v848 = vshrl.u32 %v847, 7
      %v849 = vsub.s32 0, %v848
      %v850 = vrot.slane %v818, %v849
      %v851 = vmul.f32 %v821, %v850
      %v852 = vmul.f32 %v825, %v850
      %v853 = vmul.f32 %v829, %v850
      %v854 = vmul.f32 %v833, %v850
      %v855 = vmul.f32 %v837, %v850
      %v856 = vmul.f32 %v841, %v850
      %v857 = vmul.f32 %v845, %v850
      %v858 = vadd.f32 %v811, %v851
      %v859 = vadd.f32 %v812, %v852
      %v860 = vadd.f32 %v813, %v853
      %v861 = vadd.f32 %v814, %v854
      %v862 = vadd.f32 %v815, %v855
      %v863 = vadd.f32 %v816, %v856
      %v864 = vadd.f32 %v817, %v857
      %v865 = vld [vmem:[%s1 + $0xa] sm:$0x1]
      %866 = vset.pattern.permute.xlu0 2
      %867 = vperm.xlu0 %866, %v751
      %v868 = vpop.permute.xlu0 %867
      %870 = vset.pattern.permute.xlu0 2
      %871 = vperm.xlu0 %870, %v753
      %v872 = vpop.permute.xlu0 %871
      %874 = vset.pattern.permute.xlu0 2
      %875 = vperm.xlu0 %874, %v755
      %v876 = vpop.permute.xlu0 %875
      %878 = vset.pattern.permute.xlu0 2
      %879 = vperm.xlu0 %878, %v757
      %v880 = vpop.permute.xlu0 %879
      %882 = vset.pattern.permute.xlu0 2
      %883 = vperm.xlu0 %882, %v759
      %v884 = vpop.permute.xlu0 %883
      %886 = vset.pattern.permute.xlu0 2
      %887 = vperm.xlu0 %886, %v761
      %v888 = vpop.permute.xlu0 %887
      %890 = vset.pattern.permute.xlu0 2
      %891 = vperm.xlu0 %890, %v763
      %v892 = vpop.permute.xlu0 %891
      %v894 = vlaneseq
      %v895 = vshrl.u32 %v894, 7
      %v896 = vsub.s32 0, %v895
      %v897 = vrot.slane %v865, %v896
      %v898 = vmul.f32 %v868, %v897
      %v899 = vmul.f32 %v872, %v897
      %v900 = vmul.f32 %v876, %v897
      %v901 = vmul.f32 %v880, %v897
      %v902 = vmul.f32 %v884, %v897
      %v903 = vmul.f32 %v888, %v897
      %v904 = vmul.f32 %v892, %v897
      %v905 = vadd.f32 %v858, %v898
      %v906 = vadd.f32 %v859, %v899
      %v907 = vadd.f32 %v860, %v900
      %v908 = vadd.f32 %v861, %v901
      %v909 = vadd.f32 %v862, %v902
      %v910 = vadd.f32 %v863, %v903
      %v911 = vadd.f32 %v864, %v904
      %v912 = vld [vmem:[%s1 + $0xb] sm:$0x1]
      %913 = vset.pattern.permute.xlu0 3
      %914 = vperm.xlu0 %913, %v751
      %v915 = vpop.permute.xlu0 %914
      %917 = vset.pattern.permute.xlu0 3
      %918 = vperm.xlu0 %917, %v753
      %v919 = vpop.permute.xlu0 %918
      %921 = vset.pattern.permute.xlu0 3
      %922 = vperm.xlu0 %921, %v755
      %v923 = vpop.permute.xlu0 %922
      %925 = vset.pattern.permute.xlu0 3
      %926 = vperm.xlu0 %925, %v757
      %v927 = vpop.permute.xlu0 %926
      %929 = vset.pattern.permute.xlu0 3
      %930 = vperm.xlu0 %929, %v759
      %v931 = vpop.permute.xlu0 %930
      %933 = vset.pattern.permute.xlu0 3
      %934 = vperm.xlu0 %933, %v761
      %v935 = vpop.permute.xlu0 %934
      %937 = vset.pattern.permute.xlu0 3
      %938 = vperm.xlu0 %937, %v763
      %v939 = vpop.permute.xlu0 %938
      %v941 = vlaneseq
      %v942 = vshrl.u32 %v941, 7
      %v943 = vsub.s32 0, %v942
      %v944 = vrot.slane %v912, %v943
      %v945 = vmul.f32 %v915, %v944
      %v946 = vmul.f32 %v919, %v944
      %v947 = vmul.f32 %v923, %v944
      %v948 = vmul.f32 %v927, %v944
      %v949 = vmul.f32 %v931, %v944
      %v950 = vmul.f32 %v935, %v944
      %v951 = vmul.f32 %v939, %v944
      %v952 = vadd.f32 %v905, %v945
      %v953 = vadd.f32 %v906, %v946
      %v954 = vadd.f32 %v907, %v947
      %v955 = vadd.f32 %v908, %v948
      %v956 = vadd.f32 %v909, %v949
      %v957 = vadd.f32 %v910, %v950
      %v958 = vadd.f32 %v911, %v951
      %s959 = scalar_lea.vmem %s327, 16
      %v960 = vld [vmem:[%s959] ss:$2 sm:$0x7f]
      %s961 = scalar_lea.vmem %s959, 32
      %v962 = vld [vmem:[%s961] ss:$2 sm:$0x7f]
      %s963 = scalar_lea.vmem %s959, 64
      %v964 = vld [vmem:[%s963] ss:$2 sm:$0x7f]
      %s965 = scalar_lea.vmem %s959, 96
      %v966 = vld [vmem:[%s965] ss:$2 sm:$0x7f]
      %s967 = scalar_lea.vmem %s959, 128
      %v968 = vld [vmem:[%s967] ss:$2 sm:$0x7f]
      %s969 = scalar_lea.vmem %s959, 160
      %v970 = vld [vmem:[%s969] ss:$2 sm:$0x7f]
      %s971 = scalar_lea.vmem %s959, 192
      %v972 = vld [vmem:[%s971] ss:$2 sm:$0x7f]
      %v973 = vld [vmem:[%s1 + $0xc] sm:$0x1]
      %975 = vset.pattern.permute.xlu0 0
      %976 = vperm.xlu0 %975, %v960
      %v977 = vpop.permute.xlu0 %976
      %980 = vset.pattern.permute.xlu0 0
      %981 = vperm.xlu0 %980, %v962
      %v982 = vpop.permute.xlu0 %981
      %985 = vset.pattern.permute.xlu0 0
      %986 = vperm.xlu0 %985, %v964
      %v987 = vpop.permute.xlu0 %986
      %990 = vset.pattern.permute.xlu0 0
      %991 = vperm.xlu0 %990, %v966
      %v992 = vpop.permute.xlu0 %991
      %995 = vset.pattern.permute.xlu0 0
      %996 = vperm.xlu0 %995, %v968
      %v997 = vpop.permute.xlu0 %996
      %1000 = vset.pattern.permute.xlu0 0
      %1001 = vperm.xlu0 %1000, %v970
      %v1002 = vpop.permute.xlu0 %1001
      %1005 = vset.pattern.permute.xlu0 0
      %1006 = vperm.xlu0 %1005, %v972
      %v1007 = vpop.permute.xlu0 %1006
      %v1009 = vlaneseq
      %v1010 = vshrl.u32 %v1009, 7
      %v1011 = vsub.s32 0, %v1010
      %v1012 = vrot.slane %v973, %v1011
      %v1013 = vmul.f32 %v977, %v1012
      %v1014 = vmul.f32 %v982, %v1012
      %v1015 = vmul.f32 %v987, %v1012
      %v1016 = vmul.f32 %v992, %v1012
      %v1017 = vmul.f32 %v997, %v1012
      %v1018 = vmul.f32 %v1002, %v1012
      %v1019 = vmul.f32 %v1007, %v1012
      %v1020 = vadd.f32 %v952, %v1013
      %v1021 = vadd.f32 %v953, %v1014
      %v1022 = vadd.f32 %v954, %v1015
      %v1023 = vadd.f32 %v955, %v1016
      %v1024 = vadd.f32 %v956, %v1017
      %v1025 = vadd.f32 %v957, %v1018
      %v1026 = vadd.f32 %v958, %v1019
      %v1027 = vld [vmem:[%s1 + $0xd] sm:$0x1]
      %1028 = vset.pattern.permute.xlu0 1
      %1029 = vperm.xlu0 %1028, %v960
      %v1030 = vpop.permute.xlu0 %1029
      %1032 = vset.pattern.permute.xlu0 1
      %1033 = vperm.xlu0 %1032, %v962
      %v1034 = vpop.permute.xlu0 %1033
      %1036 = vset.pattern.permute.xlu0 1
      %1037 = vperm.xlu0 %1036, %v964
      %v1038 = vpop.permute.xlu0 %1037
      %1040 = vset.pattern.permute.xlu0 1
      %1041 = vperm.xlu0 %1040, %v966
      %v1042 = vpop.permute.xlu0 %1041
      %1044 = vset.pattern.permute.xlu0 1
      %1045 = vperm.xlu0 %1044, %v968
      %v1046 = vpop.permute.xlu0 %1045
      %1048 = vset.pattern.permute.xlu0 1
      %1049 = vperm.xlu0 %1048, %v970
      %v1050 = vpop.permute.xlu0 %1049
      %1052 = vset.pattern.permute.xlu0 1
      %1053 = vperm.xlu0 %1052, %v972
      %v1054 = vpop.permute.xlu0 %1053
      %v1056 = vlaneseq
      %v1057 = vshrl.u32 %v1056, 7
      %v1058 = vsub.s32 0, %v1057
      %v1059 = vrot.slane %v1027, %v1058
      %v1060 = vmul.f32 %v1030, %v1059
      %v1061 = vmul.f32 %v1034, %v1059
      %v1062 = vmul.f32 %v1038, %v1059
      %v1063 = vmul.f32 %v1042, %v1059
      %v1064 = vmul.f32 %v1046, %v1059
      %v1065 = vmul.f32 %v1050, %v1059
      %v1066 = vmul.f32 %v1054, %v1059
      %v1067 = vadd.f32 %v1020, %v1060
      %v1068 = vadd.f32 %v1021, %v1061
      %v1069 = vadd.f32 %v1022, %v1062
      %v1070 = vadd.f32 %v1023, %v1063
      %v1071 = vadd.f32 %v1024, %v1064
      %v1072 = vadd.f32 %v1025, %v1065
      %v1073 = vadd.f32 %v1026, %v1066
      %v1074 = vld [vmem:[%s1 + $0xe] sm:$0x1]
      %1075 = vset.pattern.permute.xlu0 2
      %1076 = vperm.xlu0 %1075, %v960
      %v1077 = vpop.permute.xlu0 %1076
      %1079 = vset.pattern.permute.xlu0 2
      %1080 = vperm.xlu0 %1079, %v962
      %v1081 = vpop.permute.xlu0 %1080
      %1083 = vset.pattern.permute.xlu0 2
      %1084 = vperm.xlu0 %1083, %v964
      %v1085 = vpop.permute.xlu0 %1084
      %1087 = vset.pattern.permute.xlu0 2
      %1088 = vperm.xlu0 %1087, %v966
      %v1089 = vpop.permute.xlu0 %1088
      %1091 = vset.pattern.permute.xlu0 2
      %1092 = vperm.xlu0 %1091, %v968
      %v1093 = vpop.permute.xlu0 %1092
      %1095 = vset.pattern.permute.xlu0 2
      %1096 = vperm.xlu0 %1095, %v970
      %v1097 = vpop.permute.xlu0 %1096
      %1099 = vset.pattern.permute.xlu0 2
      %1100 = vperm.xlu0 %1099, %v972
      %v1101 = vpop.permute.xlu0 %1100
      %v1103 = vlaneseq
      %v1104 = vshrl.u32 %v1103, 7
      %v1105 = vsub.s32 0, %v1104
      %v1106 = vrot.slane %v1074, %v1105
      %v1107 = vmul.f32 %v1077, %v1106
      %v1108 = vmul.f32 %v1081, %v1106
      %v1109 = vmul.f32 %v1085, %v1106
      %v1110 = vmul.f32 %v1089, %v1106
      %v1111 = vmul.f32 %v1093, %v1106
      %v1112 = vmul.f32 %v1097, %v1106
      %v1113 = vmul.f32 %v1101, %v1106
      %v1114 = vadd.f32 %v1067, %v1107
      %v1115 = vadd.f32 %v1068, %v1108
      %v1116 = vadd.f32 %v1069, %v1109
      %v1117 = vadd.f32 %v1070, %v1110
      %v1118 = vadd.f32 %v1071, %v1111
      %v1119 = vadd.f32 %v1072, %v1112
      %v1120 = vadd.f32 %v1073, %v1113
      %v1121 = vld [vmem:[%s1 + $0xf] sm:$0x1]
      %1122 = vset.pattern.permute.xlu0 3
      %1123 = vperm.xlu0 %1122, %v960
      %v1124 = vpop.permute.xlu0 %1123
      %1126 = vset.pattern.permute.xlu0 3
      %1127 = vperm.xlu0 %1126, %v962
      %v1128 = vpop.permute.xlu0 %1127
      %1130 = vset.pattern.permute.xlu0 3
      %1131 = vperm.xlu0 %1130, %v964
      %v1132 = vpop.permute.xlu0 %1131
      %1134 = vset.pattern.permute.xlu0 3
      %1135 = vperm.xlu0 %1134, %v966
      %v1136 = vpop.permute.xlu0 %1135
      %1138 = vset.pattern.permute.xlu0 3
      %1139 = vperm.xlu0 %1138, %v968
      %v1140 = vpop.permute.xlu0 %1139
      %1142 = vset.pattern.permute.xlu0 3
      %1143 = vperm.xlu0 %1142, %v970
      %v1144 = vpop.permute.xlu0 %1143
      %1146 = vset.pattern.permute.xlu0 3
      %1147 = vperm.xlu0 %1146, %v972
      %v1148 = vpop.permute.xlu0 %1147
      %v1150 = vlaneseq
      %v1151 = vshrl.u32 %v1150, 7
      %v1152 = vsub.s32 0, %v1151
      %v1153 = vrot.slane %v1121, %v1152
      %v1154 = vmul.f32 %v1124, %v1153
      %v1155 = vmul.f32 %v1128, %v1153
      %v1156 = vmul.f32 %v1132, %v1153
      %v1157 = vmul.f32 %v1136, %v1153
      %v1158 = vmul.f32 %v1140, %v1153
      %v1159 = vmul.f32 %v1144, %v1153
      %v1160 = vmul.f32 %v1148, %v1153
      %v1161 = vadd.f32 %v1114, %v1154
      %v1162 = vadd.f32 %v1115, %v1155
      %v1163 = vadd.f32 %v1116, %v1156
      %v1164 = vadd.f32 %v1117, %v1157
      %v1165 = vadd.f32 %v1118, %v1158
      %v1166 = vadd.f32 %v1119, %v1159
      %v1167 = vadd.f32 %v1120, %v1160
      %s1168 = scalar_lea.vmem %s959, 1
      %v1169 = vld [vmem:[%s1168] ss:$2 sm:$0x7f]
      %s1170 = scalar_lea.vmem %s959, 33
      %v1171 = vld [vmem:[%s1170] ss:$2 sm:$0x7f]
      %s1172 = scalar_lea.vmem %s959, 65
      %v1173 = vld [vmem:[%s1172] ss:$2 sm:$0x7f]
      %s1174 = scalar_lea.vmem %s959, 97
      %v1175 = vld [vmem:[%s1174] ss:$2 sm:$0x7f]
      %s1176 = scalar_lea.vmem %s959, 129
      %v1177 = vld [vmem:[%s1176] ss:$2 sm:$0x7f]
      %s1178 = scalar_lea.vmem %s959, 161
      %v1179 = vld [vmem:[%s1178] ss:$2 sm:$0x7f]
      %s1180 = scalar_lea.vmem %s959, 193
      %v1181 = vld [vmem:[%s1180] ss:$2 sm:$0x7f]
      %v1182 = vld [vmem:[%s1 + $0x10] sm:$0x1]
      %1184 = vset.pattern.permute.xlu0 0
      %1185 = vperm.xlu0 %1184, %v1169
      %v1186 = vpop.permute.xlu0 %1185
      %1189 = vset.pattern.permute.xlu0 0
      %1190 = vperm.xlu0 %1189, %v1171
      %v1191 = vpop.permute.xlu0 %1190
      %1194 = vset.pattern.permute.xlu0 0
      %1195 = vperm.xlu0 %1194, %v1173
      %v1196 = vpop.permute.xlu0 %1195
      %1199 = vset.pattern.permute.xlu0 0
      %1200 = vperm.xlu0 %1199, %v1175
      %v1201 = vpop.permute.xlu0 %1200
      %1204 = vset.pattern.permute.xlu0 0
      %1205 = vperm.xlu0 %1204, %v1177
      %v1206 = vpop.permute.xlu0 %1205
      %1209 = vset.pattern.permute.xlu0 0
      %1210 = vperm.xlu0 %1209, %v1179
      %v1211 = vpop.permute.xlu0 %1210
      %1214 = vset.pattern.permute.xlu0 0
      %1215 = vperm.xlu0 %1214, %v1181
      %v1216 = vpop.permute.xlu0 %1215
      %v1218 = vlaneseq
      %v1219 = vshrl.u32 %v1218, 7
      %v1220 = vsub.s32 0, %v1219
      %v1221 = vrot.slane %v1182, %v1220
      %v1222 = vmul.f32 %v1186, %v1221
      %v1223 = vmul.f32 %v1191, %v1221
      %v1224 = vmul.f32 %v1196, %v1221
      %v1225 = vmul.f32 %v1201, %v1221
      %v1226 = vmul.f32 %v1206, %v1221
      %v1227 = vmul.f32 %v1211, %v1221
      %v1228 = vmul.f32 %v1216, %v1221
      %v1229 = vadd.f32 %v1161, %v1222
      %v1230 = vadd.f32 %v1162, %v1223
      %v1231 = vadd.f32 %v1163, %v1224
      %v1232 = vadd.f32 %v1164, %v1225
      %v1233 = vadd.f32 %v1165, %v1226
      %v1234 = vadd.f32 %v1166, %v1227
      %v1235 = vadd.f32 %v1167, %v1228
      %v1236 = vld [vmem:[%s1 + $0x11] sm:$0x1]
      %1237 = vset.pattern.permute.xlu0 1
      %1238 = vperm.xlu0 %1237, %v1169
      %v1239 = vpop.permute.xlu0 %1238
      %1241 = vset.pattern.permute.xlu0 1
      %1242 = vperm.xlu0 %1241, %v1171
      %v1243 = vpop.permute.xlu0 %1242
      %1245 = vset.pattern.permute.xlu0 1
      %1246 = vperm.xlu0 %1245, %v1173
      %v1247 = vpop.permute.xlu0 %1246
      %1249 = vset.pattern.permute.xlu0 1
      %1250 = vperm.xlu0 %1249, %v1175
      %v1251 = vpop.permute.xlu0 %1250
      %1253 = vset.pattern.permute.xlu0 1
      %1254 = vperm.xlu0 %1253, %v1177
      %v1255 = vpop.permute.xlu0 %1254
      %1257 = vset.pattern.permute.xlu0 1
      %1258 = vperm.xlu0 %1257, %v1179
      %v1259 = vpop.permute.xlu0 %1258
      %1261 = vset.pattern.permute.xlu0 1
      %1262 = vperm.xlu0 %1261, %v1181
      %v1263 = vpop.permute.xlu0 %1262
      %v1265 = vlaneseq
      %v1266 = vshrl.u32 %v1265, 7
      %v1267 = vsub.s32 0, %v1266
      %v1268 = vrot.slane %v1236, %v1267
      %v1269 = vmul.f32 %v1239, %v1268
      %v1270 = vmul.f32 %v1243, %v1268
      %v1271 = vmul.f32 %v1247, %v1268
      %v1272 = vmul.f32 %v1251, %v1268
      %v1273 = vmul.f32 %v1255, %v1268
      %v1274 = vmul.f32 %v1259, %v1268
      %v1275 = vmul.f32 %v1263, %v1268
      %v1276 = vadd.f32 %v1229, %v1269
      %v1277 = vadd.f32 %v1230, %v1270
      %v1278 = vadd.f32 %v1231, %v1271
      %v1279 = vadd.f32 %v1232, %v1272
      %v1280 = vadd.f32 %v1233, %v1273
      %v1281 = vadd.f32 %v1234, %v1274
      %v1282 = vadd.f32 %v1235, %v1275
      %v1283 = vld [vmem:[%s1 + $0x12] sm:$0x1]
      %1284 = vset.pattern.permute.xlu0 2
      %1285 = vperm.xlu0 %1284, %v1169
      %v1286 = vpop.permute.xlu0 %1285
      %1288 = vset.pattern.permute.xlu0 2
      %1289 = vperm.xlu0 %1288, %v1171
      %v1290 = vpop.permute.xlu0 %1289
      %1292 = vset.pattern.permute.xlu0 2
      %1293 = vperm.xlu0 %1292, %v1173
      %v1294 = vpop.permute.xlu0 %1293
      %1296 = vset.pattern.permute.xlu0 2
      %1297 = vperm.xlu0 %1296, %v1175
      %v1298 = vpop.permute.xlu0 %1297
      %1300 = vset.pattern.permute.xlu0 2
      %1301 = vperm.xlu0 %1300, %v1177
      %v1302 = vpop.permute.xlu0 %1301
      %1304 = vset.pattern.permute.xlu0 2
      %1305 = vperm.xlu0 %1304, %v1179
      %v1306 = vpop.permute.xlu0 %1305
      %1308 = vset.pattern.permute.xlu0 2
      %1309 = vperm.xlu0 %1308, %v1181
      %v1310 = vpop.permute.xlu0 %1309
      %v1312 = vlaneseq
      %v1313 = vshrl.u32 %v1312, 7
      %v1314 = vsub.s32 0, %v1313
      %v1315 = vrot.slane %v1283, %v1314
      %v1316 = vmul.f32 %v1286, %v1315
      %v1317 = vmul.f32 %v1290, %v1315
      %v1318 = vmul.f32 %v1294, %v1315
      %v1319 = vmul.f32 %v1298, %v1315
      %v1320 = vmul.f32 %v1302, %v1315
      %v1321 = vmul.f32 %v1306, %v1315
      %v1322 = vmul.f32 %v1310, %v1315
      %v1323 = vadd.f32 %v1276, %v1316
      %v1324 = vadd.f32 %v1277, %v1317
      %v1325 = vadd.f32 %v1278, %v1318
      %v1326 = vadd.f32 %v1279, %v1319
      %v1327 = vadd.f32 %v1280, %v1320
      %v1328 = vadd.f32 %v1281, %v1321
      %v1329 = vadd.f32 %v1282, %v1322
      %v1330 = vld [vmem:[%s1 + $0x13] sm:$0x1]
      %1331 = vset.pattern.permute.xlu0 3
      %1332 = vperm.xlu0 %1331, %v1169
      %v1333 = vpop.permute.xlu0 %1332
      %1335 = vset.pattern.permute.xlu0 3
      %1336 = vperm.xlu0 %1335, %v1171
      %v1337 = vpop.permute.xlu0 %1336
      %1339 = vset.pattern.permute.xlu0 3
      %1340 = vperm.xlu0 %1339, %v1173
      %v1341 = vpop.permute.xlu0 %1340
      %1343 = vset.pattern.permute.xlu0 3
      %1344 = vperm.xlu0 %1343, %v1175
      %v1345 = vpop.permute.xlu0 %1344
      %1347 = vset.pattern.permute.xlu0 3
      %1348 = vperm.xlu0 %1347, %v1177
      %v1349 = vpop.permute.xlu0 %1348
      %1351 = vset.pattern.permute.xlu0 3
      %1352 = vperm.xlu0 %1351, %v1179
      %v1353 = vpop.permute.xlu0 %1352
      %1355 = vset.pattern.permute.xlu0 3
      %1356 = vperm.xlu0 %1355, %v1181
      %v1357 = vpop.permute.xlu0 %1356
      %v1359 = vlaneseq
      %v1360 = vshrl.u32 %v1359, 7
      %v1361 = vsub.s32 0, %v1360
      %v1362 = vrot.slane %v1330, %v1361
      %v1363 = vmul.f32 %v1333, %v1362
      %v1364 = vmul.f32 %v1337, %v1362
      %v1365 = vmul.f32 %v1341, %v1362
      %v1366 = vmul.f32 %v1345, %v1362
      %v1367 = vmul.f32 %v1349, %v1362
      %v1368 = vmul.f32 %v1353, %v1362
      %v1369 = vmul.f32 %v1357, %v1362
      %v1370 = vadd.f32 %v1323, %v1363
      %v1371 = vadd.f32 %v1324, %v1364
      %v1372 = vadd.f32 %v1325, %v1365
      %v1373 = vadd.f32 %v1326, %v1366
      %v1374 = vadd.f32 %v1327, %v1367
      %v1375 = vadd.f32 %v1328, %v1368
      %v1376 = vadd.f32 %v1329, %v1369
      %s1377 = scalar_lea.vmem %s959, 2
      %v1378 = vld [vmem:[%s1377] ss:$2 sm:$0x7f]
      %s1379 = scalar_lea.vmem %s959, 34
      %v1380 = vld [vmem:[%s1379] ss:$2 sm:$0x7f]
      %s1381 = scalar_lea.vmem %s959, 66
      %v1382 = vld [vmem:[%s1381] ss:$2 sm:$0x7f]
      %s1383 = scalar_lea.vmem %s959, 98
      %v1384 = vld [vmem:[%s1383] ss:$2 sm:$0x7f]
      %s1385 = scalar_lea.vmem %s959, 130
      %v1386 = vld [vmem:[%s1385] ss:$2 sm:$0x7f]
      %s1387 = scalar_lea.vmem %s959, 162
      %v1388 = vld [vmem:[%s1387] ss:$2 sm:$0x7f]
      %s1389 = scalar_lea.vmem %s959, 194
      %v1390 = vld [vmem:[%s1389] ss:$2 sm:$0x7f]
      %v1391 = vld [vmem:[%s1 + $0x14] sm:$0x1]
      %1393 = vset.pattern.permute.xlu0 0
      %1394 = vperm.xlu0 %1393, %v1378
      %v1395 = vpop.permute.xlu0 %1394
      %1398 = vset.pattern.permute.xlu0 0
      %1399 = vperm.xlu0 %1398, %v1380
      %v1400 = vpop.permute.xlu0 %1399
      %1403 = vset.pattern.permute.xlu0 0
      %1404 = vperm.xlu0 %1403, %v1382
      %v1405 = vpop.permute.xlu0 %1404
      %1408 = vset.pattern.permute.xlu0 0
      %1409 = vperm.xlu0 %1408, %v1384
      %v1410 = vpop.permute.xlu0 %1409
      %1413 = vset.pattern.permute.xlu0 0
      %1414 = vperm.xlu0 %1413, %v1386
      %v1415 = vpop.permute.xlu0 %1414
      %1418 = vset.pattern.permute.xlu0 0
      %1419 = vperm.xlu0 %1418, %v1388
      %v1420 = vpop.permute.xlu0 %1419
      %1423 = vset.pattern.permute.xlu0 0
      %1424 = vperm.xlu0 %1423, %v1390
      %v1425 = vpop.permute.xlu0 %1424
      %v1427 = vlaneseq
      %v1428 = vshrl.u32 %v1427, 7
      %v1429 = vsub.s32 0, %v1428
      %v1430 = vrot.slane %v1391, %v1429
      %v1431 = vmul.f32 %v1395, %v1430
      %v1432 = vmul.f32 %v1400, %v1430
      %v1433 = vmul.f32 %v1405, %v1430
      %v1434 = vmul.f32 %v1410, %v1430
      %v1435 = vmul.f32 %v1415, %v1430
      %v1436 = vmul.f32 %v1420, %v1430
      %v1437 = vmul.f32 %v1425, %v1430
      %v1438 = vadd.f32 %v1370, %v1431
      %v1439 = vadd.f32 %v1371, %v1432
      %v1440 = vadd.f32 %v1372, %v1433
      %v1441 = vadd.f32 %v1373, %v1434
      %v1442 = vadd.f32 %v1374, %v1435
      %v1443 = vadd.f32 %v1375, %v1436
      %v1444 = vadd.f32 %v1376, %v1437
      %v1445 = vld [vmem:[%s1 + $0x15] sm:$0x1]
      %1446 = vset.pattern.permute.xlu0 1
      %1447 = vperm.xlu0 %1446, %v1378
      %v1448 = vpop.permute.xlu0 %1447
      %1450 = vset.pattern.permute.xlu0 1
      %1451 = vperm.xlu0 %1450, %v1380
      %v1452 = vpop.permute.xlu0 %1451
      %1454 = vset.pattern.permute.xlu0 1
      %1455 = vperm.xlu0 %1454, %v1382
      %v1456 = vpop.permute.xlu0 %1455
      %1458 = vset.pattern.permute.xlu0 1
      %1459 = vperm.xlu0 %1458, %v1384
      %v1460 = vpop.permute.xlu0 %1459
      %1462 = vset.pattern.permute.xlu0 1
      %1463 = vperm.xlu0 %1462, %v1386
      %v1464 = vpop.permute.xlu0 %1463
      %1466 = vset.pattern.permute.xlu0 1
      %1467 = vperm.xlu0 %1466, %v1388
      %v1468 = vpop.permute.xlu0 %1467
      %1470 = vset.pattern.permute.xlu0 1
      %1471 = vperm.xlu0 %1470, %v1390
      %v1472 = vpop.permute.xlu0 %1471
      %v1474 = vlaneseq
      %v1475 = vshrl.u32 %v1474, 7
      %v1476 = vsub.s32 0, %v1475
      %v1477 = vrot.slane %v1445, %v1476
      %v1478 = vmul.f32 %v1448, %v1477
      %v1479 = vmul.f32 %v1452, %v1477
      %v1480 = vmul.f32 %v1456, %v1477
      %v1481 = vmul.f32 %v1460, %v1477
      %v1482 = vmul.f32 %v1464, %v1477
      %v1483 = vmul.f32 %v1468, %v1477
      %v1484 = vmul.f32 %v1472, %v1477
      %v1485 = vadd.f32 %v1438, %v1478
      %v1486 = vadd.f32 %v1439, %v1479
      %v1487 = vadd.f32 %v1440, %v1480
      %v1488 = vadd.f32 %v1441, %v1481
      %v1489 = vadd.f32 %v1442, %v1482
      %v1490 = vadd.f32 %v1443, %v1483
      %v1491 = vadd.f32 %v1444, %v1484
      %v1492 = vld [vmem:[%s1 + $0x16] sm:$0x1]
      %1493 = vset.pattern.permute.xlu0 2
      %1494 = vperm.xlu0 %1493, %v1378
      %v1495 = vpop.permute.xlu0 %1494
      %1497 = vset.pattern.permute.xlu0 2
      %1498 = vperm.xlu0 %1497, %v1380
      %v1499 = vpop.permute.xlu0 %1498
      %1501 = vset.pattern.permute.xlu0 2
      %1502 = vperm.xlu0 %1501, %v1382
      %v1503 = vpop.permute.xlu0 %1502
      %1505 = vset.pattern.permute.xlu0 2
      %1506 = vperm.xlu0 %1505, %v1384
      %v1507 = vpop.permute.xlu0 %1506
      %1509 = vset.pattern.permute.xlu0 2
      %1510 = vperm.xlu0 %1509, %v1386
      %v1511 = vpop.permute.xlu0 %1510
      %1513 = vset.pattern.permute.xlu0 2
      %1514 = vperm.xlu0 %1513, %v1388
      %v1515 = vpop.permute.xlu0 %1514
      %1517 = vset.pattern.permute.xlu0 2
      %1518 = vperm.xlu0 %1517, %v1390
      %v1519 = vpop.permute.xlu0 %1518
      %v1521 = vlaneseq
      %v1522 = vshrl.u32 %v1521, 7
      %v1523 = vsub.s32 0, %v1522
      %v1524 = vrot.slane %v1492, %v1523
      %v1525 = vmul.f32 %v1495, %v1524
      %v1526 = vmul.f32 %v1499, %v1524
      %v1527 = vmul.f32 %v1503, %v1524
      %v1528 = vmul.f32 %v1507, %v1524
      %v1529 = vmul.f32 %v1511, %v1524
      %v1530 = vmul.f32 %v1515, %v1524
      %v1531 = vmul.f32 %v1519, %v1524
      %v1532 = vadd.f32 %v1485, %v1525
      %v1533 = vadd.f32 %v1486, %v1526
      %v1534 = vadd.f32 %v1487, %v1527
      %v1535 = vadd.f32 %v1488, %v1528
      %v1536 = vadd.f32 %v1489, %v1529
      %v1537 = vadd.f32 %v1490, %v1530
      %v1538 = vadd.f32 %v1491, %v1531
      %v1539 = vld [vmem:[%s1 + $0x17] sm:$0x1]
      %1540 = vset.pattern.permute.xlu0 3
      %1541 = vperm.xlu0 %1540, %v1378
      %v1542 = vpop.permute.xlu0 %1541
      %1544 = vset.pattern.permute.xlu0 3
      %1545 = vperm.xlu0 %1544, %v1380
      %v1546 = vpop.permute.xlu0 %1545
      %1548 = vset.pattern.permute.xlu0 3
      %1549 = vperm.xlu0 %1548, %v1382
      %v1550 = vpop.permute.xlu0 %1549
      %1552 = vset.pattern.permute.xlu0 3
      %1553 = vperm.xlu0 %1552, %v1384
      %v1554 = vpop.permute.xlu0 %1553
      %1556 = vset.pattern.permute.xlu0 3
      %1557 = vperm.xlu0 %1556, %v1386
      %v1558 = vpop.permute.xlu0 %1557
      %1560 = vset.pattern.permute.xlu0 3
      %1561 = vperm.xlu0 %1560, %v1388
      %v1562 = vpop.permute.xlu0 %1561
      %1564 = vset.pattern.permute.xlu0 3
      %1565 = vperm.xlu0 %1564, %v1390
      %v1566 = vpop.permute.xlu0 %1565
      %v1568 = vlaneseq
      %v1569 = vshrl.u32 %v1568, 7
      %v1570 = vsub.s32 0, %v1569
      %v1571 = vrot.slane %v1539, %v1570
      %v1572 = vmul.f32 %v1542, %v1571
      %v1573 = vmul.f32 %v1546, %v1571
      %v1574 = vmul.f32 %v1550, %v1571
      %v1575 = vmul.f32 %v1554, %v1571
      %v1576 = vmul.f32 %v1558, %v1571
      %v1577 = vmul.f32 %v1562, %v1571
      %v1578 = vmul.f32 %v1566, %v1571
      %v1579 = vadd.f32 %v1532, %v1572
      %v1580 = vadd.f32 %v1533, %v1573
      %v1581 = vadd.f32 %v1534, %v1574
      %v1582 = vadd.f32 %v1535, %v1575
      %v1583 = vadd.f32 %v1536, %v1576
      %v1584 = vadd.f32 %v1537, %v1577
      %v1585 = vadd.f32 %v1538, %v1578
      %s1586 = scalar_lea.vmem %s327, 32
      %v1587 = vld [vmem:[%s1586] ss:$2 sm:$0x7f]
      %s1588 = scalar_lea.vmem %s1586, 32
      %v1589 = vld [vmem:[%s1588] ss:$2 sm:$0x7f]
      %s1590 = scalar_lea.vmem %s1586, 64
      %v1591 = vld [vmem:[%s1590] ss:$2 sm:$0x7f]
      %s1592 = scalar_lea.vmem %s1586, 96
      %v1593 = vld [vmem:[%s1592] ss:$2 sm:$0x7f]
      %s1594 = scalar_lea.vmem %s1586, 128
      %v1595 = vld [vmem:[%s1594] ss:$2 sm:$0x7f]
      %s1596 = scalar_lea.vmem %s1586, 160
      %v1597 = vld [vmem:[%s1596] ss:$2 sm:$0x7f]
      %s1598 = scalar_lea.vmem %s1586, 192
      %v1599 = vld [vmem:[%s1598] ss:$2 sm:$0x7f]
      %v1600 = vld [vmem:[%s1 + $0x18] sm:$0x1]
      %1602 = vset.pattern.permute.xlu0 0
      %1603 = vperm.xlu0 %1602, %v1587
      %v1604 = vpop.permute.xlu0 %1603
      %1607 = vset.pattern.permute.xlu0 0
      %1608 = vperm.xlu0 %1607, %v1589
      %v1609 = vpop.permute.xlu0 %1608
      %1612 = vset.pattern.permute.xlu0 0
      %1613 = vperm.xlu0 %1612, %v1591
      %v1614 = vpop.permute.xlu0 %1613
      %1617 = vset.pattern.permute.xlu0 0
      %1618 = vperm.xlu0 %1617, %v1593
      %v1619 = vpop.permute.xlu0 %1618
      %1622 = vset.pattern.permute.xlu0 0
      %1623 = vperm.xlu0 %1622, %v1595
      %v1624 = vpop.permute.xlu0 %1623
      %1627 = vset.pattern.permute.xlu0 0
      %1628 = vperm.xlu0 %1627, %v1597
      %v1629 = vpop.permute.xlu0 %1628
      %1632 = vset.pattern.permute.xlu0 0
      %1633 = vperm.xlu0 %1632, %v1599
      %v1634 = vpop.permute.xlu0 %1633
      %v1636 = vlaneseq
      %v1637 = vshrl.u32 %v1636, 7
      %v1638 = vsub.s32 0, %v1637
      %v1639 = vrot.slane %v1600, %v1638
      %v1640 = vmul.f32 %v1604, %v1639
      %v1641 = vmul.f32 %v1609, %v1639
      %v1642 = vmul.f32 %v1614, %v1639
      %v1643 = vmul.f32 %v1619, %v1639
      %v1644 = vmul.f32 %v1624, %v1639
      %v1645 = vmul.f32 %v1629, %v1639
      %v1646 = vmul.f32 %v1634, %v1639
      %v1647 = vadd.f32 %v1579, %v1640
      %v1648 = vadd.f32 %v1580, %v1641
      %v1649 = vadd.f32 %v1581, %v1642
      %v1650 = vadd.f32 %v1582, %v1643
      %v1651 = vadd.f32 %v1583, %v1644
      %v1652 = vadd.f32 %v1584, %v1645
      %v1653 = vadd.f32 %v1585, %v1646
      %v1654 = vld [vmem:[%s1 + $0x19] sm:$0x1]
      %1655 = vset.pattern.permute.xlu0 1
      %1656 = vperm.xlu0 %1655, %v1587
      %v1657 = vpop.permute.xlu0 %1656
      %1659 = vset.pattern.permute.xlu0 1
      %1660 = vperm.xlu0 %1659, %v1589
      %v1661 = vpop.permute.xlu0 %1660
      %1663 = vset.pattern.permute.xlu0 1
      %1664 = vperm.xlu0 %1663, %v1591
      %v1665 = vpop.permute.xlu0 %1664
      %1667 = vset.pattern.permute.xlu0 1
      %1668 = vperm.xlu0 %1667, %v1593
      %v1669 = vpop.permute.xlu0 %1668
      %1671 = vset.pattern.permute.xlu0 1
      %1672 = vperm.xlu0 %1671, %v1595
      %v1673 = vpop.permute.xlu0 %1672
      %1675 = vset.pattern.permute.xlu0 1
      %1676 = vperm.xlu0 %1675, %v1597
      %v1677 = vpop.permute.xlu0 %1676
      %1679 = vset.pattern.permute.xlu0 1
      %1680 = vperm.xlu0 %1679, %v1599
      %v1681 = vpop.permute.xlu0 %1680
      %v1683 = vlaneseq
      %v1684 = vshrl.u32 %v1683, 7
      %v1685 = vsub.s32 0, %v1684
      %v1686 = vrot.slane %v1654, %v1685
      %v1687 = vmul.f32 %v1657, %v1686
      %v1688 = vmul.f32 %v1661, %v1686
      %v1689 = vmul.f32 %v1665, %v1686
      %v1690 = vmul.f32 %v1669, %v1686
      %v1691 = vmul.f32 %v1673, %v1686
      %v1692 = vmul.f32 %v1677, %v1686
      %v1693 = vmul.f32 %v1681, %v1686
      %v1694 = vadd.f32 %v1647, %v1687
      %v1695 = vadd.f32 %v1648, %v1688
      %v1696 = vadd.f32 %v1649, %v1689
      %v1697 = vadd.f32 %v1650, %v1690
      %v1698 = vadd.f32 %v1651, %v1691
      %v1699 = vadd.f32 %v1652, %v1692
      %v1700 = vadd.f32 %v1653, %v1693
      %v1701 = vld [vmem:[%s1 + $0x1a] sm:$0x1]
      %1702 = vset.pattern.permute.xlu0 2
      %1703 = vperm.xlu0 %1702, %v1587
      %v1704 = vpop.permute.xlu0 %1703
      %1706 = vset.pattern.permute.xlu0 2
      %1707 = vperm.xlu0 %1706, %v1589
      %v1708 = vpop.permute.xlu0 %1707
      %1710 = vset.pattern.permute.xlu0 2
      %1711 = vperm.xlu0 %1710, %v1591
      %v1712 = vpop.permute.xlu0 %1711
      %1714 = vset.pattern.permute.xlu0 2
      %1715 = vperm.xlu0 %1714, %v1593
      %v1716 = vpop.permute.xlu0 %1715
      %1718 = vset.pattern.permute.xlu0 2
      %1719 = vperm.xlu0 %1718, %v1595
      %v1720 = vpop.permute.xlu0 %1719
      %1722 = vset.pattern.permute.xlu0 2
      %1723 = vperm.xlu0 %1722, %v1597
      %v1724 = vpop.permute.xlu0 %1723
      %1726 = vset.pattern.permute.xlu0 2
      %1727 = vperm.xlu0 %1726, %v1599
      %v1728 = vpop.permute.xlu0 %1727
      %v1730 = vlaneseq
      %v1731 = vshrl.u32 %v1730, 7
      %v1732 = vsub.s32 0, %v1731
      %v1733 = vrot.slane %v1701, %v1732
      %v1734 = vmul.f32 %v1704, %v1733
      %v1735 = vmul.f32 %v1708, %v1733
      %v1736 = vmul.f32 %v1712, %v1733
      %v1737 = vmul.f32 %v1716, %v1733
      %v1738 = vmul.f32 %v1720, %v1733
      %v1739 = vmul.f32 %v1724, %v1733
      %v1740 = vmul.f32 %v1728, %v1733
      %v1741 = vadd.f32 %v1694, %v1734
      %v1742 = vadd.f32 %v1695, %v1735
      %v1743 = vadd.f32 %v1696, %v1736
      %v1744 = vadd.f32 %v1697, %v1737
      %v1745 = vadd.f32 %v1698, %v1738
      %v1746 = vadd.f32 %v1699, %v1739
      %v1747 = vadd.f32 %v1700, %v1740
      %v1748 = vld [vmem:[%s1 + $0x1b] sm:$0x1]
      %1749 = vset.pattern.permute.xlu0 3
      %1750 = vperm.xlu0 %1749, %v1587
      %v1751 = vpop.permute.xlu0 %1750
      %1753 = vset.pattern.permute.xlu0 3
      %1754 = vperm.xlu0 %1753, %v1589
      %v1755 = vpop.permute.xlu0 %1754
      %1757 = vset.pattern.permute.xlu0 3
      %1758 = vperm.xlu0 %1757, %v1591
      %v1759 = vpop.permute.xlu0 %1758
      %1761 = vset.pattern.permute.xlu0 3
      %1762 = vperm.xlu0 %1761, %v1593
      %v1763 = vpop.permute.xlu0 %1762
      %1765 = vset.pattern.permute.xlu0 3
      %1766 = vperm.xlu0 %1765, %v1595
      %v1767 = vpop.permute.xlu0 %1766
      %1769 = vset.pattern.permute.xlu0 3
      %1770 = vperm.xlu0 %1769, %v1597
      %v1771 = vpop.permute.xlu0 %1770
      %1773 = vset.pattern.permute.xlu0 3
      %1774 = vperm.xlu0 %1773, %v1599
      %v1775 = vpop.permute.xlu0 %1774
      %v1777 = vlaneseq
      %v1778 = vshrl.u32 %v1777, 7
      %v1779 = vsub.s32 0, %v1778
      %v1780 = vrot.slane %v1748, %v1779
      %v1781 = vmul.f32 %v1751, %v1780
      %v1782 = vmul.f32 %v1755, %v1780
      %v1783 = vmul.f32 %v1759, %v1780
      %v1784 = vmul.f32 %v1763, %v1780
      %v1785 = vmul.f32 %v1767, %v1780
      %v1786 = vmul.f32 %v1771, %v1780
      %v1787 = vmul.f32 %v1775, %v1780
      %v1788 = vadd.f32 %v1741, %v1781
      %v1789 = vadd.f32 %v1742, %v1782
      %v1790 = vadd.f32 %v1743, %v1783
      %v1791 = vadd.f32 %v1744, %v1784
      %v1792 = vadd.f32 %v1745, %v1785
      %v1793 = vadd.f32 %v1746, %v1786
      %v1794 = vadd.f32 %v1747, %v1787
      %s1795 = scalar_lea.vmem %s1586, 1
      %v1796 = vld [vmem:[%s1795] ss:$2 sm:$0x7f]
      %s1797 = scalar_lea.vmem %s1586, 33
      %v1798 = vld [vmem:[%s1797] ss:$2 sm:$0x7f]
      %s1799 = scalar_lea.vmem %s1586, 65
      %v1800 = vld [vmem:[%s1799] ss:$2 sm:$0x7f]
      %s1801 = scalar_lea.vmem %s1586, 97
      %v1802 = vld [vmem:[%s1801] ss:$2 sm:$0x7f]
      %s1803 = scalar_lea.vmem %s1586, 129
      %v1804 = vld [vmem:[%s1803] ss:$2 sm:$0x7f]
      %s1805 = scalar_lea.vmem %s1586, 161
      %v1806 = vld [vmem:[%s1805] ss:$2 sm:$0x7f]
      %s1807 = scalar_lea.vmem %s1586, 193
      %v1808 = vld [vmem:[%s1807] ss:$2 sm:$0x7f]
      %v1809 = vld [vmem:[%s1 + $0x1c] sm:$0x1]
      %1811 = vset.pattern.permute.xlu0 0
      %1812 = vperm.xlu0 %1811, %v1796
      %v1813 = vpop.permute.xlu0 %1812
      %1816 = vset.pattern.permute.xlu0 0
      %1817 = vperm.xlu0 %1816, %v1798
      %v1818 = vpop.permute.xlu0 %1817
      %1821 = vset.pattern.permute.xlu0 0
      %1822 = vperm.xlu0 %1821, %v1800
      %v1823 = vpop.permute.xlu0 %1822
      %1826 = vset.pattern.permute.xlu0 0
      %1827 = vperm.xlu0 %1826, %v1802
      %v1828 = vpop.permute.xlu0 %1827
      %1831 = vset.pattern.permute.xlu0 0
      %1832 = vperm.xlu0 %1831, %v1804
      %v1833 = vpop.permute.xlu0 %1832
      %1836 = vset.pattern.permute.xlu0 0
      %1837 = vperm.xlu0 %1836, %v1806
      %v1838 = vpop.permute.xlu0 %1837
      %1841 = vset.pattern.permute.xlu0 0
      %1842 = vperm.xlu0 %1841, %v1808
      %v1843 = vpop.permute.xlu0 %1842
      %v1845 = vlaneseq
      %v1846 = vshrl.u32 %v1845, 7
      %v1847 = vsub.s32 0, %v1846
      %v1848 = vrot.slane %v1809, %v1847
      %v1849 = vmul.f32 %v1813, %v1848
      %v1850 = vmul.f32 %v1818, %v1848
      %v1851 = vmul.f32 %v1823, %v1848
      %v1852 = vmul.f32 %v1828, %v1848
      %v1853 = vmul.f32 %v1833, %v1848
      %v1854 = vmul.f32 %v1838, %v1848
      %v1855 = vmul.f32 %v1843, %v1848
      %v1856 = vadd.f32 %v1788, %v1849
      %v1857 = vadd.f32 %v1789, %v1850
      %v1858 = vadd.f32 %v1790, %v1851
      %v1859 = vadd.f32 %v1791, %v1852
      %v1860 = vadd.f32 %v1792, %v1853
      %v1861 = vadd.f32 %v1793, %v1854
      %v1862 = vadd.f32 %v1794, %v1855
      %v1863 = vld [vmem:[%s1 + $0x1d] sm:$0x1]
      %1864 = vset.pattern.permute.xlu0 1
      %1865 = vperm.xlu0 %1864, %v1796
      %v1866 = vpop.permute.xlu0 %1865
      %1868 = vset.pattern.permute.xlu0 1
      %1869 = vperm.xlu0 %1868, %v1798
      %v1870 = vpop.permute.xlu0 %1869
      %1872 = vset.pattern.permute.xlu0 1
      %1873 = vperm.xlu0 %1872, %v1800
      %v1874 = vpop.permute.xlu0 %1873
      %1876 = vset.pattern.permute.xlu0 1
      %1877 = vperm.xlu0 %1876, %v1802
      %v1878 = vpop.permute.xlu0 %1877
      %1880 = vset.pattern.permute.xlu0 1
      %1881 = vperm.xlu0 %1880, %v1804
      %v1882 = vpop.permute.xlu0 %1881
      %1884 = vset.pattern.permute.xlu0 1
      %1885 = vperm.xlu0 %1884, %v1806
      %v1886 = vpop.permute.xlu0 %1885
      %1888 = vset.pattern.permute.xlu0 1
      %1889 = vperm.xlu0 %1888, %v1808
      %v1890 = vpop.permute.xlu0 %1889
      %v1892 = vlaneseq
      %v1893 = vshrl.u32 %v1892, 7
      %v1894 = vsub.s32 0, %v1893
      %v1895 = vrot.slane %v1863, %v1894
      %v1896 = vmul.f32 %v1866, %v1895
      %v1897 = vmul.f32 %v1870, %v1895
      %v1898 = vmul.f32 %v1874, %v1895
      %v1899 = vmul.f32 %v1878, %v1895
      %v1900 = vmul.f32 %v1882, %v1895
      %v1901 = vmul.f32 %v1886, %v1895
      %v1902 = vmul.f32 %v1890, %v1895
      %v1903 = vadd.f32 %v1856, %v1896
      %v1904 = vadd.f32 %v1857, %v1897
      %v1905 = vadd.f32 %v1858, %v1898
      %v1906 = vadd.f32 %v1859, %v1899
      %v1907 = vadd.f32 %v1860, %v1900
      %v1908 = vadd.f32 %v1861, %v1901
      %v1909 = vadd.f32 %v1862, %v1902
      %v1910 = vld [vmem:[%s1 + $0x1e] sm:$0x1]
      %1911 = vset.pattern.permute.xlu0 2
      %1912 = vperm.xlu0 %1911, %v1796
      %v1913 = vpop.permute.xlu0 %1912
      %1915 = vset.pattern.permute.xlu0 2
      %1916 = vperm.xlu0 %1915, %v1798
      %v1917 = vpop.permute.xlu0 %1916
      %1919 = vset.pattern.permute.xlu0 2
      %1920 = vperm.xlu0 %1919, %v1800
      %v1921 = vpop.permute.xlu0 %1920
      %1923 = vset.pattern.permute.xlu0 2
      %1924 = vperm.xlu0 %1923, %v1802
      %v1925 = vpop.permute.xlu0 %1924
      %1927 = vset.pattern.permute.xlu0 2
      %1928 = vperm.xlu0 %1927, %v1804
      %v1929 = vpop.permute.xlu0 %1928
      %1931 = vset.pattern.permute.xlu0 2
      %1932 = vperm.xlu0 %1931, %v1806
      %v1933 = vpop.permute.xlu0 %1932
      %1935 = vset.pattern.permute.xlu0 2
      %1936 = vperm.xlu0 %1935, %v1808
      %v1937 = vpop.permute.xlu0 %1936
      %v1939 = vlaneseq
      %v1940 = vshrl.u32 %v1939, 7
      %v1941 = vsub.s32 0, %v1940
      %v1942 = vrot.slane %v1910, %v1941
      %v1943 = vmul.f32 %v1913, %v1942
      %v1944 = vmul.f32 %v1917, %v1942
      %v1945 = vmul.f32 %v1921, %v1942
      %v1946 = vmul.f32 %v1925, %v1942
      %v1947 = vmul.f32 %v1929, %v1942
      %v1948 = vmul.f32 %v1933, %v1942
      %v1949 = vmul.f32 %v1937, %v1942
      %v1950 = vadd.f32 %v1903, %v1943
      %v1951 = vadd.f32 %v1904, %v1944
      %v1952 = vadd.f32 %v1905, %v1945
      %v1953 = vadd.f32 %v1906, %v1946
      %v1954 = vadd.f32 %v1907, %v1947
      %v1955 = vadd.f32 %v1908, %v1948
      %v1956 = vadd.f32 %v1909, %v1949
      %v1957 = vld [vmem:[%s1 + $0x1f] sm:$0x1]
      %1958 = vset.pattern.permute.xlu0 3
      %1959 = vperm.xlu0 %1958, %v1796
      %v1960 = vpop.permute.xlu0 %1959
      %1962 = vset.pattern.permute.xlu0 3
      %1963 = vperm.xlu0 %1962, %v1798
      %v1964 = vpop.permute.xlu0 %1963
      %1966 = vset.pattern.permute.xlu0 3
      %1967 = vperm.xlu0 %1966, %v1800
      %v1968 = vpop.permute.xlu0 %1967
      %1970 = vset.pattern.permute.xlu0 3
      %1971 = vperm.xlu0 %1970, %v1802
      %v1972 = vpop.permute.xlu0 %1971
      %1974 = vset.pattern.permute.xlu0 3
      %1975 = vperm.xlu0 %1974, %v1804
      %v1976 = vpop.permute.xlu0 %1975
      %1978 = vset.pattern.permute.xlu0 3
      %1979 = vperm.xlu0 %1978, %v1806
      %v1980 = vpop.permute.xlu0 %1979
      %1982 = vset.pattern.permute.xlu0 3
      %1983 = vperm.xlu0 %1982, %v1808
      %v1984 = vpop.permute.xlu0 %1983
      %v1986 = vlaneseq
      %v1987 = vshrl.u32 %v1986, 7
      %v1988 = vsub.s32 0, %v1987
      %v1989 = vrot.slane %v1957, %v1988
      %v1990 = vmul.f32 %v1960, %v1989
      %v1991 = vmul.f32 %v1964, %v1989
      %v1992 = vmul.f32 %v1968, %v1989
      %v1993 = vmul.f32 %v1972, %v1989
      %v1994 = vmul.f32 %v1976, %v1989
      %v1995 = vmul.f32 %v1980, %v1989
      %v1996 = vmul.f32 %v1984, %v1989
      %v1997 = vadd.f32 %v1950, %v1990
      %v1998 = vadd.f32 %v1951, %v1991
      %v1999 = vadd.f32 %v1952, %v1992
      %v2000 = vadd.f32 %v1953, %v1993
      %v2001 = vadd.f32 %v1954, %v1994
      %v2002 = vadd.f32 %v1955, %v1995
      %v2003 = vadd.f32 %v1956, %v1996
      %s2004 = scalar_lea.vmem %s1586, 2
      %v2005 = vld [vmem:[%s2004] ss:$2 sm:$0x7f]
      %s2006 = scalar_lea.vmem %s1586, 34
      %v2007 = vld [vmem:[%s2006] ss:$2 sm:$0x7f]
      %s2008 = scalar_lea.vmem %s1586, 66
      %v2009 = vld [vmem:[%s2008] ss:$2 sm:$0x7f]
      %s2010 = scalar_lea.vmem %s1586, 98
      %v2011 = vld [vmem:[%s2010] ss:$2 sm:$0x7f]
      %s2012 = scalar_lea.vmem %s1586, 130
      %v2013 = vld [vmem:[%s2012] ss:$2 sm:$0x7f]
      %s2014 = scalar_lea.vmem %s1586, 162
      %v2015 = vld [vmem:[%s2014] ss:$2 sm:$0x7f]
      %s2016 = scalar_lea.vmem %s1586, 194
      %v2017 = vld [vmem:[%s2016] ss:$2 sm:$0x7f]
      %v2018 = vld [vmem:[%s1 + $0x20] sm:$0x1]
      %2020 = vset.pattern.permute.xlu0 0
      %2021 = vperm.xlu0 %2020, %v2005
      %v2022 = vpop.permute.xlu0 %2021
      %2025 = vset.pattern.permute.xlu0 0
      %2026 = vperm.xlu0 %2025, %v2007
      %v2027 = vpop.permute.xlu0 %2026
      %2030 = vset.pattern.permute.xlu0 0
      %2031 = vperm.xlu0 %2030, %v2009
      %v2032 = vpop.permute.xlu0 %2031
      %2035 = vset.pattern.permute.xlu0 0
      %2036 = vperm.xlu0 %2035, %v2011
      %v2037 = vpop.permute.xlu0 %2036
      %2040 = vset.pattern.permute.xlu0 0
      %2041 = vperm.xlu0 %2040, %v2013
      %v2042 = vpop.permute.xlu0 %2041
      %2045 = vset.pattern.permute.xlu0 0
      %2046 = vperm.xlu0 %2045, %v2015
      %v2047 = vpop.permute.xlu0 %2046
      %2050 = vset.pattern.permute.xlu0 0
      %2051 = vperm.xlu0 %2050, %v2017
      %v2052 = vpop.permute.xlu0 %2051
      %v2054 = vlaneseq
      %v2055 = vshrl.u32 %v2054, 7
      %v2056 = vsub.s32 0, %v2055
      %v2057 = vrot.slane %v2018, %v2056
      %v2058 = vmul.f32 %v2022, %v2057
      %v2059 = vmul.f32 %v2027, %v2057
      %v2060 = vmul.f32 %v2032, %v2057
      %v2061 = vmul.f32 %v2037, %v2057
      %v2062 = vmul.f32 %v2042, %v2057
      %v2063 = vmul.f32 %v2047, %v2057
      %v2064 = vmul.f32 %v2052, %v2057
      %v2065 = vadd.f32 %v1997, %v2058
      %v2066 = vadd.f32 %v1998, %v2059
      %v2067 = vadd.f32 %v1999, %v2060
      %v2068 = vadd.f32 %v2000, %v2061
      %v2069 = vadd.f32 %v2001, %v2062
      %v2070 = vadd.f32 %v2002, %v2063
      %v2071 = vadd.f32 %v2003, %v2064
      %v2072 = vld [vmem:[%s1 + $0x21] sm:$0x1]
      %2073 = vset.pattern.permute.xlu0 1
      %2074 = vperm.xlu0 %2073, %v2005
      %v2075 = vpop.permute.xlu0 %2074
      %2077 = vset.pattern.permute.xlu0 1
      %2078 = vperm.xlu0 %2077, %v2007
      %v2079 = vpop.permute.xlu0 %2078
      %2081 = vset.pattern.permute.xlu0 1
      %2082 = vperm.xlu0 %2081, %v2009
      %v2083 = vpop.permute.xlu0 %2082
      %2085 = vset.pattern.permute.xlu0 1
      %2086 = vperm.xlu0 %2085, %v2011
      %v2087 = vpop.permute.xlu0 %2086
      %2089 = vset.pattern.permute.xlu0 1
      %2090 = vperm.xlu0 %2089, %v2013
      %v2091 = vpop.permute.xlu0 %2090
      %2093 = vset.pattern.permute.xlu0 1
      %2094 = vperm.xlu0 %2093, %v2015
      %v2095 = vpop.permute.xlu0 %2094
      %2097 = vset.pattern.permute.xlu0 1
      %2098 = vperm.xlu0 %2097, %v2017
      %v2099 = vpop.permute.xlu0 %2098
      %v2101 = vlaneseq
      %v2102 = vshrl.u32 %v2101, 7
      %v2103 = vsub.s32 0, %v2102
      %v2104 = vrot.slane %v2072, %v2103
      %v2105 = vmul.f32 %v2075, %v2104
      %v2106 = vmul.f32 %v2079, %v2104
      %v2107 = vmul.f32 %v2083, %v2104
      %v2108 = vmul.f32 %v2087, %v2104
      %v2109 = vmul.f32 %v2091, %v2104
      %v2110 = vmul.f32 %v2095, %v2104
      %v2111 = vmul.f32 %v2099, %v2104
      %v2112 = vadd.f32 %v2065, %v2105
      %v2113 = vadd.f32 %v2066, %v2106
      %v2114 = vadd.f32 %v2067, %v2107
      %v2115 = vadd.f32 %v2068, %v2108
      %v2116 = vadd.f32 %v2069, %v2109
      %v2117 = vadd.f32 %v2070, %v2110
      %v2118 = vadd.f32 %v2071, %v2111
      %v2119 = vld [vmem:[%s1 + $0x22] sm:$0x1]
      %2120 = vset.pattern.permute.xlu0 2
      %2121 = vperm.xlu0 %2120, %v2005
      %v2122 = vpop.permute.xlu0 %2121
      %2124 = vset.pattern.permute.xlu0 2
      %2125 = vperm.xlu0 %2124, %v2007
      %v2126 = vpop.permute.xlu0 %2125
      %2128 = vset.pattern.permute.xlu0 2
      %2129 = vperm.xlu0 %2128, %v2009
      %v2130 = vpop.permute.xlu0 %2129
      %2132 = vset.pattern.permute.xlu0 2
      %2133 = vperm.xlu0 %2132, %v2011
      %v2134 = vpop.permute.xlu0 %2133
      %2136 = vset.pattern.permute.xlu0 2
      %2137 = vperm.xlu0 %2136, %v2013
      %v2138 = vpop.permute.xlu0 %2137
      %2140 = vset.pattern.permute.xlu0 2
      %2141 = vperm.xlu0 %2140, %v2015
      %v2142 = vpop.permute.xlu0 %2141
      %2144 = vset.pattern.permute.xlu0 2
      %2145 = vperm.xlu0 %2144, %v2017
      %v2146 = vpop.permute.xlu0 %2145
      %v2148 = vlaneseq
      %v2149 = vshrl.u32 %v2148, 7
      %v2150 = vsub.s32 0, %v2149
      %v2151 = vrot.slane %v2119, %v2150
      %v2152 = vmul.f32 %v2122, %v2151
      %v2153 = vmul.f32 %v2126, %v2151
      %v2154 = vmul.f32 %v2130, %v2151
      %v2155 = vmul.f32 %v2134, %v2151
      %v2156 = vmul.f32 %v2138, %v2151
      %v2157 = vmul.f32 %v2142, %v2151
      %v2158 = vmul.f32 %v2146, %v2151
      %v2159 = vadd.f32 %v2112, %v2152
      %v2160 = vadd.f32 %v2113, %v2153
      %v2161 = vadd.f32 %v2114, %v2154
      %v2162 = vadd.f32 %v2115, %v2155
      %v2163 = vadd.f32 %v2116, %v2156
      %v2164 = vadd.f32 %v2117, %v2157
      %v2165 = vadd.f32 %v2118, %v2158
      %v2166 = vld [vmem:[%s1 + $0x23] sm:$0x1]
      %2167 = vset.pattern.permute.xlu0 3
      %2168 = vperm.xlu0 %2167, %v2005
      %v2169 = vpop.permute.xlu0 %2168
      %2171 = vset.pattern.permute.xlu0 3
      %2172 = vperm.xlu0 %2171, %v2007
      %v2173 = vpop.permute.xlu0 %2172
      %2175 = vset.pattern.permute.xlu0 3
      %2176 = vperm.xlu0 %2175, %v2009
      %v2177 = vpop.permute.xlu0 %2176
      %2179 = vset.pattern.permute.xlu0 3
      %2180 = vperm.xlu0 %2179, %v2011
      %v2181 = vpop.permute.xlu0 %2180
      %2183 = vset.pattern.permute.xlu0 3
      %2184 = vperm.xlu0 %2183, %v2013
      %v2185 = vpop.permute.xlu0 %2184
      %2187 = vset.pattern.permute.xlu0 3
      %2188 = vperm.xlu0 %2187, %v2015
      %v2189 = vpop.permute.xlu0 %2188
      %2191 = vset.pattern.permute.xlu0 3
      %2192 = vperm.xlu0 %2191, %v2017
      %v2193 = vpop.permute.xlu0 %2192
      %v2195 = vlaneseq
      %v2196 = vshrl.u32 %v2195, 7
      %v2197 = vsub.s32 0, %v2196
      %v2198 = vrot.slane %v2166, %v2197
      %v2199 = vmul.f32 %v2169, %v2198
      %v2200 = vmul.f32 %v2173, %v2198
      %v2201 = vmul.f32 %v2177, %v2198
      %v2202 = vmul.f32 %v2181, %v2198
      %v2203 = vmul.f32 %v2185, %v2198
      %v2204 = vmul.f32 %v2189, %v2198
      %v2205 = vmul.f32 %v2193, %v2198
      %v2206 = vadd.f32 %v2159, %v2199
      %v2207 = vadd.f32 %v2160, %v2200
      %v2208 = vadd.f32 %v2161, %v2201
      %v2209 = vadd.f32 %v2162, %v2202
      %v2210 = vadd.f32 %v2163, %v2203
      %v2211 = vadd.f32 %v2164, %v2204
      %v2212 = vadd.f32 %v2165, %v2205
      %v2213 = vld [vmem:[%s2] sm:$0x1]
      %v2215 = vlaneseq
      %v2216 = vshrl.u32 %v2215, 7
      %v2217 = vsub.s32 0, %v2216
      %v2218 = vrot.slane %v2213, %v2217
      %v2220 = vadd.f32 %v2206, %v2218
      %v2221 = vadd.f32 %v2207, %v2218
      %v2222 = vadd.f32 %v2208, %v2218
      %v2223 = vadd.f32 %v2209, %v2218
      %v2224 = vadd.f32 %v2210, %v2218
      %v2225 = vadd.f32 %v2211, %v2218
      %v2226 = vadd.f32 %v2212, %v2218
      %v2227 = vmax.f32 %v2220, 0.0
      %v2228 = vmax.f32 %v2221, 0.0
      %v2229 = vmax.f32 %v2222, 0.0
      %v2230 = vmax.f32 %v2223, 0.0
      %v2231 = vmax.f32 %v2224, 0.0
      %v2232 = vmax.f32 %v2225, 0.0
      %v2233 = vmax.f32 %v2226, 0.0
      %vm2234 = vcmask 63488
      %2235 = vst.msk [vmem:[#allocation2] sm:$0x7f] %vm2234, %v2227
      %2236 = vst.msk [vmem:[#allocation2 + $0x8] sm:$0x7f] %vm2234, %v2228
      %2237 = vst.msk [vmem:[#allocation2 + $0x10] sm:$0x7f] %vm2234, %v2229
      %2238 = vst.msk [vmem:[#allocation2 + $0x18] sm:$0x7f] %vm2234, %v2230
      %2239 = vst.msk [vmem:[#allocation2 + $0x20] sm:$0x7f] %vm2234, %v2231
      %2240 = vst.msk [vmem:[#allocation2 + $0x28] sm:$0x7f] %vm2234, %v2232
      %2241 = vst.msk [vmem:[#allocation2 + $0x30] sm:$0x7f] %vm2234, %v2233
      %v2242 = vld [vmem:[#allocation2] ss:$2 sm:$0x7]
      %s2243 = scalar_lea.vmem [#allocation2], 16
      %v2244 = vld [vmem:[%s2243] ss:$2 sm:$0x7]
      %s2245 = scalar_lea.vmem [#allocation2], 32
      %v2246 = vld [vmem:[%s2245] ss:$2 sm:$0x7]
      %v2247 = vld [vmem:[%s3] sm:$0x1]
      %2249 = vset.pattern.permute.xlu0 0
      %2250 = vperm.xlu0 %2249, %v2242
      %v2251 = vpop.permute.xlu0 %2250
      %2254 = vset.pattern.permute.xlu0 0
      %2255 = vperm.xlu0 %2254, %v2244
      %v2256 = vpop.permute.xlu0 %2255
      %2259 = vset.pattern.permute.xlu0 0
      %2260 = vperm.xlu0 %2259, %v2246
      %v2261 = vpop.permute.xlu0 %2260
      %v2263 = vlaneseq
      %v2264 = vshrl.u32 %v2263, 7
      %v2265 = vsub.s32 0, %v2264
      %v2266 = vrot.slane %v2247, %v2265
      %v2267 = vmul.f32 %v2251, %v2266
      %v2268 = vmul.f32 %v2256, %v2266
      %v2269 = vmul.f32 %v2261, %v2266
      %v2270 = vadd.f32 %v2267, 0.0
      %v2271 = vadd.f32 %v2268, 0.0
      %v2272 = vadd.f32 %v2269, 0.0
      %v2273 = vld [vmem:[%s3 + $0x1] sm:$0x1]
      %2274 = vset.pattern.permute.xlu0 1
      %2275 = vperm.xlu0 %2274, %v2242
      %v2276 = vpop.permute.xlu0 %2275
      %2278 = vset.pattern.permute.xlu0 1
      %2279 = vperm.xlu0 %2278, %v2244
      %v2280 = vpop.permute.xlu0 %2279
      %2282 = vset.pattern.permute.xlu0 1
      %2283 = vperm.xlu0 %2282, %v2246
      %v2284 = vpop.permute.xlu0 %2283
      %v2286 = vlaneseq
      %v2287 = vshrl.u32 %v2286, 7
      %v2288 = vsub.s32 0, %v2287
      %v2289 = vrot.slane %v2273, %v2288
      %v2290 = vmul.f32 %v2276, %v2289
      %v2291 = vmul.f32 %v2280, %v2289
      %v2292 = vmul.f32 %v2284, %v2289
      %v2293 = vadd.f32 %v2270, %v2290
      %v2294 = vadd.f32 %v2271, %v2291
      %v2295 = vadd.f32 %v2272, %v2292
      %v2296 = vld [vmem:[%s3 + $0x2] sm:$0x1]
      %2297 = vset.pattern.permute.xlu0 2
      %2298 = vperm.xlu0 %2297, %v2242
      %v2299 = vpop.permute.xlu0 %2298
      %2301 = vset.pattern.permute.xlu0 2
      %2302 = vperm.xlu0 %2301, %v2244
      %v2303 = vpop.permute.xlu0 %2302
      %2305 = vset.pattern.permute.xlu0 2
      %2306 = vperm.xlu0 %2305, %v2246
      %v2307 = vpop.permute.xlu0 %2306
      %v2309 = vlaneseq
      %v2310 = vshrl.u32 %v2309, 7
      %v2311 = vsub.s32 0, %v2310
      %v2312 = vrot.slane %v2296, %v2311
      %v2313 = vmul.f32 %v2299, %v2312
      %v2314 = vmul.f32 %v2303, %v2312
      %v2315 = vmul.f32 %v2307, %v2312
      %v2316 = vadd.f32 %v2293, %v2313
      %v2317 = vadd.f32 %v2294, %v2314
      %v2318 = vadd.f32 %v2295, %v2315
      %v2319 = vld [vmem:[%s3 + $0x3] sm:$0x1]
      %2320 = vset.pattern.permute.xlu0 3
      %2321 = vperm.xlu0 %2320, %v2242
      %v2322 = vpop.permute.xlu0 %2321
      %2324 = vset.pattern.permute.xlu0 3
      %2325 = vperm.xlu0 %2324, %v2244
      %v2326 = vpop.permute.xlu0 %2325
      %2328 = vset.pattern.permute.xlu0 3
      %2329 = vperm.xlu0 %2328, %v2246
      %v2330 = vpop.permute.xlu0 %2329
      %v2332 = vlaneseq
      %v2333 = vshrl.u32 %v2332, 7
      %v2334 = vsub.s32 0, %v2333
      %v2335 = vrot.slane %v2319, %v2334
      %v2336 = vmul.f32 %v2322, %v2335
      %v2337 = vmul.f32 %v2326, %v2335
      %v2338 = vmul.f32 %v2330, %v2335
      %v2339 = vadd.f32 %v2316, %v2336
      %v2340 = vadd.f32 %v2317, %v2337
      %v2341 = vadd.f32 %v2318, %v2338
      %v2342 = vld [vmem:[%s3 + $0x4] sm:$0x1]
      %2343 = vset.pattern.permute.xlu0 4
      %2344 = vperm.xlu0 %2343, %v2242
      %v2345 = vpop.permute.xlu0 %2344
      %2347 = vset.pattern.permute.xlu0 4
      %2348 = vperm.xlu0 %2347, %v2244
      %v2349 = vpop.permute.xlu0 %2348
      %2351 = vset.pattern.permute.xlu0 4
      %2352 = vperm.xlu0 %2351, %v2246
      %v2353 = vpop.permute.xlu0 %2352
      %v2355 = vlaneseq
      %v2356 = vshrl.u32 %v2355, 7
      %v2357 = vsub.s32 0, %v2356
      %v2358 = vrot.slane %v2342, %v2357
      %v2359 = vmul.f32 %v2345, %v2358
      %v2360 = vmul.f32 %v2349, %v2358
      %v2361 = vmul.f32 %v2353, %v2358
      %v2362 = vadd.f32 %v2339, %v2359
      %v2363 = vadd.f32 %v2340, %v2360
      %v2364 = vadd.f32 %v2341, %v2361
      %v2365 = vld [vmem:[%s3 + $0x5] sm:$0x1]
      %2366 = vset.pattern.permute.xlu0 5
      %2367 = vperm.xlu0 %2366, %v2242
      %v2368 = vpop.permute.xlu0 %2367
      %2370 = vset.pattern.permute.xlu0 5
      %2371 = vperm.xlu0 %2370, %v2244
      %v2372 = vpop.permute.xlu0 %2371
      %2374 = vset.pattern.permute.xlu0 5
      %2375 = vperm.xlu0 %2374, %v2246
      %v2376 = vpop.permute.xlu0 %2375
      %v2378 = vlaneseq
      %v2379 = vshrl.u32 %v2378, 7
      %v2380 = vsub.s32 0, %v2379
      %v2381 = vrot.slane %v2365, %v2380
      %v2382 = vmul.f32 %v2368, %v2381
      %v2383 = vmul.f32 %v2372, %v2381
      %v2384 = vmul.f32 %v2376, %v2381
      %v2385 = vadd.f32 %v2362, %v2382
      %v2386 = vadd.f32 %v2363, %v2383
      %v2387 = vadd.f32 %v2364, %v2384
      %v2388 = vld [vmem:[%s3 + $0x6] sm:$0x1]
      %2389 = vset.pattern.permute.xlu0 6
      %2390 = vperm.xlu0 %2389, %v2242
      %v2391 = vpop.permute.xlu0 %2390
      %2393 = vset.pattern.permute.xlu0 6
      %2394 = vperm.xlu0 %2393, %v2244
      %v2395 = vpop.permute.xlu0 %2394
      %2397 = vset.pattern.permute.xlu0 6
      %2398 = vperm.xlu0 %2397, %v2246
      %v2399 = vpop.permute.xlu0 %2398
      %v2401 = vlaneseq
      %v2402 = vshrl.u32 %v2401, 7
      %v2403 = vsub.s32 0, %v2402
      %v2404 = vrot.slane %v2388, %v2403
      %v2405 = vmul.f32 %v2391, %v2404
      %v2406 = vmul.f32 %v2395, %v2404
      %v2407 = vmul.f32 %v2399, %v2404
      %v2408 = vadd.f32 %v2385, %v2405
      %v2409 = vadd.f32 %v2386, %v2406
      %v2410 = vadd.f32 %v2387, %v2407
      %v2411 = vld [vmem:[%s3 + $0x7] sm:$0x1]
      %2412 = vset.pattern.permute.xlu0 7
      %2413 = vperm.xlu0 %2412, %v2242
      %v2414 = vpop.permute.xlu0 %2413
      %2416 = vset.pattern.permute.xlu0 7
      %2417 = vperm.xlu0 %2416, %v2244
      %v2418 = vpop.permute.xlu0 %2417
      %2420 = vset.pattern.permute.xlu0 7
      %2421 = vperm.xlu0 %2420, %v2246
      %v2422 = vpop.permute.xlu0 %2421
      %v2424 = vlaneseq
      %v2425 = vshrl.u32 %v2424, 7
      %v2426 = vsub.s32 0, %v2425
      %v2427 = vrot.slane %v2411, %v2426
      %v2428 = vmul.f32 %v2414, %v2427
      %v2429 = vmul.f32 %v2418, %v2427
      %v2430 = vmul.f32 %v2422, %v2427
      %v2431 = vadd.f32 %v2408, %v2428
      %v2432 = vadd.f32 %v2409, %v2429
      %v2433 = vadd.f32 %v2410, %v2430
      %s2434 = scalar_lea.vmem [#allocation2], 1
      %v2435 = vld [vmem:[%s2434] ss:$2 sm:$0x7]
      %s2436 = scalar_lea.vmem [#allocation2], 17
      %v2437 = vld [vmem:[%s2436] ss:$2 sm:$0x7]
      %s2438 = scalar_lea.vmem [#allocation2], 33
      %v2439 = vld [vmem:[%s2438] ss:$2 sm:$0x7]
      %v2440 = vld [vmem:[%s3 + $0x8] sm:$0x1]
      %2442 = vset.pattern.permute.xlu0 0
      %2443 = vperm.xlu0 %2442, %v2435
      %v2444 = vpop.permute.xlu0 %2443
      %2447 = vset.pattern.permute.xlu0 0
      %2448 = vperm.xlu0 %2447, %v2437
      %v2449 = vpop.permute.xlu0 %2448
      %2452 = vset.pattern.permute.xlu0 0
      %2453 = vperm.xlu0 %2452, %v2439
      %v2454 = vpop.permute.xlu0 %2453
      %v2456 = vlaneseq
      %v2457 = vshrl.u32 %v2456, 7
      %v2458 = vsub.s32 0, %v2457
      %v2459 = vrot.slane %v2440, %v2458
      %v2460 = vmul.f32 %v2444, %v2459
      %v2461 = vmul.f32 %v2449, %v2459
      %v2462 = vmul.f32 %v2454, %v2459
      %v2463 = vadd.f32 %v2431, %v2460
      %v2464 = vadd.f32 %v2432, %v2461
      %v2465 = vadd.f32 %v2433, %v2462
      %v2466 = vld [vmem:[%s3 + $0x9] sm:$0x1]
      %2467 = vset.pattern.permute.xlu0 1
      %2468 = vperm.xlu0 %2467, %v2435
      %v2469 = vpop.permute.xlu0 %2468
      %2471 = vset.pattern.permute.xlu0 1
      %2472 = vperm.xlu0 %2471, %v2437
      %v2473 = vpop.permute.xlu0 %2472
      %2475 = vset.pattern.permute.xlu0 1
      %2476 = vperm.xlu0 %2475, %v2439
      %v2477 = vpop.permute.xlu0 %2476
      %v2479 = vlaneseq
      %v2480 = vshrl.u32 %v2479, 7
      %v2481 = vsub.s32 0, %v2480
      %v2482 = vrot.slane %v2466, %v2481
      %v2483 = vmul.f32 %v2469, %v2482
      %v2484 = vmul.f32 %v2473, %v2482
      %v2485 = vmul.f32 %v2477, %v2482
      %v2486 = vadd.f32 %v2463, %v2483
      %v2487 = vadd.f32 %v2464, %v2484
      %v2488 = vadd.f32 %v2465, %v2485
      %v2489 = vld [vmem:[%s3 + $0xa] sm:$0x1]
      %2490 = vset.pattern.permute.xlu0 2
      %2491 = vperm.xlu0 %2490, %v2435
      %v2492 = vpop.permute.xlu0 %2491
      %2494 = vset.pattern.permute.xlu0 2
      %2495 = vperm.xlu0 %2494, %v2437
      %v2496 = vpop.permute.xlu0 %2495
      %2498 = vset.pattern.permute.xlu0 2
      %2499 = vperm.xlu0 %2498, %v2439
      %v2500 = vpop.permute.xlu0 %2499
      %v2502 = vlaneseq
      %v2503 = vshrl.u32 %v2502, 7
      %v2504 = vsub.s32 0, %v2503
      %v2505 = vrot.slane %v2489, %v2504
      %v2506 = vmul.f32 %v2492, %v2505
      %v2507 = vmul.f32 %v2496, %v2505
      %v2508 = vmul.f32 %v2500, %v2505
      %v2509 = vadd.f32 %v2486, %v2506
      %v2510 = vadd.f32 %v2487, %v2507
      %v2511 = vadd.f32 %v2488, %v2508
      %v2512 = vld [vmem:[%s3 + $0xb] sm:$0x1]
      %2513 = vset.pattern.permute.xlu0 3
      %2514 = vperm.xlu0 %2513, %v2435
      %v2515 = vpop.permute.xlu0 %2514
      %2517 = vset.pattern.permute.xlu0 3
      %2518 = vperm.xlu0 %2517, %v2437
      %v2519 = vpop.permute.xlu0 %2518
      %2521 = vset.pattern.permute.xlu0 3
      %2522 = vperm.xlu0 %2521, %v2439
      %v2523 = vpop.permute.xlu0 %2522
      %v2525 = vlaneseq
      %v2526 = vshrl.u32 %v2525, 7
      %v2527 = vsub.s32 0, %v2526
      %v2528 = vrot.slane %v2512, %v2527
      %v2529 = vmul.f32 %v2515, %v2528
      %v2530 = vmul.f32 %v2519, %v2528
      %v2531 = vmul.f32 %v2523, %v2528
      %v2532 = vadd.f32 %v2509, %v2529
      %v2533 = vadd.f32 %v2510, %v2530
      %v2534 = vadd.f32 %v2511, %v2531
      %v2535 = vld [vmem:[%s3 + $0xc] sm:$0x1]
      %2536 = vset.pattern.permute.xlu0 4
      %2537 = vperm.xlu0 %2536, %v2435
      %v2538 = vpop.permute.xlu0 %2537
      %2540 = vset.pattern.permute.xlu0 4
      %2541 = vperm.xlu0 %2540, %v2437
      %v2542 = vpop.permute.xlu0 %2541
      %2544 = vset.pattern.permute.xlu0 4
      %2545 = vperm.xlu0 %2544, %v2439
      %v2546 = vpop.permute.xlu0 %2545
      %v2548 = vlaneseq
      %v2549 = vshrl.u32 %v2548, 7
      %v2550 = vsub.s32 0, %v2549
      %v2551 = vrot.slane %v2535, %v2550
      %v2552 = vmul.f32 %v2538, %v2551
      %v2553 = vmul.f32 %v2542, %v2551
      %v2554 = vmul.f32 %v2546, %v2551
      %v2555 = vadd.f32 %v2532, %v2552
      %v2556 = vadd.f32 %v2533, %v2553
      %v2557 = vadd.f32 %v2534, %v2554
      %v2558 = vld [vmem:[%s3 + $0xd] sm:$0x1]
      %2559 = vset.pattern.permute.xlu0 5
      %2560 = vperm.xlu0 %2559, %v2435
      %v2561 = vpop.permute.xlu0 %2560
      %2563 = vset.pattern.permute.xlu0 5
      %2564 = vperm.xlu0 %2563, %v2437
      %v2565 = vpop.permute.xlu0 %2564
      %2567 = vset.pattern.permute.xlu0 5
      %2568 = vperm.xlu0 %2567, %v2439
      %v2569 = vpop.permute.xlu0 %2568
      %v2571 = vlaneseq
      %v2572 = vshrl.u32 %v2571, 7
      %v2573 = vsub.s32 0, %v2572
      %v2574 = vrot.slane %v2558, %v2573
      %v2575 = vmul.f32 %v2561, %v2574
      %v2576 = vmul.f32 %v2565, %v2574
      %v2577 = vmul.f32 %v2569, %v2574
      %v2578 = vadd.f32 %v2555, %v2575
      %v2579 = vadd.f32 %v2556, %v2576
      %v2580 = vadd.f32 %v2557, %v2577
      %v2581 = vld [vmem:[%s3 + $0xe] sm:$0x1]
      %2582 = vset.pattern.permute.xlu0 6
      %2583 = vperm.xlu0 %2582, %v2435
      %v2584 = vpop.permute.xlu0 %2583
      %2586 = vset.pattern.permute.xlu0 6
      %2587 = vperm.xlu0 %2586, %v2437
      %v2588 = vpop.permute.xlu0 %2587
      %2590 = vset.pattern.permute.xlu0 6
      %2591 = vperm.xlu0 %2590, %v2439
      %v2592 = vpop.permute.xlu0 %2591
      %v2594 = vlaneseq
      %v2595 = vshrl.u32 %v2594, 7
      %v2596 = vsub.s32 0, %v2595
      %v2597 = vrot.slane %v2581, %v2596
      %v2598 = vmul.f32 %v2584, %v2597
      %v2599 = vmul.f32 %v2588, %v2597
      %v2600 = vmul.f32 %v2592, %v2597
      %v2601 = vadd.f32 %v2578, %v2598
      %v2602 = vadd.f32 %v2579, %v2599
      %v2603 = vadd.f32 %v2580, %v2600
      %v2604 = vld [vmem:[%s3 + $0xf] sm:$0x1]
      %2605 = vset.pattern.permute.xlu0 7
      %2606 = vperm.xlu0 %2605, %v2435
      %v2607 = vpop.permute.xlu0 %2606
      %2609 = vset.pattern.permute.xlu0 7
      %2610 = vperm.xlu0 %2609, %v2437
      %v2611 = vpop.permute.xlu0 %2610
      %2613 = vset.pattern.permute.xlu0 7
      %2614 = vperm.xlu0 %2613, %v2439
      %v2615 = vpop.permute.xlu0 %2614
      %v2617 = vlaneseq
      %v2618 = vshrl.u32 %v2617, 7
      %v2619 = vsub.s32 0, %v2618
      %v2620 = vrot.slane %v2604, %v2619
      %v2621 = vmul.f32 %v2607, %v2620
      %v2622 = vmul.f32 %v2611, %v2620
      %v2623 = vmul.f32 %v2615, %v2620
      %v2624 = vadd.f32 %v2601, %v2621
      %v2625 = vadd.f32 %v2602, %v2622
      %v2626 = vadd.f32 %v2603, %v2623
      %s2627 = scalar_lea.vmem [#allocation2], 2
      %v2628 = vld [vmem:[%s2627] ss:$2 sm:$0x7]
      %s2629 = scalar_lea.vmem [#allocation2], 18
      %v2630 = vld [vmem:[%s2629] ss:$2 sm:$0x7]
      %s2631 = scalar_lea.vmem [#allocation2], 34
      %v2632 = vld [vmem:[%s2631] ss:$2 sm:$0x7]
      %v2633 = vld [vmem:[%s3 + $0x10] sm:$0x1]
      %2635 = vset.pattern.permute.xlu0 0
      %2636 = vperm.xlu0 %2635, %v2628
      %v2637 = vpop.permute.xlu0 %2636
      %2640 = vset.pattern.permute.xlu0 0
      %2641 = vperm.xlu0 %2640, %v2630
      %v2642 = vpop.permute.xlu0 %2641
      %2645 = vset.pattern.permute.xlu0 0
      %2646 = vperm.xlu0 %2645, %v2632
      %v2647 = vpop.permute.xlu0 %2646
      %v2649 = vlaneseq
      %v2650 = vshrl.u32 %v2649, 7
      %v2651 = vsub.s32 0, %v2650
      %v2652 = vrot.slane %v2633, %v2651
      %v2653 = vmul.f32 %v2637, %v2652
      %v2654 = vmul.f32 %v2642, %v2652
      %v2655 = vmul.f32 %v2647, %v2652
      %v2656 = vadd.f32 %v2624, %v2653
      %v2657 = vadd.f32 %v2625, %v2654
      %v2658 = vadd.f32 %v2626, %v2655
      %v2659 = vld [vmem:[%s3 + $0x11] sm:$0x1]
      %2660 = vset.pattern.permute.xlu0 1
      %2661 = vperm.xlu0 %2660, %v2628
      %v2662 = vpop.permute.xlu0 %2661
      %2664 = vset.pattern.permute.xlu0 1
      %2665 = vperm.xlu0 %2664, %v2630
      %v2666 = vpop.permute.xlu0 %2665
      %2668 = vset.pattern.permute.xlu0 1
      %2669 = vperm.xlu0 %2668, %v2632
      %v2670 = vpop.permute.xlu0 %2669
      %v2672 = vlaneseq
      %v2673 = vshrl.u32 %v2672, 7
      %v2674 = vsub.s32 0, %v2673
      %v2675 = vrot.slane %v2659, %v2674
      %v2676 = vmul.f32 %v2662, %v2675
      %v2677 = vmul.f32 %v2666, %v2675
      %v2678 = vmul.f32 %v2670, %v2675
      %v2679 = vadd.f32 %v2656, %v2676
      %v2680 = vadd.f32 %v2657, %v2677
      %v2681 = vadd.f32 %v2658, %v2678
      %v2682 = vld [vmem:[%s3 + $0x12] sm:$0x1]
      %2683 = vset.pattern.permute.xlu0 2
      %2684 = vperm.xlu0 %2683, %v2628
      %v2685 = vpop.permute.xlu0 %2684
      %2687 = vset.pattern.permute.xlu0 2
      %2688 = vperm.xlu0 %2687, %v2630
      %v2689 = vpop.permute.xlu0 %2688
      %2691 = vset.pattern.permute.xlu0 2
      %2692 = vperm.xlu0 %2691, %v2632
      %v2693 = vpop.permute.xlu0 %2692
      %v2695 = vlaneseq
      %v2696 = vshrl.u32 %v2695, 7
      %v2697 = vsub.s32 0, %v2696
      %v2698 = vrot.slane %v2682, %v2697
      %v2699 = vmul.f32 %v2685, %v2698
      %v2700 = vmul.f32 %v2689, %v2698
      %v2701 = vmul.f32 %v2693, %v2698
      %v2702 = vadd.f32 %v2679, %v2699
      %v2703 = vadd.f32 %v2680, %v2700
      %v2704 = vadd.f32 %v2681, %v2701
      %v2705 = vld [vmem:[%s3 + $0x13] sm:$0x1]
      %2706 = vset.pattern.permute.xlu0 3
      %2707 = vperm.xlu0 %2706, %v2628
      %v2708 = vpop.permute.xlu0 %2707
      %2710 = vset.pattern.permute.xlu0 3
      %2711 = vperm.xlu0 %2710, %v2630
      %v2712 = vpop.permute.xlu0 %2711
      %2714 = vset.pattern.permute.xlu0 3
      %2715 = vperm.xlu0 %2714, %v2632
      %v2716 = vpop.permute.xlu0 %2715
      %v2718 = vlaneseq
      %v2719 = vshrl.u32 %v2718, 7
      %v2720 = vsub.s32 0, %v2719
      %v2721 = vrot.slane %v2705, %v2720
      %v2722 = vmul.f32 %v2708, %v2721
      %v2723 = vmul.f32 %v2712, %v2721
      %v2724 = vmul.f32 %v2716, %v2721
      %v2725 = vadd.f32 %v2702, %v2722
      %v2726 = vadd.f32 %v2703, %v2723
      %v2727 = vadd.f32 %v2704, %v2724
      %v2728 = vld [vmem:[%s3 + $0x14] sm:$0x1]
      %2729 = vset.pattern.permute.xlu0 4
      %2730 = vperm.xlu0 %2729, %v2628
      %v2731 = vpop.permute.xlu0 %2730
      %2733 = vset.pattern.permute.xlu0 4
      %2734 = vperm.xlu0 %2733, %v2630
      %v2735 = vpop.permute.xlu0 %2734
      %2737 = vset.pattern.permute.xlu0 4
      %2738 = vperm.xlu0 %2737, %v2632
      %v2739 = vpop.permute.xlu0 %2738
      %v2741 = vlaneseq
      %v2742 = vshrl.u32 %v2741, 7
      %v2743 = vsub.s32 0, %v2742
      %v2744 = vrot.slane %v2728, %v2743
      %v2745 = vmul.f32 %v2731, %v2744
      %v2746 = vmul.f32 %v2735, %v2744
      %v2747 = vmul.f32 %v2739, %v2744
      %v2748 = vadd.f32 %v2725, %v2745
      %v2749 = vadd.f32 %v2726, %v2746
      %v2750 = vadd.f32 %v2727, %v2747
      %v2751 = vld [vmem:[%s3 + $0x15] sm:$0x1]
      %2752 = vset.pattern.permute.xlu0 5
      %2753 = vperm.xlu0 %2752, %v2628
      %v2754 = vpop.permute.xlu0 %2753
      %2756 = vset.pattern.permute.xlu0 5
      %2757 = vperm.xlu0 %2756, %v2630
      %v2758 = vpop.permute.xlu0 %2757
      %2760 = vset.pattern.permute.xlu0 5
      %2761 = vperm.xlu0 %2760, %v2632
      %v2762 = vpop.permute.xlu0 %2761
      %v2764 = vlaneseq
      %v2765 = vshrl.u32 %v2764, 7
      %v2766 = vsub.s32 0, %v2765
      %v2767 = vrot.slane %v2751, %v2766
      %v2768 = vmul.f32 %v2754, %v2767
      %v2769 = vmul.f32 %v2758, %v2767
      %v2770 = vmul.f32 %v2762, %v2767
      %v2771 = vadd.f32 %v2748, %v2768
      %v2772 = vadd.f32 %v2749, %v2769
      %v2773 = vadd.f32 %v2750, %v2770
      %v2774 = vld [vmem:[%s3 + $0x16] sm:$0x1]
      %2775 = vset.pattern.permute.xlu0 6
      %2776 = vperm.xlu0 %2775, %v2628
      %v2777 = vpop.permute.xlu0 %2776
      %2779 = vset.pattern.permute.xlu0 6
      %2780 = vperm.xlu0 %2779, %v2630
      %v2781 = vpop.permute.xlu0 %2780
      %2783 = vset.pattern.permute.xlu0 6
      %2784 = vperm.xlu0 %2783, %v2632
      %v2785 = vpop.permute.xlu0 %2784
      %v2787 = vlaneseq
      %v2788 = vshrl.u32 %v2787, 7
      %v2789 = vsub.s32 0, %v2788
      %v2790 = vrot.slane %v2774, %v2789
      %v2791 = vmul.f32 %v2777, %v2790
      %v2792 = vmul.f32 %v2781, %v2790
      %v2793 = vmul.f32 %v2785, %v2790
      %v2794 = vadd.f32 %v2771, %v2791
      %v2795 = vadd.f32 %v2772, %v2792
      %v2796 = vadd.f32 %v2773, %v2793
      %v2797 = vld [vmem:[%s3 + $0x17] sm:$0x1]
      %2798 = vset.pattern.permute.xlu0 7
      %2799 = vperm.xlu0 %2798, %v2628
      %v2800 = vpop.permute.xlu0 %2799
      %2802 = vset.pattern.permute.xlu0 7
      %2803 = vperm.xlu0 %2802, %v2630
      %v2804 = vpop.permute.xlu0 %2803
      %2806 = vset.pattern.permute.xlu0 7
      %2807 = vperm.xlu0 %2806, %v2632
      %v2808 = vpop.permute.xlu0 %2807
      %v2810 = vlaneseq
      %v2811 = vshrl.u32 %v2810, 7
      %v2812 = vsub.s32 0, %v2811
      %v2813 = vrot.slane %v2797, %v2812
      %v2814 = vmul.f32 %v2800, %v2813
      %v2815 = vmul.f32 %v2804, %v2813
      %v2816 = vmul.f32 %v2808, %v2813
      %v2817 = vadd.f32 %v2794, %v2814
      %v2818 = vadd.f32 %v2795, %v2815
      %v2819 = vadd.f32 %v2796, %v2816
      %s2820 = scalar_lea.vmem [#allocation2], 8
      %v2821 = vld [vmem:[%s2820] ss:$2 sm:$0x7]
      %s2822 = scalar_lea.vmem %s2820, 16 [#allocation2]
      %v2823 = vld [vmem:[%s2822] ss:$2 sm:$0x7]
      %s2824 = scalar_lea.vmem %s2820, 32 [#allocation2]
      %v2825 = vld [vmem:[%s2824] ss:$2 sm:$0x7]
      %v2826 = vld [vmem:[%s3 + $0x18] sm:$0x1]
      %2828 = vset.pattern.permute.xlu0 0
      %2829 = vperm.xlu0 %2828, %v2821
      %v2830 = vpop.permute.xlu0 %2829
      %2833 = vset.pattern.permute.xlu0 0
      %2834 = vperm.xlu0 %2833, %v2823
      %v2835 = vpop.permute.xlu0 %2834
      %2838 = vset.pattern.permute.xlu0 0
      %2839 = vperm.xlu0 %2838, %v2825
      %v2840 = vpop.permute.xlu0 %2839
      %v2842 = vlaneseq
      %v2843 = vshrl.u32 %v2842, 7
      %v2844 = vsub.s32 0, %v2843
      %v2845 = vrot.slane %v2826, %v2844
      %v2846 = vmul.f32 %v2830, %v2845
      %v2847 = vmul.f32 %v2835, %v2845
      %v2848 = vmul.f32 %v2840, %v2845
      %v2849 = vadd.f32 %v2817, %v2846
      %v2850 = vadd.f32 %v2818, %v2847
      %v2851 = vadd.f32 %v2819, %v2848
      %v2852 = vld [vmem:[%s3 + $0x19] sm:$0x1]
      %2853 = vset.pattern.permute.xlu0 1
      %2854 = vperm.xlu0 %2853, %v2821
      %v2855 = vpop.permute.xlu0 %2854
      %2857 = vset.pattern.permute.xlu0 1
      %2858 = vperm.xlu0 %2857, %v2823
      %v2859 = vpop.permute.xlu0 %2858
      %2861 = vset.pattern.permute.xlu0 1
      %2862 = vperm.xlu0 %2861, %v2825
      %v2863 = vpop.permute.xlu0 %2862
      %v2865 = vlaneseq
      %v2866 = vshrl.u32 %v2865, 7
      %v2867 = vsub.s32 0, %v2866
      %v2868 = vrot.slane %v2852, %v2867
      %v2869 = vmul.f32 %v2855, %v2868
      %v2870 = vmul.f32 %v2859, %v2868
      %v2871 = vmul.f32 %v2863, %v2868
      %v2872 = vadd.f32 %v2849, %v2869
      %v2873 = vadd.f32 %v2850, %v2870
      %v2874 = vadd.f32 %v2851, %v2871
      %v2875 = vld [vmem:[%s3 + $0x1a] sm:$0x1]
      %2876 = vset.pattern.permute.xlu0 2
      %2877 = vperm.xlu0 %2876, %v2821
      %v2878 = vpop.permute.xlu0 %2877
      %2880 = vset.pattern.permute.xlu0 2
      %2881 = vperm.xlu0 %2880, %v2823
      %v2882 = vpop.permute.xlu0 %2881
      %2884 = vset.pattern.permute.xlu0 2
      %2885 = vperm.xlu0 %2884, %v2825
      %v2886 = vpop.permute.xlu0 %2885
      %v2888 = vlaneseq
      %v2889 = vshrl.u32 %v2888, 7
      %v2890 = vsub.s32 0, %v2889
      %v2891 = vrot.slane %v2875, %v2890
      %v2892 = vmul.f32 %v2878, %v2891
      %v2893 = vmul.f32 %v2882, %v2891
      %v2894 = vmul.f32 %v2886, %v2891
      %v2895 = vadd.f32 %v2872, %v2892
      %v2896 = vadd.f32 %v2873, %v2893
      %v2897 = vadd.f32 %v2874, %v2894
      %v2898 = vld [vmem:[%s3 + $0x1b] sm:$0x1]
      %2899 = vset.pattern.permute.xlu0 3
      %2900 = vperm.xlu0 %2899, %v2821
      %v2901 = vpop.permute.xlu0 %2900
      %2903 = vset.pattern.permute.xlu0 3
      %2904 = vperm.xlu0 %2903, %v2823
      %v2905 = vpop.permute.xlu0 %2904
      %2907 = vset.pattern.permute.xlu0 3
      %2908 = vperm.xlu0 %2907, %v2825
      %v2909 = vpop.permute.xlu0 %2908
      %v2911 = vlaneseq
      %v2912 = vshrl.u32 %v2911, 7
      %v2913 = vsub.s32 0, %v2912
      %v2914 = vrot.slane %v2898, %v2913
      %v2915 = vmul.f32 %v2901, %v2914
      %v2916 = vmul.f32 %v2905, %v2914
      %v2917 = vmul.f32 %v2909, %v2914
      %v2918 = vadd.f32 %v2895, %v2915
      %v2919 = vadd.f32 %v2896, %v2916
      %v2920 = vadd.f32 %v2897, %v2917
      %v2921 = vld [vmem:[%s3 + $0x1c] sm:$0x1]
      %2922 = vset.pattern.permute.xlu0 4
      %2923 = vperm.xlu0 %2922, %v2821
      %v2924 = vpop.permute.xlu0 %2923
      %2926 = vset.pattern.permute.xlu0 4
      %2927 = vperm.xlu0 %2926, %v2823
      %v2928 = vpop.permute.xlu0 %2927
      %2930 = vset.pattern.permute.xlu0 4
      %2931 = vperm.xlu0 %2930, %v2825
      %v2932 = vpop.permute.xlu0 %2931
      %v2934 = vlaneseq
      %v2935 = vshrl.u32 %v2934, 7
      %v2936 = vsub.s32 0, %v2935
      %v2937 = vrot.slane %v2921, %v2936
      %v2938 = vmul.f32 %v2924, %v2937
      %v2939 = vmul.f32 %v2928, %v2937
      %v2940 = vmul.f32 %v2932, %v2937
      %v2941 = vadd.f32 %v2918, %v2938
      %v2942 = vadd.f32 %v2919, %v2939
      %v2943 = vadd.f32 %v2920, %v2940
      %v2944 = vld [vmem:[%s3 + $0x1d] sm:$0x1]
      %2945 = vset.pattern.permute.xlu0 5
      %2946 = vperm.xlu0 %2945, %v2821
      %v2947 = vpop.permute.xlu0 %2946
      %2949 = vset.pattern.permute.xlu0 5
      %2950 = vperm.xlu0 %2949, %v2823
      %v2951 = vpop.permute.xlu0 %2950
      %2953 = vset.pattern.permute.xlu0 5
      %2954 = vperm.xlu0 %2953, %v2825
      %v2955 = vpop.permute.xlu0 %2954
      %v2957 = vlaneseq
      %v2958 = vshrl.u32 %v2957, 7
      %v2959 = vsub.s32 0, %v2958
      %v2960 = vrot.slane %v2944, %v2959
      %v2961 = vmul.f32 %v2947, %v2960
      %v2962 = vmul.f32 %v2951, %v2960
      %v2963 = vmul.f32 %v2955, %v2960
      %v2964 = vadd.f32 %v2941, %v2961
      %v2965 = vadd.f32 %v2942, %v2962
      %v2966 = vadd.f32 %v2943, %v2963
      %v2967 = vld [vmem:[%s3 + $0x1e] sm:$0x1]
      %2968 = vset.pattern.permute.xlu0 6
      %2969 = vperm.xlu0 %2968, %v2821
      %v2970 = vpop.permute.xlu0 %2969
      %2972 = vset.pattern.permute.xlu0 6
      %2973 = vperm.xlu0 %2972, %v2823
      %v2974 = vpop.permute.xlu0 %2973
      %2976 = vset.pattern.permute.xlu0 6
      %2977 = vperm.xlu0 %2976, %v2825
      %v2978 = vpop.permute.xlu0 %2977
      %v2980 = vlaneseq
      %v2981 = vshrl.u32 %v2980, 7
      %v2982 = vsub.s32 0, %v2981
      %v2983 = vrot.slane %v2967, %v2982
      %v2984 = vmul.f32 %v2970, %v2983
      %v2985 = vmul.f32 %v2974, %v2983
      %v2986 = vmul.f32 %v2978, %v2983
      %v2987 = vadd.f32 %v2964, %v2984
      %v2988 = vadd.f32 %v2965, %v2985
      %v2989 = vadd.f32 %v2966, %v2986
      %v2990 = vld [vmem:[%s3 + $0x1f] sm:$0x1]
      %2991 = vset.pattern.permute.xlu0 7
      %2992 = vperm.xlu0 %2991, %v2821
      %v2993 = vpop.permute.xlu0 %2992
      %2995 = vset.pattern.permute.xlu0 7
      %2996 = vperm.xlu0 %2995, %v2823
      %v2997 = vpop.permute.xlu0 %2996
      %2999 = vset.pattern.permute.xlu0 7
      %3000 = vperm.xlu0 %2999, %v2825
      %v3001 = vpop.permute.xlu0 %3000
      %v3003 = vlaneseq
      %v3004 = vshrl.u32 %v3003, 7
      %v3005 = vsub.s32 0, %v3004
      %v3006 = vrot.slane %v2990, %v3005
      %v3007 = vmul.f32 %v2993, %v3006
      %v3008 = vmul.f32 %v2997, %v3006
      %v3009 = vmul.f32 %v3001, %v3006
      %v3010 = vadd.f32 %v2987, %v3007
      %v3011 = vadd.f32 %v2988, %v3008
      %v3012 = vadd.f32 %v2989, %v3009
      %s3013 = scalar_lea.vmem %s2820, 1 [#allocation2]
      %v3014 = vld [vmem:[%s3013] ss:$2 sm:$0x7]
      %s3015 = scalar_lea.vmem %s2820, 17 [#allocation2]
      %v3016 = vld [vmem:[%s3015] ss:$2 sm:$0x7]
      %s3017 = scalar_lea.vmem %s2820, 33 [#allocation2]
      %v3018 = vld [vmem:[%s3017] ss:$2 sm:$0x7]
      %v3019 = vld [vmem:[%s3 + $0x20] sm:$0x1]
      %3021 = vset.pattern.permute.xlu0 0
      %3022 = vperm.xlu0 %3021, %v3014
      %v3023 = vpop.permute.xlu0 %3022
      %3026 = vset.pattern.permute.xlu0 0
      %3027 = vperm.xlu0 %3026, %v3016
      %v3028 = vpop.permute.xlu0 %3027
      %3031 = vset.pattern.permute.xlu0 0
      %3032 = vperm.xlu0 %3031, %v3018
      %v3033 = vpop.permute.xlu0 %3032
      %v3035 = vlaneseq
      %v3036 = vshrl.u32 %v3035, 7
      %v3037 = vsub.s32 0, %v3036
      %v3038 = vrot.slane %v3019, %v3037
      %v3039 = vmul.f32 %v3023, %v3038
      %v3040 = vmul.f32 %v3028, %v3038
      %v3041 = vmul.f32 %v3033, %v3038
      %v3042 = vadd.f32 %v3010, %v3039
      %v3043 = vadd.f32 %v3011, %v3040
      %v3044 = vadd.f32 %v3012, %v3041
      %v3045 = vld [vmem:[%s3 + $0x21] sm:$0x1]
      %3046 = vset.pattern.permute.xlu0 1
      %3047 = vperm.xlu0 %3046, %v3014
      %v3048 = vpop.permute.xlu0 %3047
      %3050 = vset.pattern.permute.xlu0 1
      %3051 = vperm.xlu0 %3050, %v3016
      %v3052 = vpop.permute.xlu0 %3051
      %3054 = vset.pattern.permute.xlu0 1
      %3055 = vperm.xlu0 %3054, %v3018
      %v3056 = vpop.permute.xlu0 %3055
      %v3058 = vlaneseq
      %v3059 = vshrl.u32 %v3058, 7
      %v3060 = vsub.s32 0, %v3059
      %v3061 = vrot.slane %v3045, %v3060
      %v3062 = vmul.f32 %v3048, %v3061
      %v3063 = vmul.f32 %v3052, %v3061
      %v3064 = vmul.f32 %v3056, %v3061
      %v3065 = vadd.f32 %v3042, %v3062
      %v3066 = vadd.f32 %v3043, %v3063
      %v3067 = vadd.f32 %v3044, %v3064
      %v3068 = vld [vmem:[%s3 + $0x22] sm:$0x1]
      %3069 = vset.pattern.permute.xlu0 2
      %3070 = vperm.xlu0 %3069, %v3014
      %v3071 = vpop.permute.xlu0 %3070
      %3073 = vset.pattern.permute.xlu0 2
      %3074 = vperm.xlu0 %3073, %v3016
      %v3075 = vpop.permute.xlu0 %3074
      %3077 = vset.pattern.permute.xlu0 2
      %3078 = vperm.xlu0 %3077, %v3018
      %v3079 = vpop.permute.xlu0 %3078
      %v3081 = vlaneseq
      %v3082 = vshrl.u32 %v3081, 7
      %v3083 = vsub.s32 0, %v3082
      %v3084 = vrot.slane %v3068, %v3083
      %v3085 = vmul.f32 %v3071, %v3084
      %v3086 = vmul.f32 %v3075, %v3084
      %v3087 = vmul.f32 %v3079, %v3084
      %v3088 = vadd.f32 %v3065, %v3085
      %v3089 = vadd.f32 %v3066, %v3086
      %v3090 = vadd.f32 %v3067, %v3087
      %v3091 = vld [vmem:[%s3 + $0x23] sm:$0x1]
      %3092 = vset.pattern.permute.xlu0 3
      %3093 = vperm.xlu0 %3092, %v3014
      %v3094 = vpop.permute.xlu0 %3093
      %3096 = vset.pattern.permute.xlu0 3
      %3097 = vperm.xlu0 %3096, %v3016
      %v3098 = vpop.permute.xlu0 %3097
      %3100 = vset.pattern.permute.xlu0 3
      %3101 = vperm.xlu0 %3100, %v3018
      %v3102 = vpop.permute.xlu0 %3101
      %v3104 = vlaneseq
      %v3105 = vshrl.u32 %v3104, 7
      %v3106 = vsub.s32 0, %v3105
      %v3107 = vrot.slane %v3091, %v3106
      %v3108 = vmul.f32 %v3094, %v3107
      %v3109 = vmul.f32 %v3098, %v3107
      %v3110 = vmul.f32 %v3102, %v3107
      %v3111 = vadd.f32 %v3088, %v3108
      %v3112 = vadd.f32 %v3089, %v3109
      %v3113 = vadd.f32 %v3090, %v3110
      %v3114 = vld [vmem:[%s3 + $0x24] sm:$0x1]
      %3115 = vset.pattern.permute.xlu0 4
      %3116 = vperm.xlu0 %3115, %v3014
      %v3117 = vpop.permute.xlu0 %3116
      %3119 = vset.pattern.permute.xlu0 4
      %3120 = vperm.xlu0 %3119, %v3016
      %v3121 = vpop.permute.xlu0 %3120
      %3123 = vset.pattern.permute.xlu0 4
      %3124 = vperm.xlu0 %3123, %v3018
      %v3125 = vpop.permute.xlu0 %3124
      %v3127 = vlaneseq
      %v3128 = vshrl.u32 %v3127, 7
      %v3129 = vsub.s32 0, %v3128
      %v3130 = vrot.slane %v3114, %v3129
      %v3131 = vmul.f32 %v3117, %v3130
      %v3132 = vmul.f32 %v3121, %v3130
      %v3133 = vmul.f32 %v3125, %v3130
      %v3134 = vadd.f32 %v3111, %v3131
      %v3135 = vadd.f32 %v3112, %v3132
      %v3136 = vadd.f32 %v3113, %v3133
      %v3137 = vld [vmem:[%s3 + $0x25] sm:$0x1]
      %3138 = vset.pattern.permute.xlu0 5
      %3139 = vperm.xlu0 %3138, %v3014
      %v3140 = vpop.permute.xlu0 %3139
      %3142 = vset.pattern.permute.xlu0 5
      %3143 = vperm.xlu0 %3142, %v3016
      %v3144 = vpop.permute.xlu0 %3143
      %3146 = vset.pattern.permute.xlu0 5
      %3147 = vperm.xlu0 %3146, %v3018
      %v3148 = vpop.permute.xlu0 %3147
      %v3150 = vlaneseq
      %v3151 = vshrl.u32 %v3150, 7
      %v3152 = vsub.s32 0, %v3151
      %v3153 = vrot.slane %v3137, %v3152
      %v3154 = vmul.f32 %v3140, %v3153
      %v3155 = vmul.f32 %v3144, %v3153
      %v3156 = vmul.f32 %v3148, %v3153
      %v3157 = vadd.f32 %v3134, %v3154
      %v3158 = vadd.f32 %v3135, %v3155
      %v3159 = vadd.f32 %v3136, %v3156
      %v3160 = vld [vmem:[%s3 + $0x26] sm:$0x1]
      %3161 = vset.pattern.permute.xlu0 6
      %3162 = vperm.xlu0 %3161, %v3014
      %v3163 = vpop.permute.xlu0 %3162
      %3165 = vset.pattern.permute.xlu0 6
      %3166 = vperm.xlu0 %3165, %v3016
      %v3167 = vpop.permute.xlu0 %3166
      %3169 = vset.pattern.permute.xlu0 6
      %3170 = vperm.xlu0 %3169, %v3018
      %v3171 = vpop.permute.xlu0 %3170
      %v3173 = vlaneseq
      %v3174 = vshrl.u32 %v3173, 7
      %v3175 = vsub.s32 0, %v3174
      %v3176 = vrot.slane %v3160, %v3175
      %v3177 = vmul.f32 %v3163, %v3176
      %v3178 = vmul.f32 %v3167, %v3176
      %v3179 = vmul.f32 %v3171, %v3176
      %v3180 = vadd.f32 %v3157, %v3177
      %v3181 = vadd.f32 %v3158, %v3178
      %v3182 = vadd.f32 %v3159, %v3179
      %v3183 = vld [vmem:[%s3 + $0x27] sm:$0x1]
      %3184 = vset.pattern.permute.xlu0 7
      %3185 = vperm.xlu0 %3184, %v3014
      %v3186 = vpop.permute.xlu0 %3185
      %3188 = vset.pattern.permute.xlu0 7
      %3189 = vperm.xlu0 %3188, %v3016
      %v3190 = vpop.permute.xlu0 %3189
      %3192 = vset.pattern.permute.xlu0 7
      %3193 = vperm.xlu0 %3192, %v3018
      %v3194 = vpop.permute.xlu0 %3193
      %v3196 = vlaneseq
      %v3197 = vshrl.u32 %v3196, 7
      %v3198 = vsub.s32 0, %v3197
      %v3199 = vrot.slane %v3183, %v3198
      %v3200 = vmul.f32 %v3186, %v3199
      %v3201 = vmul.f32 %v3190, %v3199
      %v3202 = vmul.f32 %v3194, %v3199
      %v3203 = vadd.f32 %v3180, %v3200
      %v3204 = vadd.f32 %v3181, %v3201
      %v3205 = vadd.f32 %v3182, %v3202
      %s3206 = scalar_lea.vmem %s2820, 2 [#allocation2]
      %v3207 = vld [vmem:[%s3206] ss:$2 sm:$0x7]
      %s3208 = scalar_lea.vmem %s2820, 18 [#allocation2]
      %v3209 = vld [vmem:[%s3208] ss:$2 sm:$0x7]
      %s3210 = scalar_lea.vmem %s2820, 34 [#allocation2]
      %v3211 = vld [vmem:[%s3210] ss:$2 sm:$0x7]
      %v3212 = vld [vmem:[%s3 + $0x28] sm:$0x1]
      %3214 = vset.pattern.permute.xlu0 0
      %3215 = vperm.xlu0 %3214, %v3207
      %v3216 = vpop.permute.xlu0 %3215
      %3219 = vset.pattern.permute.xlu0 0
      %3220 = vperm.xlu0 %3219, %v3209
      %v3221 = vpop.permute.xlu0 %3220
      %3224 = vset.pattern.permute.xlu0 0
      %3225 = vperm.xlu0 %3224, %v3211
      %v3226 = vpop.permute.xlu0 %3225
      %v3228 = vlaneseq
      %v3229 = vshrl.u32 %v3228, 7
      %v3230 = vsub.s32 0, %v3229
      %v3231 = vrot.slane %v3212, %v3230
      %v3232 = vmul.f32 %v3216, %v3231
      %v3233 = vmul.f32 %v3221, %v3231
      %v3234 = vmul.f32 %v3226, %v3231
      %v3235 = vadd.f32 %v3203, %v3232
      %v3236 = vadd.f32 %v3204, %v3233
      %v3237 = vadd.f32 %v3205, %v3234
      %v3238 = vld [vmem:[%s3 + $0x29] sm:$0x1]
      %3239 = vset.pattern.permute.xlu0 1
      %3240 = vperm.xlu0 %3239, %v3207
      %v3241 = vpop.permute.xlu0 %3240
      %3243 = vset.pattern.permute.xlu0 1
      %3244 = vperm.xlu0 %3243, %v3209
      %v3245 = vpop.permute.xlu0 %3244
      %3247 = vset.pattern.permute.xlu0 1
      %3248 = vperm.xlu0 %3247, %v3211
      %v3249 = vpop.permute.xlu0 %3248
      %v3251 = vlaneseq
      %v3252 = vshrl.u32 %v3251, 7
      %v3253 = vsub.s32 0, %v3252
      %v3254 = vrot.slane %v3238, %v3253
      %v3255 = vmul.f32 %v3241, %v3254
      %v3256 = vmul.f32 %v3245, %v3254
      %v3257 = vmul.f32 %v3249, %v3254
      %v3258 = vadd.f32 %v3235, %v3255
      %v3259 = vadd.f32 %v3236, %v3256
      %v3260 = vadd.f32 %v3237, %v3257
      %v3261 = vld [vmem:[%s3 + $0x2a] sm:$0x1]
      %3262 = vset.pattern.permute.xlu0 2
      %3263 = vperm.xlu0 %3262, %v3207
      %v3264 = vpop.permute.xlu0 %3263
      %3266 = vset.pattern.permute.xlu0 2
      %3267 = vperm.xlu0 %3266, %v3209
      %v3268 = vpop.permute.xlu0 %3267
      %3270 = vset.pattern.permute.xlu0 2
      %3271 = vperm.xlu0 %3270, %v3211
      %v3272 = vpop.permute.xlu0 %3271
      %v3274 = vlaneseq
      %v3275 = vshrl.u32 %v3274, 7
      %v3276 = vsub.s32 0, %v3275
      %v3277 = vrot.slane %v3261, %v3276
      %v3278 = vmul.f32 %v3264, %v3277
      %v3279 = vmul.f32 %v3268, %v3277
      %v3280 = vmul.f32 %v3272, %v3277
      %v3281 = vadd.f32 %v3258, %v3278
      %v3282 = vadd.f32 %v3259, %v3279
      %v3283 = vadd.f32 %v3260, %v3280
      %v3284 = vld [vmem:[%s3 + $0x2b] sm:$0x1]
      %3285 = vset.pattern.permute.xlu0 3
      %3286 = vperm.xlu0 %3285, %v3207
      %v3287 = vpop.permute.xlu0 %3286
      %3289 = vset.pattern.permute.xlu0 3
      %3290 = vperm.xlu0 %3289, %v3209
      %v3291 = vpop.permute.xlu0 %3290
      %3293 = vset.pattern.permute.xlu0 3
      %3294 = vperm.xlu0 %3293, %v3211
      %v3295 = vpop.permute.xlu0 %3294
      %v3297 = vlaneseq
      %v3298 = vshrl.u32 %v3297, 7
      %v3299 = vsub.s32 0, %v3298
      %v3300 = vrot.slane %v3284, %v3299
      %v3301 = vmul.f32 %v3287, %v3300
      %v3302 = vmul.f32 %v3291, %v3300
      %v3303 = vmul.f32 %v3295, %v3300
      %v3304 = vadd.f32 %v3281, %v3301
      %v3305 = vadd.f32 %v3282, %v3302
      %v3306 = vadd.f32 %v3283, %v3303
      %v3307 = vld [vmem:[%s3 + $0x2c] sm:$0x1]
      %3308 = vset.pattern.permute.xlu0 4
      %3309 = vperm.xlu0 %3308, %v3207
      %v3310 = vpop.permute.xlu0 %3309
      %3312 = vset.pattern.permute.xlu0 4
      %3313 = vperm.xlu0 %3312, %v3209
      %v3314 = vpop.permute.xlu0 %3313
      %3316 = vset.pattern.permute.xlu0 4
      %3317 = vperm.xlu0 %3316, %v3211
      %v3318 = vpop.permute.xlu0 %3317
      %v3320 = vlaneseq
      %v3321 = vshrl.u32 %v3320, 7
      %v3322 = vsub.s32 0, %v3321
      %v3323 = vrot.slane %v3307, %v3322
      %v3324 = vmul.f32 %v3310, %v3323
      %v3325 = vmul.f32 %v3314, %v3323
      %v3326 = vmul.f32 %v3318, %v3323
      %v3327 = vadd.f32 %v3304, %v3324
      %v3328 = vadd.f32 %v3305, %v3325
      %v3329 = vadd.f32 %v3306, %v3326
      %v3330 = vld [vmem:[%s3 + $0x2d] sm:$0x1]
      %3331 = vset.pattern.permute.xlu0 5
      %3332 = vperm.xlu0 %3331, %v3207
      %v3333 = vpop.permute.xlu0 %3332
      %3335 = vset.pattern.permute.xlu0 5
      %3336 = vperm.xlu0 %3335, %v3209
      %v3337 = vpop.permute.xlu0 %3336
      %3339 = vset.pattern.permute.xlu0 5
      %3340 = vperm.xlu0 %3339, %v3211
      %v3341 = vpop.permute.xlu0 %3340
      %v3343 = vlaneseq
      %v3344 = vshrl.u32 %v3343, 7
      %v3345 = vsub.s32 0, %v3344
      %v3346 = vrot.slane %v3330, %v3345
      %v3347 = vmul.f32 %v3333, %v3346
      %v3348 = vmul.f32 %v3337, %v3346
      %v3349 = vmul.f32 %v3341, %v3346
      %v3350 = vadd.f32 %v3327, %v3347
      %v3351 = vadd.f32 %v3328, %v3348
      %v3352 = vadd.f32 %v3329, %v3349
      %v3353 = vld [vmem:[%s3 + $0x2e] sm:$0x1]
      %3354 = vset.pattern.permute.xlu0 6
      %3355 = vperm.xlu0 %3354, %v3207
      %v3356 = vpop.permute.xlu0 %3355
      %3358 = vset.pattern.permute.xlu0 6
      %3359 = vperm.xlu0 %3358, %v3209
      %v3360 = vpop.permute.xlu0 %3359
      %3362 = vset.pattern.permute.xlu0 6
      %3363 = vperm.xlu0 %3362, %v3211
      %v3364 = vpop.permute.xlu0 %3363
      %v3366 = vlaneseq
      %v3367 = vshrl.u32 %v3366, 7
      %v3368 = vsub.s32 0, %v3367
      %v3369 = vrot.slane %v3353, %v3368
      %v3370 = vmul.f32 %v3356, %v3369
      %v3371 = vmul.f32 %v3360, %v3369
      %v3372 = vmul.f32 %v3364, %v3369
      %v3373 = vadd.f32 %v3350, %v3370
      %v3374 = vadd.f32 %v3351, %v3371
      %v3375 = vadd.f32 %v3352, %v3372
      %v3376 = vld [vmem:[%s3 + $0x2f] sm:$0x1]
      %3377 = vset.pattern.permute.xlu0 7
      %3378 = vperm.xlu0 %3377, %v3207
      %v3379 = vpop.permute.xlu0 %3378
      %3381 = vset.pattern.permute.xlu0 7
      %3382 = vperm.xlu0 %3381, %v3209
      %v3383 = vpop.permute.xlu0 %3382
      %3385 = vset.pattern.permute.xlu0 7
      %3386 = vperm.xlu0 %3385, %v3211
      %v3387 = vpop.permute.xlu0 %3386
      %v3389 = vlaneseq
      %v3390 = vshrl.u32 %v3389, 7
      %v3391 = vsub.s32 0, %v3390
      %v3392 = vrot.slane %v3376, %v3391
      %v3393 = vmul.f32 %v3379, %v3392
      %v3394 = vmul.f32 %v3383, %v3392
      %v3395 = vmul.f32 %v3387, %v3392
      %v3396 = vadd.f32 %v3373, %v3393
      %v3397 = vadd.f32 %v3374, %v3394
      %v3398 = vadd.f32 %v3375, %v3395
      %s3399 = scalar_lea.vmem [#allocation2], 16
      %v3400 = vld [vmem:[%s3399] ss:$2 sm:$0x7]
      %s3401 = scalar_lea.vmem %s3399, 16 [#allocation2]
      %v3402 = vld [vmem:[%s3401] ss:$2 sm:$0x7]
      %s3403 = scalar_lea.vmem %s3399, 32 [#allocation2]
      %v3404 = vld [vmem:[%s3403] ss:$2 sm:$0x7]
      %v3405 = vld [vmem:[%s3 + $0x30] sm:$0x1]
      %3407 = vset.pattern.permute.xlu0 0
      %3408 = vperm.xlu0 %3407, %v3400
      %v3409 = vpop.permute.xlu0 %3408
      %3412 = vset.pattern.permute.xlu0 0
      %3413 = vperm.xlu0 %3412, %v3402
      %v3414 = vpop.permute.xlu0 %3413
      %3417 = vset.pattern.permute.xlu0 0
      %3418 = vperm.xlu0 %3417, %v3404
      %v3419 = vpop.permute.xlu0 %3418
      %v3421 = vlaneseq
      %v3422 = vshrl.u32 %v3421, 7
      %v3423 = vsub.s32 0, %v3422
      %v3424 = vrot.slane %v3405, %v3423
      %v3425 = vmul.f32 %v3409, %v3424
      %v3426 = vmul.f32 %v3414, %v3424
      %v3427 = vmul.f32 %v3419, %v3424
      %v3428 = vadd.f32 %v3396, %v3425
      %v3429 = vadd.f32 %v3397, %v3426
      %v3430 = vadd.f32 %v3398, %v3427
      %v3431 = vld [vmem:[%s3 + $0x31] sm:$0x1]
      %3432 = vset.pattern.permute.xlu0 1
      %3433 = vperm.xlu0 %3432, %v3400
      %v3434 = vpop.permute.xlu0 %3433
      %3436 = vset.pattern.permute.xlu0 1
      %3437 = vperm.xlu0 %3436, %v3402
      %v3438 = vpop.permute.xlu0 %3437
      %3440 = vset.pattern.permute.xlu0 1
      %3441 = vperm.xlu0 %3440, %v3404
      %v3442 = vpop.permute.xlu0 %3441
      %v3444 = vlaneseq
      %v3445 = vshrl.u32 %v3444, 7
      %v3446 = vsub.s32 0, %v3445
      %v3447 = vrot.slane %v3431, %v3446
      %v3448 = vmul.f32 %v3434, %v3447
      %v3449 = vmul.f32 %v3438, %v3447
      %v3450 = vmul.f32 %v3442, %v3447
      %v3451 = vadd.f32 %v3428, %v3448
      %v3452 = vadd.f32 %v3429, %v3449
      %v3453 = vadd.f32 %v3430, %v3450
      %v3454 = vld [vmem:[%s3 + $0x32] sm:$0x1]
      %3455 = vset.pattern.permute.xlu0 2
      %3456 = vperm.xlu0 %3455, %v3400
      %v3457 = vpop.permute.xlu0 %3456
      %3459 = vset.pattern.permute.xlu0 2
      %3460 = vperm.xlu0 %3459, %v3402
      %v3461 = vpop.permute.xlu0 %3460
      %3463 = vset.pattern.permute.xlu0 2
      %3464 = vperm.xlu0 %3463, %v3404
      %v3465 = vpop.permute.xlu0 %3464
      %v3467 = vlaneseq
      %v3468 = vshrl.u32 %v3467, 7
      %v3469 = vsub.s32 0, %v3468
      %v3470 = vrot.slane %v3454, %v3469
      %v3471 = vmul.f32 %v3457, %v3470
      %v3472 = vmul.f32 %v3461, %v3470
      %v3473 = vmul.f32 %v3465, %v3470
      %v3474 = vadd.f32 %v3451, %v3471
      %v3475 = vadd.f32 %v3452, %v3472
      %v3476 = vadd.f32 %v3453, %v3473
      %v3477 = vld [vmem:[%s3 + $0x33] sm:$0x1]
      %3478 = vset.pattern.permute.xlu0 3
      %3479 = vperm.xlu0 %3478, %v3400
      %v3480 = vpop.permute.xlu0 %3479
      %3482 = vset.pattern.permute.xlu0 3
      %3483 = vperm.xlu0 %3482, %v3402
      %v3484 = vpop.permute.xlu0 %3483
      %3486 = vset.pattern.permute.xlu0 3
      %3487 = vperm.xlu0 %3486, %v3404
      %v3488 = vpop.permute.xlu0 %3487
      %v3490 = vlaneseq
      %v3491 = vshrl.u32 %v3490, 7
      %v3492 = vsub.s32 0, %v3491
      %v3493 = vrot.slane %v3477, %v3492
      %v3494 = vmul.f32 %v3480, %v3493
      %v3495 = vmul.f32 %v3484, %v3493
      %v3496 = vmul.f32 %v3488, %v3493
      %v3497 = vadd.f32 %v3474, %v3494
      %v3498 = vadd.f32 %v3475, %v3495
      %v3499 = vadd.f32 %v3476, %v3496
      %v3500 = vld [vmem:[%s3 + $0x34] sm:$0x1]
      %3501 = vset.pattern.permute.xlu0 4
      %3502 = vperm.xlu0 %3501, %v3400
      %v3503 = vpop.permute.xlu0 %3502
      %3505 = vset.pattern.permute.xlu0 4
      %3506 = vperm.xlu0 %3505, %v3402
      %v3507 = vpop.permute.xlu0 %3506
      %3509 = vset.pattern.permute.xlu0 4
      %3510 = vperm.xlu0 %3509, %v3404
      %v3511 = vpop.permute.xlu0 %3510
      %v3513 = vlaneseq
      %v3514 = vshrl.u32 %v3513, 7
      %v3515 = vsub.s32 0, %v3514
      %v3516 = vrot.slane %v3500, %v3515
      %v3517 = vmul.f32 %v3503, %v3516
      %v3518 = vmul.f32 %v3507, %v3516
      %v3519 = vmul.f32 %v3511, %v3516
      %v3520 = vadd.f32 %v3497, %v3517
      %v3521 = vadd.f32 %v3498, %v3518
      %v3522 = vadd.f32 %v3499, %v3519
      %v3523 = vld [vmem:[%s3 + $0x35] sm:$0x1]
      %3524 = vset.pattern.permute.xlu0 5
      %3525 = vperm.xlu0 %3524, %v3400
      %v3526 = vpop.permute.xlu0 %3525
      %3528 = vset.pattern.permute.xlu0 5
      %3529 = vperm.xlu0 %3528, %v3402
      %v3530 = vpop.permute.xlu0 %3529
      %3532 = vset.pattern.permute.xlu0 5
      %3533 = vperm.xlu0 %3532, %v3404
      %v3534 = vpop.permute.xlu0 %3533
      %v3536 = vlaneseq
      %v3537 = vshrl.u32 %v3536, 7
      %v3538 = vsub.s32 0, %v3537
      %v3539 = vrot.slane %v3523, %v3538
      %v3540 = vmul.f32 %v3526, %v3539
      %v3541 = vmul.f32 %v3530, %v3539
      %v3542 = vmul.f32 %v3534, %v3539
      %v3543 = vadd.f32 %v3520, %v3540
      %v3544 = vadd.f32 %v3521, %v3541
      %v3545 = vadd.f32 %v3522, %v3542
      %v3546 = vld [vmem:[%s3 + $0x36] sm:$0x1]
      %3547 = vset.pattern.permute.xlu0 6
      %3548 = vperm.xlu0 %3547, %v3400
      %v3549 = vpop.permute.xlu0 %3548
      %3551 = vset.pattern.permute.xlu0 6
      %3552 = vperm.xlu0 %3551, %v3402
      %v3553 = vpop.permute.xlu0 %3552
      %3555 = vset.pattern.permute.xlu0 6
      %3556 = vperm.xlu0 %3555, %v3404
      %v3557 = vpop.permute.xlu0 %3556
      %v3559 = vlaneseq
      %v3560 = vshrl.u32 %v3559, 7
      %v3561 = vsub.s32 0, %v3560
      %v3562 = vrot.slane %v3546, %v3561
      %v3563 = vmul.f32 %v3549, %v3562
      %v3564 = vmul.f32 %v3553, %v3562
      %v3565 = vmul.f32 %v3557, %v3562
      %v3566 = vadd.f32 %v3543, %v3563
      %v3567 = vadd.f32 %v3544, %v3564
      %v3568 = vadd.f32 %v3545, %v3565
      %v3569 = vld [vmem:[%s3 + $0x37] sm:$0x1]
      %3570 = vset.pattern.permute.xlu0 7
      %3571 = vperm.xlu0 %3570, %v3400
      %v3572 = vpop.permute.xlu0 %3571
      %3574 = vset.pattern.permute.xlu0 7
      %3575 = vperm.xlu0 %3574, %v3402
      %v3576 = vpop.permute.xlu0 %3575
      %3578 = vset.pattern.permute.xlu0 7
      %3579 = vperm.xlu0 %3578, %v3404
      %v3580 = vpop.permute.xlu0 %3579
      %v3582 = vlaneseq
      %v3583 = vshrl.u32 %v3582, 7
      %v3584 = vsub.s32 0, %v3583
      %v3585 = vrot.slane %v3569, %v3584
      %v3586 = vmul.f32 %v3572, %v3585
      %v3587 = vmul.f32 %v3576, %v3585
      %v3588 = vmul.f32 %v3580, %v3585
      %v3589 = vadd.f32 %v3566, %v3586
      %v3590 = vadd.f32 %v3567, %v3587
      %v3591 = vadd.f32 %v3568, %v3588
      %s3592 = scalar_lea.vmem %s3399, 1 [#allocation2]
      %v3593 = vld [vmem:[%s3592] ss:$2 sm:$0x7]
      %s3594 = scalar_lea.vmem %s3399, 17 [#allocation2]
      %v3595 = vld [vmem:[%s3594] ss:$2 sm:$0x7]
      %s3596 = scalar_lea.vmem %s3399, 33 [#allocation2]
      %v3597 = vld [vmem:[%s3596] ss:$2 sm:$0x7]
      %v3598 = vld [vmem:[%s3 + $0x38] sm:$0x1]
      %3600 = vset.pattern.permute.xlu0 0
      %3601 = vperm.xlu0 %3600, %v3593
      %v3602 = vpop.permute.xlu0 %3601
      %3605 = vset.pattern.permute.xlu0 0
      %3606 = vperm.xlu0 %3605, %v3595
      %v3607 = vpop.permute.xlu0 %3606
      %3610 = vset.pattern.permute.xlu0 0
      %3611 = vperm.xlu0 %3610, %v3597
      %v3612 = vpop.permute.xlu0 %3611
      %v3614 = vlaneseq
      %v3615 = vshrl.u32 %v3614, 7
      %v3616 = vsub.s32 0, %v3615
      %v3617 = vrot.slane %v3598, %v3616
      %v3618 = vmul.f32 %v3602, %v3617
      %v3619 = vmul.f32 %v3607, %v3617
      %v3620 = vmul.f32 %v3612, %v3617
      %v3621 = vadd.f32 %v3589, %v3618
      %v3622 = vadd.f32 %v3590, %v3619
      %v3623 = vadd.f32 %v3591, %v3620
      %v3624 = vld [vmem:[%s3 + $0x39] sm:$0x1]
      %3625 = vset.pattern.permute.xlu0 1
      %3626 = vperm.xlu0 %3625, %v3593
      %v3627 = vpop.permute.xlu0 %3626
      %3629 = vset.pattern.permute.xlu0 1
      %3630 = vperm.xlu0 %3629, %v3595
      %v3631 = vpop.permute.xlu0 %3630
      %3633 = vset.pattern.permute.xlu0 1
      %3634 = vperm.xlu0 %3633, %v3597
      %v3635 = vpop.permute.xlu0 %3634
      %v3637 = vlaneseq
      %v3638 = vshrl.u32 %v3637, 7
      %v3639 = vsub.s32 0, %v3638
      %v3640 = vrot.slane %v3624, %v3639
      %v3641 = vmul.f32 %v3627, %v3640
      %v3642 = vmul.f32 %v3631, %v3640
      %v3643 = vmul.f32 %v3635, %v3640
      %v3644 = vadd.f32 %v3621, %v3641
      %v3645 = vadd.f32 %v3622, %v3642
      %v3646 = vadd.f32 %v3623, %v3643
      %v3647 = vld [vmem:[%s3 + $0x3a] sm:$0x1]
      %3648 = vset.pattern.permute.xlu0 2
      %3649 = vperm.xlu0 %3648, %v3593
      %v3650 = vpop.permute.xlu0 %3649
      %3652 = vset.pattern.permute.xlu0 2
      %3653 = vperm.xlu0 %3652, %v3595
      %v3654 = vpop.permute.xlu0 %3653
      %3656 = vset.pattern.permute.xlu0 2
      %3657 = vperm.xlu0 %3656, %v3597
      %v3658 = vpop.permute.xlu0 %3657
      %v3660 = vlaneseq
      %v3661 = vshrl.u32 %v3660, 7
      %v3662 = vsub.s32 0, %v3661
      %v3663 = vrot.slane %v3647, %v3662
      %v3664 = vmul.f32 %v3650, %v3663
      %v3665 = vmul.f32 %v3654, %v3663
      %v3666 = vmul.f32 %v3658, %v3663
      %v3667 = vadd.f32 %v3644, %v3664
      %v3668 = vadd.f32 %v3645, %v3665
      %v3669 = vadd.f32 %v3646, %v3666
      %v3670 = vld [vmem:[%s3 + $0x3b] sm:$0x1]
      %3671 = vset.pattern.permute.xlu0 3
      %3672 = vperm.xlu0 %3671, %v3593
      %v3673 = vpop.permute.xlu0 %3672
      %3675 = vset.pattern.permute.xlu0 3
      %3676 = vperm.xlu0 %3675, %v3595
      %v3677 = vpop.permute.xlu0 %3676
      %3679 = vset.pattern.permute.xlu0 3
      %3680 = vperm.xlu0 %3679, %v3597
      %v3681 = vpop.permute.xlu0 %3680
      %v3683 = vlaneseq
      %v3684 = vshrl.u32 %v3683, 7
      %v3685 = vsub.s32 0, %v3684
      %v3686 = vrot.slane %v3670, %v3685
      %v3687 = vmul.f32 %v3673, %v3686
      %v3688 = vmul.f32 %v3677, %v3686
      %v3689 = vmul.f32 %v3681, %v3686
      %v3690 = vadd.f32 %v3667, %v3687
      %v3691 = vadd.f32 %v3668, %v3688
      %v3692 = vadd.f32 %v3669, %v3689
      %v3693 = vld [vmem:[%s3 + $0x3c] sm:$0x1]
      %3694 = vset.pattern.permute.xlu0 4
      %3695 = vperm.xlu0 %3694, %v3593
      %v3696 = vpop.permute.xlu0 %3695
      %3698 = vset.pattern.permute.xlu0 4
      %3699 = vperm.xlu0 %3698, %v3595
      %v3700 = vpop.permute.xlu0 %3699
      %3702 = vset.pattern.permute.xlu0 4
      %3703 = vperm.xlu0 %3702, %v3597
      %v3704 = vpop.permute.xlu0 %3703
      %v3706 = vlaneseq
      %v3707 = vshrl.u32 %v3706, 7
      %v3708 = vsub.s32 0, %v3707
      %v3709 = vrot.slane %v3693, %v3708
      %v3710 = vmul.f32 %v3696, %v3709
      %v3711 = vmul.f32 %v3700, %v3709
      %v3712 = vmul.f32 %v3704, %v3709
      %v3713 = vadd.f32 %v3690, %v3710
      %v3714 = vadd.f32 %v3691, %v3711
      %v3715 = vadd.f32 %v3692, %v3712
      %v3716 = vld [vmem:[%s3 + $0x3d] sm:$0x1]
      %3717 = vset.pattern.permute.xlu0 5
      %3718 = vperm.xlu0 %3717, %v3593
      %v3719 = vpop.permute.xlu0 %3718
      %3721 = vset.pattern.permute.xlu0 5
      %3722 = vperm.xlu0 %3721, %v3595
      %v3723 = vpop.permute.xlu0 %3722
      %3725 = vset.pattern.permute.xlu0 5
      %3726 = vperm.xlu0 %3725, %v3597
      %v3727 = vpop.permute.xlu0 %3726
      %v3729 = vlaneseq
      %v3730 = vshrl.u32 %v3729, 7
      %v3731 = vsub.s32 0, %v3730
      %v3732 = vrot.slane %v3716, %v3731
      %v3733 = vmul.f32 %v3719, %v3732
      %v3734 = vmul.f32 %v3723, %v3732
      %v3735 = vmul.f32 %v3727, %v3732
      %v3736 = vadd.f32 %v3713, %v3733
      %v3737 = vadd.f32 %v3714, %v3734
      %v3738 = vadd.f32 %v3715, %v3735
      %v3739 = vld [vmem:[%s3 + $0x3e] sm:$0x1]
      %3740 = vset.pattern.permute.xlu0 6
      %3741 = vperm.xlu0 %3740, %v3593
      %v3742 = vpop.permute.xlu0 %3741
      %3744 = vset.pattern.permute.xlu0 6
      %3745 = vperm.xlu0 %3744, %v3595
      %v3746 = vpop.permute.xlu0 %3745
      %3748 = vset.pattern.permute.xlu0 6
      %3749 = vperm.xlu0 %3748, %v3597
      %v3750 = vpop.permute.xlu0 %3749
      %v3752 = vlaneseq
      %v3753 = vshrl.u32 %v3752, 7
      %v3754 = vsub.s32 0, %v3753
      %v3755 = vrot.slane %v3739, %v3754
      %v3756 = vmul.f32 %v3742, %v3755
      %v3757 = vmul.f32 %v3746, %v3755
      %v3758 = vmul.f32 %v3750, %v3755
      %v3759 = vadd.f32 %v3736, %v3756
      %v3760 = vadd.f32 %v3737, %v3757
      %v3761 = vadd.f32 %v3738, %v3758
      %v3762 = vld [vmem:[%s3 + $0x3f] sm:$0x1]
      %3763 = vset.pattern.permute.xlu0 7
      %3764 = vperm.xlu0 %3763, %v3593
      %v3765 = vpop.permute.xlu0 %3764
      %3767 = vset.pattern.permute.xlu0 7
      %3768 = vperm.xlu0 %3767, %v3595
      %v3769 = vpop.permute.xlu0 %3768
      %3771 = vset.pattern.permute.xlu0 7
      %3772 = vperm.xlu0 %3771, %v3597
      %v3773 = vpop.permute.xlu0 %3772
      %v3775 = vlaneseq
      %v3776 = vshrl.u32 %v3775, 7
      %v3777 = vsub.s32 0, %v3776
      %v3778 = vrot.slane %v3762, %v3777
      %v3779 = vmul.f32 %v3765, %v3778
      %v3780 = vmul.f32 %v3769, %v3778
      %v3781 = vmul.f32 %v3773, %v3778
      %v3782 = vadd.f32 %v3759, %v3779
      %v3783 = vadd.f32 %v3760, %v3780
      %v3784 = vadd.f32 %v3761, %v3781
      %s3785 = scalar_lea.vmem %s3399, 2 [#allocation2]
      %v3786 = vld [vmem:[%s3785] ss:$2 sm:$0x7]
      %s3787 = scalar_lea.vmem %s3399, 18 [#allocation2]
      %v3788 = vld [vmem:[%s3787] ss:$2 sm:$0x7]
      %s3789 = scalar_lea.vmem %s3399, 34 [#allocation2]
      %v3790 = vld [vmem:[%s3789] ss:$2 sm:$0x7]
      %v3791 = vld [vmem:[%s3 + $0x40] sm:$0x1]
      %3793 = vset.pattern.permute.xlu0 0
      %3794 = vperm.xlu0 %3793, %v3786
      %v3795 = vpop.permute.xlu0 %3794
      %3798 = vset.pattern.permute.xlu0 0
      %3799 = vperm.xlu0 %3798, %v3788
      %v3800 = vpop.permute.xlu0 %3799
      %3803 = vset.pattern.permute.xlu0 0
      %3804 = vperm.xlu0 %3803, %v3790
      %v3805 = vpop.permute.xlu0 %3804
      %v3807 = vlaneseq
      %v3808 = vshrl.u32 %v3807, 7
      %v3809 = vsub.s32 0, %v3808
      %v3810 = vrot.slane %v3791, %v3809
      %v3811 = vmul.f32 %v3795, %v3810
      %v3812 = vmul.f32 %v3800, %v3810
      %v3813 = vmul.f32 %v3805, %v3810
      %v3814 = vadd.f32 %v3782, %v3811
      %v3815 = vadd.f32 %v3783, %v3812
      %v3816 = vadd.f32 %v3784, %v3813
      %v3817 = vld [vmem:[%s3 + $0x41] sm:$0x1]
      %3818 = vset.pattern.permute.xlu0 1
      %3819 = vperm.xlu0 %3818, %v3786
      %v3820 = vpop.permute.xlu0 %3819
      %3822 = vset.pattern.permute.xlu0 1
      %3823 = vperm.xlu0 %3822, %v3788
      %v3824 = vpop.permute.xlu0 %3823
      %3826 = vset.pattern.permute.xlu0 1
      %3827 = vperm.xlu0 %3826, %v3790
      %v3828 = vpop.permute.xlu0 %3827
      %v3830 = vlaneseq
      %v3831 = vshrl.u32 %v3830, 7
      %v3832 = vsub.s32 0, %v3831
      %v3833 = vrot.slane %v3817, %v3832
      %v3834 = vmul.f32 %v3820, %v3833
      %v3835 = vmul.f32 %v3824, %v3833
      %v3836 = vmul.f32 %v3828, %v3833
      %v3837 = vadd.f32 %v3814, %v3834
      %v3838 = vadd.f32 %v3815, %v3835
      %v3839 = vadd.f32 %v3816, %v3836
      %v3840 = vld [vmem:[%s3 + $0x42] sm:$0x1]
      %3841 = vset.pattern.permute.xlu0 2
      %3842 = vperm.xlu0 %3841, %v3786
      %v3843 = vpop.permute.xlu0 %3842
      %3845 = vset.pattern.permute.xlu0 2
      %3846 = vperm.xlu0 %3845, %v3788
      %v3847 = vpop.permute.xlu0 %3846
      %3849 = vset.pattern.permute.xlu0 2
      %3850 = vperm.xlu0 %3849, %v3790
      %v3851 = vpop.permute.xlu0 %3850
      %v3853 = vlaneseq
      %v3854 = vshrl.u32 %v3853, 7
      %v3855 = vsub.s32 0, %v3854
      %v3856 = vrot.slane %v3840, %v3855
      %v3857 = vmul.f32 %v3843, %v3856
      %v3858 = vmul.f32 %v3847, %v3856
      %v3859 = vmul.f32 %v3851, %v3856
      %v3860 = vadd.f32 %v3837, %v3857
      %v3861 = vadd.f32 %v3838, %v3858
      %v3862 = vadd.f32 %v3839, %v3859
      %v3863 = vld [vmem:[%s3 + $0x43] sm:$0x1]
      %3864 = vset.pattern.permute.xlu0 3
      %3865 = vperm.xlu0 %3864, %v3786
      %v3866 = vpop.permute.xlu0 %3865
      %3868 = vset.pattern.permute.xlu0 3
      %3869 = vperm.xlu0 %3868, %v3788
      %v3870 = vpop.permute.xlu0 %3869
      %3872 = vset.pattern.permute.xlu0 3
      %3873 = vperm.xlu0 %3872, %v3790
      %v3874 = vpop.permute.xlu0 %3873
      %v3876 = vlaneseq
      %v3877 = vshrl.u32 %v3876, 7
      %v3878 = vsub.s32 0, %v3877
      %v3879 = vrot.slane %v3863, %v3878
      %v3880 = vmul.f32 %v3866, %v3879
      %v3881 = vmul.f32 %v3870, %v3879
      %v3882 = vmul.f32 %v3874, %v3879
      %v3883 = vadd.f32 %v3860, %v3880
      %v3884 = vadd.f32 %v3861, %v3881
      %v3885 = vadd.f32 %v3862, %v3882
      %v3886 = vld [vmem:[%s3 + $0x44] sm:$0x1]
      %3887 = vset.pattern.permute.xlu0 4
      %3888 = vperm.xlu0 %3887, %v3786
      %v3889 = vpop.permute.xlu0 %3888
      %3891 = vset.pattern.permute.xlu0 4
      %3892 = vperm.xlu0 %3891, %v3788
      %v3893 = vpop.permute.xlu0 %3892
      %3895 = vset.pattern.permute.xlu0 4
      %3896 = vperm.xlu0 %3895, %v3790
      %v3897 = vpop.permute.xlu0 %3896
      %v3899 = vlaneseq
      %v3900 = vshrl.u32 %v3899, 7
      %v3901 = vsub.s32 0, %v3900
      %v3902 = vrot.slane %v3886, %v3901
      %v3903 = vmul.f32 %v3889, %v3902
      %v3904 = vmul.f32 %v3893, %v3902
      %v3905 = vmul.f32 %v3897, %v3902
      %v3906 = vadd.f32 %v3883, %v3903
      %v3907 = vadd.f32 %v3884, %v3904
      %v3908 = vadd.f32 %v3885, %v3905
      %v3909 = vld [vmem:[%s3 + $0x45] sm:$0x1]
      %3910 = vset.pattern.permute.xlu0 5
      %3911 = vperm.xlu0 %3910, %v3786
      %v3912 = vpop.permute.xlu0 %3911
      %3914 = vset.pattern.permute.xlu0 5
      %3915 = vperm.xlu0 %3914, %v3788
      %v3916 = vpop.permute.xlu0 %3915
      %3918 = vset.pattern.permute.xlu0 5
      %3919 = vperm.xlu0 %3918, %v3790
      %v3920 = vpop.permute.xlu0 %3919
      %v3922 = vlaneseq
      %v3923 = vshrl.u32 %v3922, 7
      %v3924 = vsub.s32 0, %v3923
      %v3925 = vrot.slane %v3909, %v3924
      %v3926 = vmul.f32 %v3912, %v3925
      %v3927 = vmul.f32 %v3916, %v3925
      %v3928 = vmul.f32 %v3920, %v3925
      %v3929 = vadd.f32 %v3906, %v3926
      %v3930 = vadd.f32 %v3907, %v3927
      %v3931 = vadd.f32 %v3908, %v3928
      %v3932 = vld [vmem:[%s3 + $0x46] sm:$0x1]
      %3933 = vset.pattern.permute.xlu0 6
      %3934 = vperm.xlu0 %3933, %v3786
      %v3935 = vpop.permute.xlu0 %3934
      %3937 = vset.pattern.permute.xlu0 6
      %3938 = vperm.xlu0 %3937, %v3788
      %v3939 = vpop.permute.xlu0 %3938
      %3941 = vset.pattern.permute.xlu0 6
      %3942 = vperm.xlu0 %3941, %v3790
      %v3943 = vpop.permute.xlu0 %3942
      %v3945 = vlaneseq
      %v3946 = vshrl.u32 %v3945, 7
      %v3947 = vsub.s32 0, %v3946
      %v3948 = vrot.slane %v3932, %v3947
      %v3949 = vmul.f32 %v3935, %v3948
      %v3950 = vmul.f32 %v3939, %v3948
      %v3951 = vmul.f32 %v3943, %v3948
      %v3952 = vadd.f32 %v3929, %v3949
      %v3953 = vadd.f32 %v3930, %v3950
      %v3954 = vadd.f32 %v3931, %v3951
      %v3955 = vld [vmem:[%s3 + $0x47] sm:$0x1]
      %3956 = vset.pattern.permute.xlu0 7
      %3957 = vperm.xlu0 %3956, %v3786
      %v3958 = vpop.permute.xlu0 %3957
      %3960 = vset.pattern.permute.xlu0 7
      %3961 = vperm.xlu0 %3960, %v3788
      %v3962 = vpop.permute.xlu0 %3961
      %3964 = vset.pattern.permute.xlu0 7
      %3965 = vperm.xlu0 %3964, %v3790
      %v3966 = vpop.permute.xlu0 %3965
      %v3968 = vlaneseq
      %v3969 = vshrl.u32 %v3968, 7
      %v3970 = vsub.s32 0, %v3969
      %v3971 = vrot.slane %v3955, %v3970
      %v3972 = vmul.f32 %v3958, %v3971
      %v3973 = vmul.f32 %v3962, %v3971
      %v3974 = vmul.f32 %v3966, %v3971
      %v3975 = vadd.f32 %v3952, %v3972
      %v3976 = vadd.f32 %v3953, %v3973
      %v3977 = vadd.f32 %v3954, %v3974
      %v3978 = vld [vmem:[%s4] sm:$0x1]
      %v3980 = vlaneseq
      %v3981 = vshrl.u32 %v3980, 7
      %v3982 = vsub.s32 0, %v3981
      %v3983 = vrot.slane %v3978, %v3982
      %v3985 = vadd.f32 %v3975, %v3983
      %v3986 = vadd.f32 %v3976, %v3983
      %v3987 = vadd.f32 %v3977, %v3983
      %v3988 = vmax.f32 %v3985, 0.0
      %v3989 = vmax.f32 %v3986, 0.0
      %v3990 = vmax.f32 %v3987, 0.0
      %v3991 = vld [vmem:[%s5] sm:$0x1]
      %3993 = vset.pattern.permute.xlu0 0
      %3994 = vperm.xlu0 %3993, %v3988
      %v3995 = vpop.permute.xlu0 %3994
      %3998 = vset.pattern.permute.xlu0 0
      %3999 = vperm.xlu0 %3998, %v3989
      %v4000 = vpop.permute.xlu0 %3999
      %4003 = vset.pattern.permute.xlu0 0
      %4004 = vperm.xlu0 %4003, %v3990
      %v4005 = vpop.permute.xlu0 %4004
      %v4007 = vlaneseq
      %v4008 = vshrl.u32 %v4007, 7
      %v4009 = vsub.s32 0, %v4008
      %v4010 = vrot.slane %v3991, %v4009
      %v4011 = vmul.f32 %v3995, %v4010
      %v4012 = vmul.f32 %v4000, %v4010
      %v4013 = vmul.f32 %v4005, %v4010
      %v4014 = vadd.f32 %v4011, 0.0
      %v4015 = vadd.f32 %v4012, 0.0
      %v4016 = vadd.f32 %v4013, 0.0
      %v4017 = vld [vmem:[%s5 + $0x1] sm:$0x1]
      %4018 = vset.pattern.permute.xlu0 1
      %4019 = vperm.xlu0 %4018, %v3988
      %v4020 = vpop.permute.xlu0 %4019
      %4022 = vset.pattern.permute.xlu0 1
      %4023 = vperm.xlu0 %4022, %v3989
      %v4024 = vpop.permute.xlu0 %4023
      %4026 = vset.pattern.permute.xlu0 1
      %4027 = vperm.xlu0 %4026, %v3990
      %v4028 = vpop.permute.xlu0 %4027
      %v4030 = vlaneseq
      %v4031 = vshrl.u32 %v4030, 7
      %v4032 = vsub.s32 0, %v4031
      %v4033 = vrot.slane %v4017, %v4032
      %v4034 = vmul.f32 %v4020, %v4033
      %v4035 = vmul.f32 %v4024, %v4033
      %v4036 = vmul.f32 %v4028, %v4033
      %v4037 = vadd.f32 %v4014, %v4034
      %v4038 = vadd.f32 %v4015, %v4035
      %v4039 = vadd.f32 %v4016, %v4036
      %v4040 = vld [vmem:[%s5 + $0x2] sm:$0x1]
      %4041 = vset.pattern.permute.xlu0 2
      %4042 = vperm.xlu0 %4041, %v3988
      %v4043 = vpop.permute.xlu0 %4042
      %4045 = vset.pattern.permute.xlu0 2
      %4046 = vperm.xlu0 %4045, %v3989
      %v4047 = vpop.permute.xlu0 %4046
      %4049 = vset.pattern.permute.xlu0 2
      %4050 = vperm.xlu0 %4049, %v3990
      %v4051 = vpop.permute.xlu0 %4050
      %v4053 = vlaneseq
      %v4054 = vshrl.u32 %v4053, 7
      %v4055 = vsub.s32 0, %v4054
      %v4056 = vrot.slane %v4040, %v4055
      %v4057 = vmul.f32 %v4043, %v4056
      %v4058 = vmul.f32 %v4047, %v4056
      %v4059 = vmul.f32 %v4051, %v4056
      %v4060 = vadd.f32 %v4037, %v4057
      %v4061 = vadd.f32 %v4038, %v4058
      %v4062 = vadd.f32 %v4039, %v4059
      %v4063 = vld [vmem:[%s5 + $0x3] sm:$0x1]
      %4064 = vset.pattern.permute.xlu0 3
      %4065 = vperm.xlu0 %4064, %v3988
      %v4066 = vpop.permute.xlu0 %4065
      %4068 = vset.pattern.permute.xlu0 3
      %4069 = vperm.xlu0 %4068, %v3989
      %v4070 = vpop.permute.xlu0 %4069
      %4072 = vset.pattern.permute.xlu0 3
      %4073 = vperm.xlu0 %4072, %v3990
      %v4074 = vpop.permute.xlu0 %4073
      %v4076 = vlaneseq
      %v4077 = vshrl.u32 %v4076, 7
      %v4078 = vsub.s32 0, %v4077
      %v4079 = vrot.slane %v4063, %v4078
      %v4080 = vmul.f32 %v4066, %v4079
      %v4081 = vmul.f32 %v4070, %v4079
      %v4082 = vmul.f32 %v4074, %v4079
      %v4083 = vadd.f32 %v4060, %v4080
      %v4084 = vadd.f32 %v4061, %v4081
      %v4085 = vadd.f32 %v4062, %v4082
      %v4086 = vld [vmem:[%s5 + $0x4] sm:$0x1]
      %4087 = vset.pattern.permute.xlu0 4
      %4088 = vperm.xlu0 %4087, %v3988
      %v4089 = vpop.permute.xlu0 %4088
      %4091 = vset.pattern.permute.xlu0 4
      %4092 = vperm.xlu0 %4091, %v3989
      %v4093 = vpop.permute.xlu0 %4092
      %4095 = vset.pattern.permute.xlu0 4
      %4096 = vperm.xlu0 %4095, %v3990
      %v4097 = vpop.permute.xlu0 %4096
      %v4099 = vlaneseq
      %v4100 = vshrl.u32 %v4099, 7
      %v4101 = vsub.s32 0, %v4100
      %v4102 = vrot.slane %v4086, %v4101
      %v4103 = vmul.f32 %v4089, %v4102
      %v4104 = vmul.f32 %v4093, %v4102
      %v4105 = vmul.f32 %v4097, %v4102
      %v4106 = vadd.f32 %v4083, %v4103
      %v4107 = vadd.f32 %v4084, %v4104
      %v4108 = vadd.f32 %v4085, %v4105
      %v4109 = vld [vmem:[%s5 + $0x5] sm:$0x1]
      %4110 = vset.pattern.permute.xlu0 5
      %4111 = vperm.xlu0 %4110, %v3988
      %v4112 = vpop.permute.xlu0 %4111
      %4114 = vset.pattern.permute.xlu0 5
      %4115 = vperm.xlu0 %4114, %v3989
      %v4116 = vpop.permute.xlu0 %4115
      %4118 = vset.pattern.permute.xlu0 5
      %4119 = vperm.xlu0 %4118, %v3990
      %v4120 = vpop.permute.xlu0 %4119
      %v4122 = vlaneseq
      %v4123 = vshrl.u32 %v4122, 7
      %v4124 = vsub.s32 0, %v4123
      %v4125 = vrot.slane %v4109, %v4124
      %v4126 = vmul.f32 %v4112, %v4125
      %v4127 = vmul.f32 %v4116, %v4125
      %v4128 = vmul.f32 %v4120, %v4125
      %v4129 = vadd.f32 %v4106, %v4126
      %v4130 = vadd.f32 %v4107, %v4127
      %v4131 = vadd.f32 %v4108, %v4128
      %v4132 = vld [vmem:[%s5 + $0x6] sm:$0x1]
      %4133 = vset.pattern.permute.xlu0 6
      %4134 = vperm.xlu0 %4133, %v3988
      %v4135 = vpop.permute.xlu0 %4134
      %4137 = vset.pattern.permute.xlu0 6
      %4138 = vperm.xlu0 %4137, %v3989
      %v4139 = vpop.permute.xlu0 %4138
      %4141 = vset.pattern.permute.xlu0 6
      %4142 = vperm.xlu0 %4141, %v3990
      %v4143 = vpop.permute.xlu0 %4142
      %v4145 = vlaneseq
      %v4146 = vshrl.u32 %v4145, 7
      %v4147 = vsub.s32 0, %v4146
      %v4148 = vrot.slane %v4132, %v4147
      %v4149 = vmul.f32 %v4135, %v4148
      %v4150 = vmul.f32 %v4139, %v4148
      %v4151 = vmul.f32 %v4143, %v4148
      %v4152 = vadd.f32 %v4129, %v4149
      %v4153 = vadd.f32 %v4130, %v4150
      %v4154 = vadd.f32 %v4131, %v4151
      %v4155 = vld [vmem:[%s5 + $0x7] sm:$0x1]
      %4156 = vset.pattern.permute.xlu0 7
      %4157 = vperm.xlu0 %4156, %v3988
      %v4158 = vpop.permute.xlu0 %4157
      %4160 = vset.pattern.permute.xlu0 7
      %4161 = vperm.xlu0 %4160, %v3989
      %v4162 = vpop.permute.xlu0 %4161
      %4164 = vset.pattern.permute.xlu0 7
      %4165 = vperm.xlu0 %4164, %v3990
      %v4166 = vpop.permute.xlu0 %4165
      %v4168 = vlaneseq
      %v4169 = vshrl.u32 %v4168, 7
      %v4170 = vsub.s32 0, %v4169
      %v4171 = vrot.slane %v4155, %v4170
      %v4172 = vmul.f32 %v4158, %v4171
      %v4173 = vmul.f32 %v4162, %v4171
      %v4174 = vmul.f32 %v4166, %v4171
      %v4175 = vadd.f32 %v4152, %v4172
      %v4176 = vadd.f32 %v4153, %v4173
      %v4177 = vadd.f32 %v4154, %v4174
      %v4178 = vld [vmem:[%s5 + $0x8] sm:$0x1]
      %4179 = vset.pattern.permute.xlu0 8
      %4180 = vperm.xlu0 %4179, %v3988
      %v4181 = vpop.permute.xlu0 %4180
      %4183 = vset.pattern.permute.xlu0 8
      %4184 = vperm.xlu0 %4183, %v3989
      %v4185 = vpop.permute.xlu0 %4184
      %4187 = vset.pattern.permute.xlu0 8
      %4188 = vperm.xlu0 %4187, %v3990
      %v4189 = vpop.permute.xlu0 %4188
      %v4191 = vlaneseq
      %v4192 = vshrl.u32 %v4191, 7
      %v4193 = vsub.s32 0, %v4192
      %v4194 = vrot.slane %v4178, %v4193
      %v4195 = vmul.f32 %v4181, %v4194
      %v4196 = vmul.f32 %v4185, %v4194
      %v4197 = vmul.f32 %v4189, %v4194
      %v4198 = vadd.f32 %v4175, %v4195
      %v4199 = vadd.f32 %v4176, %v4196
      %v4200 = vadd.f32 %v4177, %v4197
      %v4201 = vld [vmem:[%s5 + $0x9] sm:$0x1]
      %4202 = vset.pattern.permute.xlu0 9
      %4203 = vperm.xlu0 %4202, %v3988
      %v4204 = vpop.permute.xlu0 %4203
      %4206 = vset.pattern.permute.xlu0 9
      %4207 = vperm.xlu0 %4206, %v3989
      %v4208 = vpop.permute.xlu0 %4207
      %4210 = vset.pattern.permute.xlu0 9
      %4211 = vperm.xlu0 %4210, %v3990
      %v4212 = vpop.permute.xlu0 %4211
      %v4214 = vlaneseq
      %v4215 = vshrl.u32 %v4214, 7
      %v4216 = vsub.s32 0, %v4215
      %v4217 = vrot.slane %v4201, %v4216
      %v4218 = vmul.f32 %v4204, %v4217
      %v4219 = vmul.f32 %v4208, %v4217
      %v4220 = vmul.f32 %v4212, %v4217
      %v4221 = vadd.f32 %v4198, %v4218
      %v4222 = vadd.f32 %v4199, %v4219
      %v4223 = vadd.f32 %v4200, %v4220
      %v4224 = vld [vmem:[%s5 + $0xa] sm:$0x1]
      %4225 = vset.pattern.permute.xlu0 10
      %4226 = vperm.xlu0 %4225, %v3988
      %v4227 = vpop.permute.xlu0 %4226
      %4229 = vset.pattern.permute.xlu0 10
      %4230 = vperm.xlu0 %4229, %v3989
      %v4231 = vpop.permute.xlu0 %4230
      %4233 = vset.pattern.permute.xlu0 10
      %4234 = vperm.xlu0 %4233, %v3990
      %v4235 = vpop.permute.xlu0 %4234
      %v4237 = vlaneseq
      %v4238 = vshrl.u32 %v4237, 7
      %v4239 = vsub.s32 0, %v4238
      %v4240 = vrot.slane %v4224, %v4239
      %v4241 = vmul.f32 %v4227, %v4240
      %v4242 = vmul.f32 %v4231, %v4240
      %v4243 = vmul.f32 %v4235, %v4240
      %v4244 = vadd.f32 %v4221, %v4241
      %v4245 = vadd.f32 %v4222, %v4242
      %v4246 = vadd.f32 %v4223, %v4243
      %v4247 = vld [vmem:[%s5 + $0xb] sm:$0x1]
      %4248 = vset.pattern.permute.xlu0 11
      %4249 = vperm.xlu0 %4248, %v3988
      %v4250 = vpop.permute.xlu0 %4249
      %4252 = vset.pattern.permute.xlu0 11
      %4253 = vperm.xlu0 %4252, %v3989
      %v4254 = vpop.permute.xlu0 %4253
      %4256 = vset.pattern.permute.xlu0 11
      %4257 = vperm.xlu0 %4256, %v3990
      %v4258 = vpop.permute.xlu0 %4257
      %v4260 = vlaneseq
      %v4261 = vshrl.u32 %v4260, 7
      %v4262 = vsub.s32 0, %v4261
      %v4263 = vrot.slane %v4247, %v4262
      %v4264 = vmul.f32 %v4250, %v4263
      %v4265 = vmul.f32 %v4254, %v4263
      %v4266 = vmul.f32 %v4258, %v4263
      %v4267 = vadd.f32 %v4244, %v4264
      %v4268 = vadd.f32 %v4245, %v4265
      %v4269 = vadd.f32 %v4246, %v4266
      %v4270 = vld [vmem:[%s5 + $0xc] sm:$0x1]
      %4271 = vset.pattern.permute.xlu0 12
      %4272 = vperm.xlu0 %4271, %v3988
      %v4273 = vpop.permute.xlu0 %4272
      %4275 = vset.pattern.permute.xlu0 12
      %4276 = vperm.xlu0 %4275, %v3989
      %v4277 = vpop.permute.xlu0 %4276
      %4279 = vset.pattern.permute.xlu0 12
      %4280 = vperm.xlu0 %4279, %v3990
      %v4281 = vpop.permute.xlu0 %4280
      %v4283 = vlaneseq
      %v4284 = vshrl.u32 %v4283, 7
      %v4285 = vsub.s32 0, %v4284
      %v4286 = vrot.slane %v4270, %v4285
      %v4287 = vmul.f32 %v4273, %v4286
      %v4288 = vmul.f32 %v4277, %v4286
      %v4289 = vmul.f32 %v4281, %v4286
      %v4290 = vadd.f32 %v4267, %v4287
      %v4291 = vadd.f32 %v4268, %v4288
      %v4292 = vadd.f32 %v4269, %v4289
      %v4293 = vld [vmem:[%s5 + $0xd] sm:$0x1]
      %4294 = vset.pattern.permute.xlu0 13
      %4295 = vperm.xlu0 %4294, %v3988
      %v4296 = vpop.permute.xlu0 %4295
      %4298 = vset.pattern.permute.xlu0 13
      %4299 = vperm.xlu0 %4298, %v3989
      %v4300 = vpop.permute.xlu0 %4299
      %4302 = vset.pattern.permute.xlu0 13
      %4303 = vperm.xlu0 %4302, %v3990
      %v4304 = vpop.permute.xlu0 %4303
      %v4306 = vlaneseq
      %v4307 = vshrl.u32 %v4306, 7
      %v4308 = vsub.s32 0, %v4307
      %v4309 = vrot.slane %v4293, %v4308
      %v4310 = vmul.f32 %v4296, %v4309
      %v4311 = vmul.f32 %v4300, %v4309
      %v4312 = vmul.f32 %v4304, %v4309
      %v4313 = vadd.f32 %v4290, %v4310
      %v4314 = vadd.f32 %v4291, %v4311
      %v4315 = vadd.f32 %v4292, %v4312
      %v4316 = vld [vmem:[%s5 + $0xe] sm:$0x1]
      %4317 = vset.pattern.permute.xlu0 14
      %4318 = vperm.xlu0 %4317, %v3988
      %v4319 = vpop.permute.xlu0 %4318
      %4321 = vset.pattern.permute.xlu0 14
      %4322 = vperm.xlu0 %4321, %v3989
      %v4323 = vpop.permute.xlu0 %4322
      %4325 = vset.pattern.permute.xlu0 14
      %4326 = vperm.xlu0 %4325, %v3990
      %v4327 = vpop.permute.xlu0 %4326
      %v4329 = vlaneseq
      %v4330 = vshrl.u32 %v4329, 7
      %v4331 = vsub.s32 0, %v4330
      %v4332 = vrot.slane %v4316, %v4331
      %v4333 = vmul.f32 %v4319, %v4332
      %v4334 = vmul.f32 %v4323, %v4332
      %v4335 = vmul.f32 %v4327, %v4332
      %v4336 = vadd.f32 %v4313, %v4333
      %v4337 = vadd.f32 %v4314, %v4334
      %v4338 = vadd.f32 %v4315, %v4335
      %v4339 = vld [vmem:[%s5 + $0xf] sm:$0x1]
      %4340 = vset.pattern.permute.xlu0 15
      %4341 = vperm.xlu0 %4340, %v3988
      %v4342 = vpop.permute.xlu0 %4341
      %4344 = vset.pattern.permute.xlu0 15
      %4345 = vperm.xlu0 %4344, %v3989
      %v4346 = vpop.permute.xlu0 %4345
      %4348 = vset.pattern.permute.xlu0 15
      %4349 = vperm.xlu0 %4348, %v3990
      %v4350 = vpop.permute.xlu0 %4349
      %v4352 = vlaneseq
      %v4353 = vshrl.u32 %v4352, 7
      %v4354 = vsub.s32 0, %v4353
      %v4355 = vrot.slane %v4339, %v4354
      %v4356 = vmul.f32 %v4342, %v4355
      %v4357 = vmul.f32 %v4346, %v4355
      %v4358 = vmul.f32 %v4350, %v4355
      %v4359 = vadd.f32 %v4336, %v4356
      %v4360 = vadd.f32 %v4337, %v4357
      %v4361 = vadd.f32 %v4338, %v4358
      %v4362 = vld [vmem:[%s6] sm:$0x1]
      %v4364 = vlaneseq
      %v4365 = vshrl.u32 %v4364, 7
      %v4366 = vsub.s32 0, %v4365
      %v4367 = vrot.slane %v4362, %v4366
      %v4369 = vadd.f32 %v4359, %v4367
      %v4370 = vadd.f32 %v4360, %v4367
      %v4371 = vadd.f32 %v4361, %v4367
      %v4372 = vmax.f32 %v4369, 0.0
      %v4373 = vmax.f32 %v4370, 0.0
      %v4374 = vmax.f32 %v4371, 0.0
      %v4375 = vld [vmem:[%s7] sm:$0x1]
      %4377 = vset.pattern.permute.xlu0 0
      %4378 = vperm.xlu0 %4377, %v4372
      %v4379 = vpop.permute.xlu0 %4378
      %4382 = vset.pattern.permute.xlu0 0
      %4383 = vperm.xlu0 %4382, %v4373
      %v4384 = vpop.permute.xlu0 %4383
      %4387 = vset.pattern.permute.xlu0 0
      %4388 = vperm.xlu0 %4387, %v4374
      %v4389 = vpop.permute.xlu0 %4388
      %v4391 = vlaneseq
      %v4392 = vshrl.u32 %v4391, 7
      %v4393 = vsub.s32 0, %v4392
      %v4394 = vrot.slane %v4375, %v4393
      %v4395 = vmul.f32 %v4379, %v4394
      %v4396 = vmul.f32 %v4384, %v4394
      %v4397 = vmul.f32 %v4389, %v4394
      %v4398 = vadd.f32 %v4395, 0.0
      %v4399 = vadd.f32 %v4396, 0.0
      %v4400 = vadd.f32 %v4397, 0.0
      %v4401 = vld [vmem:[%s7 + $0x1] sm:$0x1]
      %4402 = vset.pattern.permute.xlu0 1
      %4403 = vperm.xlu0 %4402, %v4372
      %v4404 = vpop.permute.xlu0 %4403
      %4406 = vset.pattern.permute.xlu0 1
      %4407 = vperm.xlu0 %4406, %v4373
      %v4408 = vpop.permute.xlu0 %4407
      %4410 = vset.pattern.permute.xlu0 1
      %4411 = vperm.xlu0 %4410, %v4374
      %v4412 = vpop.permute.xlu0 %4411
      %v4414 = vlaneseq
      %v4415 = vshrl.u32 %v4414, 7
      %v4416 = vsub.s32 0, %v4415
      %v4417 = vrot.slane %v4401, %v4416
      %v4418 = vmul.f32 %v4404, %v4417
      %v4419 = vmul.f32 %v4408, %v4417
      %v4420 = vmul.f32 %v4412, %v4417
      %v4421 = vadd.f32 %v4398, %v4418
      %v4422 = vadd.f32 %v4399, %v4419
      %v4423 = vadd.f32 %v4400, %v4420
      %v4424 = vld [vmem:[%s7 + $0x2] sm:$0x1]
      %4425 = vset.pattern.permute.xlu0 2
      %4426 = vperm.xlu0 %4425, %v4372
      %v4427 = vpop.permute.xlu0 %4426
      %4429 = vset.pattern.permute.xlu0 2
      %4430 = vperm.xlu0 %4429, %v4373
      %v4431 = vpop.permute.xlu0 %4430
      %4433 = vset.pattern.permute.xlu0 2
      %4434 = vperm.xlu0 %4433, %v4374
      %v4435 = vpop.permute.xlu0 %4434
      %v4437 = vlaneseq
      %v4438 = vshrl.u32 %v4437, 7
      %v4439 = vsub.s32 0, %v4438
      %v4440 = vrot.slane %v4424, %v4439
      %v4441 = vmul.f32 %v4427, %v4440
      %v4442 = vmul.f32 %v4431, %v4440
      %v4443 = vmul.f32 %v4435, %v4440
      %v4444 = vadd.f32 %v4421, %v4441
      %v4445 = vadd.f32 %v4422, %v4442
      %v4446 = vadd.f32 %v4423, %v4443
      %v4447 = vld [vmem:[%s7 + $0x3] sm:$0x1]
      %4448 = vset.pattern.permute.xlu0 3
      %4449 = vperm.xlu0 %4448, %v4372
      %v4450 = vpop.permute.xlu0 %4449
      %4452 = vset.pattern.permute.xlu0 3
      %4453 = vperm.xlu0 %4452, %v4373
      %v4454 = vpop.permute.xlu0 %4453
      %4456 = vset.pattern.permute.xlu0 3
      %4457 = vperm.xlu0 %4456, %v4374
      %v4458 = vpop.permute.xlu0 %4457
      %v4460 = vlaneseq
      %v4461 = vshrl.u32 %v4460, 7
      %v4462 = vsub.s32 0, %v4461
      %v4463 = vrot.slane %v4447, %v4462
      %v4464 = vmul.f32 %v4450, %v4463
      %v4465 = vmul.f32 %v4454, %v4463
      %v4466 = vmul.f32 %v4458, %v4463
      %v4467 = vadd.f32 %v4444, %v4464
      %v4468 = vadd.f32 %v4445, %v4465
      %v4469 = vadd.f32 %v4446, %v4466
      %v4470 = vld [vmem:[%s7 + $0x4] sm:$0x1]
      %4471 = vset.pattern.permute.xlu0 4
      %4472 = vperm.xlu0 %4471, %v4372
      %v4473 = vpop.permute.xlu0 %4472
      %4475 = vset.pattern.permute.xlu0 4
      %4476 = vperm.xlu0 %4475, %v4373
      %v4477 = vpop.permute.xlu0 %4476
      %4479 = vset.pattern.permute.xlu0 4
      %4480 = vperm.xlu0 %4479, %v4374
      %v4481 = vpop.permute.xlu0 %4480
      %v4483 = vlaneseq
      %v4484 = vshrl.u32 %v4483, 7
      %v4485 = vsub.s32 0, %v4484
      %v4486 = vrot.slane %v4470, %v4485
      %v4487 = vmul.f32 %v4473, %v4486
      %v4488 = vmul.f32 %v4477, %v4486
      %v4489 = vmul.f32 %v4481, %v4486
      %v4490 = vadd.f32 %v4467, %v4487
      %v4491 = vadd.f32 %v4468, %v4488
      %v4492 = vadd.f32 %v4469, %v4489
      %v4493 = vld [vmem:[%s7 + $0x5] sm:$0x1]
      %4494 = vset.pattern.permute.xlu0 5
      %4495 = vperm.xlu0 %4494, %v4372
      %v4496 = vpop.permute.xlu0 %4495
      %4498 = vset.pattern.permute.xlu0 5
      %4499 = vperm.xlu0 %4498, %v4373
      %v4500 = vpop.permute.xlu0 %4499
      %4502 = vset.pattern.permute.xlu0 5
      %4503 = vperm.xlu0 %4502, %v4374
      %v4504 = vpop.permute.xlu0 %4503
      %v4506 = vlaneseq
      %v4507 = vshrl.u32 %v4506, 7
      %v4508 = vsub.s32 0, %v4507
      %v4509 = vrot.slane %v4493, %v4508
      %v4510 = vmul.f32 %v4496, %v4509
      %v4511 = vmul.f32 %v4500, %v4509
      %v4512 = vmul.f32 %v4504, %v4509
      %v4513 = vadd.f32 %v4490, %v4510
      %v4514 = vadd.f32 %v4491, %v4511
      %v4515 = vadd.f32 %v4492, %v4512
      %v4516 = vld [vmem:[%s7 + $0x6] sm:$0x1]
      %4517 = vset.pattern.permute.xlu0 6
      %4518 = vperm.xlu0 %4517, %v4372
      %v4519 = vpop.permute.xlu0 %4518
      %4521 = vset.pattern.permute.xlu0 6
      %4522 = vperm.xlu0 %4521, %v4373
      %v4523 = vpop.permute.xlu0 %4522
      %4525 = vset.pattern.permute.xlu0 6
      %4526 = vperm.xlu0 %4525, %v4374
      %v4527 = vpop.permute.xlu0 %4526
      %v4529 = vlaneseq
      %v4530 = vshrl.u32 %v4529, 7
      %v4531 = vsub.s32 0, %v4530
      %v4532 = vrot.slane %v4516, %v4531
      %v4533 = vmul.f32 %v4519, %v4532
      %v4534 = vmul.f32 %v4523, %v4532
      %v4535 = vmul.f32 %v4527, %v4532
      %v4536 = vadd.f32 %v4513, %v4533
      %v4537 = vadd.f32 %v4514, %v4534
      %v4538 = vadd.f32 %v4515, %v4535
      %v4539 = vld [vmem:[%s7 + $0x7] sm:$0x1]
      %4540 = vset.pattern.permute.xlu0 7
      %4541 = vperm.xlu0 %4540, %v4372
      %v4542 = vpop.permute.xlu0 %4541
      %4544 = vset.pattern.permute.xlu0 7
      %4545 = vperm.xlu0 %4544, %v4373
      %v4546 = vpop.permute.xlu0 %4545
      %4548 = vset.pattern.permute.xlu0 7
      %4549 = vperm.xlu0 %4548, %v4374
      %v4550 = vpop.permute.xlu0 %4549
      %v4552 = vlaneseq
      %v4553 = vshrl.u32 %v4552, 7
      %v4554 = vsub.s32 0, %v4553
      %v4555 = vrot.slane %v4539, %v4554
      %v4556 = vmul.f32 %v4542, %v4555
      %v4557 = vmul.f32 %v4546, %v4555
      %v4558 = vmul.f32 %v4550, %v4555
      %v4559 = vadd.f32 %v4536, %v4556
      %v4560 = vadd.f32 %v4537, %v4557
      %v4561 = vadd.f32 %v4538, %v4558
      %v4562 = vld [vmem:[%s7 + $0x8] sm:$0x1]
      %4563 = vset.pattern.permute.xlu0 8
      %4564 = vperm.xlu0 %4563, %v4372
      %v4565 = vpop.permute.xlu0 %4564
      %4567 = vset.pattern.permute.xlu0 8
      %4568 = vperm.xlu0 %4567, %v4373
      %v4569 = vpop.permute.xlu0 %4568
      %4571 = vset.pattern.permute.xlu0 8
      %4572 = vperm.xlu0 %4571, %v4374
      %v4573 = vpop.permute.xlu0 %4572
      %v4575 = vlaneseq
      %v4576 = vshrl.u32 %v4575, 7
      %v4577 = vsub.s32 0, %v4576
      %v4578 = vrot.slane %v4562, %v4577
      %v4579 = vmul.f32 %v4565, %v4578
      %v4580 = vmul.f32 %v4569, %v4578
      %v4581 = vmul.f32 %v4573, %v4578
      %v4582 = vadd.f32 %v4559, %v4579
      %v4583 = vadd.f32 %v4560, %v4580
      %v4584 = vadd.f32 %v4561, %v4581
      %v4585 = vld [vmem:[%s7 + $0x9] sm:$0x1]
      %4586 = vset.pattern.permute.xlu0 9
      %4587 = vperm.xlu0 %4586, %v4372
      %v4588 = vpop.permute.xlu0 %4587
      %4590 = vset.pattern.permute.xlu0 9
      %4591 = vperm.xlu0 %4590, %v4373
      %v4592 = vpop.permute.xlu0 %4591
      %4594 = vset.pattern.permute.xlu0 9
      %4595 = vperm.xlu0 %4594, %v4374
      %v4596 = vpop.permute.xlu0 %4595
      %v4598 = vlaneseq
      %v4599 = vshrl.u32 %v4598, 7
      %v4600 = vsub.s32 0, %v4599
      %v4601 = vrot.slane %v4585, %v4600
      %v4602 = vmul.f32 %v4588, %v4601
      %v4603 = vmul.f32 %v4592, %v4601
      %v4604 = vmul.f32 %v4596, %v4601
      %v4605 = vadd.f32 %v4582, %v4602
      %v4606 = vadd.f32 %v4583, %v4603
      %v4607 = vadd.f32 %v4584, %v4604
      %v4608 = vld [vmem:[%s7 + $0xa] sm:$0x1]
      %4609 = vset.pattern.permute.xlu0 10
      %4610 = vperm.xlu0 %4609, %v4372
      %v4611 = vpop.permute.xlu0 %4610
      %4613 = vset.pattern.permute.xlu0 10
      %4614 = vperm.xlu0 %4613, %v4373
      %v4615 = vpop.permute.xlu0 %4614
      %4617 = vset.pattern.permute.xlu0 10
      %4618 = vperm.xlu0 %4617, %v4374
      %v4619 = vpop.permute.xlu0 %4618
      %v4621 = vlaneseq
      %v4622 = vshrl.u32 %v4621, 7
      %v4623 = vsub.s32 0, %v4622
      %v4624 = vrot.slane %v4608, %v4623
      %v4625 = vmul.f32 %v4611, %v4624
      %v4626 = vmul.f32 %v4615, %v4624
      %v4627 = vmul.f32 %v4619, %v4624
      %v4628 = vadd.f32 %v4605, %v4625
      %v4629 = vadd.f32 %v4606, %v4626
      %v4630 = vadd.f32 %v4607, %v4627
      %v4631 = vld [vmem:[%s7 + $0xb] sm:$0x1]
      %4632 = vset.pattern.permute.xlu0 11
      %4633 = vperm.xlu0 %4632, %v4372
      %v4634 = vpop.permute.xlu0 %4633
      %4636 = vset.pattern.permute.xlu0 11
      %4637 = vperm.xlu0 %4636, %v4373
      %v4638 = vpop.permute.xlu0 %4637
      %4640 = vset.pattern.permute.xlu0 11
      %4641 = vperm.xlu0 %4640, %v4374
      %v4642 = vpop.permute.xlu0 %4641
      %v4644 = vlaneseq
      %v4645 = vshrl.u32 %v4644, 7
      %v4646 = vsub.s32 0, %v4645
      %v4647 = vrot.slane %v4631, %v4646
      %v4648 = vmul.f32 %v4634, %v4647
      %v4649 = vmul.f32 %v4638, %v4647
      %v4650 = vmul.f32 %v4642, %v4647
      %v4651 = vadd.f32 %v4628, %v4648
      %v4652 = vadd.f32 %v4629, %v4649
      %v4653 = vadd.f32 %v4630, %v4650
      %v4654 = vld [vmem:[%s7 + $0xc] sm:$0x1]
      %4655 = vset.pattern.permute.xlu0 12
      %4656 = vperm.xlu0 %4655, %v4372
      %v4657 = vpop.permute.xlu0 %4656
      %4659 = vset.pattern.permute.xlu0 12
      %4660 = vperm.xlu0 %4659, %v4373
      %v4661 = vpop.permute.xlu0 %4660
      %4663 = vset.pattern.permute.xlu0 12
      %4664 = vperm.xlu0 %4663, %v4374
      %v4665 = vpop.permute.xlu0 %4664
      %v4667 = vlaneseq
      %v4668 = vshrl.u32 %v4667, 7
      %v4669 = vsub.s32 0, %v4668
      %v4670 = vrot.slane %v4654, %v4669
      %v4671 = vmul.f32 %v4657, %v4670
      %v4672 = vmul.f32 %v4661, %v4670
      %v4673 = vmul.f32 %v4665, %v4670
      %v4674 = vadd.f32 %v4651, %v4671
      %v4675 = vadd.f32 %v4652, %v4672
      %v4676 = vadd.f32 %v4653, %v4673
      %v4677 = vld [vmem:[%s7 + $0xd] sm:$0x1]
      %4678 = vset.pattern.permute.xlu0 13
      %4679 = vperm.xlu0 %4678, %v4372
      %v4680 = vpop.permute.xlu0 %4679
      %4682 = vset.pattern.permute.xlu0 13
      %4683 = vperm.xlu0 %4682, %v4373
      %v4684 = vpop.permute.xlu0 %4683
      %4686 = vset.pattern.permute.xlu0 13
      %4687 = vperm.xlu0 %4686, %v4374
      %v4688 = vpop.permute.xlu0 %4687
      %v4690 = vlaneseq
      %v4691 = vshrl.u32 %v4690, 7
      %v4692 = vsub.s32 0, %v4691
      %v4693 = vrot.slane %v4677, %v4692
      %v4694 = vmul.f32 %v4680, %v4693
      %v4695 = vmul.f32 %v4684, %v4693
      %v4696 = vmul.f32 %v4688, %v4693
      %v4697 = vadd.f32 %v4674, %v4694
      %v4698 = vadd.f32 %v4675, %v4695
      %v4699 = vadd.f32 %v4676, %v4696
      %v4700 = vld [vmem:[%s7 + $0xe] sm:$0x1]
      %4701 = vset.pattern.permute.xlu0 14
      %4702 = vperm.xlu0 %4701, %v4372
      %v4703 = vpop.permute.xlu0 %4702
      %4705 = vset.pattern.permute.xlu0 14
      %4706 = vperm.xlu0 %4705, %v4373
      %v4707 = vpop.permute.xlu0 %4706
      %4709 = vset.pattern.permute.xlu0 14
      %4710 = vperm.xlu0 %4709, %v4374
      %v4711 = vpop.permute.xlu0 %4710
      %v4713 = vlaneseq
      %v4714 = vshrl.u32 %v4713, 7
      %v4715 = vsub.s32 0, %v4714
      %v4716 = vrot.slane %v4700, %v4715
      %v4717 = vmul.f32 %v4703, %v4716
      %v4718 = vmul.f32 %v4707, %v4716
      %v4719 = vmul.f32 %v4711, %v4716
      %v4720 = vadd.f32 %v4697, %v4717
      %v4721 = vadd.f32 %v4698, %v4718
      %v4722 = vadd.f32 %v4699, %v4719
      %v4723 = vld [vmem:[%s7 + $0xf] sm:$0x1]
      %4724 = vset.pattern.permute.xlu0 15
      %4725 = vperm.xlu0 %4724, %v4372
      %v4726 = vpop.permute.xlu0 %4725
      %4728 = vset.pattern.permute.xlu0 15
      %4729 = vperm.xlu0 %4728, %v4373
      %v4730 = vpop.permute.xlu0 %4729
      %4732 = vset.pattern.permute.xlu0 15
      %4733 = vperm.xlu0 %4732, %v4374
      %v4734 = vpop.permute.xlu0 %4733
      %v4736 = vlaneseq
      %v4737 = vshrl.u32 %v4736, 7
      %v4738 = vsub.s32 0, %v4737
      %v4739 = vrot.slane %v4723, %v4738
      %v4740 = vmul.f32 %v4726, %v4739
      %v4741 = vmul.f32 %v4730, %v4739
      %v4742 = vmul.f32 %v4734, %v4739
      %v4743 = vadd.f32 %v4720, %v4740
      %v4744 = vadd.f32 %v4721, %v4741
      %v4745 = vadd.f32 %v4722, %v4742
      %v4746 = vld [vmem:[%s7 + $0x10] sm:$0x1]
      %4747 = vset.pattern.permute.xlu0 16
      %4748 = vperm.xlu0 %4747, %v4372
      %v4749 = vpop.permute.xlu0 %4748
      %4751 = vset.pattern.permute.xlu0 16
      %4752 = vperm.xlu0 %4751, %v4373
      %v4753 = vpop.permute.xlu0 %4752
      %4755 = vset.pattern.permute.xlu0 16
      %4756 = vperm.xlu0 %4755, %v4374
      %v4757 = vpop.permute.xlu0 %4756
      %v4759 = vlaneseq
      %v4760 = vshrl.u32 %v4759, 7
      %v4761 = vsub.s32 0, %v4760
      %v4762 = vrot.slane %v4746, %v4761
      %v4763 = vmul.f32 %v4749, %v4762
      %v4764 = vmul.f32 %v4753, %v4762
      %v4765 = vmul.f32 %v4757, %v4762
      %v4766 = vadd.f32 %v4743, %v4763
      %v4767 = vadd.f32 %v4744, %v4764
      %v4768 = vadd.f32 %v4745, %v4765
      %v4769 = vld [vmem:[%s7 + $0x11] sm:$0x1]
      %4770 = vset.pattern.permute.xlu0 17
      %4771 = vperm.xlu0 %4770, %v4372
      %v4772 = vpop.permute.xlu0 %4771
      %4774 = vset.pattern.permute.xlu0 17
      %4775 = vperm.xlu0 %4774, %v4373
      %v4776 = vpop.permute.xlu0 %4775
      %4778 = vset.pattern.permute.xlu0 17
      %4779 = vperm.xlu0 %4778, %v4374
      %v4780 = vpop.permute.xlu0 %4779
      %v4782 = vlaneseq
      %v4783 = vshrl.u32 %v4782, 7
      %v4784 = vsub.s32 0, %v4783
      %v4785 = vrot.slane %v4769, %v4784
      %v4786 = vmul.f32 %v4772, %v4785
      %v4787 = vmul.f32 %v4776, %v4785
      %v4788 = vmul.f32 %v4780, %v4785
      %v4789 = vadd.f32 %v4766, %v4786
      %v4790 = vadd.f32 %v4767, %v4787
      %v4791 = vadd.f32 %v4768, %v4788
      %v4792 = vld [vmem:[%s7 + $0x12] sm:$0x1]
      %4793 = vset.pattern.permute.xlu0 18
      %4794 = vperm.xlu0 %4793, %v4372
      %v4795 = vpop.permute.xlu0 %4794
      %4797 = vset.pattern.permute.xlu0 18
      %4798 = vperm.xlu0 %4797, %v4373
      %v4799 = vpop.permute.xlu0 %4798
      %4801 = vset.pattern.permute.xlu0 18
      %4802 = vperm.xlu0 %4801, %v4374
      %v4803 = vpop.permute.xlu0 %4802
      %v4805 = vlaneseq
      %v4806 = vshrl.u32 %v4805, 7
      %v4807 = vsub.s32 0, %v4806
      %v4808 = vrot.slane %v4792, %v4807
      %v4809 = vmul.f32 %v4795, %v4808
      %v4810 = vmul.f32 %v4799, %v4808
      %v4811 = vmul.f32 %v4803, %v4808
      %v4812 = vadd.f32 %v4789, %v4809
      %v4813 = vadd.f32 %v4790, %v4810
      %v4814 = vadd.f32 %v4791, %v4811
      %v4815 = vld [vmem:[%s7 + $0x13] sm:$0x1]
      %4816 = vset.pattern.permute.xlu0 19
      %4817 = vperm.xlu0 %4816, %v4372
      %v4818 = vpop.permute.xlu0 %4817
      %4820 = vset.pattern.permute.xlu0 19
      %4821 = vperm.xlu0 %4820, %v4373
      %v4822 = vpop.permute.xlu0 %4821
      %4824 = vset.pattern.permute.xlu0 19
      %4825 = vperm.xlu0 %4824, %v4374
      %v4826 = vpop.permute.xlu0 %4825
      %v4828 = vlaneseq
      %v4829 = vshrl.u32 %v4828, 7
      %v4830 = vsub.s32 0, %v4829
      %v4831 = vrot.slane %v4815, %v4830
      %v4832 = vmul.f32 %v4818, %v4831
      %v4833 = vmul.f32 %v4822, %v4831
      %v4834 = vmul.f32 %v4826, %v4831
      %v4835 = vadd.f32 %v4812, %v4832
      %v4836 = vadd.f32 %v4813, %v4833
      %v4837 = vadd.f32 %v4814, %v4834
      %v4838 = vld [vmem:[%s7 + $0x14] sm:$0x1]
      %4839 = vset.pattern.permute.xlu0 20
      %4840 = vperm.xlu0 %4839, %v4372
      %v4841 = vpop.permute.xlu0 %4840
      %4843 = vset.pattern.permute.xlu0 20
      %4844 = vperm.xlu0 %4843, %v4373
      %v4845 = vpop.permute.xlu0 %4844
      %4847 = vset.pattern.permute.xlu0 20
      %4848 = vperm.xlu0 %4847, %v4374
      %v4849 = vpop.permute.xlu0 %4848
      %v4851 = vlaneseq
      %v4852 = vshrl.u32 %v4851, 7
      %v4853 = vsub.s32 0, %v4852
      %v4854 = vrot.slane %v4838, %v4853
      %v4855 = vmul.f32 %v4841, %v4854
      %v4856 = vmul.f32 %v4845, %v4854
      %v4857 = vmul.f32 %v4849, %v4854
      %v4858 = vadd.f32 %v4835, %v4855
      %v4859 = vadd.f32 %v4836, %v4856
      %v4860 = vadd.f32 %v4837, %v4857
      %v4861 = vld [vmem:[%s7 + $0x15] sm:$0x1]
      %4862 = vset.pattern.permute.xlu0 21
      %4863 = vperm.xlu0 %4862, %v4372
      %v4864 = vpop.permute.xlu0 %4863
      %4866 = vset.pattern.permute.xlu0 21
      %4867 = vperm.xlu0 %4866, %v4373
      %v4868 = vpop.permute.xlu0 %4867
      %4870 = vset.pattern.permute.xlu0 21
      %4871 = vperm.xlu0 %4870, %v4374
      %v4872 = vpop.permute.xlu0 %4871
      %v4874 = vlaneseq
      %v4875 = vshrl.u32 %v4874, 7
      %v4876 = vsub.s32 0, %v4875
      %v4877 = vrot.slane %v4861, %v4876
      %v4878 = vmul.f32 %v4864, %v4877
      %v4879 = vmul.f32 %v4868, %v4877
      %v4880 = vmul.f32 %v4872, %v4877
      %v4881 = vadd.f32 %v4858, %v4878
      %v4882 = vadd.f32 %v4859, %v4879
      %v4883 = vadd.f32 %v4860, %v4880
      %v4884 = vld [vmem:[%s7 + $0x16] sm:$0x1]
      %4885 = vset.pattern.permute.xlu0 22
      %4886 = vperm.xlu0 %4885, %v4372
      %v4887 = vpop.permute.xlu0 %4886
      %4889 = vset.pattern.permute.xlu0 22
      %4890 = vperm.xlu0 %4889, %v4373
      %v4891 = vpop.permute.xlu0 %4890
      %4893 = vset.pattern.permute.xlu0 22
      %4894 = vperm.xlu0 %4893, %v4374
      %v4895 = vpop.permute.xlu0 %4894
      %v4897 = vlaneseq
      %v4898 = vshrl.u32 %v4897, 7
      %v4899 = vsub.s32 0, %v4898
      %v4900 = vrot.slane %v4884, %v4899
      %v4901 = vmul.f32 %v4887, %v4900
      %v4902 = vmul.f32 %v4891, %v4900
      %v4903 = vmul.f32 %v4895, %v4900
      %v4904 = vadd.f32 %v4881, %v4901
      %v4905 = vadd.f32 %v4882, %v4902
      %v4906 = vadd.f32 %v4883, %v4903
      %v4907 = vld [vmem:[%s7 + $0x17] sm:$0x1]
      %4908 = vset.pattern.permute.xlu0 23
      %4909 = vperm.xlu0 %4908, %v4372
      %v4910 = vpop.permute.xlu0 %4909
      %4912 = vset.pattern.permute.xlu0 23
      %4913 = vperm.xlu0 %4912, %v4373
      %v4914 = vpop.permute.xlu0 %4913
      %4916 = vset.pattern.permute.xlu0 23
      %4917 = vperm.xlu0 %4916, %v4374
      %v4918 = vpop.permute.xlu0 %4917
      %v4920 = vlaneseq
      %v4921 = vshrl.u32 %v4920, 7
      %v4922 = vsub.s32 0, %v4921
      %v4923 = vrot.slane %v4907, %v4922
      %v4924 = vmul.f32 %v4910, %v4923
      %v4925 = vmul.f32 %v4914, %v4923
      %v4926 = vmul.f32 %v4918, %v4923
      %v4927 = vadd.f32 %v4904, %v4924
      %v4928 = vadd.f32 %v4905, %v4925
      %v4929 = vadd.f32 %v4906, %v4926
      %v4930 = vld [vmem:[%s7 + $0x18] sm:$0x1]
      %4931 = vset.pattern.permute.xlu0 24
      %4932 = vperm.xlu0 %4931, %v4372
      %v4933 = vpop.permute.xlu0 %4932
      %4935 = vset.pattern.permute.xlu0 24
      %4936 = vperm.xlu0 %4935, %v4373
      %v4937 = vpop.permute.xlu0 %4936
      %4939 = vset.pattern.permute.xlu0 24
      %4940 = vperm.xlu0 %4939, %v4374
      %v4941 = vpop.permute.xlu0 %4940
      %v4943 = vlaneseq
      %v4944 = vshrl.u32 %v4943, 7
      %v4945 = vsub.s32 0, %v4944
      %v4946 = vrot.slane %v4930, %v4945
      %v4947 = vmul.f32 %v4933, %v4946
      %v4948 = vmul.f32 %v4937, %v4946
      %v4949 = vmul.f32 %v4941, %v4946
      %v4950 = vadd.f32 %v4927, %v4947
      %v4951 = vadd.f32 %v4928, %v4948
      %v4952 = vadd.f32 %v4929, %v4949
      %v4953 = vld [vmem:[%s7 + $0x19] sm:$0x1]
      %4954 = vset.pattern.permute.xlu0 25
      %4955 = vperm.xlu0 %4954, %v4372
      %v4956 = vpop.permute.xlu0 %4955
      %4958 = vset.pattern.permute.xlu0 25
      %4959 = vperm.xlu0 %4958, %v4373
      %v4960 = vpop.permute.xlu0 %4959
      %4962 = vset.pattern.permute.xlu0 25
      %4963 = vperm.xlu0 %4962, %v4374
      %v4964 = vpop.permute.xlu0 %4963
      %v4966 = vlaneseq
      %v4967 = vshrl.u32 %v4966, 7
      %v4968 = vsub.s32 0, %v4967
      %v4969 = vrot.slane %v4953, %v4968
      %v4970 = vmul.f32 %v4956, %v4969
      %v4971 = vmul.f32 %v4960, %v4969
      %v4972 = vmul.f32 %v4964, %v4969
      %v4973 = vadd.f32 %v4950, %v4970
      %v4974 = vadd.f32 %v4951, %v4971
      %v4975 = vadd.f32 %v4952, %v4972
      %v4976 = vld [vmem:[%s7 + $0x1a] sm:$0x1]
      %4977 = vset.pattern.permute.xlu0 26
      %4978 = vperm.xlu0 %4977, %v4372
      %v4979 = vpop.permute.xlu0 %4978
      %4981 = vset.pattern.permute.xlu0 26
      %4982 = vperm.xlu0 %4981, %v4373
      %v4983 = vpop.permute.xlu0 %4982
      %4985 = vset.pattern.permute.xlu0 26
      %4986 = vperm.xlu0 %4985, %v4374
      %v4987 = vpop.permute.xlu0 %4986
      %v4989 = vlaneseq
      %v4990 = vshrl.u32 %v4989, 7
      %v4991 = vsub.s32 0, %v4990
      %v4992 = vrot.slane %v4976, %v4991
      %v4993 = vmul.f32 %v4979, %v4992
      %v4994 = vmul.f32 %v4983, %v4992
      %v4995 = vmul.f32 %v4987, %v4992
      %v4996 = vadd.f32 %v4973, %v4993
      %v4997 = vadd.f32 %v4974, %v4994
      %v4998 = vadd.f32 %v4975, %v4995
      %v4999 = vld [vmem:[%s7 + $0x1b] sm:$0x1]
      %5000 = vset.pattern.permute.xlu0 27
      %5001 = vperm.xlu0 %5000, %v4372
      %v5002 = vpop.permute.xlu0 %5001
      %5004 = vset.pattern.permute.xlu0 27
      %5005 = vperm.xlu0 %5004, %v4373
      %v5006 = vpop.permute.xlu0 %5005
      %5008 = vset.pattern.permute.xlu0 27
      %5009 = vperm.xlu0 %5008, %v4374
      %v5010 = vpop.permute.xlu0 %5009
      %v5012 = vlaneseq
      %v5013 = vshrl.u32 %v5012, 7
      %v5014 = vsub.s32 0, %v5013
      %v5015 = vrot.slane %v4999, %v5014
      %v5016 = vmul.f32 %v5002, %v5015
      %v5017 = vmul.f32 %v5006, %v5015
      %v5018 = vmul.f32 %v5010, %v5015
      %v5019 = vadd.f32 %v4996, %v5016
      %v5020 = vadd.f32 %v4997, %v5017
      %v5021 = vadd.f32 %v4998, %v5018
      %v5022 = vld [vmem:[%s7 + $0x1c] sm:$0x1]
      %5023 = vset.pattern.permute.xlu0 28
      %5024 = vperm.xlu0 %5023, %v4372
      %v5025 = vpop.permute.xlu0 %5024
      %5027 = vset.pattern.permute.xlu0 28
      %5028 = vperm.xlu0 %5027, %v4373
      %v5029 = vpop.permute.xlu0 %5028
      %5031 = vset.pattern.permute.xlu0 28
      %5032 = vperm.xlu0 %5031, %v4374
      %v5033 = vpop.permute.xlu0 %5032
      %v5035 = vlaneseq
      %v5036 = vshrl.u32 %v5035, 7
      %v5037 = vsub.s32 0, %v5036
      %v5038 = vrot.slane %v5022, %v5037
      %v5039 = vmul.f32 %v5025, %v5038
      %v5040 = vmul.f32 %v5029, %v5038
      %v5041 = vmul.f32 %v5033, %v5038
      %v5042 = vadd.f32 %v5019, %v5039
      %v5043 = vadd.f32 %v5020, %v5040
      %v5044 = vadd.f32 %v5021, %v5041
      %v5045 = vld [vmem:[%s7 + $0x1d] sm:$0x1]
      %5046 = vset.pattern.permute.xlu0 29
      %5047 = vperm.xlu0 %5046, %v4372
      %v5048 = vpop.permute.xlu0 %5047
      %5050 = vset.pattern.permute.xlu0 29
      %5051 = vperm.xlu0 %5050, %v4373
      %v5052 = vpop.permute.xlu0 %5051
      %5054 = vset.pattern.permute.xlu0 29
      %5055 = vperm.xlu0 %5054, %v4374
      %v5056 = vpop.permute.xlu0 %5055
      %v5058 = vlaneseq
      %v5059 = vshrl.u32 %v5058, 7
      %v5060 = vsub.s32 0, %v5059
      %v5061 = vrot.slane %v5045, %v5060
      %v5062 = vmul.f32 %v5048, %v5061
      %v5063 = vmul.f32 %v5052, %v5061
      %v5064 = vmul.f32 %v5056, %v5061
      %v5065 = vadd.f32 %v5042, %v5062
      %v5066 = vadd.f32 %v5043, %v5063
      %v5067 = vadd.f32 %v5044, %v5064
      %v5068 = vld [vmem:[%s7 + $0x1e] sm:$0x1]
      %5069 = vset.pattern.permute.xlu0 30
      %5070 = vperm.xlu0 %5069, %v4372
      %v5071 = vpop.permute.xlu0 %5070
      %5073 = vset.pattern.permute.xlu0 30
      %5074 = vperm.xlu0 %5073, %v4373
      %v5075 = vpop.permute.xlu0 %5074
      %5077 = vset.pattern.permute.xlu0 30
      %5078 = vperm.xlu0 %5077, %v4374
      %v5079 = vpop.permute.xlu0 %5078
      %v5081 = vlaneseq
      %v5082 = vshrl.u32 %v5081, 7
      %v5083 = vsub.s32 0, %v5082
      %v5084 = vrot.slane %v5068, %v5083
      %v5085 = vmul.f32 %v5071, %v5084
      %v5086 = vmul.f32 %v5075, %v5084
      %v5087 = vmul.f32 %v5079, %v5084
      %v5088 = vadd.f32 %v5065, %v5085
      %v5089 = vadd.f32 %v5066, %v5086
      %v5090 = vadd.f32 %v5067, %v5087
      %v5091 = vld [vmem:[%s7 + $0x1f] sm:$0x1]
      %5092 = vset.pattern.permute.xlu0 31
      %5093 = vperm.xlu0 %5092, %v4372
      %v5094 = vpop.permute.xlu0 %5093
      %5096 = vset.pattern.permute.xlu0 31
      %5097 = vperm.xlu0 %5096, %v4373
      %v5098 = vpop.permute.xlu0 %5097
      %5100 = vset.pattern.permute.xlu0 31
      %5101 = vperm.xlu0 %5100, %v4374
      %v5102 = vpop.permute.xlu0 %5101
      %v5104 = vlaneseq
      %v5105 = vshrl.u32 %v5104, 7
      %v5106 = vsub.s32 0, %v5105
      %v5107 = vrot.slane %v5091, %v5106
      %v5108 = vmul.f32 %v5094, %v5107
      %v5109 = vmul.f32 %v5098, %v5107
      %v5110 = vmul.f32 %v5102, %v5107
      %v5111 = vadd.f32 %v5088, %v5108
      %v5112 = vadd.f32 %v5089, %v5109
      %v5113 = vadd.f32 %v5090, %v5110
      %v5114 = vld [vmem:[%s8] sm:$0x1]
      %v5116 = vlaneseq
      %v5117 = vshrl.u32 %v5116, 7
      %v5118 = vsub.s32 0, %v5117
      %v5119 = vrot.slane %v5114, %v5118
      %v5121 = vadd.f32 %v5111, %v5119
      %v5122 = vadd.f32 %v5112, %v5119
      %v5123 = vadd.f32 %v5113, %v5119
      %vm5124 = vcmask 75776
      %5125 = vst.msk [vmem:[%s332] sm:$0x7] %vm5124, %v5121
      %5126 = vst.msk [vmem:[%s332 + $0x4] sm:$0x7] %vm5124, %v5122
      %5127 = vst.msk [vmem:[%s332 + $0x8] sm:$0x7] %vm5124, %v5123
      %p5128 = scmp.lt.s32.totalorder %s20, 1
      %s5129 = scalar_select %p5128, %s20, 1
      %s5130 = smul.addr %s5129, 3
      %s5131 = smul.addr %s5130, 4
      %s5132 = scalar_lea.vmem %s9, %s5131
      // Predicated region
      $region57: #{tpu_custom_call.1} parent=55 // pred_check
        %p5133 = pneg %p232
      $region58: #{tpu_custom_call.1} parent=55 // pred_check_branch
        %5135 = sbr.rel (%p5133) target = $region60
      $region59: #{tpu_custom_call.1} parent=55 // pred_region
        _
      $region60: #{tpu_custom_call.1} parent=55 // pred_fallthru
        _
    $region56: #{tpu_custom_call.1} parent=5 // pred_fallthru
      _
    %p5136 = scmp.le.s32.totalorder 2, %s15
    // Predicated region
    $region61: #{tpu_custom_call.1} parent=5 // pred_check
      %p5137 = pneg %p5136
    $region62: #{tpu_custom_call.1} parent=5 // pred_check_branch
      %5139 = sbr.rel (%p5137) target = $region64
    $region63: #{tpu_custom_call.1} parent=5 // pred_region
      %s5140 = ssub.s32 %s15, 2
      // Predicated region
      $region65: #{tpu_custom_call.1} parent=63 // pred_check
        %p5141 = pneg %p238
      $region66: #{tpu_custom_call.1} parent=63 // pred_check_branch
        %5143 = sbr.rel (%p5141) target = $region68
      $region67: #{tpu_custom_call.1} parent=63 // pred_region
        %p5144 = scmp.lt.s32.totalorder %s21, 1
        %s5145 = scalar_select %p5144, %s21, 1
        %s5146 = smul.addr %s5145, 3
        %s5147 = smul.addr %s5146, 4
        %s5148 = scalar_lea.vmem %s9, %s5147
      $region68: #{tpu_custom_call.1} parent=63 // pred_fallthru
        _
    $region64: #{tpu_custom_call.1} parent=5 // pred_fallthru
      _
  $region6: #{tpu_custom_call.1} parent=0 // loop_footer
    %s19 = sadd.s32 1, %s15
  $region7: #{tpu_custom_call.1} parent=0 // loop_footer_branch
    %14 = sbr.rel target = $region3
  $region8: #{tpu_custom_call.1} parent=0 // loop_exit
    _

</llo_original>
